<compile_context>
chip_gen: v5e
topology: v5e:2x2
jax: 0.10.0
libtpu: 0.0.40
codegen_flags: <defaults>
</compile_context>

<pallas_src>
import math
import functools

import jax
import jax.numpy as jnp
from jax.experimental import pallas as pl
from jax.experimental.pallas import tpu as pltpu


_VMEM_LIMIT = 32 * 1024 * 1024  # safe scoped-VMEM budget on v5e/v6e/v7x


def _tile_m(m):
    # second-to-last block dim: multiple of 8/16 or the full dim
    return m if m <= 256 else 256


def _tile_n(n):
    # last block dim: multiple of 128 or the full dim
    return n if n <= 512 else 512


# --------------------------- fused linear kernel ----------------------------
# y = [LN(x)] @ W [+ b] [GELU] [+ residual], bf16 matmul operands, f32 accum.

def _mm_kernel(*refs, act, has_bias, has_res, has_ln, ln_eps):
    i = 0
    x_ref = refs[i]; i += 1
    if has_ln:
        g_ref = refs[i]; i += 1
        beta_ref = refs[i]; i += 1
    w_ref = refs[i]; i += 1
    if has_bias:
        b_ref = refs[i]; i += 1
    if has_res:
        r_ref = refs[i]; i += 1
    o_ref = refs[i]

    x = x_ref[...]
    if has_ln:
        xf = x.astype(jnp.float32)
        mu = jnp.mean(xf, axis=-1, keepdims=True)
        xc = xf - mu
        var = jnp.mean(xc * xc, axis=-1, keepdims=True)
        xf = xc * jax.lax.rsqrt(var + ln_eps) * g_ref[...] + beta_ref[...]
        x_mm = xf.astype(jnp.bfloat16)
    else:
        x_mm = x.astype(jnp.bfloat16)

    y = jnp.dot(x_mm, w_ref[...].astype(jnp.bfloat16),
                preferred_element_type=jnp.float32)
    if has_bias:
        y = y + b_ref[...]
    if act == "gelu":
        # exact GELU (erf), matching torch.nn.GELU(approximate='none')
        y = 0.5 * y * (1.0 + jax.lax.erf(y * (1.0 / math.sqrt(2.0))))
    if has_res:
        y = y + r_ref[...].astype(jnp.float32)
    o_ref[...] = y.astype(o_ref.dtype)


def fused_linear(x2d, w, b=None, *, act="none", residual=None, ln=None,
                 out_dtype=jnp.bfloat16, ln_eps=1e-5):
    """x2d: (M, K). w: (K, N). Optional LN over K, bias, exact GELU, residual add."""
    M, K = x2d.shape
    K2, N = w.shape
    assert K == K2
    tm, tn = _tile_m(M), _tile_n(N)
    gm, gn = pl.cdiv(M, tm), pl.cdiv(N, tn)

    inputs = [x2d]
    in_specs = [pl.BlockSpec((tm, K), lambda i, j: (i, 0))]
    if ln is not None:
        g, beta = ln
        inputs += [g.reshape(1, K).astype(jnp.float32),
                   beta.reshape(1, K).astype(jnp.float32)]
        in_specs += [pl.BlockSpec((1, K), lambda i, j: (0, 0)),
                     pl.BlockSpec((1, K), lambda i, j: (0, 0))]
    inputs.append(w)
    in_specs.append(pl.BlockSpec((K, tn), lambda i, j: (0, j)))
    if b is not None:
        inputs.append(b.reshape(1, N).astype(jnp.float32))
        in_specs.append(pl.BlockSpec((1, tn), lambda i, j: (0, j)))
    if residual is not None:
        inputs.append(residual)
        in_specs.append(pl.BlockSpec((tm, tn), lambda i, j: (i, j)))

    kernel = functools.partial(_mm_kernel, act=act, has_bias=b is not None,
                               has_res=residual is not None,
                               has_ln=ln is not None, ln_eps=ln_eps)
    return pl.pallas_call(
        kernel,
        out_shape=jax.ShapeDtypeStruct((M, N), out_dtype),
        grid=(gm, gn),
        in_specs=in_specs,
        out_specs=pl.BlockSpec((tm, tn), lambda i, j: (i, j)),
        compiler_params=pltpu.CompilerParams(
            dimension_semantics=("parallel", "parallel"),
            vmem_limit_bytes=_VMEM_LIMIT),
    )(*inputs)


# ---------------------- skip connection: x@W1 + s@W2 + b ---------------------

def _dual_mm_kernel(x_ref, s_ref, w1_ref, w2_ref, b_ref, o_ref):
    y = jnp.dot(x_ref[...].astype(jnp.bfloat16), w1_ref[...].astype(jnp.bfloat16),
                preferred_element_type=jnp.float32)
    y = y + jnp.dot(s_ref[...].astype(jnp.bfloat16), w2_ref[...].astype(jnp.bfloat16),
                    preferred_element_type=jnp.float32)
    o_ref[...] = (y + b_ref[...]).astype(o_ref.dtype)


def dual_linear(x2d, s2d, w1, w2, b, out_dtype=jnp.bfloat16):
    M, K = x2d.shape
    _, N = w1.shape
    tm, tn = _tile_m(M), _tile_n(N)
    return pl.pallas_call(
        _dual_mm_kernel,
        out_shape=jax.ShapeDtypeStruct((M, N), out_dtype),
        grid=(pl.cdiv(M, tm), pl.cdiv(N, tn)),
        in_specs=[
            pl.BlockSpec((tm, K), lambda i, j: (i, 0)),
            pl.BlockSpec((tm, K), lambda i, j: (i, 0)),
            pl.BlockSpec((K, tn), lambda i, j: (0, j)),
            pl.BlockSpec((K, tn), lambda i, j: (0, j)),
            pl.BlockSpec((1, tn), lambda i, j: (0, j)),
        ],
        out_specs=pl.BlockSpec((tm, tn), lambda i, j: (i, j)),
        compiler_params=pltpu.CompilerParams(
            dimension_semantics=("parallel", "parallel"),
            vmem_limit_bytes=_VMEM_LIMIT),
    )(x2d, s2d, w1, w2, b.reshape(1, N).astype(jnp.float32))


# ------------------------------- attention ----------------------------------
# One grid step per batch element; heads are sliced inside the kernel straight
# from the (S, 3D) qkv slab (layout 'L (K H D)'); output is a lane-dense (S, D).

def _attn_kernel(qkv_ref, o_ref, *, num_heads, head_dim, scale):
    D = num_heads * head_dim
    outs = []
    for h in range(num_heads):
        q = qkv_ref[0, :, h * head_dim:(h + 1) * head_dim]
        k = qkv_ref[0, :, D + h * head_dim:D + (h + 1) * head_dim]
        v = qkv_ref[0, :, 2 * D + h * head_dim:2 * D + (h + 1) * head_dim]
        s = jax.lax.dot_general(q, k, (((1,), (1,)), ((), ())),
                                preferred_element_type=jnp.float32) * scale
        m = jnp.max(s, axis=-1, keepdims=True)
        p = jnp.exp(s - m)
        p = p * pl.reciprocal(jnp.sum(p, axis=-1, keepdims=True), approx=True)
        outs.append(jnp.dot(p.astype(jnp.bfloat16), v,
                            preferred_element_type=jnp.float32))
    o_ref[0, :, :] = jnp.concatenate(outs, axis=-1).astype(o_ref.dtype)


def mha(qkv_bsd, num_heads, head_dim):
    B, S, D3 = qkv_bsd.shape
    D = D3 // 3
    return pl.pallas_call(
        functools.partial(_attn_kernel, num_heads=num_heads, head_dim=head_dim,
                          scale=head_dim ** (-0.5)),
        out_shape=jax.ShapeDtypeStruct((B, S, D), jnp.bfloat16),
        grid=(B,),
        in_specs=[pl.BlockSpec((1, S, D3), lambda b: (b, 0, 0))],
        out_specs=pl.BlockSpec((1, S, D), lambda b: (b, 0, 0)),
        compiler_params=pltpu.CompilerParams(
            dimension_semantics=("parallel",),
            vmem_limit_bytes=_VMEM_LIMIT),
    )(qkv_bsd)


# ------------------------------ 3x3 conv (SAME) ------------------------------
# Direct conv: padded image tile stays in VMEM, 9 taps accumulated with shifted
# static slices; 3x3 weights/bias are scalars in SMEM. No im2col HBM blow-up.
# TODO(synk): output block lane width is W (<128) — negligible for this tiny layer.

def _conv3x3_kernel(xpad_ref, wf_ref, b_ref, o_ref, *, C, Cout, H, W):
    chans = [xpad_ref[0, ci, :, :] for ci in range(C)]
    for co in range(Cout):
        acc = jnp.zeros((H, W), jnp.float32)
        for ci in range(C):
            xc = chans[ci]
            for di in range(3):
                for dj in range(3):
                    wv = wf_ref[((co * C + ci) * 3 + di) * 3 + dj]
                    acc = acc + wv * xc[di:di + H, dj:dj + W]
        o_ref[0, co, :, :] = acc + b_ref[co]


def conv3x3(x, w, b):
    """3x3 SAME conv, NCHW, PyTorch (Cout, Cin, 3, 3) weight layout."""
    B, C, H, W = x.shape
    Cout = w.shape[0]
    xpad = jnp.pad(x.astype(jnp.float32), ((0, 0), (0, 0), (1, 1), (1, 1)))
    wf = w.reshape(-1).astype(jnp.float32)
    return pl.pallas_call(
        functools.partial(_conv3x3_kernel, C=C, Cout=Cout, H=H, W=W),
        out_shape=jax.ShapeDtypeStruct((B, Cout, H, W), jnp.float32),
        grid=(B,),
        in_specs=[
            pl.BlockSpec((1, C, H + 2, W + 2), lambda bb: (bb, 0, 0, 0)),
            pl.BlockSpec((Cout * C * 9,), lambda bb: (0,),
                         memory_space=pltpu.MemorySpace.SMEM),
            pl.BlockSpec((Cout,), lambda bb: (0,),
                         memory_space=pltpu.MemorySpace.SMEM),
        ],
        out_specs=pl.BlockSpec((1, Cout, H, W), lambda bb: (bb, 0, 0, 0)),
        compiler_params=pltpu.CompilerParams(
            dimension_semantics=("parallel",),
            vmem_limit_bytes=_VMEM_LIMIT),
    )(xpad, wf, b.astype(jnp.float32))


# ------------------------------ model pieces --------------------------------

def timestep_embedding(timesteps, dim, max_period=10000):
    half = dim // 2
    freqs = jnp.exp(-math.log(max_period) * jnp.arange(half, dtype=jnp.float32) / half)
    args = timesteps[:, None].astype(jnp.float32) * freqs[None]
    emb = jnp.concatenate([jnp.cos(args), jnp.sin(args)], axis=-1)
    if dim % 2:
        emb = jnp.concatenate([emb, jnp.zeros_like(emb[:, :1])], axis=-1)
    return emb


def patch_embed(x, w_flat, b, patch):
    """Conv2d(kernel=stride=patch) == per-patch linear projection."""
    B, C, H, W = x.shape
    h, wn = H // patch, W // patch
    xp = x.reshape(B, C, h, patch, wn, patch)
    xp = jnp.transpose(xp, (0, 2, 4, 1, 3, 5)).reshape(B * h * wn, C * patch * patch)
    y = fused_linear(xp, w_flat, b, out_dtype=jnp.float32)
    return y.reshape(B, h * wn, -1)


def unpatchify(x, channels):
    # einops: 'B (h w) (p1 p2 C) -> B C (h p1) (w p2)'
    B, L, pd = x.shape
    patch = int((pd // channels) ** 0.5)
    h = w = int(L ** 0.5)
    x = x.reshape(B, h, w, patch, patch, channels)
    x = jnp.transpose(x, (0, 5, 1, 3, 2, 4))
    return x.reshape(B, channels, h * patch, w * patch)


def block_forward(p, x_bsd, skip=None, *, num_heads):
    B, S, D = x_bsd.shape
    Dh = D // num_heads
    x2 = x_bsd.reshape(B * S, D)

    if skip is not None:
        x2 = dual_linear(x2, skip.reshape(B * S, D),
                         p["skip_w1"], p["skip_w2"], p["skip_b"])

    # --- attention: LN1 fused into qkv matmul (no qkv bias) ---
    qkv = fused_linear(x2, p["qkv_w"], None, ln=(p["norm1_g"], p["norm1_b"]))
    attn = mha(qkv.reshape(B, S, 3 * D), num_heads, Dh)          # (B, S, D) bf16
    # proj + residual fused
    x2 = fused_linear(attn.reshape(B * S, D), p["proj_w"], p["proj_b"], residual=x2)

    # --- MLP: LN2 + fc1 + GELU fused; fc2 + residual fused ---
    h = fused_linear(x2, p["fc1_w"], p["fc1_b"], act="gelu",
                     ln=(p["norm2_g"], p["norm2_b"]))
    x2 = fused_linear(h, p["fc2_w"], p["fc2_b"], residual=x2)
    return x2.reshape(B, S, D)


def uvit_forward(params, x, timesteps, context, *, cfg):
    D = cfg["embed_dim"]
    heads = cfg["num_heads"]
    patch = cfg["patch_size"]
    C = cfg["in_chans"]
    extras = 1 + cfg["num_clip_token"]

    tokens = patch_embed(x, params["patch_w"], params["patch_b"], patch)   # (B, L, D) f32
    B, L, _ = tokens.shape

    # time_embed is nn.Identity (mlp_time_embed=False default)
    time_token = timestep_embedding(timesteps, D)[:, None, :]              # (B, 1, D)
    ctx = fused_linear(context.reshape(-1, cfg["clip_dim"]),
                       params["ctx_w"], params["ctx_b"],
                       out_dtype=jnp.float32).reshape(B, -1, D)            # (B, T, D)

    xseq = jnp.concatenate([time_token, ctx, tokens], axis=1)              # (B, S, D)
    xseq = xseq + params["pos_embed"][:, :extras + L, :]
    xseq = xseq.astype(jnp.bfloat16)                                       # bf16 activations

    skips = []
    for bp in params["in_blocks"]:
        xseq = block_forward(bp, xseq, num_heads=heads)
        skips.append(xseq)                                                 # bf16 skips
    xseq = block_forward(params["mid_block"], xseq, num_heads=heads)
    for bp in params["out_blocks"]:
        xseq = block_forward(bp, xseq, skip=skips.pop(), num_heads=heads)

    # final LayerNorm is per-token: slice first, then fuse LN into decoder_pred
    feat = xseq[:, extras:extras + L, :].reshape(B * L, D)
    noise = fused_linear(feat, params["dec_w"], params["dec_b"],
                         ln=(params["norm_g"], params["norm_b"]),
                         out_dtype=jnp.float32).reshape(B, L, -1)
    noise = unpatchify(noise, C)
    noise = conv3x3(noise, params["final_w"], params["final_b"])
    return noise


# ----------------------------- parameter init -------------------------------

def _normal_bf16(key, shape, std=0.02):
    return (std * jax.random.normal(key, shape, dtype=jnp.float32)).astype(jnp.bfloat16)


def _normal_f32(key, shape, std=0.02):
    return std * jax.random.normal(key, shape, dtype=jnp.float32)


def init_block(key, D, hidden, skip):
    ks = jax.random.split(key, 6)
    p = dict(
        norm1_g=jnp.ones((D,), jnp.float32), norm1_b=jnp.zeros((D,), jnp.float32),
        qkv_w=_normal_bf16(ks[0], (D, 3 * D)),                  # qkv_bias=False
        proj_w=_normal_bf16(ks[1], (D, D)), proj_b=jnp.zeros((D,), jnp.float32),
        norm2_g=jnp.ones((D,), jnp.float32), norm2_b=jnp.zeros((D,), jnp.float32),
        fc1_w=_normal_bf16(ks[2], (D, hidden)), fc1_b=jnp.zeros((hidden,), jnp.float32),
        fc2_w=_normal_bf16(ks[3], (hidden, D)), fc2_b=jnp.zeros((D,), jnp.float32),
    )
    if skip:
        w = _normal_f32(ks[4], (2 * D, D))
        p["skip_w1"] = w[:D].astype(jnp.bfloat16)   # multiplies x
        p["skip_w2"] = w[D:].astype(jnp.bfloat16)   # multiplies skip
        p["skip_b"] = jnp.zeros((D,), jnp.float32)
    return p


def init_params(key, cfg):
    D = cfg["embed_dim"]
    C = cfg["in_chans"]
    p = cfg["patch_size"]
    hidden = int(D * cfg["mlp_ratio"])
    num_patches = (cfg["img_size"] // p) ** 2
    extras = 1 + cfg["num_clip_token"]
    patch_dim = p * p * C
    keys = jax.random.split(key, 32)
    it = iter(keys)
    params = dict(
        patch_w=_normal_bf16(next(it), (C * p * p, D)),          # flattened conv(p,p,stride=p)
        patch_b=jnp.zeros((D,), jnp.float32),
        ctx_w=_normal_bf16(next(it), (cfg["clip_dim"], D)),
        ctx_b=jnp.zeros((D,), jnp.float32),
        # enable_panoptic=True default -> pos_embed covers extras + 2*num_patches
        pos_embed=_normal_f32(next(it), (1, extras + 2 * num_patches, D)),
        norm_g=jnp.ones((D,), jnp.float32),
        norm_b=jnp.zeros((D,), jnp.float32),
        dec_w=_normal_bf16(next(it), (D, patch_dim)),
        dec_b=jnp.zeros((patch_dim,), jnp.float32),
        final_w=_normal_f32(next(it), (C, C, 3, 3)),
        final_b=jnp.zeros((C,), jnp.float32),
    )
    params["in_blocks"] = [init_block(next(it), D, hidden, False)
                           for _ in range(cfg["depth"] // 2)]
    params["mid_block"] = init_block(next(it), D, hidden, False)
    params["out_blocks"] = [init_block(next(it), D, hidden, True)
                            for _ in range(cfg["depth"] // 2)]
    return params


# ---------------------------------- main ------------------------------------

if __name__ == "__main__":
    cfg = dict(
        img_size=16, patch_size=4, in_chans=4, embed_dim=64, depth=2,
        num_heads=4, mlp_ratio=4.0, clip_dim=32, num_clip_token=7,
    )
    key = jax.random.PRNGKey(0)
    kp, kx, kc = jax.random.split(key, 3)
    params = init_params(kp, cfg)

    x = jax.random.normal(kx, (2, cfg["in_chans"], cfg["img_size"], cfg["img_size"]),
                          dtype=jnp.float32)
    timesteps = jnp.array([1.0, 5.0], dtype=jnp.float32)
    context = jax.random.normal(kc, (2, cfg["num_clip_token"], cfg["clip_dim"]),
                                dtype=jnp.float32)

    fwd = jax.jit(functools.partial(uvit_forward, cfg=cfg))
    out = fwd(params, x, timesteps, context)
    jax.block_until_ready(out)
    assert out.shape == (2, cfg["in_chans"], cfg["img_size"], cfg["img_size"]), out.shape
    assert out.dtype == jnp.float32
    print("KERNEL_OK")
</pallas_src>

<mosaic_0001>
module attributes {stable_mosaic.version = 11 : i64} {
  func.func @_mm_kernel(%arg0: i32, %arg1: i32, %arg2: memref<32x64xf32, #tpu.memory_space<vmem>>, %arg3: memref<64x64xbf16, #tpu.memory_space<vmem>>, %arg4: memref<1x64xf32, #tpu.memory_space<vmem>>, %arg5: memref<32x64xf32, #tpu.memory_space<vmem>>) attributes {dimension_semantics = [#tpu.dimension_semantics<parallel>, #tpu.dimension_semantics<parallel>], iteration_bounds = array<i64: 1, 1>, scalar_prefetch = 0 : i64, scratch_operands = 0 : i64, tpu.core_type = #tpu.core_type<tc>, window_params = [{transform_indices = @transform_0, window_bounds = array<i64: 32, 64>}, {transform_indices = @transform_1, window_bounds = array<i64: 64, 64>}, {transform_indices = @transform_2, window_bounds = array<i64: 1, 64>}, {transform_indices = @transform_3, window_bounds = array<i64: 32, 64>}]} {
    %c0 = arith.constant 0 : index
    %c0_0 = arith.constant 0 : index
    %0 = vector.load %arg2[%c0, %c0_0] : memref<32x64xf32, #tpu.memory_space<vmem>>, vector<32x64xf32>
    %1 = arith.truncf %0 : vector<32x64xf32> to vector<32x64xbf16>
    %c0_1 = arith.constant 0 : index
    %c0_2 = arith.constant 0 : index
    %2 = vector.load %arg3[%c0_1, %c0_2] : memref<64x64xbf16, #tpu.memory_space<vmem>>, vector<64x64xbf16>
    %cst = arith.constant dense<0.000000e+00> : vector<32x64xf32>
    %3 = tpu.matmul %1, %2, %cst {dimension_numbers = #tpu.dot_dimension_numbers<[1], [0], [0], [1], [0, 0, 1, 1], [], []>} : vector<32x64xbf16>, vector<64x64xbf16>, vector<32x64xf32> -> vector<32x64xf32>
    %c0_3 = arith.constant 0 : index
    %c0_4 = arith.constant 0 : index
    %4 = vector.load %arg4[%c0_3, %c0_4] : memref<1x64xf32, #tpu.memory_space<vmem>>, vector<1x64xf32>
    %5 = vector.broadcast %4 : vector<1x64xf32> to vector<32x64xf32>
    %6 = arith.addf %3, %5 : vector<32x64xf32>
    %c0_5 = arith.constant 0 : index
    %c0_6 = arith.constant 0 : index
    %7 = vector.load %arg5[%c0_5, %c0_6] : memref<32x64xf32, #tpu.memory_space<vmem>>, vector<32x64xf32>
    tpu.vector_store %arg5[%c0_5, %c0_6], %6 {strides = array<i32>} : memref<32x64xf32, #tpu.memory_space<vmem>>, vector<32x64xf32>,
    return
  }
  func.func @transform_0(%arg0: i32, %arg1: i32) -> (i32, i32) {
    %c0_i32 = arith.constant 0 : i32
    %c0_i32_0 = arith.constant 0 : i32
    return %arg0, %c0_i32 : i32, i32
  }
  func.func @transform_1(%arg0: i32, %arg1: i32) -> (i32, i32) {
    %c0_i32 = arith.constant 0 : i32
    %c0_i32_0 = arith.constant 0 : i32
    return %c0_i32, %arg1 : i32, i32
  }
  func.func @transform_2(%arg0: i32, %arg1: i32) -> (i32, i32) {
    %c0_i32 = arith.constant 0 : i32
    %c0_i32_0 = arith.constant 0 : i32
    return %c0_i32, %arg1 : i32, i32
  }
  func.func @transform_3(%arg0: i32, %arg1: i32) -> (i32, i32) {
    %c0_i32 = arith.constant 0 : i32
    return %arg0, %arg1 : i32, i32
  }
}

module attributes {stable_mosaic.version = 11 : i64} {
  func.func @_mm_kernel(%arg0: i32, %arg1: i32, %arg2: memref<14x32xf32, #tpu.memory_space<vmem>>, %arg3: memref<32x64xbf16, #tpu.memory_space<vmem>>, %arg4: memref<1x64xf32, #tpu.memory_space<vmem>>, %arg5: memref<14x64xf32, #tpu.memory_space<vmem>>) attributes {dimension_semantics = [#tpu.dimension_semantics<parallel>, #tpu.dimension_semantics<parallel>], iteration_bounds = array<i64: 1, 1>, scalar_prefetch = 0 : i64, scratch_operands = 0 : i64, tpu.core_type = #tpu.core_type<tc>, window_params = [{transform_indices = @transform_0, window_bounds = array<i64: 14, 32>}, {transform_indices = @transform_1, window_bounds = array<i64: 32, 64>}, {transform_indices = @transform_2, window_bounds = array<i64: 1, 64>}, {transform_indices = @transform_3, window_bounds = array<i64: 14, 64>}]} {
    %c0 = arith.constant 0 : index
    %c0_0 = arith.constant 0 : index
    %0 = vector.load %arg2[%c0, %c0_0] : memref<14x32xf32, #tpu.memory_space<vmem>>, vector<14x32xf32>
    %1 = arith.truncf %0 : vector<14x32xf32> to vector<14x32xbf16>
    %c0_1 = arith.constant 0 : index
    %c0_2 = arith.constant 0 : index
    %2 = vector.load %arg3[%c0_1, %c0_2] : memref<32x64xbf16, #tpu.memory_space<vmem>>, vector<32x64xbf16>
    %cst = arith.constant dense<0.000000e+00> : vector<14x64xf32>
    %3 = tpu.matmul %1, %2, %cst {dimension_numbers = #tpu.dot_dimension_numbers<[1], [0], [0], [1], [0, 0, 1, 1], [], []>} : vector<14x32xbf16>, vector<32x64xbf16>, vector<14x64xf32> -> vector<14x64xf32>
    %c0_3 = arith.constant 0 : index
    %c0_4 = arith.constant 0 : index
    %4 = vector.load %arg4[%c0_3, %c0_4] : memref<1x64xf32, #tpu.memory_space<vmem>>, vector<1x64xf32>
    %5 = vector.broadcast %4 : vector<1x64xf32> to vector<14x64xf32>
    %6 = arith.addf %3, %5 : vector<14x64xf32>
    %c0_5 = arith.constant 0 : index
    %c0_6 = arith.constant 0 : index
    %7 = vector.load %arg5[%c0_5, %c0_6] : memref<14x64xf32, #tpu.memory_space<vmem>>, vector<14x64xf32>
    tpu.vector_store %arg5[%c0_5, %c0_6], %6 {strides = array<i32>} : memref<14x64xf32, #tpu.memory_space<vmem>>, vector<14x64xf32>,
    return
  }
  func.func @transform_0(%arg0: i32, %arg1: i32) -> (i32, i32) {
    %c0_i32 = arith.constant 0 : i32
    %c0_i32_0 = arith.constant 0 : i32
    return %arg0, %c0_i32 : i32, i32
  }
  func.func @transform_1(%arg0: i32, %arg1: i32) -> (i32, i32) {
    %c0_i32 = arith.constant 0 : i32
    %c0_i32_0 = arith.constant 0 : i32
    return %c0_i32, %arg1 : i32, i32
  }
  func.func @transform_2(%arg0: i32, %arg1: i32) -> (i32, i32) {
    %c0_i32 = arith.constant 0 : i32
    %c0_i32_0 = arith.constant 0 : i32
    return %c0_i32, %arg1 : i32, i32
  }
  func.func @transform_3(%arg0: i32, %arg1: i32) -> (i32, i32) {
    %c0_i32 = arith.constant 0 : i32
    return %arg0, %arg1 : i32, i32
  }
}

module attributes {stable_mosaic.version = 11 : i64} {
  func.func @_mm_kernel(%arg0: i32, %arg1: i32, %arg2: memref<48x64xbf16, #tpu.memory_space<vmem>>, %arg3: memref<1x64xf32, #tpu.memory_space<vmem>>, %arg4: memref<1x64xf32, #tpu.memory_space<vmem>>, %arg5: memref<64x192xbf16, #tpu.memory_space<vmem>>, %arg6: memref<48x192xbf16, #tpu.memory_space<vmem>>) attributes {dimension_semantics = [#tpu.dimension_semantics<parallel>, #tpu.dimension_semantics<parallel>], iteration_bounds = array<i64: 1, 1>, scalar_prefetch = 0 : i64, scratch_operands = 0 : i64, tpu.core_type = #tpu.core_type<tc>, window_params = [{transform_indices = @transform_0, window_bounds = array<i64: 48, 64>}, {pipeline_mode = #tpu.pipeline_mode<synchronous>, transform_indices = @transform_1, window_bounds = array<i64: 1, 64>}, {pipeline_mode = #tpu.pipeline_mode<synchronous>, transform_indices = @transform_2, window_bounds = array<i64: 1, 64>}, {transform_indices = @transform_3, window_bounds = array<i64: 64, 192>}, {transform_indices = @transform_4, window_bounds = array<i64: 48, 192>}]} {
    %c0 = arith.constant 0 : index
    %c0_0 = arith.constant 0 : index
    %0 = vector.load %arg2[%c0, %c0_0] : memref<48x64xbf16, #tpu.memory_space<vmem>>, vector<48x64xbf16>
    %1 = arith.extf %0 : vector<48x64xbf16> to vector<48x64xf32>
    %cst = arith.constant dense<0.000000e+00> : vector<48xf32>
    %2 = vector.multi_reduction <add>, %1, %cst [1] : vector<48x64xf32> to vector<48xf32>
    %3 = vector.shape_cast %2 : vector<48xf32> to vector<48x1xf32>
    %cst_1 = arith.constant 6.400000e+01 : f32
    %4 = vector.broadcast %cst_1 : f32 to vector<48x1xf32>
    %5 = arith.divf %3, %4 : vector<48x1xf32>
    %6 = vector.broadcast %5 : vector<48x1xf32> to vector<48x64xf32>
    %7 = arith.subf %1, %6 : vector<48x64xf32>
    %8 = arith.mulf %7, %7 : vector<48x64xf32>
    %cst_2 = arith.constant dense<0.000000e+00> : vector<48xf32>
    %9 = vector.multi_reduction <add>, %8, %cst_2 [1] : vector<48x64xf32> to vector<48xf32>
    %10 = vector.shape_cast %9 : vector<48xf32> to vector<48x1xf32>
    %cst_3 = arith.constant 6.400000e+01 : f32
    %11 = vector.broadcast %cst_3 : f32 to vector<48x1xf32>
    %12 = arith.divf %10, %11 : vector<48x1xf32>
    %cst_4 = arith.constant 9.99999974E-6 : f32
    %13 = vector.broadcast %cst_4 : f32 to vector<48x1xf32>
    %14 = arith.addf %12, %13 : vector<48x1xf32>
    %15 = math.rsqrt %14 : vector<48x1xf32>
    %16 = vector.broadcast %15 : vector<48x1xf32> to vector<48x64xf32>
    %17 = arith.mulf %7, %16 : vector<48x64xf32>
    %c0_5 = arith.constant 0 : index
    %c0_6 = arith.constant 0 : index
    %18 = vector.load %arg3[%c0_5, %c0_6] : memref<1x64xf32, #tpu.memory_space<vmem>>, vector<1x64xf32>
    %19 = vector.broadcast %18 : vector<1x64xf32> to vector<48x64xf32>
    %20 = arith.mulf %17, %19 : vector<48x64xf32>
    %c0_7 = arith.constant 0 : index
    %c0_8 = arith.constant 0 : index
    %21 = vector.load %arg4[%c0_7, %c0_8] : memref<1x64xf32, #tpu.memory_space<vmem>>, vector<1x64xf32>
    %22 = vector.broadcast %21 : vector<1x64xf32> to vector<48x64xf32>
    %23 = arith.addf %20, %22 : vector<48x64xf32>
    %24 = arith.truncf %23 : vector<48x64xf32> to vector<48x64xbf16>
    %c0_9 = arith.constant 0 : index
    %c0_10 = arith.constant 0 : index
    %25 = vector.load %arg5[%c0_9, %c0_10] : memref<64x192xbf16, #tpu.memory_space<vmem>>, vector<64x192xbf16>
    %cst_11 = arith.constant dense<0.000000e+00> : vector<48x192xf32>
    %26 = tpu.matmul %24, %25, %cst_11 {dimension_numbers = #tpu.dot_dimension_numbers<[1], [0], [0], [1], [0, 0, 1, 1], [], []>} : vector<48x64xbf16>, vector<64x192xbf16>, vector<48x192xf32> -> vector<48x192xf32>
    %27 = arith.truncf %26 : vector<48x192xf32> to vector<48x192xbf16>
    %c0_12 = arith.constant 0 : index
    %c0_13 = arith.constant 0 : index
    %28 = vector.load %arg6[%c0_12, %c0_13] : memref<48x192xbf16, #tpu.memory_space<vmem>>, vector<48x192xbf16>
    tpu.vector_store %arg6[%c0_12, %c0_13], %27 {strides = array<i32>} : memref<48x192xbf16, #tpu.memory_space<vmem>>, vector<48x192xbf16>,
    return
  }
  func.func @transform_0(%arg0: i32, %arg1: i32) -> (i32, i32) {
    %c0_i32 = arith.constant 0 : i32
    %c0_i32_0 = arith.constant 0 : i32
    return %arg0, %c0_i32 : i32, i32
  }
  func.func @transform_1(%arg0: i32, %arg1: i32) -> (i32, i32) {
    %c0_i32 = arith.constant 0 : i32
    %c0_i32_0 = arith.constant 0 : i32
    %c0_i32_1 = arith.constant 0 : i32
    return %c0_i32, %c0_i32_0 : i32, i32
  }
  func.func @transform_2(%arg0: i32, %arg1: i32) -> (i32, i32) {
    %c0_i32 = arith.constant 0 : i32
    %c0_i32_0 = arith.constant 0 : i32
    %c0_i32_1 = arith.constant 0 : i32
    return %c0_i32, %c0_i32_0 : i32, i32
  }
  func.func @transform_3(%arg0: i32, %arg1: i32) -> (i32, i32) {
    %c0_i32 = arith.constant 0 : i32
    %c0_i32_0 = arith.constant 0 : i32
    return %c0_i32, %arg1 : i32, i32
  }
  func.func @transform_4(%arg0: i32, %arg1: i32) -> (i32, i32) {
    %c0_i32 = arith.constant 0 : i32
    return %arg0, %arg1 : i32, i32
  }
}

module attributes {stable_mosaic.version = 11 : i64} {
  func.func @_mm_kernel(%arg0: i32, %arg1: i32, %arg2: memref<48x64xbf16, #tpu.memory_space<vmem>>, %arg3: memref<64x64xbf16, #tpu.memory_space<vmem>>, %arg4: memref<1x64xf32, #tpu.memory_space<vmem>>, %arg5: memref<48x64xbf16, #tpu.memory_space<vmem>>, %arg6: memref<48x64xbf16, #tpu.memory_space<vmem>>) attributes {dimension_semantics = [#tpu.dimension_semantics<parallel>, #tpu.dimension_semantics<parallel>], iteration_bounds = array<i64: 1, 1>, scalar_prefetch = 0 : i64, scratch_operands = 0 : i64, tpu.core_type = #tpu.core_type<tc>, window_params = [{transform_indices = @transform_0, window_bounds = array<i64: 48, 64>}, {transform_indices = @transform_1, window_bounds = array<i64: 64, 64>}, {transform_indices = @transform_2, window_bounds = array<i64: 1, 64>}, {transform_indices = @transform_3, window_bounds = array<i64: 48, 64>}, {transform_indices = @transform_4, window_bounds = array<i64: 48, 64>}]} {
    %c0 = arith.constant 0 : index
    %c0_0 = arith.constant 0 : index
    %0 = vector.load %arg2[%c0, %c0_0] : memref<48x64xbf16, #tpu.memory_space<vmem>>, vector<48x64xbf16>
    %c0_1 = arith.constant 0 : index
    %c0_2 = arith.constant 0 : index
    %1 = vector.load %arg3[%c0_1, %c0_2] : memref<64x64xbf16, #tpu.memory_space<vmem>>, vector<64x64xbf16>
    %cst = arith.constant dense<0.000000e+00> : vector<48x64xf32>
    %2 = tpu.matmul %0, %1, %cst {dimension_numbers = #tpu.dot_dimension_numbers<[1], [0], [0], [1], [0, 0, 1, 1], [], []>} : vector<48x64xbf16>, vector<64x64xbf16>, vector<48x64xf32> -> vector<48x64xf32>
    %c0_3 = arith.constant 0 : index
    %c0_4 = arith.constant 0 : index
    %3 = vector.load %arg4[%c0_3, %c0_4] : memref<1x64xf32, #tpu.memory_space<vmem>>, vector<1x64xf32>
    %4 = vector.broadcast %3 : vector<1x64xf32> to vector<48x64xf32>
    %5 = arith.addf %2, %4 : vector<48x64xf32>
    %c0_5 = arith.constant 0 : index
    %c0_6 = arith.constant 0 : index
    %6 = vector.load %arg5[%c0_5, %c0_6] : memref<48x64xbf16, #tpu.memory_space<vmem>>, vector<48x64xbf16>
    %7 = arith.extf %6 : vector<48x64xbf16> to vector<48x64xf32>
    %8 = arith.addf %5, %7 : vector<48x64xf32>
    %9 = arith.truncf %8 : vector<48x64xf32> to vector<48x64xbf16>
    %c0_7 = arith.constant 0 : index
    %c0_8 = arith.constant 0 : index
    %10 = vector.load %arg6[%c0_7, %c0_8] : memref<48x64xbf16, #tpu.memory_space<vmem>>, vector<48x64xbf16>
    tpu.vector_store %arg6[%c0_7, %c0_8], %9 {strides = array<i32>} : memref<48x64xbf16, #tpu.memory_space<vmem>>, vector<48x64xbf16>,
    return
  }
  func.func @transform_0(%arg0: i32, %arg1: i32) -> (i32, i32) {
    %c0_i32 = arith.constant 0 : i32
    %c0_i32_0 = arith.constant 0 : i32
    return %arg0, %c0_i32 : i32, i32
  }
  func.func @transform_1(%arg0: i32, %arg1: i32) -> (i32, i32) {
    %c0_i32 = arith.constant 0 : i32
    %c0_i32_0 = arith.constant 0 : i32
    return %c0_i32, %arg1 : i32, i32
  }
  func.func @transform_2(%arg0: i32, %arg1: i32) -> (i32, i32) {
    %c0_i32 = arith.constant 0 : i32
    %c0_i32_0 = arith.constant 0 : i32
    return %c0_i32, %arg1 : i32, i32
  }
  func.func @transform_3(%arg0: i32, %arg1: i32) -> (i32, i32) {
    %c0_i32 = arith.constant 0 : i32
    return %arg0, %arg1 : i32, i32
  }
  func.func @transform_4(%arg0: i32, %arg1: i32) -> (i32, i32) {
    %c0_i32 = arith.constant 0 : i32
    return %arg0, %arg1 : i32, i32
  }
}

module attributes {stable_mosaic.version = 11 : i64} {
  func.func @_attn_kernel(%arg0: i32, %arg1: memref<1x24x192xbf16, #tpu.memory_space<vmem>>, %arg2: memref<1x24x64xbf16, #tpu.memory_space<vmem>>) attributes {dimension_semantics = [#tpu.dimension_semantics<parallel>], iteration_bounds = array<i64: 2>, scalar_prefetch = 0 : i64, scratch_operands = 0 : i64, tpu.core_type = #tpu.core_type<tc>, window_params = [{transform_indices = @transform_0, window_bounds = array<i64: 1, 24, 192>}, {transform_indices = @transform_1, window_bounds = array<i64: 1, 24, 64>}]} {
    %c0 = arith.constant 0 : index
    %c0_0 = arith.constant 0 : index
    %c0_1 = arith.constant 0 : index
    %0 = vector.load %arg1[%c0, %c0_0, %c0_1] : memref<1x24x192xbf16, #tpu.memory_space<vmem>>, vector<1x24x16xbf16>
    %1 = vector.shape_cast %0 : vector<1x24x16xbf16> to vector<24x16xbf16>
    %c0_2 = arith.constant 0 : index
    %c0_3 = arith.constant 0 : index
    %c64 = arith.constant 64 : index
    %2 = vector.load %arg1[%c0_2, %c0_3, %c64] : memref<1x24x192xbf16, #tpu.memory_space<vmem>>, vector<1x24x16xbf16>
    %3 = vector.shape_cast %2 : vector<1x24x16xbf16> to vector<24x16xbf16>
    %c0_4 = arith.constant 0 : index
    %c0_5 = arith.constant 0 : index
    %c128 = arith.constant 128 : index
    %4 = vector.load %arg1[%c0_4, %c0_5, %c128] : memref<1x24x192xbf16, #tpu.memory_space<vmem>>, vector<1x24x16xbf16>
    %5 = vector.shape_cast %4 : vector<1x24x16xbf16> to vector<24x16xbf16>
    %cst = arith.constant dense<0.000000e+00> : vector<24x24xf32>
    %6 = tpu.matmul %1, %3, %cst {dimension_numbers = #tpu.dot_dimension_numbers<[1], [1], [0], [0], [0, 0, 1, 0], [], []>} : vector<24x16xbf16>, vector<24x16xbf16>, vector<24x24xf32> -> vector<24x24xf32>
    %cst_6 = arith.constant 2.500000e-01 : f32
    %7 = vector.broadcast %cst_6 : f32 to vector<24x24xf32>
    %8 = arith.mulf %6, %7 : vector<24x24xf32>
    %cst_7 = arith.constant dense<0xFF800000> : vector<24xf32>
    %9 = vector.multi_reduction <maximumf>, %8, %cst_7 [1] : vector<24x24xf32> to vector<24xf32>
    %10 = vector.shape_cast %9 : vector<24xf32> to vector<24x1xf32>
    %11 = vector.broadcast %10 : vector<24x1xf32> to vector<24x24xf32>
    %12 = arith.subf %8, %11 : vector<24x24xf32>
    %13 = math.exp %12 : vector<24x24xf32>
    %cst_8 = arith.constant dense<0.000000e+00> : vector<24xf32>
    %14 = vector.multi_reduction <add>, %13, %cst_8 [1] : vector<24x24xf32> to vector<24xf32>
    %15 = vector.shape_cast %14 : vector<24xf32> to vector<24x1xf32>
    %16 = tpu.reciprocal %15 {approx = true} : vector<24x1xf32> -> vector<24x1xf32>
    %17 = vector.broadcast %16 : vector<24x1xf32> to vector<24x24xf32>
    %18 = arith.mulf %13, %17 : vector<24x24xf32>
    %19 = arith.truncf %18 : vector<24x24xf32> to vector<24x24xbf16>
    %cst_9 = arith.constant dense<0.000000e+00> : vector<24x16xf32>
    %20 = tpu.matmul %19, %5, %cst_9 {dimension_numbers = #tpu.dot_dimension_numbers<[1], [0], [0], [1], [0, 0, 1, 1], [], []>} : vector<24x24xbf16>, vector<24x16xbf16>, vector<24x16xf32> -> vector<24x16xf32>
    %c0_10 = arith.constant 0 : index
    %c0_11 = arith.constant 0 : index
    %c16 = arith.constant 16 : index
    %21 = vector.load %arg1[%c0_10, %c0_11, %c16] : memref<1x24x192xbf16, #tpu.memory_space<vmem>>, vector<1x24x16xbf16>
    %22 = vector.shape_cast %21 : vector<1x24x16xbf16> to vector<24x16xbf16>
    %c0_12 = arith.constant 0 : index
    %c0_13 = arith.constant 0 : index
    %c80 = arith.constant 80 : index
    %23 = vector.load %arg1[%c0_12, %c0_13, %c80] : memref<1x24x192xbf16, #tpu.memory_space<vmem>>, vector<1x24x16xbf16>
    %24 = vector.shape_cast %23 : vector<1x24x16xbf16> to vector<24x16xbf16>
    %c0_14 = arith.constant 0 : index
    %c0_15 = arith.constant 0 : index
    %c144 = arith.constant 144 : index
    %25 = vector.load %arg1[%c0_14, %c0_15, %c144] : memref<1x24x192xbf16, #tpu.memory_space<vmem>>, vector<1x24x16xbf16>
    %26 = vector.shape_cast %25 : vector<1x24x16xbf16> to vector<24x16xbf16>
    %cst_16 = arith.constant dense<0.000000e+00> : vector<24x24xf32>
    %27 = tpu.matmul %22, %24, %cst_16 {dimension_numbers = #tpu.dot_dimension_numbers<[1], [1], [0], [0], [0, 0, 1, 0], [], []>} : vector<24x16xbf16>, vector<24x16xbf16>, vector<24x24xf32> -> vector<24x24xf32>
    %cst_17 = arith.constant 2.500000e-01 : f32
    %28 = vector.broadcast %cst_17 : f32 to vector<24x24xf32>
    %29 = arith.mulf %27, %28 : vector<24x24xf32>
    %cst_18 = arith.constant dense<0xFF800000> : vector<24xf32>
    %30 = vector.multi_reduction <maximumf>, %29, %cst_18 [1] : vector<24x24xf32> to vector<24xf32>
    %31 = vector.shape_cast %30 : vector<24xf32> to vector<24x1xf32>
    %32 = vector.broadcast %31 : vector<24x1xf32> to vector<24x24xf32>
    %33 = arith.subf %29, %32 : vector<24x24xf32>
    %34 = math.exp %33 : vector<24x24xf32>
    %cst_19 = arith.constant dense<0.000000e+00> : vector<24xf32>
    %35 = vector.multi_reduction <add>, %34, %cst_19 [1] : vector<24x24xf32> to vector<24xf32>
    %36 = vector.shape_cast %35 : vector<24xf32> to vector<24x1xf32>
    %37 = tpu.reciprocal %36 {approx = true} : vector<24x1xf32> -> vector<24x1xf32>
    %38 = vector.broadcast %37 : vector<24x1xf32> to vector<24x24xf32>
    %39 = arith.mulf %34, %38 : vector<24x24xf32>
    %40 = arith.truncf %39 : vector<24x24xf32> to vector<24x24xbf16>
    %cst_20 = arith.constant dense<0.000000e+00> : vector<24x16xf32>
    %41 = tpu.matmul %40, %26, %cst_20 {dimension_numbers = #tpu.dot_dimension_numbers<[1], [0], [0], [1], [0, 0, 1, 1], [], []>} : vector<24x24xbf16>, vector<24x16xbf16>, vector<24x16xf32> -> vector<24x16xf32>
    %c0_21 = arith.constant 0 : index
    %c0_22 = arith.constant 0 : index
    %c32 = arith.constant 32 : index
    %42 = vector.load %arg1[%c0_21, %c0_22, %c32] : memref<1x24x192xbf16, #tpu.memory_space<vmem>>, vector<1x24x16xbf16>
    %43 = vector.shape_cast %42 : vector<1x24x16xbf16> to vector<24x16xbf16>
    %c0_23 = arith.constant 0 : index
    %c0_24 = arith.constant 0 : index
    %c96 = arith.constant 96 : index
    %44 = vector.load %arg1[%c0_23, %c0_24, %c96] : memref<1x24x192xbf16, #tpu.memory_space<vmem>>, vector<1x24x16xbf16>
    %45 = vector.shape_cast %44 : vector<1x24x16xbf16> to vector<24x16xbf16>
    %c0_25 = arith.constant 0 : index
    %c0_26 = arith.constant 0 : index
    %c160 = arith.constant 160 : index
    %46 = vector.load %arg1[%c0_25, %c0_26, %c160] : memref<1x24x192xbf16, #tpu.memory_space<vmem>>, vector<1x24x16xbf16>
    %47 = vector.shape_cast %46 : vector<1x24x16xbf16> to vector<24x16xbf16>
    %cst_27 = arith.constant dense<0.000000e+00> : vector<24x24xf32>
    %48 = tpu.matmul %43, %45, %cst_27 {dimension_numbers = #tpu.dot_dimension_numbers<[1], [1], [0], [0], [0, 0, 1, 0], [], []>} : vector<24x16xbf16>, vector<24x16xbf16>, vector<24x24xf32> -> vector<24x24xf32>
    %cst_28 = arith.constant 2.500000e-01 : f32
    %49 = vector.broadcast %cst_28 : f32 to vector<24x24xf32>
    %50 = arith.mulf %48, %49 : vector<24x24xf32>
    %cst_29 = arith.constant dense<0xFF800000> : vector<24xf32>
    %51 = vector.multi_reduction <maximumf>, %50, %cst_29 [1] : vector<24x24xf32> to vector<24xf32>
    %52 = vector.shape_cast %51 : vector<24xf32> to vector<24x1xf32>
    %53 = vector.broadcast %52 : vector<24x1xf32> to vector<24x24xf32>
    %54 = arith.subf %50, %53 : vector<24x24xf32>
    %55 = math.exp %54 : vector<24x24xf32>
    %cst_30 = arith.constant dense<0.000000e+00> : vector<24xf32>
    %56 = vector.multi_reduction <add>, %55, %cst_30 [1] : vector<24x24xf32> to vector<24xf32>
    %57 = vector.shape_cast %56 : vector<24xf32> to vector<24x1xf32>
    %58 = tpu.reciprocal %57 {approx = true} : vector<24x1xf32> -> vector<24x1xf32>
    %59 = vector.broadcast %58 : vector<24x1xf32> to vector<24x24xf32>
    %60 = arith.mulf %55, %59 : vector<24x24xf32>
    %61 = arith.truncf %60 : vector<24x24xf32> to vector<24x24xbf16>
    %cst_31 = arith.constant dense<0.000000e+00> : vector<24x16xf32>
    %62 = tpu.matmul %61, %47, %cst_31 {dimension_numbers = #tpu.dot_dimension_numbers<[1], [0], [0], [1], [0, 0, 1, 1], [], []>} : vector<24x24xbf16>, vector<24x16xbf16>, vector<24x16xf32> -> vector<24x16xf32>
    %c0_32 = arith.constant 0 : index
    %c0_33 = arith.constant 0 : index
    %c48 = arith.constant 48 : index
    %63 = vector.load %arg1[%c0_32, %c0_33, %c48] : memref<1x24x192xbf16, #tpu.memory_space<vmem>>, vector<1x24x16xbf16>
    %64 = vector.shape_cast %63 : vector<1x24x16xbf16> to vector<24x16xbf16>
    %c0_34 = arith.constant 0 : index
    %c0_35 = arith.constant 0 : index
    %c112 = arith.constant 112 : index
    %65 = vector.load %arg1[%c0_34, %c0_35, %c112] : memref<1x24x192xbf16, #tpu.memory_space<vmem>>, vector<1x24x16xbf16>
    %66 = vector.shape_cast %65 : vector<1x24x16xbf16> to vector<24x16xbf16>
    %c0_36 = arith.constant 0 : index
    %c0_37 = arith.constant 0 : index
    %c176 = arith.constant 176 : index
    %67 = vector.load %arg1[%c0_36, %c0_37, %c176] : memref<1x24x192xbf16, #tpu.memory_space<vmem>>, vector<1x24x16xbf16>
    %68 = vector.shape_cast %67 : vector<1x24x16xbf16> to vector<24x16xbf16>
    %cst_38 = arith.constant dense<0.000000e+00> : vector<24x24xf32>
    %69 = tpu.matmul %64, %66, %cst_38 {dimension_numbers = #tpu.dot_dimension_numbers<[1], [1], [0], [0], [0, 0, 1, 0], [], []>} : vector<24x16xbf16>, vector<24x16xbf16>, vector<24x24xf32> -> vector<24x24xf32>
    %cst_39 = arith.constant 2.500000e-01 : f32
    %70 = vector.broadcast %cst_39 : f32 to vector<24x24xf32>
    %71 = arith.mulf %69, %70 : vector<24x24xf32>
    %cst_40 = arith.constant dense<0xFF800000> : vector<24xf32>
    %72 = vector.multi_reduction <maximumf>, %71, %cst_40 [1] : vector<24x24xf32> to vector<24xf32>
    %73 = vector.shape_cast %72 : vector<24xf32> to vector<24x1xf32>
    %74 = vector.broadcast %73 : vector<24x1xf32> to vector<24x24xf32>
    %75 = arith.subf %71, %74 : vector<24x24xf32>
    %76 = math.exp %75 : vector<24x24xf32>
    %cst_41 = arith.constant dense<0.000000e+00> : vector<24xf32>
    %77 = vector.multi_reduction <add>, %76, %cst_41 [1] : vector<24x24xf32> to vector<24xf32>
    %78 = vector.shape_cast %77 : vector<24xf32> to vector<24x1xf32>
    %79 = tpu.reciprocal %78 {approx = true} : vector<24x1xf32> -> vector<24x1xf32>
    %80 = vector.broadcast %79 : vector<24x1xf32> to vector<24x24xf32>
    %81 = arith.mulf %76, %80 : vector<24x24xf32>
    %82 = arith.truncf %81 : vector<24x24xf32> to vector<24x24xbf16>
    %cst_42 = arith.constant dense<0.000000e+00> : vector<24x16xf32>
    %83 = tpu.matmul %82, %68, %cst_42 {dimension_numbers = #tpu.dot_dimension_numbers<[1], [0], [0], [1], [0, 0, 1, 1], [], []>} : vector<24x24xbf16>, vector<24x16xbf16>, vector<24x16xf32> -> vector<24x16xf32>
    %84 = tpu.concatenate %20, %41, %62, %83 in 1 : vector<24x16xf32>, vector<24x16xf32>, vector<24x16xf32>, vector<24x16xf32> -> vector<24x64xf32>
    %85 = arith.truncf %84 : vector<24x64xf32> to vector<24x64xbf16>
    %c0_43 = arith.constant 0 : index
    %c0_44 = arith.constant 0 : index
    %c0_45 = arith.constant 0 : index
    %86 = vector.load %arg2[%c0_43, %c0_44, %c0_45] : memref<1x24x64xbf16, #tpu.memory_space<vmem>>, vector<1x24x64xbf16>
    %87 = vector.shape_cast %86 : vector<1x24x64xbf16> to vector<24x64xbf16>
    %88 = vector.shape_cast %85 : vector<24x64xbf16> to vector<1x24x64xbf16>
    tpu.vector_store %arg2[%c0_43, %c0_44, %c0_45], %88 {strides = array<i32>} : memref<1x24x64xbf16, #tpu.memory_space<vmem>>, vector<1x24x64xbf16>,
    return
  }
  func.func @transform_0(%arg0: i32) -> (i32, i32, i32) {
    %c0_i32 = arith.constant 0 : i32
    %c0_i32_0 = arith.constant 0 : i32
    %c0_i32_1 = arith.constant 0 : i32
    return %arg0, %c0_i32, %c0_i32_0 : i32, i32, i32
  }
  func.func @transform_1(%arg0: i32) -> (i32, i32, i32) {
    %c0_i32 = arith.constant 0 : i32
    %c0_i32_0 = arith.constant 0 : i32
    %c0_i32_1 = arith.constant 0 : i32
    return %arg0, %c0_i32, %c0_i32_0 : i32, i32, i32
  }
}

module attributes {stable_mosaic.version = 11 : i64} {
  func.func @_mm_kernel(%arg0: i32, %arg1: i32, %arg2: memref<48x64xbf16, #tpu.memory_space<vmem>>, %arg3: memref<1x64xf32, #tpu.memory_space<vmem>>, %arg4: memref<1x64xf32, #tpu.memory_space<vmem>>, %arg5: memref<64x256xbf16, #tpu.memory_space<vmem>>, %arg6: memref<1x256xf32, #tpu.memory_space<vmem>>, %arg7: memref<48x256xbf16, #tpu.memory_space<vmem>>) attributes {dimension_semantics = [#tpu.dimension_semantics<parallel>, #tpu.dimension_semantics<parallel>], iteration_bounds = array<i64: 1, 1>, scalar_prefetch = 0 : i64, scratch_operands = 0 : i64, tpu.core_type = #tpu.core_type<tc>, window_params = [{transform_indices = @transform_0, window_bounds = array<i64: 48, 64>}, {pipeline_mode = #tpu.pipeline_mode<synchronous>, transform_indices = @transform_1, window_bounds = array<i64: 1, 64>}, {pipeline_mode = #tpu.pipeline_mode<synchronous>, transform_indices = @transform_2, window_bounds = array<i64: 1, 64>}, {transform_indices = @transform_3, window_bounds = array<i64: 64, 256>}, {transform_indices = @transform_4, window_bounds = array<i64: 1, 256>}, {transform_indices = @transform_5, window_bounds = array<i64: 48, 256>}]} {
    %c0 = arith.constant 0 : index
    %c0_0 = arith.constant 0 : index
    %0 = vector.load %arg2[%c0, %c0_0] : memref<48x64xbf16, #tpu.memory_space<vmem>>, vector<48x64xbf16>
    %1 = arith.extf %0 : vector<48x64xbf16> to vector<48x64xf32>
    %cst = arith.constant dense<0.000000e+00> : vector<48xf32>
    %2 = vector.multi_reduction <add>, %1, %cst [1] : vector<48x64xf32> to vector<48xf32>
    %3 = vector.shape_cast %2 : vector<48xf32> to vector<48x1xf32>
    %cst_1 = arith.constant 6.400000e+01 : f32
    %4 = vector.broadcast %cst_1 : f32 to vector<48x1xf32>
    %5 = arith.divf %3, %4 : vector<48x1xf32>
    %6 = vector.broadcast %5 : vector<48x1xf32> to vector<48x64xf32>
    %7 = arith.subf %1, %6 : vector<48x64xf32>
    %8 = arith.mulf %7, %7 : vector<48x64xf32>
    %cst_2 = arith.constant dense<0.000000e+00> : vector<48xf32>
    %9 = vector.multi_reduction <add>, %8, %cst_2 [1] : vector<48x64xf32> to vector<48xf32>
    %10 = vector.shape_cast %9 : vector<48xf32> to vector<48x1xf32>
    %cst_3 = arith.constant 6.400000e+01 : f32
    %11 = vector.broadcast %cst_3 : f32 to vector<48x1xf32>
    %12 = arith.divf %10, %11 : vector<48x1xf32>
    %cst_4 = arith.constant 9.99999974E-6 : f32
    %13 = vector.broadcast %cst_4 : f32 to vector<48x1xf32>
    %14 = arith.addf %12, %13 : vector<48x1xf32>
    %15 = math.rsqrt %14 : vector<48x1xf32>
    %16 = vector.broadcast %15 : vector<48x1xf32> to vector<48x64xf32>
    %17 = arith.mulf %7, %16 : vector<48x64xf32>
    %c0_5 = arith.constant 0 : index
    %c0_6 = arith.constant 0 : index
    %18 = vector.load %arg3[%c0_5, %c0_6] : memref<1x64xf32, #tpu.memory_space<vmem>>, vector<1x64xf32>
    %19 = vector.broadcast %18 : vector<1x64xf32> to vector<48x64xf32>
    %20 = arith.mulf %17, %19 : vector<48x64xf32>
    %c0_7 = arith.constant 0 : index
    %c0_8 = arith.constant 0 : index
    %21 = vector.load %arg4[%c0_7, %c0_8] : memref<1x64xf32, #tpu.memory_space<vmem>>, vector<1x64xf32>
    %22 = vector.broadcast %21 : vector<1x64xf32> to vector<48x64xf32>
    %23 = arith.addf %20, %22 : vector<48x64xf32>
    %24 = arith.truncf %23 : vector<48x64xf32> to vector<48x64xbf16>
    %c0_9 = arith.constant 0 : index
    %c0_10 = arith.constant 0 : index
    %25 = vector.load %arg5[%c0_9, %c0_10] : memref<64x256xbf16, #tpu.memory_space<vmem>>, vector<64x256xbf16>
    %cst_11 = arith.constant dense<0.000000e+00> : vector<48x256xf32>
    %26 = tpu.matmul %24, %25, %cst_11 {dimension_numbers = #tpu.dot_dimension_numbers<[1], [0], [0], [1], [0, 0, 1, 1], [], []>} : vector<48x64xbf16>, vector<64x256xbf16>, vector<48x256xf32> -> vector<48x256xf32>
    %c0_12 = arith.constant 0 : index
    %c0_13 = arith.constant 0 : index
    %27 = vector.load %arg6[%c0_12, %c0_13] : memref<1x256xf32, #tpu.memory_space<vmem>>, vector<1x256xf32>
    %28 = vector.broadcast %27 : vector<1x256xf32> to vector<48x256xf32>
    %29 = arith.addf %26, %28 : vector<48x256xf32>
    %cst_14 = arith.constant 5.000000e-01 : f32
    %30 = vector.broadcast %cst_14 : f32 to vector<48x256xf32>
    %31 = arith.mulf %30, %29 : vector<48x256xf32>
    %cst_15 = arith.constant 0.707106769 : f32
    %32 = vector.broadcast %cst_15 : f32 to vector<48x256xf32>
    %33 = arith.mulf %29, %32 : vector<48x256xf32>
    %34 = math.erf %33 : vector<48x256xf32>
    %cst_16 = arith.constant 1.000000e+00 : f32
    %35 = vector.broadcast %cst_16 : f32 to vector<48x256xf32>
    %36 = arith.addf %35, %34 : vector<48x256xf32>
    %37 = arith.mulf %31, %36 : vector<48x256xf32>
    %38 = arith.truncf %37 : vector<48x256xf32> to vector<48x256xbf16>
    %c0_17 = arith.constant 0 : index
    %c0_18 = arith.constant 0 : index
    %39 = vector.load %arg7[%c0_17, %c0_18] : memref<48x256xbf16, #tpu.memory_space<vmem>>, vector<48x256xbf16>
    tpu.vector_store %arg7[%c0_17, %c0_18], %38 {strides = array<i32>} : memref<48x256xbf16, #tpu.memory_space<vmem>>, vector<48x256xbf16>,
    return
  }
  func.func @transform_0(%arg0: i32, %arg1: i32) -> (i32, i32) {
    %c0_i32 = arith.constant 0 : i32
    %c0_i32_0 = arith.constant 0 : i32
    return %arg0, %c0_i32 : i32, i32
  }
  func.func @transform_1(%arg0: i32, %arg1: i32) -> (i32, i32) {
    %c0_i32 = arith.constant 0 : i32
    %c0_i32_0 = arith.constant 0 : i32
    %c0_i32_1 = arith.constant 0 : i32
    return %c0_i32, %c0_i32_0 : i32, i32
  }
  func.func @transform_2(%arg0: i32, %arg1: i32) -> (i32, i32) {
    %c0_i32 = arith.constant 0 : i32
    %c0_i32_0 = arith.constant 0 : i32
    %c0_i32_1 = arith.constant 0 : i32
    return %c0_i32, %c0_i32_0 : i32, i32
  }
  func.func @transform_3(%arg0: i32, %arg1: i32) -> (i32, i32) {
    %c0_i32 = arith.constant 0 : i32
    %c0_i32_0 = arith.constant 0 : i32
    return %c0_i32, %arg1 : i32, i32
  }
  func.func @transform_4(%arg0: i32, %arg1: i32) -> (i32, i32) {
    %c0_i32 = arith.constant 0 : i32
    %c0_i32_0 = arith.constant 0 : i32
    return %c0_i32, %arg1 : i32, i32
  }
  func.func @transform_5(%arg0: i32, %arg1: i32) -> (i32, i32) {
    %c0_i32 = arith.constant 0 : i32
    return %arg0, %arg1 : i32, i32
  }
}

module attributes {stable_mosaic.version = 11 : i64} {
  func.func @_mm_kernel(%arg0: i32, %arg1: i32, %arg2: memref<48x256xbf16, #tpu.memory_space<vmem>>, %arg3: memref<256x64xbf16, #tpu.memory_space<vmem>>, %arg4: memref<1x64xf32, #tpu.memory_space<vmem>>, %arg5: memref<48x64xbf16, #tpu.memory_space<vmem>>, %arg6: memref<48x64xbf16, #tpu.memory_space<vmem>>) attributes {dimension_semantics = [#tpu.dimension_semantics<parallel>, #tpu.dimension_semantics<parallel>], iteration_bounds = array<i64: 1, 1>, scalar_prefetch = 0 : i64, scratch_operands = 0 : i64, tpu.core_type = #tpu.core_type<tc>, window_params = [{transform_indices = @transform_0, window_bounds = array<i64: 48, 256>}, {transform_indices = @transform_1, window_bounds = array<i64: 256, 64>}, {transform_indices = @transform_2, window_bounds = array<i64: 1, 64>}, {transform_indices = @transform_3, window_bounds = array<i64: 48, 64>}, {transform_indices = @transform_4, window_bounds = array<i64: 48, 64>}]} {
    %c0 = arith.constant 0 : index
    %c0_0 = arith.constant 0 : index
    %0 = vector.load %arg2[%c0, %c0_0] : memref<48x256xbf16, #tpu.memory_space<vmem>>, vector<48x256xbf16>
    %c0_1 = arith.constant 0 : index
    %c0_2 = arith.constant 0 : index
    %1 = vector.load %arg3[%c0_1, %c0_2] : memref<256x64xbf16, #tpu.memory_space<vmem>>, vector<256x64xbf16>
    %cst = arith.constant dense<0.000000e+00> : vector<48x64xf32>
    %2 = tpu.matmul %0, %1, %cst {dimension_numbers = #tpu.dot_dimension_numbers<[1], [0], [0], [1], [0, 0, 1, 1], [], []>} : vector<48x256xbf16>, vector<256x64xbf16>, vector<48x64xf32> -> vector<48x64xf32>
    %c0_3 = arith.constant 0 : index
    %c0_4 = arith.constant 0 : index
    %3 = vector.load %arg4[%c0_3, %c0_4] : memref<1x64xf32, #tpu.memory_space<vmem>>, vector<1x64xf32>
    %4 = vector.broadcast %3 : vector<1x64xf32> to vector<48x64xf32>
    %5 = arith.addf %2, %4 : vector<48x64xf32>
    %c0_5 = arith.constant 0 : index
    %c0_6 = arith.constant 0 : index
    %6 = vector.load %arg5[%c0_5, %c0_6] : memref<48x64xbf16, #tpu.memory_space<vmem>>, vector<48x64xbf16>
    %7 = arith.extf %6 : vector<48x64xbf16> to vector<48x64xf32>
    %8 = arith.addf %5, %7 : vector<48x64xf32>
    %9 = arith.truncf %8 : vector<48x64xf32> to vector<48x64xbf16>
    %c0_7 = arith.constant 0 : index
    %c0_8 = arith.constant 0 : index
    %10 = vector.load %arg6[%c0_7, %c0_8] : memref<48x64xbf16, #tpu.memory_space<vmem>>, vector<48x64xbf16>
    tpu.vector_store %arg6[%c0_7, %c0_8], %9 {strides = array<i32>} : memref<48x64xbf16, #tpu.memory_space<vmem>>, vector<48x64xbf16>,
    return
  }
  func.func @transform_0(%arg0: i32, %arg1: i32) -> (i32, i32) {
    %c0_i32 = arith.constant 0 : i32
    %c0_i32_0 = arith.constant 0 : i32
    return %arg0, %c0_i32 : i32, i32
  }
  func.func @transform_1(%arg0: i32, %arg1: i32) -> (i32, i32) {
    %c0_i32 = arith.constant 0 : i32
    %c0_i32_0 = arith.constant 0 : i32
    return %c0_i32, %arg1 : i32, i32
  }
  func.func @transform_2(%arg0: i32, %arg1: i32) -> (i32, i32) {
    %c0_i32 = arith.constant 0 : i32
    %c0_i32_0 = arith.constant 0 : i32
    return %c0_i32, %arg1 : i32, i32
  }
  func.func @transform_3(%arg0: i32, %arg1: i32) -> (i32, i32) {
    %c0_i32 = arith.constant 0 : i32
    return %arg0, %arg1 : i32, i32
  }
  func.func @transform_4(%arg0: i32, %arg1: i32) -> (i32, i32) {
    %c0_i32 = arith.constant 0 : i32
    return %arg0, %arg1 : i32, i32
  }
}

module attributes {stable_mosaic.version = 11 : i64} {
  func.func @_dual_mm_kernel(%arg0: i32, %arg1: i32, %arg2: memref<48x64xbf16, #tpu.memory_space<vmem>>, %arg3: memref<48x64xbf16, #tpu.memory_space<vmem>>, %arg4: memref<64x64xbf16, #tpu.memory_space<vmem>>, %arg5: memref<64x64xbf16, #tpu.memory_space<vmem>>, %arg6: memref<1x64xf32, #tpu.memory_space<vmem>>, %arg7: memref<48x64xbf16, #tpu.memory_space<vmem>>) attributes {dimension_semantics = [#tpu.dimension_semantics<parallel>, #tpu.dimension_semantics<parallel>], iteration_bounds = array<i64: 1, 1>, scalar_prefetch = 0 : i64, scratch_operands = 0 : i64, tpu.core_type = #tpu.core_type<tc>, window_params = [{transform_indices = @transform_0, window_bounds = array<i64: 48, 64>}, {transform_indices = @transform_1, window_bounds = array<i64: 48, 64>}, {transform_indices = @transform_2, window_bounds = array<i64: 64, 64>}, {transform_indices = @transform_3, window_bounds = array<i64: 64, 64>}, {transform_indices = @transform_4, window_bounds = array<i64: 1, 64>}, {transform_indices = @transform_5, window_bounds = array<i64: 48, 64>}]} {
    %c0 = arith.constant 0 : index
    %c0_0 = arith.constant 0 : index
    %0 = vector.load %arg2[%c0, %c0_0] : memref<48x64xbf16, #tpu.memory_space<vmem>>, vector<48x64xbf16>
    %c0_1 = arith.constant 0 : index
    %c0_2 = arith.constant 0 : index
    %1 = vector.load %arg4[%c0_1, %c0_2] : memref<64x64xbf16, #tpu.memory_space<vmem>>, vector<64x64xbf16>
    %cst = arith.constant dense<0.000000e+00> : vector<48x64xf32>
    %2 = tpu.matmul %0, %1, %cst {dimension_numbers = #tpu.dot_dimension_numbers<[1], [0], [0], [1], [0, 0, 1, 1], [], []>} : vector<48x64xbf16>, vector<64x64xbf16>, vector<48x64xf32> -> vector<48x64xf32>
    %c0_3 = arith.constant 0 : index
    %c0_4 = arith.constant 0 : index
    %3 = vector.load %arg3[%c0_3, %c0_4] : memref<48x64xbf16, #tpu.memory_space<vmem>>, vector<48x64xbf16>
    %c0_5 = arith.constant 0 : index
    %c0_6 = arith.constant 0 : index
    %4 = vector.load %arg5[%c0_5, %c0_6] : memref<64x64xbf16, #tpu.memory_space<vmem>>, vector<64x64xbf16>
    %cst_7 = arith.constant dense<0.000000e+00> : vector<48x64xf32>
    %5 = tpu.matmul %3, %4, %cst_7 {dimension_numbers = #tpu.dot_dimension_numbers<[1], [0], [0], [1], [0, 0, 1, 1], [], []>} : vector<48x64xbf16>, vector<64x64xbf16>, vector<48x64xf32> -> vector<48x64xf32>
    %6 = arith.addf %2, %5 : vector<48x64xf32>
    %c0_8 = arith.constant 0 : index
    %c0_9 = arith.constant 0 : index
    %7 = vector.load %arg6[%c0_8, %c0_9] : memref<1x64xf32, #tpu.memory_space<vmem>>, vector<1x64xf32>
    %8 = vector.broadcast %7 : vector<1x64xf32> to vector<48x64xf32>
    %9 = arith.addf %6, %8 : vector<48x64xf32>
    %10 = arith.truncf %9 : vector<48x64xf32> to vector<48x64xbf16>
    %c0_10 = arith.constant 0 : index
    %c0_11 = arith.constant 0 : index
    %11 = vector.load %arg7[%c0_10, %c0_11] : memref<48x64xbf16, #tpu.memory_space<vmem>>, vector<48x64xbf16>
    tpu.vector_store %arg7[%c0_10, %c0_11], %10 {strides = array<i32>} : memref<48x64xbf16, #tpu.memory_space<vmem>>, vector<48x64xbf16>,
    return
  }
  func.func @transform_0(%arg0: i32, %arg1: i32) -> (i32, i32) {
    %c0_i32 = arith.constant 0 : i32
    %c0_i32_0 = arith.constant 0 : i32
    return %arg0, %c0_i32 : i32, i32
  }
  func.func @transform_1(%arg0: i32, %arg1: i32) -> (i32, i32) {
    %c0_i32 = arith.constant 0 : i32
    %c0_i32_0 = arith.constant 0 : i32
    return %arg0, %c0_i32 : i32, i32
  }
  func.func @transform_2(%arg0: i32, %arg1: i32) -> (i32, i32) {
    %c0_i32 = arith.constant 0 : i32
    %c0_i32_0 = arith.constant 0 : i32
    return %c0_i32, %arg1 : i32, i32
  }
  func.func @transform_3(%arg0: i32, %arg1: i32) -> (i32, i32) {
    %c0_i32 = arith.constant 0 : i32
    %c0_i32_0 = arith.constant 0 : i32
    return %c0_i32, %arg1 : i32, i32
  }
  func.func @transform_4(%arg0: i32, %arg1: i32) -> (i32, i32) {
    %c0_i32 = arith.constant 0 : i32
    %c0_i32_0 = arith.constant 0 : i32
    return %c0_i32, %arg1 : i32, i32
  }
  func.func @transform_5(%arg0: i32, %arg1: i32) -> (i32, i32) {
    %c0_i32 = arith.constant 0 : i32
    return %arg0, %arg1 : i32, i32
  }
}

module attributes {stable_mosaic.version = 11 : i64} {
  func.func @_mm_kernel(%arg0: i32, %arg1: i32, %arg2: memref<48x64xbf16, #tpu.memory_space<vmem>>, %arg3: memref<1x64xf32, #tpu.memory_space<vmem>>, %arg4: memref<1x64xf32, #tpu.memory_space<vmem>>, %arg5: memref<64x256xbf16, #tpu.memory_space<vmem>>, %arg6: memref<1x256xf32, #tpu.memory_space<vmem>>, %arg7: memref<48x256xbf16, #tpu.memory_space<vmem>>) attributes {dimension_semantics = [#tpu.dimension_semantics<parallel>, #tpu.dimension_semantics<parallel>], iteration_bounds = array<i64: 1, 1>, scalar_prefetch = 0 : i64, scratch_operands = 0 : i64, tpu.core_type = #tpu.core_type<tc>, window_params = [{transform_indices = @transform_0, window_bounds = array<i64: 48, 64>}, {pipeline_mode = #tpu.pipeline_mode<synchronous>, transform_indices = @transform_1, window_bounds = array<i64: 1, 64>}, {pipeline_mode = #tpu.pipeline_mode<synchronous>, transform_indices = @transform_2, window_bounds = array<i64: 1, 64>}, {transform_indices = @transform_3, window_bounds = array<i64: 64, 256>}, {transform_indices = @transform_4, window_bounds = array<i64: 1, 256>}, {transform_indices = @transform_5, window_bounds = array<i64: 48, 256>}]} {
    %c0 = arith.constant 0 : index
    %c0_0 = arith.constant 0 : index
    %0 = vector.load %arg2[%c0, %c0_0] : memref<48x64xbf16, #tpu.memory_space<vmem>>, vector<48x64xbf16>
    %1 = arith.extf %0 : vector<48x64xbf16> to vector<48x64xf32>
    %cst = arith.constant dense<0.000000e+00> : vector<48xf32>
    %2 = vector.multi_reduction <add>, %1, %cst [1] : vector<48x64xf32> to vector<48xf32>
    %3 = vector.shape_cast %2 : vector<48xf32> to vector<48x1xf32>
    %cst_1 = arith.constant 6.400000e+01 : f32
    %4 = vector.broadcast %cst_1 : f32 to vector<48x1xf32>
    %5 = arith.divf %3, %4 : vector<48x1xf32>
    %6 = vector.broadcast %5 : vector<48x1xf32> to vector<48x64xf32>
    %7 = arith.subf %1, %6 : vector<48x64xf32>
    %8 = arith.mulf %7, %7 : vector<48x64xf32>
    %cst_2 = arith.constant dense<0.000000e+00> : vector<48xf32>
    %9 = vector.multi_reduction <add>, %8, %cst_2 [1] : vector<48x64xf32> to vector<48xf32>
    %10 = vector.shape_cast %9 : vector<48xf32> to vector<48x1xf32>
    %cst_3 = arith.constant 6.400000e+01 : f32
    %11 = vector.broadcast %cst_3 : f32 to vector<48x1xf32>
    %12 = arith.divf %10, %11 : vector<48x1xf32>
    %cst_4 = arith.constant 9.99999974E-6 : f32
    %13 = vector.broadcast %cst_4 : f32 to vector<48x1xf32>
    %14 = arith.addf %12, %13 : vector<48x1xf32>
    %15 = math.rsqrt %14 : vector<48x1xf32>
    %16 = vector.broadcast %15 : vector<48x1xf32> to vector<48x64xf32>
    %17 = arith.mulf %7, %16 : vector<48x64xf32>
    %c0_5 = arith.constant 0 : index
    %c0_6 = arith.constant 0 : index
    %18 = vector.load %arg3[%c0_5, %c0_6] : memref<1x64xf32, #tpu.memory_space<vmem>>, vector<1x64xf32>
    %19 = vector.broadcast %18 : vector<1x64xf32> to vector<48x64xf32>
    %20 = arith.mulf %17, %19 : vector<48x64xf32>
    %c0_7 = arith.constant 0 : index
    %c0_8 = arith.constant 0 : index
    %21 = vector.load %arg4[%c0_7, %c0_8] : memref<1x64xf32, #tpu.memory_space<vmem>>, vector<1x64xf32>
    %22 = vector.broadcast %21 : vector<1x64xf32> to vector<48x64xf32>
    %23 = arith.addf %20, %22 : vector<48x64xf32>
    %24 = arith.truncf %23 : vector<48x64xf32> to vector<48x64xbf16>
    %c0_9 = arith.constant 0 : index
    %c0_10 = arith.constant 0 : index
    %25 = vector.load %arg5[%c0_9, %c0_10] : memref<64x256xbf16, #tpu.memory_space<vmem>>, vector<64x256xbf16>
    %cst_11 = arith.constant dense<0.000000e+00> : vector<48x256xf32>
    %26 = tpu.matmul %24, %25, %cst_11 {dimension_numbers = #tpu.dot_dimension_numbers<[1], [0], [0], [1], [0, 0, 1, 1], [], []>} : vector<48x64xbf16>, vector<64x256xbf16>, vector<48x256xf32> -> vector<48x256xf32>
    %c0_12 = arith.constant 0 : index
    %c0_13 = arith.constant 0 : index
    %27 = vector.load %arg6[%c0_12, %c0_13] : memref<1x256xf32, #tpu.memory_space<vmem>>, vector<1x256xf32>
    %28 = vector.broadcast %27 : vector<1x256xf32> to vector<48x256xf32>
    %29 = arith.addf %26, %28 : vector<48x256xf32>
    %cst_14 = arith.constant 5.000000e-01 : f32
    %30 = vector.broadcast %cst_14 : f32 to vector<48x256xf32>
    %31 = arith.mulf %30, %29 : vector<48x256xf32>
    %cst_15 = arith.constant 0.707106769 : f32
    %32 = vector.broadcast %cst_15 : f32 to vector<48x256xf32>
    %33 = arith.mulf %29, %32 : vector<48x256xf32>
    %34 = math.erf %33 : vector<48x256xf32>
    %cst_16 = arith.constant 1.000000e+00 : f32
    %35 = vector.broadcast %cst_16 : f32 to vector<48x256xf32>
    %36 = arith.addf %35, %34 : vector<48x256xf32>
    %37 = arith.mulf %31, %36 : vector<48x256xf32>
    %38 = arith.truncf %37 : vector<48x256xf32> to vector<48x256xbf16>
    %c0_17 = arith.constant 0 : index
    %c0_18 = arith.constant 0 : index
    %39 = vector.load %arg7[%c0_17, %c0_18] : memref<48x256xbf16, #tpu.memory_space<vmem>>, vector<48x256xbf16>
    tpu.vector_store %arg7[%c0_17, %c0_18], %38 {strides = array<i32>} : memref<48x256xbf16, #tpu.memory_space<vmem>>, vector<48x256xbf16>,
    return
  }
  func.func @transform_0(%arg0: i32, %arg1: i32) -> (i32, i32) {
    %c0_i32 = arith.constant 0 : i32
    %c0_i32_0 = arith.constant 0 : i32
    return %arg0, %c0_i32 : i32, i32
  }
  func.func @transform_1(%arg0: i32, %arg1: i32) -> (i32, i32) {
    %c0_i32 = arith.constant 0 : i32
    %c0_i32_0 = arith.constant 0 : i32
    %c0_i32_1 = arith.constant 0 : i32
    return %c0_i32, %c0_i32_0 : i32, i32
  }
  func.func @transform_2(%arg0: i32, %arg1: i32) -> (i32, i32) {
    %c0_i32 = arith.constant 0 : i32
    %c0_i32_0 = arith.constant 0 : i32
    %c0_i32_1 = arith.constant 0 : i32
    return %c0_i32, %c0_i32_0 : i32, i32
  }
  func.func @transform_3(%arg0: i32, %arg1: i32) -> (i32, i32) {
    %c0_i32 = arith.constant 0 : i32
    %c0_i32_0 = arith.constant 0 : i32
    return %c0_i32, %arg1 : i32, i32
  }
  func.func @transform_4(%arg0: i32, %arg1: i32) -> (i32, i32) {
    %c0_i32 = arith.constant 0 : i32
    %c0_i32_0 = arith.constant 0 : i32
    return %c0_i32, %arg1 : i32, i32
  }
  func.func @transform_5(%arg0: i32, %arg1: i32) -> (i32, i32) {
    %c0_i32 = arith.constant 0 : i32
    return %arg0, %arg1 : i32, i32
  }
}

module attributes {stable_mosaic.version = 11 : i64} {
  func.func @_mm_kernel(%arg0: i32, %arg1: i32, %arg2: memref<32x64xbf16, #tpu.memory_space<vmem>>, %arg3: memref<1x64xf32, #tpu.memory_space<vmem>>, %arg4: memref<1x64xf32, #tpu.memory_space<vmem>>, %arg5: memref<64x64xbf16, #tpu.memory_space<vmem>>, %arg6: memref<1x64xf32, #tpu.memory_space<vmem>>, %arg7: memref<32x64xf32, #tpu.memory_space<vmem>>) attributes {dimension_semantics = [#tpu.dimension_semantics<parallel>, #tpu.dimension_semantics<parallel>], iteration_bounds = array<i64: 1, 1>, scalar_prefetch = 0 : i64, scratch_operands = 0 : i64, tpu.core_type = #tpu.core_type<tc>, window_params = [{transform_indices = @transform_0, window_bounds = array<i64: 32, 64>}, {pipeline_mode = #tpu.pipeline_mode<synchronous>, transform_indices = @transform_1, window_bounds = array<i64: 1, 64>}, {pipeline_mode = #tpu.pipeline_mode<synchronous>, transform_indices = @transform_2, window_bounds = array<i64: 1, 64>}, {transform_indices = @transform_3, window_bounds = array<i64: 64, 64>}, {transform_indices = @transform_4, window_bounds = array<i64: 1, 64>}, {transform_indices = @transform_5, window_bounds = array<i64: 32, 64>}]} {
    %c0 = arith.constant 0 : index
    %c0_0 = arith.constant 0 : index
    %0 = vector.load %arg2[%c0, %c0_0] : memref<32x64xbf16, #tpu.memory_space<vmem>>, vector<32x64xbf16>
    %1 = arith.extf %0 : vector<32x64xbf16> to vector<32x64xf32>
    %cst = arith.constant dense<0.000000e+00> : vector<32xf32>
    %2 = vector.multi_reduction <add>, %1, %cst [1] : vector<32x64xf32> to vector<32xf32>
    %3 = vector.shape_cast %2 : vector<32xf32> to vector<32x1xf32>
    %cst_1 = arith.constant 6.400000e+01 : f32
    %4 = vector.broadcast %cst_1 : f32 to vector<32x1xf32>
    %5 = arith.divf %3, %4 : vector<32x1xf32>
    %6 = vector.broadcast %5 : vector<32x1xf32> to vector<32x64xf32>
    %7 = arith.subf %1, %6 : vector<32x64xf32>
    %8 = arith.mulf %7, %7 : vector<32x64xf32>
    %cst_2 = arith.constant dense<0.000000e+00> : vector<32xf32>
    %9 = vector.multi_reduction <add>, %8, %cst_2 [1] : vector<32x64xf32> to vector<32xf32>
    %10 = vector.shape_cast %9 : vector<32xf32> to vector<32x1xf32>
    %cst_3 = arith.constant 6.400000e+01 : f32
    %11 = vector.broadcast %cst_3 : f32 to vector<32x1xf32>
    %12 = arith.divf %10, %11 : vector<32x1xf32>
    %cst_4 = arith.constant 9.99999974E-6 : f32
    %13 = vector.broadcast %cst_4 : f32 to vector<32x1xf32>
    %14 = arith.addf %12, %13 : vector<32x1xf32>
    %15 = math.rsqrt %14 : vector<32x1xf32>
    %16 = vector.broadcast %15 : vector<32x1xf32> to vector<32x64xf32>
    %17 = arith.mulf %7, %16 : vector<32x64xf32>
    %c0_5 = arith.constant 0 : index
    %c0_6 = arith.constant 0 : index
    %18 = vector.load %arg3[%c0_5, %c0_6] : memref<1x64xf32, #tpu.memory_space<vmem>>, vector<1x64xf32>
    %19 = vector.broadcast %18 : vector<1x64xf32> to vector<32x64xf32>
    %20 = arith.mulf %17, %19 : vector<32x64xf32>
    %c0_7 = arith.constant 0 : index
    %c0_8 = arith.constant 0 : index
    %21 = vector.load %arg4[%c0_7, %c0_8] : memref<1x64xf32, #tpu.memory_space<vmem>>, vector<1x64xf32>
    %22 = vector.broadcast %21 : vector<1x64xf32> to vector<32x64xf32>
    %23 = arith.addf %20, %22 : vector<32x64xf32>
    %24 = arith.truncf %23 : vector<32x64xf32> to vector<32x64xbf16>
    %c0_9 = arith.constant 0 : index
    %c0_10 = arith.constant 0 : index
    %25 = vector.load %arg5[%c0_9, %c0_10] : memref<64x64xbf16, #tpu.memory_space<vmem>>, vector<64x64xbf16>
    %cst_11 = arith.constant dense<0.000000e+00> : vector<32x64xf32>
    %26 = tpu.matmul %24, %25, %cst_11 {dimension_numbers = #tpu.dot_dimension_numbers<[1], [0], [0], [1], [0, 0, 1, 1], [], []>} : vector<32x64xbf16>, vector<64x64xbf16>, vector<32x64xf32> -> vector<32x64xf32>
    %c0_12 = arith.constant 0 : index
    %c0_13 = arith.constant 0 : index
    %27 = vector.load %arg6[%c0_12, %c0_13] : memref<1x64xf32, #tpu.memory_space<vmem>>, vector<1x64xf32>
    %28 = vector.broadcast %27 : vector<1x64xf32> to vector<32x64xf32>
    %29 = arith.addf %26, %28 : vector<32x64xf32>
    %c0_14 = arith.constant 0 : index
    %c0_15 = arith.constant 0 : index
    %30 = vector.load %arg7[%c0_14, %c0_15] : memref<32x64xf32, #tpu.memory_space<vmem>>, vector<32x64xf32>
    tpu.vector_store %arg7[%c0_14, %c0_15], %29 {strides = array<i32>} : memref<32x64xf32, #tpu.memory_space<vmem>>, vector<32x64xf32>,
    return
  }
  func.func @transform_0(%arg0: i32, %arg1: i32) -> (i32, i32) {
    %c0_i32 = arith.constant 0 : i32
    %c0_i32_0 = arith.constant 0 : i32
    return %arg0, %c0_i32 : i32, i32
  }
  func.func @transform_1(%arg0: i32, %arg1: i32) -> (i32, i32) {
    %c0_i32 = arith.constant 0 : i32
    %c0_i32_0 = arith.constant 0 : i32
    %c0_i32_1 = arith.constant 0 : i32
    return %c0_i32, %c0_i32_0 : i32, i32
  }
  func.func @transform_2(%arg0: i32, %arg1: i32) -> (i32, i32) {
    %c0_i32 = arith.constant 0 : i32
    %c0_i32_0 = arith.constant 0 : i32
    %c0_i32_1 = arith.constant 0 : i32
    return %c0_i32, %c0_i32_0 : i32, i32
  }
  func.func @transform_3(%arg0: i32, %arg1: i32) -> (i32, i32) {
    %c0_i32 = arith.constant 0 : i32
    %c0_i32_0 = arith.constant 0 : i32
    return %c0_i32, %arg1 : i32, i32
  }
  func.func @transform_4(%arg0: i32, %arg1: i32) -> (i32, i32) {
    %c0_i32 = arith.constant 0 : i32
    %c0_i32_0 = arith.constant 0 : i32
    return %c0_i32, %arg1 : i32, i32
  }
  func.func @transform_5(%arg0: i32, %arg1: i32) -> (i32, i32) {
    %c0_i32 = arith.constant 0 : i32
    return %arg0, %arg1 : i32, i32
  }
}

module attributes {stable_mosaic.version = 11 : i64} {
  func.func @_conv3x3_kernel(%arg0: i32, %arg1: memref<1x4x18x18xf32, #tpu.memory_space<vmem>>, %arg2: memref<144xf32, #tpu.memory_space<smem>>, %arg3: memref<4xf32, #tpu.memory_space<smem>>, %arg4: memref<1x4x16x16xf32, #tpu.memory_space<vmem>>) attributes {dimension_semantics = [#tpu.dimension_semantics<parallel>], iteration_bounds = array<i64: 2>, scalar_prefetch = 0 : i64, scratch_operands = 0 : i64, tpu.core_type = #tpu.core_type<tc>, window_params = [{transform_indices = @transform_0, window_bounds = array<i64: 1, 4, 18, 18>}, {transform_indices = @transform_1, window_bounds = array<i64: 144>}, {transform_indices = @transform_2, window_bounds = array<i64: 4>}, {transform_indices = @transform_3, window_bounds = array<i64: 1, 4, 16, 16>}]} {
    %c0 = arith.constant 0 : index
    %c0_0 = arith.constant 0 : index
    %c0_1 = arith.constant 0 : index
    %c0_2 = arith.constant 0 : index
    %0 = vector.load %arg1[%c0, %c0_0, %c0_1, %c0_2] : memref<1x4x18x18xf32, #tpu.memory_space<vmem>>, vector<1x1x18x18xf32>
    %1 = vector.shape_cast %0 : vector<1x1x18x18xf32> to vector<18x18xf32>
    %c0_3 = arith.constant 0 : index
    %c1 = arith.constant 1 : index
    %c0_4 = arith.constant 0 : index
    %c0_5 = arith.constant 0 : index
    %2 = vector.load %arg1[%c0_3, %c1, %c0_4, %c0_5] : memref<1x4x18x18xf32, #tpu.memory_space<vmem>>, vector<1x1x18x18xf32>
    %3 = vector.shape_cast %2 : vector<1x1x18x18xf32> to vector<18x18xf32>
    %c0_6 = arith.constant 0 : index
    %c2 = arith.constant 2 : index
    %c0_7 = arith.constant 0 : index
    %c0_8 = arith.constant 0 : index
    %4 = vector.load %arg1[%c0_6, %c2, %c0_7, %c0_8] : memref<1x4x18x18xf32, #tpu.memory_space<vmem>>, vector<1x1x18x18xf32>
    %5 = vector.shape_cast %4 : vector<1x1x18x18xf32> to vector<18x18xf32>
    %c0_9 = arith.constant 0 : index
    %c3 = arith.constant 3 : index
    %c0_10 = arith.constant 0 : index
    %c0_11 = arith.constant 0 : index
    %6 = vector.load %arg1[%c0_9, %c3, %c0_10, %c0_11] : memref<1x4x18x18xf32, #tpu.memory_space<vmem>>, vector<1x1x18x18xf32>
    %7 = vector.shape_cast %6 : vector<1x1x18x18xf32> to vector<18x18xf32>
    %cst = arith.constant 0.000000e+00 : f32
    %8 = vector.broadcast %cst : f32 to vector<16x16xf32>
    %c0_12 = arith.constant 0 : index
    %9 = memref.load %arg2[%c0_12] : memref<144xf32, #tpu.memory_space<smem>>
    %10 = vector.extract_strided_slice %1 {offsets = [0, 0], sizes = [16, 16], strides = [1, 1]} : vector<18x18xf32> to vector<16x16xf32>
    %11 = vector.broadcast %9 : f32 to vector<16x16xf32>
    %12 = arith.mulf %11, %10 : vector<16x16xf32>
    %13 = arith.addf %8, %12 : vector<16x16xf32>
    %c1_13 = arith.constant 1 : index
    %14 = memref.load %arg2[%c1_13] : memref<144xf32, #tpu.memory_space<smem>>
    %15 = vector.extract_strided_slice %1 {offsets = [0, 1], sizes = [16, 16], strides = [1, 1]} : vector<18x18xf32> to vector<16x16xf32>
    %16 = vector.broadcast %14 : f32 to vector<16x16xf32>
    %17 = arith.mulf %16, %15 : vector<16x16xf32>
    %18 = arith.addf %13, %17 : vector<16x16xf32>
    %c2_14 = arith.constant 2 : index
    %19 = memref.load %arg2[%c2_14] : memref<144xf32, #tpu.memory_space<smem>>
    %20 = vector.extract_strided_slice %1 {offsets = [0, 2], sizes = [16, 16], strides = [1, 1]} : vector<18x18xf32> to vector<16x16xf32>
    %21 = vector.broadcast %19 : f32 to vector<16x16xf32>
    %22 = arith.mulf %21, %20 : vector<16x16xf32>
    %23 = arith.addf %18, %22 : vector<16x16xf32>
    %c3_15 = arith.constant 3 : index
    %24 = memref.load %arg2[%c3_15] : memref<144xf32, #tpu.memory_space<smem>>
    %25 = vector.extract_strided_slice %1 {offsets = [1, 0], sizes = [16, 16], strides = [1, 1]} : vector<18x18xf32> to vector<16x16xf32>
    %26 = vector.broadcast %24 : f32 to vector<16x16xf32>
    %27 = arith.mulf %26, %25 : vector<16x16xf32>
    %28 = arith.addf %23, %27 : vector<16x16xf32>
    %c4 = arith.constant 4 : index
    %29 = memref.load %arg2[%c4] : memref<144xf32, #tpu.memory_space<smem>>
    %30 = vector.extract_strided_slice %1 {offsets = [1, 1], sizes = [16, 16], strides = [1, 1]} : vector<18x18xf32> to vector<16x16xf32>
    %31 = vector.broadcast %29 : f32 to vector<16x16xf32>
    %32 = arith.mulf %31, %30 : vector<16x16xf32>
    %33 = arith.addf %28, %32 : vector<16x16xf32>
    %c5 = arith.constant 5 : index
    %34 = memref.load %arg2[%c5] : memref<144xf32, #tpu.memory_space<smem>>
    %35 = vector.extract_strided_slice %1 {offsets = [1, 2], sizes = [16, 16], strides = [1, 1]} : vector<18x18xf32> to vector<16x16xf32>
    %36 = vector.broadcast %34 : f32 to vector<16x16xf32>
    %37 = arith.mulf %36, %35 : vector<16x16xf32>
    %38 = arith.addf %33, %37 : vector<16x16xf32>
    %c6 = arith.constant 6 : index
    %39 = memref.load %arg2[%c6] : memref<144xf32, #tpu.memory_space<smem>>
    %40 = vector.extract_strided_slice %1 {offsets = [2, 0], sizes = [16, 16], strides = [1, 1]} : vector<18x18xf32> to vector<16x16xf32>
    %41 = vector.broadcast %39 : f32 to vector<16x16xf32>
    %42 = arith.mulf %41, %40 : vector<16x16xf32>
    %43 = arith.addf %38, %42 : vector<16x16xf32>
    %c7 = arith.constant 7 : index
    %44 = memref.load %arg2[%c7] : memref<144xf32, #tpu.memory_space<smem>>
    %45 = vector.extract_strided_slice %1 {offsets = [2, 1], sizes = [16, 16], strides = [1, 1]} : vector<18x18xf32> to vector<16x16xf32>
    %46 = vector.broadcast %44 : f32 to vector<16x16xf32>
    %47 = arith.mulf %46, %45 : vector<16x16xf32>
    %48 = arith.addf %43, %47 : vector<16x16xf32>
    %c8 = arith.constant 8 : index
    %49 = memref.load %arg2[%c8] : memref<144xf32, #tpu.memory_space<smem>>
    %50 = vector.extract_strided_slice %1 {offsets = [2, 2], sizes = [16, 16], strides = [1, 1]} : vector<18x18xf32> to vector<16x16xf32>
    %51 = vector.broadcast %49 : f32 to vector<16x16xf32>
    %52 = arith.mulf %51, %50 : vector<16x16xf32>
    %53 = arith.addf %48, %52 : vector<16x16xf32>
    %c9 = arith.constant 9 : index
    %54 = memref.load %arg2[%c9] : memref<144xf32, #tpu.memory_space<smem>>
    %55 = vector.extract_strided_slice %3 {offsets = [0, 0], sizes = [16, 16], strides = [1, 1]} : vector<18x18xf32> to vector<16x16xf32>
    %56 = vector.broadcast %54 : f32 to vector<16x16xf32>
    %57 = arith.mulf %56, %55 : vector<16x16xf32>
    %58 = arith.addf %53, %57 : vector<16x16xf32>
    %c10 = arith.constant 10 : index
    %59 = memref.load %arg2[%c10] : memref<144xf32, #tpu.memory_space<smem>>
    %60 = vector.extract_strided_slice %3 {offsets = [0, 1], sizes = [16, 16], strides = [1, 1]} : vector<18x18xf32> to vector<16x16xf32>
    %61 = vector.broadcast %59 : f32 to vector<16x16xf32>
    %62 = arith.mulf %61, %60 : vector<16x16xf32>
    %63 = arith.addf %58, %62 : vector<16x16xf32>
    %c11 = arith.constant 11 : index
    %64 = memref.load %arg2[%c11] : memref<144xf32, #tpu.memory_space<smem>>
    %65 = vector.extract_strided_slice %3 {offsets = [0, 2], sizes = [16, 16], strides = [1, 1]} : vector<18x18xf32> to vector<16x16xf32>
    %66 = vector.broadcast %64 : f32 to vector<16x16xf32>
    %67 = arith.mulf %66, %65 : vector<16x16xf32>
    %68 = arith.addf %63, %67 : vector<16x16xf32>
    %c12 = arith.constant 12 : index
    %69 = memref.load %arg2[%c12] : memref<144xf32, #tpu.memory_space<smem>>
    %70 = vector.extract_strided_slice %3 {offsets = [1, 0], sizes = [16, 16], strides = [1, 1]} : vector<18x18xf32> to vector<16x16xf32>
    %71 = vector.broadcast %69 : f32 to vector<16x16xf32>
    %72 = arith.mulf %71, %70 : vector<16x16xf32>
    %73 = arith.addf %68, %72 : vector<16x16xf32>
    %c13 = arith.constant 13 : index
    %74 = memref.load %arg2[%c13] : memref<144xf32, #tpu.memory_space<smem>>
    %75 = vector.extract_strided_slice %3 {offsets = [1, 1], sizes = [16, 16], strides = [1, 1]} : vector<18x18xf32> to vector<16x16xf32>
    %76 = vector.broadcast %74 : f32 to vector<16x16xf32>
    %77 = arith.mulf %76, %75 : vector<16x16xf32>
    %78 = arith.addf %73, %77 : vector<16x16xf32>
    %c14 = arith.constant 14 : index
    %79 = memref.load %arg2[%c14] : memref<144xf32, #tpu.memory_space<smem>>
    %80 = vector.extract_strided_slice %3 {offsets = [1, 2], sizes = [16, 16], strides = [1, 1]} : vector<18x18xf32> to vector<16x16xf32>
    %81 = vector.broadcast %79 : f32 to vector<16x16xf32>
    %82 = arith.mulf %81, %80 : vector<16x16xf32>
    %83 = arith.addf %78, %82 : vector<16x16xf32>
    %c15 = arith.constant 15 : index
    %84 = memref.load %arg2[%c15] : memref<144xf32, #tpu.memory_space<smem>>
    %85 = vector.extract_strided_slice %3 {offsets = [2, 0], sizes = [16, 16], strides = [1, 1]} : vector<18x18xf32> to vector<16x16xf32>
    %86 = vector.broadcast %84 : f32 to vector<16x16xf32>
    %87 = arith.mulf %86, %85 : vector<16x16xf32>
    %88 = arith.addf %83, %87 : vector<16x16xf32>
    %c16 = arith.constant 16 : index
    %89 = memref.load %arg2[%c16] : memref<144xf32, #tpu.memory_space<smem>>
    %90 = vector.extract_strided_slice %3 {offsets = [2, 1], sizes = [16, 16], strides = [1, 1]} : vector<18x18xf32> to vector<16x16xf32>
    %91 = vector.broadcast %89 : f32 to vector<16x16xf32>
    %92 = arith.mulf %91, %90 : vector<16x16xf32>
    %93 = arith.addf %88, %92 : vector<16x16xf32>
    %c17 = arith.constant 17 : index
    %94 = memref.load %arg2[%c17] : memref<144xf32, #tpu.memory_space<smem>>
    %95 = vector.extract_strided_slice %3 {offsets = [2, 2], sizes = [16, 16], strides = [1, 1]} : vector<18x18xf32> to vector<16x16xf32>
    %96 = vector.broadcast %94 : f32 to vector<16x16xf32>
    %97 = arith.mulf %96, %95 : vector<16x16xf32>
    %98 = arith.addf %93, %97 : vector<16x16xf32>
    %c18 = arith.constant 18 : index
    %99 = memref.load %arg2[%c18] : memref<144xf32, #tpu.memory_space<smem>>
    %100 = vector.extract_strided_slice %5 {offsets = [0, 0], sizes = [16, 16], strides = [1, 1]} : vector<18x18xf32> to vector<16x16xf32>
    %101 = vector.broadcast %99 : f32 to vector<16x16xf32>
    %102 = arith.mulf %101, %100 : vector<16x16xf32>
    %103 = arith.addf %98, %102 : vector<16x16xf32>
    %c19 = arith.constant 19 : index
    %104 = memref.load %arg2[%c19] : memref<144xf32, #tpu.memory_space<smem>>
    %105 = vector.extract_strided_slice %5 {offsets = [0, 1], sizes = [16, 16], strides = [1, 1]} : vector<18x18xf32> to vector<16x16xf32>
    %106 = vector.broadcast %104 : f32 to vector<16x16xf32>
    %107 = arith.mulf %106, %105 : vector<16x16xf32>
    %108 = arith.addf %103, %107 : vector<16x16xf32>
    %c20 = arith.constant 20 : index
    %109 = memref.load %arg2[%c20] : memref<144xf32, #tpu.memory_space<smem>>
    %110 = vector.extract_strided_slice %5 {offsets = [0, 2], sizes = [16, 16], strides = [1, 1]} : vector<18x18xf32> to vector<16x16xf32>
    %111 = vector.broadcast %109 : f32 to vector<16x16xf32>
    %112 = arith.mulf %111, %110 : vector<16x16xf32>
    %113 = arith.addf %108, %112 : vector<16x16xf32>
    %c21 = arith.constant 21 : index
    %114 = memref.load %arg2[%c21] : memref<144xf32, #tpu.memory_space<smem>>
    %115 = vector.extract_strided_slice %5 {offsets = [1, 0], sizes = [16, 16], strides = [1, 1]} : vector<18x18xf32> to vector<16x16xf32>
    %116 = vector.broadcast %114 : f32 to vector<16x16xf32>
    %117 = arith.mulf %116, %115 : vector<16x16xf32>
    %118 = arith.addf %113, %117 : vector<16x16xf32>
    %c22 = arith.constant 22 : index
    %119 = memref.load %arg2[%c22] : memref<144xf32, #tpu.memory_space<smem>>
    %120 = vector.extract_strided_slice %5 {offsets = [1, 1], sizes = [16, 16], strides = [1, 1]} : vector<18x18xf32> to vector<16x16xf32>
    %121 = vector.broadcast %119 : f32 to vector<16x16xf32>
    %122 = arith.mulf %121, %120 : vector<16x16xf32>
    %123 = arith.addf %118, %122 : vector<16x16xf32>
    %c23 = arith.constant 23 : index
    %124 = memref.load %arg2[%c23] : memref<144xf32, #tpu.memory_space<smem>>
    %125 = vector.extract_strided_slice %5 {offsets = [1, 2], sizes = [16, 16], strides = [1, 1]} : vector<18x18xf32> to vector<16x16xf32>
    %126 = vector.broadcast %124 : f32 to vector<16x16xf32>
    %127 = arith.mulf %126, %125 : vector<16x16xf32>
    %128 = arith.addf %123, %127 : vector<16x16xf32>
    %c24 = arith.constant 24 : index
    %129 = memref.load %arg2[%c24] : memref<144xf32, #tpu.memory_space<smem>>
    %130 = vector.extract_strided_slice %5 {offsets = [2, 0], sizes = [16, 16], strides = [1, 1]} : vector<18x18xf32> to vector<16x16xf32>
    %131 = vector.broadcast %129 : f32 to vector<16x16xf32>
    %132 = arith.mulf %131, %130 : vector<16x16xf32>
    %133 = arith.addf %128, %132 : vector<16x16xf32>
    %c25 = arith.constant 25 : index
    %134 = memref.load %arg2[%c25] : memref<144xf32, #tpu.memory_space<smem>>
    %135 = vector.extract_strided_slice %5 {offsets = [2, 1], sizes = [16, 16], strides = [1, 1]} : vector<18x18xf32> to vector<16x16xf32>
    %136 = vector.broadcast %134 : f32 to vector<16x16xf32>
    %137 = arith.mulf %136, %135 : vector<16x16xf32>
    %138 = arith.addf %133, %137 : vector<16x16xf32>
    %c26 = arith.constant 26 : index
    %139 = memref.load %arg2[%c26] : memref<144xf32, #tpu.memory_space<smem>>
    %140 = vector.extract_strided_slice %5 {offsets = [2, 2], sizes = [16, 16], strides = [1, 1]} : vector<18x18xf32> to vector<16x16xf32>
    %141 = vector.broadcast %139 : f32 to vector<16x16xf32>
    %142 = arith.mulf %141, %140 : vector<16x16xf32>
    %143 = arith.addf %138, %142 : vector<16x16xf32>
    %c27 = arith.constant 27 : index
    %144 = memref.load %arg2[%c27] : memref<144xf32, #tpu.memory_space<smem>>
    %145 = vector.extract_strided_slice %7 {offsets = [0, 0], sizes = [16, 16], strides = [1, 1]} : vector<18x18xf32> to vector<16x16xf32>
    %146 = vector.broadcast %144 : f32 to vector<16x16xf32>
    %147 = arith.mulf %146, %145 : vector<16x16xf32>
    %148 = arith.addf %143, %147 : vector<16x16xf32>
    %c28 = arith.constant 28 : index
    %149 = memref.load %arg2[%c28] : memref<144xf32, #tpu.memory_space<smem>>
    %150 = vector.extract_strided_slice %7 {offsets = [0, 1], sizes = [16, 16], strides = [1, 1]} : vector<18x18xf32> to vector<16x16xf32>
    %151 = vector.broadcast %149 : f32 to vector<16x16xf32>
    %152 = arith.mulf %151, %150 : vector<16x16xf32>
    %153 = arith.addf %148, %152 : vector<16x16xf32>
    %c29 = arith.constant 29 : index
    %154 = memref.load %arg2[%c29] : memref<144xf32, #tpu.memory_space<smem>>
    %155 = vector.extract_strided_slice %7 {offsets = [0, 2], sizes = [16, 16], strides = [1, 1]} : vector<18x18xf32> to vector<16x16xf32>
    %156 = vector.broadcast %154 : f32 to vector<16x16xf32>
    %157 = arith.mulf %156, %155 : vector<16x16xf32>
    %158 = arith.addf %153, %157 : vector<16x16xf32>
    %c30 = arith.constant 30 : index
    %159 = memref.load %arg2[%c30] : memref<144xf32, #tpu.memory_space<smem>>
    %160 = vector.extract_strided_slice %7 {offsets = [1, 0], sizes = [16, 16], strides = [1, 1]} : vector<18x18xf32> to vector<16x16xf32>
    %161 = vector.broadcast %159 : f32 to vector<16x16xf32>
    %162 = arith.mulf %161, %160 : vector<16x16xf32>
    %163 = arith.addf %158, %162 : vector<16x16xf32>
    %c31 = arith.constant 31 : index
    %164 = memref.load %arg2[%c31] : memref<144xf32, #tpu.memory_space<smem>>
    %165 = vector.extract_strided_slice %7 {offsets = [1, 1], sizes = [16, 16], strides = [1, 1]} : vector<18x18xf32> to vector<16x16xf32>
    %166 = vector.broadcast %164 : f32 to vector<16x16xf32>
    %167 = arith.mulf %166, %165 : vector<16x16xf32>
    %168 = arith.addf %163, %167 : vector<16x16xf32>
    %c32 = arith.constant 32 : index
    %169 = memref.load %arg2[%c32] : memref<144xf32, #tpu.memory_space<smem>>
    %170 = vector.extract_strided_slice %7 {offsets = [1, 2], sizes = [16, 16], strides = [1, 1]} : vector<18x18xf32> to vector<16x16xf32>
    %171 = vector.broadcast %169 : f32 to vector<16x16xf32>
    %172 = arith.mulf %171, %170 : vector<16x16xf32>
    %173 = arith.addf %168, %172 : vector<16x16xf32>
    %c33 = arith.constant 33 : index
    %174 = memref.load %arg2[%c33] : memref<144xf32, #tpu.memory_space<smem>>
    %175 = vector.extract_strided_slice %7 {offsets = [2, 0], sizes = [16, 16], strides = [1, 1]} : vector<18x18xf32> to vector<16x16xf32>
    %176 = vector.broadcast %174 : f32 to vector<16x16xf32>
    %177 = arith.mulf %176, %175 : vector<16x16xf32>
    %178 = arith.addf %173, %177 : vector<16x16xf32>
    %c34 = arith.constant 34 : index
    %179 = memref.load %arg2[%c34] : memref<144xf32, #tpu.memory_space<smem>>
    %180 = vector.extract_strided_slice %7 {offsets = [2, 1], sizes = [16, 16], strides = [1, 1]} : vector<18x18xf32> to vector<16x16xf32>
    %181 = vector.broadcast %179 : f32 to vector<16x16xf32>
    %182 = arith.mulf %181, %180 : vector<16x16xf32>
    %183 = arith.addf %178, %182 : vector<16x16xf32>
    %c35 = arith.constant 35 : index
    %184 = memref.load %arg2[%c35] : memref<144xf32, #tpu.memory_space<smem>>
    %185 = vector.extract_strided_slice %7 {offsets = [2, 2], sizes = [16, 16], strides = [1, 1]} : vector<18x18xf32> to vector<16x16xf32>
    %186 = vector.broadcast %184 : f32 to vector<16x16xf32>
    %187 = arith.mulf %186, %185 : vector<16x16xf32>
    %188 = arith.addf %183, %187 : vector<16x16xf32>
    %c0_16 = arith.constant 0 : index
    %189 = memref.load %arg3[%c0_16] : memref<4xf32, #tpu.memory_space<smem>>
    %190 = vector.broadcast %189 : f32 to vector<16x16xf32>
    %191 = arith.addf %188, %190 : vector<16x16xf32>
    %c0_17 = arith.constant 0 : index
    %c0_18 = arith.constant 0 : index
    %c0_19 = arith.constant 0 : index
    %c0_20 = arith.constant 0 : index
    %192 = vector.load %arg4[%c0_17, %c0_18, %c0_19, %c0_20] : memref<1x4x16x16xf32, #tpu.memory_space<vmem>>, vector<1x1x16x16xf32>
    %193 = vector.shape_cast %192 : vector<1x1x16x16xf32> to vector<16x16xf32>
    %194 = vector.shape_cast %191 : vector<16x16xf32> to vector<1x1x16x16xf32>
    tpu.vector_store %arg4[%c0_17, %c0_18, %c0_19, %c0_20], %194 {strides = array<i32>} : memref<1x4x16x16xf32, #tpu.memory_space<vmem>>, vector<1x1x16x16xf32>,
    %cst_21 = arith.constant 0.000000e+00 : f32
    %195 = vector.broadcast %cst_21 : f32 to vector<16x16xf32>
    %c36 = arith.constant 36 : index
    %196 = memref.load %arg2[%c36] : memref<144xf32, #tpu.memory_space<smem>>
    %197 = vector.extract_strided_slice %1 {offsets = [0, 0], sizes = [16, 16], strides = [1, 1]} : vector<18x18xf32> to vector<16x16xf32>
    %198 = vector.broadcast %196 : f32 to vector<16x16xf32>
    %199 = arith.mulf %198, %197 : vector<16x16xf32>
    %200 = arith.addf %195, %199 : vector<16x16xf32>
    %c37 = arith.constant 37 : index
    %201 = memref.load %arg2[%c37] : memref<144xf32, #tpu.memory_space<smem>>
    %202 = vector.extract_strided_slice %1 {offsets = [0, 1], sizes = [16, 16], strides = [1, 1]} : vector<18x18xf32> to vector<16x16xf32>
    %203 = vector.broadcast %201 : f32 to vector<16x16xf32>
    %204 = arith.mulf %203, %202 : vector<16x16xf32>
    %205 = arith.addf %200, %204 : vector<16x16xf32>
    %c38 = arith.constant 38 : index
    %206 = memref.load %arg2[%c38] : memref<144xf32, #tpu.memory_space<smem>>
    %207 = vector.extract_strided_slice %1 {offsets = [0, 2], sizes = [16, 16], strides = [1, 1]} : vector<18x18xf32> to vector<16x16xf32>
    %208 = vector.broadcast %206 : f32 to vector<16x16xf32>
    %209 = arith.mulf %208, %207 : vector<16x16xf32>
    %210 = arith.addf %205, %209 : vector<16x16xf32>
    %c39 = arith.constant 39 : index
    %211 = memref.load %arg2[%c39] : memref<144xf32, #tpu.memory_space<smem>>
    %212 = vector.extract_strided_slice %1 {offsets = [1, 0], sizes = [16, 16], strides = [1, 1]} : vector<18x18xf32> to vector<16x16xf32>
    %213 = vector.broadcast %211 : f32 to vector<16x16xf32>
    %214 = arith.mulf %213, %212 : vector<16x16xf32>
    %215 = arith.addf %210, %214 : vector<16x16xf32>
    %c40 = arith.constant 40 : index
    %216 = memref.load %arg2[%c40] : memref<144xf32, #tpu.memory_space<smem>>
    %217 = vector.extract_strided_slice %1 {offsets = [1, 1], sizes = [16, 16], strides = [1, 1]} : vector<18x18xf32> to vector<16x16xf32>
    %218 = vector.broadcast %216 : f32 to vector<16x16xf32>
    %219 = arith.mulf %218, %217 : vector<16x16xf32>
    %220 = arith.addf %215, %219 : vector<16x16xf32>
    %c41 = arith.constant 41 : index
    %221 = memref.load %arg2[%c41] : memref<144xf32, #tpu.memory_space<smem>>
    %222 = vector.extract_strided_slice %1 {offsets = [1, 2], sizes = [16, 16], strides = [1, 1]} : vector<18x18xf32> to vector<16x16xf32>
    %223 = vector.broadcast %221 : f32 to vector<16x16xf32>
    %224 = arith.mulf %223, %222 : vector<16x16xf32>
    %225 = arith.addf %220, %224 : vector<16x16xf32>
    %c42 = arith.constant 42 : index
    %226 = memref.load %arg2[%c42] : memref<144xf32, #tpu.memory_space<smem>>
    %227 = vector.extract_strided_slice %1 {offsets = [2, 0], sizes = [16, 16], strides = [1, 1]} : vector<18x18xf32> to vector<16x16xf32>
    %228 = vector.broadcast %226 : f32 to vector<16x16xf32>
    %229 = arith.mulf %228, %227 : vector<16x16xf32>
    %230 = arith.addf %225, %229 : vector<16x16xf32>
    %c43 = arith.constant 43 : index
    %231 = memref.load %arg2[%c43] : memref<144xf32, #tpu.memory_space<smem>>
    %232 = vector.extract_strided_slice %1 {offsets = [2, 1], sizes = [16, 16], strides = [1, 1]} : vector<18x18xf32> to vector<16x16xf32>
    %233 = vector.broadcast %231 : f32 to vector<16x16xf32>
    %234 = arith.mulf %233, %232 : vector<16x16xf32>
    %235 = arith.addf %230, %234 : vector<16x16xf32>
    %c44 = arith.constant 44 : index
    %236 = memref.load %arg2[%c44] : memref<144xf32, #tpu.memory_space<smem>>
    %237 = vector.extract_strided_slice %1 {offsets = [2, 2], sizes = [16, 16], strides = [1, 1]} : vector<18x18xf32> to vector<16x16xf32>
    %238 = vector.broadcast %236 : f32 to vector<16x16xf32>
    %239 = arith.mulf %238, %237 : vector<16x16xf32>
    %240 = arith.addf %235, %239 : vector<16x16xf32>
    %c45 = arith.constant 45 : index
    %241 = memref.load %arg2[%c45] : memref<144xf32, #tpu.memory_space<smem>>
    %242 = vector.extract_strided_slice %3 {offsets = [0, 0], sizes = [16, 16], strides = [1, 1]} : vector<18x18xf32> to vector<16x16xf32>
    %243 = vector.broadcast %241 : f32 to vector<16x16xf32>
    %244 = arith.mulf %243, %242 : vector<16x16xf32>
    %245 = arith.addf %240, %244 : vector<16x16xf32>
    %c46 = arith.constant 46 : index
    %246 = memref.load %arg2[%c46] : memref<144xf32, #tpu.memory_space<smem>>
    %247 = vector.extract_strided_slice %3 {offsets = [0, 1], sizes = [16, 16], strides = [1, 1]} : vector<18x18xf32> to vector<16x16xf32>
    %248 = vector.broadcast %246 : f32 to vector<16x16xf32>
    %249 = arith.mulf %248, %247 : vector<16x16xf32>
    %250 = arith.addf %245, %249 : vector<16x16xf32>
    %c47 = arith.constant 47 : index
    %251 = memref.load %arg2[%c47] : memref<144xf32, #tpu.memory_space<smem>>
    %252 = vector.extract_strided_slice %3 {offsets = [0, 2], sizes = [16, 16], strides = [1, 1]} : vector<18x18xf32> to vector<16x16xf32>
    %253 = vector.broadcast %251 : f32 to vector<16x16xf32>
    %254 = arith.mulf %253, %252 : vector<16x16xf32>
    %255 = arith.addf %250, %254 : vector<16x16xf32>
    %c48 = arith.constant 48 : index
    %256 = memref.load %arg2[%c48] : memref<144xf32, #tpu.memory_space<smem>>
    %257 = vector.extract_strided_slice %3 {offsets = [1, 0], sizes = [16, 16], strides = [1, 1]} : vector<18x18xf32> to vector<16x16xf32>
    %258 = vector.broadcast %256 : f32 to vector<16x16xf32>
    %259 = arith.mulf %258, %257 : vector<16x16xf32>
    %260 = arith.addf %255, %259 : vector<16x16xf32>
    %c49 = arith.constant 49 : index
    %261 = memref.load %arg2[%c49] : memref<144xf32, #tpu.memory_space<smem>>
    %262 = vector.extract_strided_slice %3 {offsets = [1, 1], sizes = [16, 16], strides = [1, 1]} : vector<18x18xf32> to vector<16x16xf32>
    %263 = vector.broadcast %261 : f32 to vector<16x16xf32>
    %264 = arith.mulf %263, %262 : vector<16x16xf32>
    %265 = arith.addf %260, %264 : vector<16x16xf32>
    %c50 = arith.constant 50 : index
    %266 = memref.load %arg2[%c50] : memref<144xf32, #tpu.memory_space<smem>>
    %267 = vector.extract_strided_slice %3 {offsets = [1, 2], sizes = [16, 16], strides = [1, 1]} : vector<18x18xf32> to vector<16x16xf32>
    %268 = vector.broadcast %266 : f32 to vector<16x16xf32>
    %269 = arith.mulf %268, %267 : vector<16x16xf32>
    %270 = arith.addf %265, %269 : vector<16x16xf32>
    %c51 = arith.constant 51 : index
    %271 = memref.load %arg2[%c51] : memref<144xf32, #tpu.memory_space<smem>>
    %272 = vector.extract_strided_slice %3 {offsets = [2, 0], sizes = [16, 16], strides = [1, 1]} : vector<18x18xf32> to vector<16x16xf32>
    %273 = vector.broadcast %271 : f32 to vector<16x16xf32>
    %274 = arith.mulf %273, %272 : vector<16x16xf32>
    %275 = arith.addf %270, %274 : vector<16x16xf32>
    %c52 = arith.constant 52 : index
    %276 = memref.load %arg2[%c52] : memref<144xf32, #tpu.memory_space<smem>>
    %277 = vector.extract_strided_slice %3 {offsets = [2, 1], sizes = [16, 16], strides = [1, 1]} : vector<18x18xf32> to vector<16x16xf32>
    %278 = vector.broadcast %276 : f32 to vector<16x16xf32>
    %279 = arith.mulf %278, %277 : vector<16x16xf32>
    %280 = arith.addf %275, %279 : vector<16x16xf32>
    %c53 = arith.constant 53 : index
    %281 = memref.load %arg2[%c53] : memref<144xf32, #tpu.memory_space<smem>>
    %282 = vector.extract_strided_slice %3 {offsets = [2, 2], sizes = [16, 16], strides = [1, 1]} : vector<18x18xf32> to vector<16x16xf32>
    %283 = vector.broadcast %281 : f32 to vector<16x16xf32>
    %284 = arith.mulf %283, %282 : vector<16x16xf32>
    %285 = arith.addf %280, %284 : vector<16x16xf32>
    %c54 = arith.constant 54 : index
    %286 = memref.load %arg2[%c54] : memref<144xf32, #tpu.memory_space<smem>>
    %287 = vector.extract_strided_slice %5 {offsets = [0, 0], sizes = [16, 16], strides = [1, 1]} : vector<18x18xf32> to vector<16x16xf32>
    %288 = vector.broadcast %286 : f32 to vector<16x16xf32>
    %289 = arith.mulf %288, %287 : vector<16x16xf32>
    %290 = arith.addf %285, %289 : vector<16x16xf32>
    %c55 = arith.constant 55 : index
    %291 = memref.load %arg2[%c55] : memref<144xf32, #tpu.memory_space<smem>>
    %292 = vector.extract_strided_slice %5 {offsets = [0, 1], sizes = [16, 16], strides = [1, 1]} : vector<18x18xf32> to vector<16x16xf32>
    %293 = vector.broadcast %291 : f32 to vector<16x16xf32>
    %294 = arith.mulf %293, %292 : vector<16x16xf32>
    %295 = arith.addf %290, %294 : vector<16x16xf32>
    %c56 = arith.constant 56 : index
    %296 = memref.load %arg2[%c56] : memref<144xf32, #tpu.memory_space<smem>>
    %297 = vector.extract_strided_slice %5 {offsets = [0, 2], sizes = [16, 16], strides = [1, 1]} : vector<18x18xf32> to vector<16x16xf32>
    %298 = vector.broadcast %296 : f32 to vector<16x16xf32>
    %299 = arith.mulf %298, %297 : vector<16x16xf32>
    %300 = arith.addf %295, %299 : vector<16x16xf32>
    %c57 = arith.constant 57 : index
    %301 = memref.load %arg2[%c57] : memref<144xf32, #tpu.memory_space<smem>>
    %302 = vector.extract_strided_slice %5 {offsets = [1, 0], sizes = [16, 16], strides = [1, 1]} : vector<18x18xf32> to vector<16x16xf32>
    %303 = vector.broadcast %301 : f32 to vector<16x16xf32>
    %304 = arith.mulf %303, %302 : vector<16x16xf32>
    %305 = arith.addf %300, %304 : vector<16x16xf32>
    %c58 = arith.constant 58 : index
    %306 = memref.load %arg2[%c58] : memref<144xf32, #tpu.memory_space<smem>>
    %307 = vector.extract_strided_slice %5 {offsets = [1, 1], sizes = [16, 16], strides = [1, 1]} : vector<18x18xf32> to vector<16x16xf32>
    %308 = vector.broadcast %306 : f32 to vector<16x16xf32>
    %309 = arith.mulf %308, %307 : vector<16x16xf32>
    %310 = arith.addf %305, %309 : vector<16x16xf32>
    %c59 = arith.constant 59 : index
    %311 = memref.load %arg2[%c59] : memref<144xf32, #tpu.memory_space<smem>>
    %312 = vector.extract_strided_slice %5 {offsets = [1, 2], sizes = [16, 16], strides = [1, 1]} : vector<18x18xf32> to vector<16x16xf32>
    %313 = vector.broadcast %311 : f32 to vector<16x16xf32>
    %314 = arith.mulf %313, %312 : vector<16x16xf32>
    %315 = arith.addf %310, %314 : vector<16x16xf32>
    %c60 = arith.constant 60 : index
    %316 = memref.load %arg2[%c60] : memref<144xf32, #tpu.memory_space<smem>>
    %317 = vector.extract_strided_slice %5 {offsets = [2, 0], sizes = [16, 16], strides = [1, 1]} : vector<18x18xf32> to vector<16x16xf32>
    %318 = vector.broadcast %316 : f32 to vector<16x16xf32>
    %319 = arith.mulf %318, %317 : vector<16x16xf32>
    %320 = arith.addf %315, %319 : vector<16x16xf32>
    %c61 = arith.constant 61 : index
    %321 = memref.load %arg2[%c61] : memref<144xf32, #tpu.memory_space<smem>>
    %322 = vector.extract_strided_slice %5 {offsets = [2, 1], sizes = [16, 16], strides = [1, 1]} : vector<18x18xf32> to vector<16x16xf32>
    %323 = vector.broadcast %321 : f32 to vector<16x16xf32>
    %324 = arith.mulf %323, %322 : vector<16x16xf32>
    %325 = arith.addf %320, %324 : vector<16x16xf32>
    %c62 = arith.constant 62 : index
    %326 = memref.load %arg2[%c62] : memref<144xf32, #tpu.memory_space<smem>>
    %327 = vector.extract_strided_slice %5 {offsets = [2, 2], sizes = [16, 16], strides = [1, 1]} : vector<18x18xf32> to vector<16x16xf32>
    %328 = vector.broadcast %326 : f32 to vector<16x16xf32>
    %329 = arith.mulf %328, %327 : vector<16x16xf32>
    %330 = arith.addf %325, %329 : vector<16x16xf32>
    %c63 = arith.constant 63 : index
    %331 = memref.load %arg2[%c63] : memref<144xf32, #tpu.memory_space<smem>>
    %332 = vector.extract_strided_slice %7 {offsets = [0, 0], sizes = [16, 16], strides = [1, 1]} : vector<18x18xf32> to vector<16x16xf32>
    %333 = vector.broadcast %331 : f32 to vector<16x16xf32>
    %334 = arith.mulf %333, %332 : vector<16x16xf32>
    %335 = arith.addf %330, %334 : vector<16x16xf32>
    %c64 = arith.constant 64 : index
    %336 = memref.load %arg2[%c64] : memref<144xf32, #tpu.memory_space<smem>>
    %337 = vector.extract_strided_slice %7 {offsets = [0, 1], sizes = [16, 16], strides = [1, 1]} : vector<18x18xf32> to vector<16x16xf32>
    %338 = vector.broadcast %336 : f32 to vector<16x16xf32>
    %339 = arith.mulf %338, %337 : vector<16x16xf32>
    %340 = arith.addf %335, %339 : vector<16x16xf32>
    %c65 = arith.constant 65 : index
    %341 = memref.load %arg2[%c65] : memref<144xf32, #tpu.memory_space<smem>>
    %342 = vector.extract_strided_slice %7 {offsets = [0, 2], sizes = [16, 16], strides = [1, 1]} : vector<18x18xf32> to vector<16x16xf32>
    %343 = vector.broadcast %341 : f32 to vector<16x16xf32>
    %344 = arith.mulf %343, %342 : vector<16x16xf32>
    %345 = arith.addf %340, %344 : vector<16x16xf32>
    %c66 = arith.constant 66 : index
    %346 = memref.load %arg2[%c66] : memref<144xf32, #tpu.memory_space<smem>>
    %347 = vector.extract_strided_slice %7 {offsets = [1, 0], sizes = [16, 16], strides = [1, 1]} : vector<18x18xf32> to vector<16x16xf32>
    %348 = vector.broadcast %346 : f32 to vector<16x16xf32>
    %349 = arith.mulf %348, %347 : vector<16x16xf32>
    %350 = arith.addf %345, %349 : vector<16x16xf32>
    %c67 = arith.constant 67 : index
    %351 = memref.load %arg2[%c67] : memref<144xf32, #tpu.memory_space<smem>>
    %352 = vector.extract_strided_slice %7 {offsets = [1, 1], sizes = [16, 16], strides = [1, 1]} : vector<18x18xf32> to vector<16x16xf32>
    %353 = vector.broadcast %351 : f32 to vector<16x16xf32>
    %354 = arith.mulf %353, %352 : vector<16x16xf32>
    %355 = arith.addf %350, %354 : vector<16x16xf32>
    %c68 = arith.constant 68 : index
    %356 = memref.load %arg2[%c68] : memref<144xf32, #tpu.memory_space<smem>>
    %357 = vector.extract_strided_slice %7 {offsets = [1, 2], sizes = [16, 16], strides = [1, 1]} : vector<18x18xf32> to vector<16x16xf32>
    %358 = vector.broadcast %356 : f32 to vector<16x16xf32>
    %359 = arith.mulf %358, %357 : vector<16x16xf32>
    %360 = arith.addf %355, %359 : vector<16x16xf32>
    %c69 = arith.constant 69 : index
    %361 = memref.load %arg2[%c69] : memref<144xf32, #tpu.memory_space<smem>>
    %362 = vector.extract_strided_slice %7 {offsets = [2, 0], sizes = [16, 16], strides = [1, 1]} : vector<18x18xf32> to vector<16x16xf32>
    %363 = vector.broadcast %361 : f32 to vector<16x16xf32>
    %364 = arith.mulf %363, %362 : vector<16x16xf32>
    %365 = arith.addf %360, %364 : vector<16x16xf32>
    %c70 = arith.constant 70 : index
    %366 = memref.load %arg2[%c70] : memref<144xf32, #tpu.memory_space<smem>>
    %367 = vector.extract_strided_slice %7 {offsets = [2, 1], sizes = [16, 16], strides = [1, 1]} : vector<18x18xf32> to vector<16x16xf32>
    %368 = vector.broadcast %366 : f32 to vector<16x16xf32>
    %369 = arith.mulf %368, %367 : vector<16x16xf32>
    %370 = arith.addf %365, %369 : vector<16x16xf32>
    %c71 = arith.constant 71 : index
    %371 = memref.load %arg2[%c71] : memref<144xf32, #tpu.memory_space<smem>>
    %372 = vector.extract_strided_slice %7 {offsets = [2, 2], sizes = [16, 16], strides = [1, 1]} : vector<18x18xf32> to vector<16x16xf32>
    %373 = vector.broadcast %371 : f32 to vector<16x16xf32>
    %374 = arith.mulf %373, %372 : vector<16x16xf32>
    %375 = arith.addf %370, %374 : vector<16x16xf32>
    %c1_22 = arith.constant 1 : index
    %376 = memref.load %arg3[%c1_22] : memref<4xf32, #tpu.memory_space<smem>>
    %377 = vector.broadcast %376 : f32 to vector<16x16xf32>
    %378 = arith.addf %375, %377 : vector<16x16xf32>
    %c0_23 = arith.constant 0 : index
    %c1_24 = arith.constant 1 : index
    %c0_25 = arith.constant 0 : index
    %c0_26 = arith.constant 0 : index
    %379 = vector.load %arg4[%c0_23, %c1_24, %c0_25, %c0_26] : memref<1x4x16x16xf32, #tpu.memory_space<vmem>>, vector<1x1x16x16xf32>
    %380 = vector.shape_cast %379 : vector<1x1x16x16xf32> to vector<16x16xf32>
    %381 = vector.shape_cast %378 : vector<16x16xf32> to vector<1x1x16x16xf32>
    tpu.vector_store %arg4[%c0_23, %c1_24, %c0_25, %c0_26], %381 {strides = array<i32>} : memref<1x4x16x16xf32, #tpu.memory_space<vmem>>, vector<1x1x16x16xf32>,
    %cst_27 = arith.constant 0.000000e+00 : f32
    %382 = vector.broadcast %cst_27 : f32 to vector<16x16xf32>
    %c72 = arith.constant 72 : index
    %383 = memref.load %arg2[%c72] : memref<144xf32, #tpu.memory_space<smem>>
    %384 = vector.extract_strided_slice %1 {offsets = [0, 0], sizes = [16, 16], strides = [1, 1]} : vector<18x18xf32> to vector<16x16xf32>
    %385 = vector.broadcast %383 : f32 to vector<16x16xf32>
    %386 = arith.mulf %385, %384 : vector<16x16xf32>
    %387 = arith.addf %382, %386 : vector<16x16xf32>
    %c73 = arith.constant 73 : index
    %388 = memref.load %arg2[%c73] : memref<144xf32, #tpu.memory_space<smem>>
    %389 = vector.extract_strided_slice %1 {offsets = [0, 1], sizes = [16, 16], strides = [1, 1]} : vector<18x18xf32> to vector<16x16xf32>
    %390 = vector.broadcast %388 : f32 to vector<16x16xf32>
    %391 = arith.mulf %390, %389 : vector<16x16xf32>
    %392 = arith.addf %387, %391 : vector<16x16xf32>
    %c74 = arith.constant 74 : index
    %393 = memref.load %arg2[%c74] : memref<144xf32, #tpu.memory_space<smem>>
    %394 = vector.extract_strided_slice %1 {offsets = [0, 2], sizes = [16, 16], strides = [1, 1]} : vector<18x18xf32> to vector<16x16xf32>
    %395 = vector.broadcast %393 : f32 to vector<16x16xf32>
    %396 = arith.mulf %395, %394 : vector<16x16xf32>
    %397 = arith.addf %392, %396 : vector<16x16xf32>
    %c75 = arith.constant 75 : index
    %398 = memref.load %arg2[%c75] : memref<144xf32, #tpu.memory_space<smem>>
    %399 = vector.extract_strided_slice %1 {offsets = [1, 0], sizes = [16, 16], strides = [1, 1]} : vector<18x18xf32> to vector<16x16xf32>
    %400 = vector.broadcast %398 : f32 to vector<16x16xf32>
    %401 = arith.mulf %400, %399 : vector<16x16xf32>
    %402 = arith.addf %397, %401 : vector<16x16xf32>
    %c76 = arith.constant 76 : index
    %403 = memref.load %arg2[%c76] : memref<144xf32, #tpu.memory_space<smem>>
    %404 = vector.extract_strided_slice %1 {offsets = [1, 1], sizes = [16, 16], strides = [1, 1]} : vector<18x18xf32> to vector<16x16xf32>
    %405 = vector.broadcast %403 : f32 to vector<16x16xf32>
    %406 = arith.mulf %405, %404 : vector<16x16xf32>
    %407 = arith.addf %402, %406 : vector<16x16xf32>
    %c77 = arith.constant 77 : index
    %408 = memref.load %arg2[%c77] : memref<144xf32, #tpu.memory_space<smem>>
    %409 = vector.extract_strided_slice %1 {offsets = [1, 2], sizes = [16, 16], strides = [1, 1]} : vector<18x18xf32> to vector<16x16xf32>
    %410 = vector.broadcast %408 : f32 to vector<16x16xf32>
    %411 = arith.mulf %410, %409 : vector<16x16xf32>
    %412 = arith.addf %407, %411 : vector<16x16xf32>
    %c78 = arith.constant 78 : index
    %413 = memref.load %arg2[%c78] : memref<144xf32, #tpu.memory_space<smem>>
    %414 = vector.extract_strided_slice %1 {offsets = [2, 0], sizes = [16, 16], strides = [1, 1]} : vector<18x18xf32> to vector<16x16xf32>
    %415 = vector.broadcast %413 : f32 to vector<16x16xf32>
    %416 = arith.mulf %415, %414 : vector<16x16xf32>
    %417 = arith.addf %412, %416 : vector<16x16xf32>
    %c79 = arith.constant 79 : index
    %418 = memref.load %arg2[%c79] : memref<144xf32, #tpu.memory_space<smem>>
    %419 = vector.extract_strided_slice %1 {offsets = [2, 1], sizes = [16, 16], strides = [1, 1]} : vector<18x18xf32> to vector<16x16xf32>
    %420 = vector.broadcast %418 : f32 to vector<16x16xf32>
    %421 = arith.mulf %420, %419 : vector<16x16xf32>
    %422 = arith.addf %417, %421 : vector<16x16xf32>
    %c80 = arith.constant 80 : index
    %423 = memref.load %arg2[%c80] : memref<144xf32, #tpu.memory_space<smem>>
    %424 = vector.extract_strided_slice %1 {offsets = [2, 2], sizes = [16, 16], strides = [1, 1]} : vector<18x18xf32> to vector<16x16xf32>
    %425 = vector.broadcast %423 : f32 to vector<16x16xf32>
    %426 = arith.mulf %425, %424 : vector<16x16xf32>
    %427 = arith.addf %422, %426 : vector<16x16xf32>
    %c81 = arith.constant 81 : index
    %428 = memref.load %arg2[%c81] : memref<144xf32, #tpu.memory_space<smem>>
    %429 = vector.extract_strided_slice %3 {offsets = [0, 0], sizes = [16, 16], strides = [1, 1]} : vector<18x18xf32> to vector<16x16xf32>
    %430 = vector.broadcast %428 : f32 to vector<16x16xf32>
    %431 = arith.mulf %430, %429 : vector<16x16xf32>
    %432 = arith.addf %427, %431 : vector<16x16xf32>
    %c82 = arith.constant 82 : index
    %433 = memref.load %arg2[%c82] : memref<144xf32, #tpu.memory_space<smem>>
    %434 = vector.extract_strided_slice %3 {offsets = [0, 1], sizes = [16, 16], strides = [1, 1]} : vector<18x18xf32> to vector<16x16xf32>
    %435 = vector.broadcast %433 : f32 to vector<16x16xf32>
    %436 = arith.mulf %435, %434 : vector<16x16xf32>
    %437 = arith.addf %432, %436 : vector<16x16xf32>
    %c83 = arith.constant 83 : index
    %438 = memref.load %arg2[%c83] : memref<144xf32, #tpu.memory_space<smem>>
    %439 = vector.extract_strided_slice %3 {offsets = [0, 2], sizes = [16, 16], strides = [1, 1]} : vector<18x18xf32> to vector<16x16xf32>
    %440 = vector.broadcast %438 : f32 to vector<16x16xf32>
    %441 = arith.mulf %440, %439 : vector<16x16xf32>
    %442 = arith.addf %437, %441 : vector<16x16xf32>
    %c84 = arith.constant 84 : index
    %443 = memref.load %arg2[%c84] : memref<144xf32, #tpu.memory_space<smem>>
    %444 = vector.extract_strided_slice %3 {offsets = [1, 0], sizes = [16, 16], strides = [1, 1]} : vector<18x18xf32> to vector<16x16xf32>
    %445 = vector.broadcast %443 : f32 to vector<16x16xf32>
    %446 = arith.mulf %445, %444 : vector<16x16xf32>
    %447 = arith.addf %442, %446 : vector<16x16xf32>
    %c85 = arith.constant 85 : index
    %448 = memref.load %arg2[%c85] : memref<144xf32, #tpu.memory_space<smem>>
    %449 = vector.extract_strided_slice %3 {offsets = [1, 1], sizes = [16, 16], strides = [1, 1]} : vector<18x18xf32> to vector<16x16xf32>
    %450 = vector.broadcast %448 : f32 to vector<16x16xf32>
    %451 = arith.mulf %450, %449 : vector<16x16xf32>
    %452 = arith.addf %447, %451 : vector<16x16xf32>
    %c86 = arith.constant 86 : index
    %453 = memref.load %arg2[%c86] : memref<144xf32, #tpu.memory_space<smem>>
    %454 = vector.extract_strided_slice %3 {offsets = [1, 2], sizes = [16, 16], strides = [1, 1]} : vector<18x18xf32> to vector<16x16xf32>
    %455 = vector.broadcast %453 : f32 to vector<16x16xf32>
    %456 = arith.mulf %455, %454 : vector<16x16xf32>
    %457 = arith.addf %452, %456 : vector<16x16xf32>
    %c87 = arith.constant 87 : index
    %458 = memref.load %arg2[%c87] : memref<144xf32, #tpu.memory_space<smem>>
    %459 = vector.extract_strided_slice %3 {offsets = [2, 0], sizes = [16, 16], strides = [1, 1]} : vector<18x18xf32> to vector<16x16xf32>
    %460 = vector.broadcast %458 : f32 to vector<16x16xf32>
    %461 = arith.mulf %460, %459 : vector<16x16xf32>
    %462 = arith.addf %457, %461 : vector<16x16xf32>
    %c88 = arith.constant 88 : index
    %463 = memref.load %arg2[%c88] : memref<144xf32, #tpu.memory_space<smem>>
    %464 = vector.extract_strided_slice %3 {offsets = [2, 1], sizes = [16, 16], strides = [1, 1]} : vector<18x18xf32> to vector<16x16xf32>
    %465 = vector.broadcast %463 : f32 to vector<16x16xf32>
    %466 = arith.mulf %465, %464 : vector<16x16xf32>
    %467 = arith.addf %462, %466 : vector<16x16xf32>
    %c89 = arith.constant 89 : index
    %468 = memref.load %arg2[%c89] : memref<144xf32, #tpu.memory_space<smem>>
    %469 = vector.extract_strided_slice %3 {offsets = [2, 2], sizes = [16, 16], strides = [1, 1]} : vector<18x18xf32> to vector<16x16xf32>
    %470 = vector.broadcast %468 : f32 to vector<16x16xf32>
    %471 = arith.mulf %470, %469 : vector<16x16xf32>
    %472 = arith.addf %467, %471 : vector<16x16xf32>
    %c90 = arith.constant 90 : index
    %473 = memref.load %arg2[%c90] : memref<144xf32, #tpu.memory_space<smem>>
    %474 = vector.extract_strided_slice %5 {offsets = [0, 0], sizes = [16, 16], strides = [1, 1]} : vector<18x18xf32> to vector<16x16xf32>
    %475 = vector.broadcast %473 : f32 to vector<16x16xf32>
    %476 = arith.mulf %475, %474 : vector<16x16xf32>
    %477 = arith.addf %472, %476 : vector<16x16xf32>
    %c91 = arith.constant 91 : index
    %478 = memref.load %arg2[%c91] : memref<144xf32, #tpu.memory_space<smem>>
    %479 = vector.extract_strided_slice %5 {offsets = [0, 1], sizes = [16, 16], strides = [1, 1]} : vector<18x18xf32> to vector<16x16xf32>
    %480 = vector.broadcast %478 : f32 to vector<16x16xf32>
    %481 = arith.mulf %480, %479 : vector<16x16xf32>
    %482 = arith.addf %477, %481 : vector<16x16xf32>
    %c92 = arith.constant 92 : index
    %483 = memref.load %arg2[%c92] : memref<144xf32, #tpu.memory_space<smem>>
    %484 = vector.extract_strided_slice %5 {offsets = [0, 2], sizes = [16, 16], strides = [1, 1]} : vector<18x18xf32> to vector<16x16xf32>
    %485 = vector.broadcast %483 : f32 to vector<16x16xf32>
    %486 = arith.mulf %485, %484 : vector<16x16xf32>
    %487 = arith.addf %482, %486 : vector<16x16xf32>
    %c93 = arith.constant 93 : index
    %488 = memref.load %arg2[%c93] : memref<144xf32, #tpu.memory_space<smem>>
    %489 = vector.extract_strided_slice %5 {offsets = [1, 0], sizes = [16, 16], strides = [1, 1]} : vector<18x18xf32> to vector<16x16xf32>
    %490 = vector.broadcast %488 : f32 to vector<16x16xf32>
    %491 = arith.mulf %490, %489 : vector<16x16xf32>
    %492 = arith.addf %487, %491 : vector<16x16xf32>
    %c94 = arith.constant 94 : index
    %493 = memref.load %arg2[%c94] : memref<144xf32, #tpu.memory_space<smem>>
    %494 = vector.extract_strided_slice %5 {offsets = [1, 1], sizes = [16, 16], strides = [1, 1]} : vector<18x18xf32> to vector<16x16xf32>
    %495 = vector.broadcast %493 : f32 to vector<16x16xf32>
    %496 = arith.mulf %495, %494 : vector<16x16xf32>
    %497 = arith.addf %492, %496 : vector<16x16xf32>
    %c95 = arith.constant 95 : index
    %498 = memref.load %arg2[%c95] : memref<144xf32, #tpu.memory_space<smem>>
    %499 = vector.extract_strided_slice %5 {offsets = [1, 2], sizes = [16, 16], strides = [1, 1]} : vector<18x18xf32> to vector<16x16xf32>
    %500 = vector.broadcast %498 : f32 to vector<16x16xf32>
    %501 = arith.mulf %500, %499 : vector<16x16xf32>
    %502 = arith.addf %497, %501 : vector<16x16xf32>
    %c96 = arith.constant 96 : index
    %503 = memref.load %arg2[%c96] : memref<144xf32, #tpu.memory_space<smem>>
    %504 = vector.extract_strided_slice %5 {offsets = [2, 0], sizes = [16, 16], strides = [1, 1]} : vector<18x18xf32> to vector<16x16xf32>
    %505 = vector.broadcast %503 : f32 to vector<16x16xf32>
    %506 = arith.mulf %505, %504 : vector<16x16xf32>
    %507 = arith.addf %502, %506 : vector<16x16xf32>
    %c97 = arith.constant 97 : index
    %508 = memref.load %arg2[%c97] : memref<144xf32, #tpu.memory_space<smem>>
    %509 = vector.extract_strided_slice %5 {offsets = [2, 1], sizes = [16, 16], strides = [1, 1]} : vector<18x18xf32> to vector<16x16xf32>
    %510 = vector.broadcast %508 : f32 to vector<16x16xf32>
    %511 = arith.mulf %510, %509 : vector<16x16xf32>
    %512 = arith.addf %507, %511 : vector<16x16xf32>
    %c98 = arith.constant 98 : index
    %513 = memref.load %arg2[%c98] : memref<144xf32, #tpu.memory_space<smem>>
    %514 = vector.extract_strided_slice %5 {offsets = [2, 2], sizes = [16, 16], strides = [1, 1]} : vector<18x18xf32> to vector<16x16xf32>
    %515 = vector.broadcast %513 : f32 to vector<16x16xf32>
    %516 = arith.mulf %515, %514 : vector<16x16xf32>
    %517 = arith.addf %512, %516 : vector<16x16xf32>
    %c99 = arith.constant 99 : index
    %518 = memref.load %arg2[%c99] : memref<144xf32, #tpu.memory_space<smem>>
    %519 = vector.extract_strided_slice %7 {offsets = [0, 0], sizes = [16, 16], strides = [1, 1]} : vector<18x18xf32> to vector<16x16xf32>
    %520 = vector.broadcast %518 : f32 to vector<16x16xf32>
    %521 = arith.mulf %520, %519 : vector<16x16xf32>
    %522 = arith.addf %517, %521 : vector<16x16xf32>
    %c100 = arith.constant 100 : index
    %523 = memref.load %arg2[%c100] : memref<144xf32, #tpu.memory_space<smem>>
    %524 = vector.extract_strided_slice %7 {offsets = [0, 1], sizes = [16, 16], strides = [1, 1]} : vector<18x18xf32> to vector<16x16xf32>
    %525 = vector.broadcast %523 : f32 to vector<16x16xf32>
    %526 = arith.mulf %525, %524 : vector<16x16xf32>
    %527 = arith.addf %522, %526 : vector<16x16xf32>
    %c101 = arith.constant 101 : index
    %528 = memref.load %arg2[%c101] : memref<144xf32, #tpu.memory_space<smem>>
    %529 = vector.extract_strided_slice %7 {offsets = [0, 2], sizes = [16, 16], strides = [1, 1]} : vector<18x18xf32> to vector<16x16xf32>
    %530 = vector.broadcast %528 : f32 to vector<16x16xf32>
    %531 = arith.mulf %530, %529 : vector<16x16xf32>
    %532 = arith.addf %527, %531 : vector<16x16xf32>
    %c102 = arith.constant 102 : index
    %533 = memref.load %arg2[%c102] : memref<144xf32, #tpu.memory_space<smem>>
    %534 = vector.extract_strided_slice %7 {offsets = [1, 0], sizes = [16, 16], strides = [1, 1]} : vector<18x18xf32> to vector<16x16xf32>
    %535 = vector.broadcast %533 : f32 to vector<16x16xf32>
    %536 = arith.mulf %535, %534 : vector<16x16xf32>
    %537 = arith.addf %532, %536 : vector<16x16xf32>
    %c103 = arith.constant 103 : index
    %538 = memref.load %arg2[%c103] : memref<144xf32, #tpu.memory_space<smem>>
    %539 = vector.extract_strided_slice %7 {offsets = [1, 1], sizes = [16, 16], strides = [1, 1]} : vector<18x18xf32> to vector<16x16xf32>
    %540 = vector.broadcast %538 : f32 to vector<16x16xf32>
    %541 = arith.mulf %540, %539 : vector<16x16xf32>
    %542 = arith.addf %537, %541 : vector<16x16xf32>
    %c104 = arith.constant 104 : index
    %543 = memref.load %arg2[%c104] : memref<144xf32, #tpu.memory_space<smem>>
    %544 = vector.extract_strided_slice %7 {offsets = [1, 2], sizes = [16, 16], strides = [1, 1]} : vector<18x18xf32> to vector<16x16xf32>
    %545 = vector.broadcast %543 : f32 to vector<16x16xf32>
    %546 = arith.mulf %545, %544 : vector<16x16xf32>
    %547 = arith.addf %542, %546 : vector<16x16xf32>
    %c105 = arith.constant 105 : index
    %548 = memref.load %arg2[%c105] : memref<144xf32, #tpu.memory_space<smem>>
    %549 = vector.extract_strided_slice %7 {offsets = [2, 0], sizes = [16, 16], strides = [1, 1]} : vector<18x18xf32> to vector<16x16xf32>
    %550 = vector.broadcast %548 : f32 to vector<16x16xf32>
    %551 = arith.mulf %550, %549 : vector<16x16xf32>
    %552 = arith.addf %547, %551 : vector<16x16xf32>
    %c106 = arith.constant 106 : index
    %553 = memref.load %arg2[%c106] : memref<144xf32, #tpu.memory_space<smem>>
    %554 = vector.extract_strided_slice %7 {offsets = [2, 1], sizes = [16, 16], strides = [1, 1]} : vector<18x18xf32> to vector<16x16xf32>
    %555 = vector.broadcast %553 : f32 to vector<16x16xf32>
    %556 = arith.mulf %555, %554 : vector<16x16xf32>
    %557 = arith.addf %552, %556 : vector<16x16xf32>
    %c107 = arith.constant 107 : index
    %558 = memref.load %arg2[%c107] : memref<144xf32, #tpu.memory_space<smem>>
    %559 = vector.extract_strided_slice %7 {offsets = [2, 2], sizes = [16, 16], strides = [1, 1]} : vector<18x18xf32> to vector<16x16xf32>
    %560 = vector.broadcast %558 : f32 to vector<16x16xf32>
    %561 = arith.mulf %560, %559 : vector<16x16xf32>
    %562 = arith.addf %557, %561 : vector<16x16xf32>
    %c2_28 = arith.constant 2 : index
    %563 = memref.load %arg3[%c2_28] : memref<4xf32, #tpu.memory_space<smem>>
    %564 = vector.broadcast %563 : f32 to vector<16x16xf32>
    %565 = arith.addf %562, %564 : vector<16x16xf32>
    %c0_29 = arith.constant 0 : index
    %c2_30 = arith.constant 2 : index
    %c0_31 = arith.constant 0 : index
    %c0_32 = arith.constant 0 : index
    %566 = vector.load %arg4[%c0_29, %c2_30, %c0_31, %c0_32] : memref<1x4x16x16xf32, #tpu.memory_space<vmem>>, vector<1x1x16x16xf32>
    %567 = vector.shape_cast %566 : vector<1x1x16x16xf32> to vector<16x16xf32>
    %568 = vector.shape_cast %565 : vector<16x16xf32> to vector<1x1x16x16xf32>
    tpu.vector_store %arg4[%c0_29, %c2_30, %c0_31, %c0_32], %568 {strides = array<i32>} : memref<1x4x16x16xf32, #tpu.memory_space<vmem>>, vector<1x1x16x16xf32>,
    %cst_33 = arith.constant 0.000000e+00 : f32
    %569 = vector.broadcast %cst_33 : f32 to vector<16x16xf32>
    %c108 = arith.constant 108 : index
    %570 = memref.load %arg2[%c108] : memref<144xf32, #tpu.memory_space<smem>>
    %571 = vector.extract_strided_slice %1 {offsets = [0, 0], sizes = [16, 16], strides = [1, 1]} : vector<18x18xf32> to vector<16x16xf32>
    %572 = vector.broadcast %570 : f32 to vector<16x16xf32>
    %573 = arith.mulf %572, %571 : vector<16x16xf32>
    %574 = arith.addf %569, %573 : vector<16x16xf32>
    %c109 = arith.constant 109 : index
    %575 = memref.load %arg2[%c109] : memref<144xf32, #tpu.memory_space<smem>>
    %576 = vector.extract_strided_slice %1 {offsets = [0, 1], sizes = [16, 16], strides = [1, 1]} : vector<18x18xf32> to vector<16x16xf32>
    %577 = vector.broadcast %575 : f32 to vector<16x16xf32>
    %578 = arith.mulf %577, %576 : vector<16x16xf32>
    %579 = arith.addf %574, %578 : vector<16x16xf32>
    %c110 = arith.constant 110 : index
    %580 = memref.load %arg2[%c110] : memref<144xf32, #tpu.memory_space<smem>>
    %581 = vector.extract_strided_slice %1 {offsets = [0, 2], sizes = [16, 16], strides = [1, 1]} : vector<18x18xf32> to vector<16x16xf32>
    %582 = vector.broadcast %580 : f32 to vector<16x16xf32>
    %583 = arith.mulf %582, %581 : vector<16x16xf32>
    %584 = arith.addf %579, %583 : vector<16x16xf32>
    %c111 = arith.constant 111 : index
    %585 = memref.load %arg2[%c111] : memref<144xf32, #tpu.memory_space<smem>>
    %586 = vector.extract_strided_slice %1 {offsets = [1, 0], sizes = [16, 16], strides = [1, 1]} : vector<18x18xf32> to vector<16x16xf32>
    %587 = vector.broadcast %585 : f32 to vector<16x16xf32>
    %588 = arith.mulf %587, %586 : vector<16x16xf32>
    %589 = arith.addf %584, %588 : vector<16x16xf32>
    %c112 = arith.constant 112 : index
    %590 = memref.load %arg2[%c112] : memref<144xf32, #tpu.memory_space<smem>>
    %591 = vector.extract_strided_slice %1 {offsets = [1, 1], sizes = [16, 16], strides = [1, 1]} : vector<18x18xf32> to vector<16x16xf32>
    %592 = vector.broadcast %590 : f32 to vector<16x16xf32>
    %593 = arith.mulf %592, %591 : vector<16x16xf32>
    %594 = arith.addf %589, %593 : vector<16x16xf32>
    %c113 = arith.constant 113 : index
    %595 = memref.load %arg2[%c113] : memref<144xf32, #tpu.memory_space<smem>>
    %596 = vector.extract_strided_slice %1 {offsets = [1, 2], sizes = [16, 16], strides = [1, 1]} : vector<18x18xf32> to vector<16x16xf32>
    %597 = vector.broadcast %595 : f32 to vector<16x16xf32>
    %598 = arith.mulf %597, %596 : vector<16x16xf32>
    %599 = arith.addf %594, %598 : vector<16x16xf32>
    %c114 = arith.constant 114 : index
    %600 = memref.load %arg2[%c114] : memref<144xf32, #tpu.memory_space<smem>>
    %601 = vector.extract_strided_slice %1 {offsets = [2, 0], sizes = [16, 16], strides = [1, 1]} : vector<18x18xf32> to vector<16x16xf32>
    %602 = vector.broadcast %600 : f32 to vector<16x16xf32>
    %603 = arith.mulf %602, %601 : vector<16x16xf32>
    %604 = arith.addf %599, %603 : vector<16x16xf32>
    %c115 = arith.constant 115 : index
    %605 = memref.load %arg2[%c115] : memref<144xf32, #tpu.memory_space<smem>>
    %606 = vector.extract_strided_slice %1 {offsets = [2, 1], sizes = [16, 16], strides = [1, 1]} : vector<18x18xf32> to vector<16x16xf32>
    %607 = vector.broadcast %605 : f32 to vector<16x16xf32>
    %608 = arith.mulf %607, %606 : vector<16x16xf32>
    %609 = arith.addf %604, %608 : vector<16x16xf32>
    %c116 = arith.constant 116 : index
    %610 = memref.load %arg2[%c116] : memref<144xf32, #tpu.memory_space<smem>>
    %611 = vector.extract_strided_slice %1 {offsets = [2, 2], sizes = [16, 16], strides = [1, 1]} : vector<18x18xf32> to vector<16x16xf32>
    %612 = vector.broadcast %610 : f32 to vector<16x16xf32>
    %613 = arith.mulf %612, %611 : vector<16x16xf32>
    %614 = arith.addf %609, %613 : vector<16x16xf32>
    %c117 = arith.constant 117 : index
    %615 = memref.load %arg2[%c117] : memref<144xf32, #tpu.memory_space<smem>>
    %616 = vector.extract_strided_slice %3 {offsets = [0, 0], sizes = [16, 16], strides = [1, 1]} : vector<18x18xf32> to vector<16x16xf32>
    %617 = vector.broadcast %615 : f32 to vector<16x16xf32>
    %618 = arith.mulf %617, %616 : vector<16x16xf32>
    %619 = arith.addf %614, %618 : vector<16x16xf32>
    %c118 = arith.constant 118 : index
    %620 = memref.load %arg2[%c118] : memref<144xf32, #tpu.memory_space<smem>>
    %621 = vector.extract_strided_slice %3 {offsets = [0, 1], sizes = [16, 16], strides = [1, 1]} : vector<18x18xf32> to vector<16x16xf32>
    %622 = vector.broadcast %620 : f32 to vector<16x16xf32>
    %623 = arith.mulf %622, %621 : vector<16x16xf32>
    %624 = arith.addf %619, %623 : vector<16x16xf32>
    %c119 = arith.constant 119 : index
    %625 = memref.load %arg2[%c119] : memref<144xf32, #tpu.memory_space<smem>>
    %626 = vector.extract_strided_slice %3 {offsets = [0, 2], sizes = [16, 16], strides = [1, 1]} : vector<18x18xf32> to vector<16x16xf32>
    %627 = vector.broadcast %625 : f32 to vector<16x16xf32>
    %628 = arith.mulf %627, %626 : vector<16x16xf32>
    %629 = arith.addf %624, %628 : vector<16x16xf32>
    %c120 = arith.constant 120 : index
    %630 = memref.load %arg2[%c120] : memref<144xf32, #tpu.memory_space<smem>>
    %631 = vector.extract_strided_slice %3 {offsets = [1, 0], sizes = [16, 16], strides = [1, 1]} : vector<18x18xf32> to vector<16x16xf32>
    %632 = vector.broadcast %630 : f32 to vector<16x16xf32>
    %633 = arith.mulf %632, %631 : vector<16x16xf32>
    %634 = arith.addf %629, %633 : vector<16x16xf32>
    %c121 = arith.constant 121 : index
    %635 = memref.load %arg2[%c121] : memref<144xf32, #tpu.memory_space<smem>>
    %636 = vector.extract_strided_slice %3 {offsets = [1, 1], sizes = [16, 16], strides = [1, 1]} : vector<18x18xf32> to vector<16x16xf32>
    %637 = vector.broadcast %635 : f32 to vector<16x16xf32>
    %638 = arith.mulf %637, %636 : vector<16x16xf32>
    %639 = arith.addf %634, %638 : vector<16x16xf32>
    %c122 = arith.constant 122 : index
    %640 = memref.load %arg2[%c122] : memref<144xf32, #tpu.memory_space<smem>>
    %641 = vector.extract_strided_slice %3 {offsets = [1, 2], sizes = [16, 16], strides = [1, 1]} : vector<18x18xf32> to vector<16x16xf32>
    %642 = vector.broadcast %640 : f32 to vector<16x16xf32>
    %643 = arith.mulf %642, %641 : vector<16x16xf32>
    %644 = arith.addf %639, %643 : vector<16x16xf32>
    %c123 = arith.constant 123 : index
    %645 = memref.load %arg2[%c123] : memref<144xf32, #tpu.memory_space<smem>>
    %646 = vector.extract_strided_slice %3 {offsets = [2, 0], sizes = [16, 16], strides = [1, 1]} : vector<18x18xf32> to vector<16x16xf32>
    %647 = vector.broadcast %645 : f32 to vector<16x16xf32>
    %648 = arith.mulf %647, %646 : vector<16x16xf32>
    %649 = arith.addf %644, %648 : vector<16x16xf32>
    %c124 = arith.constant 124 : index
    %650 = memref.load %arg2[%c124] : memref<144xf32, #tpu.memory_space<smem>>
    %651 = vector.extract_strided_slice %3 {offsets = [2, 1], sizes = [16, 16], strides = [1, 1]} : vector<18x18xf32> to vector<16x16xf32>
    %652 = vector.broadcast %650 : f32 to vector<16x16xf32>
    %653 = arith.mulf %652, %651 : vector<16x16xf32>
    %654 = arith.addf %649, %653 : vector<16x16xf32>
    %c125 = arith.constant 125 : index
    %655 = memref.load %arg2[%c125] : memref<144xf32, #tpu.memory_space<smem>>
    %656 = vector.extract_strided_slice %3 {offsets = [2, 2], sizes = [16, 16], strides = [1, 1]} : vector<18x18xf32> to vector<16x16xf32>
    %657 = vector.broadcast %655 : f32 to vector<16x16xf32>
    %658 = arith.mulf %657, %656 : vector<16x16xf32>
    %659 = arith.addf %654, %658 : vector<16x16xf32>
    %c126 = arith.constant 126 : index
    %660 = memref.load %arg2[%c126] : memref<144xf32, #tpu.memory_space<smem>>
    %661 = vector.extract_strided_slice %5 {offsets = [0, 0], sizes = [16, 16], strides = [1, 1]} : vector<18x18xf32> to vector<16x16xf32>
    %662 = vector.broadcast %660 : f32 to vector<16x16xf32>
    %663 = arith.mulf %662, %661 : vector<16x16xf32>
    %664 = arith.addf %659, %663 : vector<16x16xf32>
    %c127 = arith.constant 127 : index
    %665 = memref.load %arg2[%c127] : memref<144xf32, #tpu.memory_space<smem>>
    %666 = vector.extract_strided_slice %5 {offsets = [0, 1], sizes = [16, 16], strides = [1, 1]} : vector<18x18xf32> to vector<16x16xf32>
    %667 = vector.broadcast %665 : f32 to vector<16x16xf32>
    %668 = arith.mulf %667, %666 : vector<16x16xf32>
    %669 = arith.addf %664, %668 : vector<16x16xf32>
    %c128 = arith.constant 128 : index
    %670 = memref.load %arg2[%c128] : memref<144xf32, #tpu.memory_space<smem>>
    %671 = vector.extract_strided_slice %5 {offsets = [0, 2], sizes = [16, 16], strides = [1, 1]} : vector<18x18xf32> to vector<16x16xf32>
    %672 = vector.broadcast %670 : f32 to vector<16x16xf32>
    %673 = arith.mulf %672, %671 : vector<16x16xf32>
    %674 = arith.addf %669, %673 : vector<16x16xf32>
    %c129 = arith.constant 129 : index
    %675 = memref.load %arg2[%c129] : memref<144xf32, #tpu.memory_space<smem>>
    %676 = vector.extract_strided_slice %5 {offsets = [1, 0], sizes = [16, 16], strides = [1, 1]} : vector<18x18xf32> to vector<16x16xf32>
    %677 = vector.broadcast %675 : f32 to vector<16x16xf32>
    %678 = arith.mulf %677, %676 : vector<16x16xf32>
    %679 = arith.addf %674, %678 : vector<16x16xf32>
    %c130 = arith.constant 130 : index
    %680 = memref.load %arg2[%c130] : memref<144xf32, #tpu.memory_space<smem>>
    %681 = vector.extract_strided_slice %5 {offsets = [1, 1], sizes = [16, 16], strides = [1, 1]} : vector<18x18xf32> to vector<16x16xf32>
    %682 = vector.broadcast %680 : f32 to vector<16x16xf32>
    %683 = arith.mulf %682, %681 : vector<16x16xf32>
    %684 = arith.addf %679, %683 : vector<16x16xf32>
    %c131 = arith.constant 131 : index
    %685 = memref.load %arg2[%c131] : memref<144xf32, #tpu.memory_space<smem>>
    %686 = vector.extract_strided_slice %5 {offsets = [1, 2], sizes = [16, 16], strides = [1, 1]} : vector<18x18xf32> to vector<16x16xf32>
    %687 = vector.broadcast %685 : f32 to vector<16x16xf32>
    %688 = arith.mulf %687, %686 : vector<16x16xf32>
    %689 = arith.addf %684, %688 : vector<16x16xf32>
    %c132 = arith.constant 132 : index
    %690 = memref.load %arg2[%c132] : memref<144xf32, #tpu.memory_space<smem>>
    %691 = vector.extract_strided_slice %5 {offsets = [2, 0], sizes = [16, 16], strides = [1, 1]} : vector<18x18xf32> to vector<16x16xf32>
    %692 = vector.broadcast %690 : f32 to vector<16x16xf32>
    %693 = arith.mulf %692, %691 : vector<16x16xf32>
    %694 = arith.addf %689, %693 : vector<16x16xf32>
    %c133 = arith.constant 133 : index
    %695 = memref.load %arg2[%c133] : memref<144xf32, #tpu.memory_space<smem>>
    %696 = vector.extract_strided_slice %5 {offsets = [2, 1], sizes = [16, 16], strides = [1, 1]} : vector<18x18xf32> to vector<16x16xf32>
    %697 = vector.broadcast %695 : f32 to vector<16x16xf32>
    %698 = arith.mulf %697, %696 : vector<16x16xf32>
    %699 = arith.addf %694, %698 : vector<16x16xf32>
    %c134 = arith.constant 134 : index
    %700 = memref.load %arg2[%c134] : memref<144xf32, #tpu.memory_space<smem>>
    %701 = vector.extract_strided_slice %5 {offsets = [2, 2], sizes = [16, 16], strides = [1, 1]} : vector<18x18xf32> to vector<16x16xf32>
    %702 = vector.broadcast %700 : f32 to vector<16x16xf32>
    %703 = arith.mulf %702, %701 : vector<16x16xf32>
    %704 = arith.addf %699, %703 : vector<16x16xf32>
    %c135 = arith.constant 135 : index
    %705 = memref.load %arg2[%c135] : memref<144xf32, #tpu.memory_space<smem>>
    %706 = vector.extract_strided_slice %7 {offsets = [0, 0], sizes = [16, 16], strides = [1, 1]} : vector<18x18xf32> to vector<16x16xf32>
    %707 = vector.broadcast %705 : f32 to vector<16x16xf32>
    %708 = arith.mulf %707, %706 : vector<16x16xf32>
    %709 = arith.addf %704, %708 : vector<16x16xf32>
    %c136 = arith.constant 136 : index
    %710 = memref.load %arg2[%c136] : memref<144xf32, #tpu.memory_space<smem>>
    %711 = vector.extract_strided_slice %7 {offsets = [0, 1], sizes = [16, 16], strides = [1, 1]} : vector<18x18xf32> to vector<16x16xf32>
    %712 = vector.broadcast %710 : f32 to vector<16x16xf32>
    %713 = arith.mulf %712, %711 : vector<16x16xf32>
    %714 = arith.addf %709, %713 : vector<16x16xf32>
    %c137 = arith.constant 137 : index
    %715 = memref.load %arg2[%c137] : memref<144xf32, #tpu.memory_space<smem>>
    %716 = vector.extract_strided_slice %7 {offsets = [0, 2], sizes = [16, 16], strides = [1, 1]} : vector<18x18xf32> to vector<16x16xf32>
    %717 = vector.broadcast %715 : f32 to vector<16x16xf32>
    %718 = arith.mulf %717, %716 : vector<16x16xf32>
    %719 = arith.addf %714, %718 : vector<16x16xf32>
    %c138 = arith.constant 138 : index
    %720 = memref.load %arg2[%c138] : memref<144xf32, #tpu.memory_space<smem>>
    %721 = vector.extract_strided_slice %7 {offsets = [1, 0], sizes = [16, 16], strides = [1, 1]} : vector<18x18xf32> to vector<16x16xf32>
    %722 = vector.broadcast %720 : f32 to vector<16x16xf32>
    %723 = arith.mulf %722, %721 : vector<16x16xf32>
    %724 = arith.addf %719, %723 : vector<16x16xf32>
    %c139 = arith.constant 139 : index
    %725 = memref.load %arg2[%c139] : memref<144xf32, #tpu.memory_space<smem>>
    %726 = vector.extract_strided_slice %7 {offsets = [1, 1], sizes = [16, 16], strides = [1, 1]} : vector<18x18xf32> to vector<16x16xf32>
    %727 = vector.broadcast %725 : f32 to vector<16x16xf32>
    %728 = arith.mulf %727, %726 : vector<16x16xf32>
    %729 = arith.addf %724, %728 : vector<16x16xf32>
    %c140 = arith.constant 140 : index
    %730 = memref.load %arg2[%c140] : memref<144xf32, #tpu.memory_space<smem>>
    %731 = vector.extract_strided_slice %7 {offsets = [1, 2], sizes = [16, 16], strides = [1, 1]} : vector<18x18xf32> to vector<16x16xf32>
    %732 = vector.broadcast %730 : f32 to vector<16x16xf32>
    %733 = arith.mulf %732, %731 : vector<16x16xf32>
    %734 = arith.addf %729, %733 : vector<16x16xf32>
    %c141 = arith.constant 141 : index
    %735 = memref.load %arg2[%c141] : memref<144xf32, #tpu.memory_space<smem>>
    %736 = vector.extract_strided_slice %7 {offsets = [2, 0], sizes = [16, 16], strides = [1, 1]} : vector<18x18xf32> to vector<16x16xf32>
    %737 = vector.broadcast %735 : f32 to vector<16x16xf32>
    %738 = arith.mulf %737, %736 : vector<16x16xf32>
    %739 = arith.addf %734, %738 : vector<16x16xf32>
    %c142 = arith.constant 142 : index
    %740 = memref.load %arg2[%c142] : memref<144xf32, #tpu.memory_space<smem>>
    %741 = vector.extract_strided_slice %7 {offsets = [2, 1], sizes = [16, 16], strides = [1, 1]} : vector<18x18xf32> to vector<16x16xf32>
    %742 = vector.broadcast %740 : f32 to vector<16x16xf32>
    %743 = arith.mulf %742, %741 : vector<16x16xf32>
    %744 = arith.addf %739, %743 : vector<16x16xf32>
    %c143 = arith.constant 143 : index
    %745 = memref.load %arg2[%c143] : memref<144xf32, #tpu.memory_space<smem>>
    %746 = vector.extract_strided_slice %7 {offsets = [2, 2], sizes = [16, 16], strides = [1, 1]} : vector<18x18xf32> to vector<16x16xf32>
    %747 = vector.broadcast %745 : f32 to vector<16x16xf32>
    %748 = arith.mulf %747, %746 : vector<16x16xf32>
    %749 = arith.addf %744, %748 : vector<16x16xf32>
    %c3_34 = arith.constant 3 : index
    %750 = memref.load %arg3[%c3_34] : memref<4xf32, #tpu.memory_space<smem>>
    %751 = vector.broadcast %750 : f32 to vector<16x16xf32>
    %752 = arith.addf %749, %751 : vector<16x16xf32>
    %c0_35 = arith.constant 0 : index
    %c3_36 = arith.constant 3 : index
    %c0_37 = arith.constant 0 : index
    %c0_38 = arith.constant 0 : index
    %753 = vector.load %arg4[%c0_35, %c3_36, %c0_37, %c0_38] : memref<1x4x16x16xf32, #tpu.memory_space<vmem>>, vector<1x1x16x16xf32>
    %754 = vector.shape_cast %753 : vector<1x1x16x16xf32> to vector<16x16xf32>
    %755 = vector.shape_cast %752 : vector<16x16xf32> to vector<1x1x16x16xf32>
    tpu.vector_store %arg4[%c0_35, %c3_36, %c0_37, %c0_38], %755 {strides = array<i32>} : memref<1x4x16x16xf32, #tpu.memory_space<vmem>>, vector<1x1x16x16xf32>,
    return
  }
  func.func @transform_0(%arg0: i32) -> (i32, i32, i32, i32) {
    %c0_i32 = arith.constant 0 : i32
    %c0_i32_0 = arith.constant 0 : i32
    %c0_i32_1 = arith.constant 0 : i32
    %c0_i32_2 = arith.constant 0 : i32
    return %arg0, %c0_i32, %c0_i32_0, %c0_i32_1 : i32, i32, i32, i32
  }
  func.func @transform_1(%arg0: i32) -> i32 {
    %c0_i32 = arith.constant 0 : i32
    %c0_i32_0 = arith.constant 0 : i32
    return %c0_i32 : i32
  }
  func.func @transform_2(%arg0: i32) -> i32 {
    %c0_i32 = arith.constant 0 : i32
    %c0_i32_0 = arith.constant 0 : i32
    return %c0_i32 : i32
  }
  func.func @transform_3(%arg0: i32) -> (i32, i32, i32, i32) {
    %c0_i32 = arith.constant 0 : i32
    %c0_i32_0 = arith.constant 0 : i32
    %c0_i32_1 = arith.constant 0 : i32
    %c0_i32_2 = arith.constant 0 : i32
    return %arg0, %c0_i32, %c0_i32_0, %c0_i32_1 : i32, i32, i32, i32
  }
}

</mosaic_0001>

<llo_original>
// kernel: uvit_forward.20
$region0: #{uvit_forward.20}
  #allocation0 [shape = 'u32[]', space=smem, size = 0x4, offset = 0x4, fixed_abs, tag = 'smem constant byte address 0x4 - core index']
  #allocation1 [shape = 'u32[72,128]{1,0:T(1,128)}', space=vmem, size = 0x9000, scoped, tag = 'internal scratch']
  %s0 = inlined_call_operand.vmem [shape: f32[32,64], index: 0, kind: input, shape index: {}]
  %s1 = inlined_call_operand.vmem [shape: bf16[64,64], index: 1, kind: input, shape index: {}]
  %s2 = inlined_call_operand.vmem [shape: f32[1,64], index: 2, kind: input, shape index: {}]
  %s3 = inlined_call_operand.vmem [shape: f32[32,64], index: 3, kind: output, shape index: {}]
  %s4 = sld [smem:[#allocation0]]
  $region22: #{uvit_forward.20} parent=0
    _
  %s6 = ssub.s32 1, %s4
  %s7 = scalar_select 0, %s6, %s4
  // Predicated region
  $region2: #{uvit_forward.20} parent=0 // pred_check
    _
  $region3: #{uvit_forward.20} parent=0 // pred_check_branch
    %9 = sbr.rel (0) target = $region5
  $region4: #{uvit_forward.20} parent=0 // pred_region
    _
  $region5: #{uvit_forward.20} parent=0 // pred_fallthru
    _
  // Predicated region
  $region6: #{uvit_forward.20} parent=0 // pred_check
    _
  $region7: #{uvit_forward.20} parent=0 // pred_check_branch
    %11 = sbr.rel (0) target = $region9
  $region8: #{uvit_forward.20} parent=0 // pred_region
    _
  $region9: #{uvit_forward.20} parent=0 // pred_fallthru
    _
  // Predicated region
  $region10: #{uvit_forward.20} parent=0 // pred_check
    _
  $region11: #{uvit_forward.20} parent=0 // pred_check_branch
    %13 = sbr.rel (0) target = $region13
  $region12: #{uvit_forward.20} parent=0 // pred_region
    _
  $region13: #{uvit_forward.20} parent=0 // pred_fallthru
    _
  %v15 = vld [vmem:[%s0] sm:$0xff]
  %v16 = vld [vmem:[%s0 + $0x8] sm:$0xff]
  %v17 = vld [vmem:[%s0 + $0x10] sm:$0xff]
  %v18 = vld [vmem:[%s0 + $0x18] sm:$0xff]
  %v19 = vpack.c.bf16 %v16, %v15
  %v20 = vpack.c.bf16 %v18, %v17
  %v21 = vld [vmem:[%s1] sm:$0xf]
  %v22 = vld [vmem:[%s1 + $0x4] sm:$0xf]
  %v23 = vld [vmem:[%s1 + $0x8] sm:$0xf]
  %v24 = vld [vmem:[%s1 + $0xc] sm:$0xf]
  %v25 = vld [vmem:[%s1 + $0x10] sm:$0xf]
  %v26 = vld [vmem:[%s1 + $0x14] sm:$0xf]
  %v27 = vld [vmem:[%s1 + $0x18] sm:$0xf]
  %v28 = vld [vmem:[%s1 + $0x1c] sm:$0xf]
  %v29 = vld [vmem:[%s2] sm:$0x1]
  %v31 = vperm.slane %v29, 0
  %v41 = vunpack.c.l.b16 %v21
  %v42 = vunpack.c.l.b16 %v22
  %v43 = vunpack.c.l.b16 %v23
  %v44 = vunpack.c.l.b16 %v24
  %v45 = vunpack.c.l.b16 %v25
  %v46 = vunpack.c.l.b16 %v26
  %v47 = vunpack.c.l.b16 %v27
  %v48 = vunpack.c.l.b16 %v28
  %v49 = vpack.c.b16 %v42, %v41
  %v50 = vpack.c.b16 %v44, %v43
  %v51 = vpack.c.b16 %v46, %v45
  %v52 = vpack.c.b16 %v48, %v47
  %vm57 = vcmask 523264
  %v59 = vsel %vm57, %v19, 0
  %v62 = vsel %vm57, %v20, 0
  %64 = vmatpush.bf16.msra.mxu0 0
  %65 = vmatpush.bf16.msra.mxu0 0
  %66 = vmatpush.bf16.msra.mxu0 0
  %67 = vmatpush.bf16.msra.mxu0 0
  %68 = vmatpush.bf16.msra.mxu0 %v52
  %69 = vmatpush.bf16.msra.mxu0 %v51
  %70 = vmatpush.bf16.msra.mxu0 %v50
  %71 = vmatpush.bf16.msra.mxu0 %v49
  %72 = vmatmul.bf16.gmra.mxu0 %v59
  %v73 = vpop.f32.mrf.mxu0
  %v74 = vadd.f32 %v31, %v73
  %v75 = vpop.f32.mrf.mxu0
  %v76 = vadd.f32 %v31, %v75
  %77 = vmatmul.bf16.gmra.mxu0 %v62
  %v78 = vpop.f32.mrf.mxu0
  %v79 = vadd.f32 %v31, %v78
  %v80 = vpop.f32.mrf.mxu0
  %v81 = vadd.f32 %v31, %v80
  %82 = vdwg.mxu0
  %83 = vst.msk [vmem:[%s3] sm:$0xff] %vm57, %v74
  %84 = vst.msk [vmem:[%s3 + $0x8] sm:$0xff] %vm57, %v76
  %85 = vst.msk [vmem:[%s3 + $0x10] sm:$0xff] %vm57, %v79
  %86 = vst.msk [vmem:[%s3 + $0x18] sm:$0xff] %vm57, %v81
  // Predicated region
  $region14: #{uvit_forward.20} parent=0 // pred_check
    _
  $region15: #{uvit_forward.20} parent=0 // pred_check_branch
    %88 = sbr.rel (0) target = $region17
  $region16: #{uvit_forward.20} parent=0 // pred_region
    _
  $region17: #{uvit_forward.20} parent=0 // pred_fallthru
    _
  // Predicated region
  $region18: #{uvit_forward.20} parent=0 // pred_check
    _
  $region19: #{uvit_forward.20} parent=0 // pred_check_branch
    %90 = sbr.rel (0) target = $region21
  $region20: #{uvit_forward.20} parent=0 // pred_region
    _
  $region21: #{uvit_forward.20} parent=0 // pred_fallthru
    _

// kernel: uvit_forward.21
$region0: #{uvit_forward.21}
  #allocation0 [shape = 'u32[]', space=smem, size = 0x4, offset = 0x4, fixed_abs, tag = 'smem constant byte address 0x4 - core index']
  #allocation1 [shape = 'u32[72,128]{1,0:T(1,128)}', space=vmem, size = 0x9000, scoped, tag = 'internal scratch']
  %s0 = inlined_call_operand.vmem [shape: f32[14,32], index: 0, kind: input, shape index: {}]
  %s1 = inlined_call_operand.vmem [shape: bf16[32,64], index: 1, kind: input, shape index: {}]
  %s2 = inlined_call_operand.vmem [shape: f32[1,64], index: 2, kind: input, shape index: {}]
  %s3 = inlined_call_operand.vmem [shape: f32[14,64], index: 3, kind: output, shape index: {}]
  %s4 = sld [smem:[#allocation0]]
  $region22: #{uvit_forward.21} parent=0
    _
  %s6 = ssub.s32 1, %s4
  %s7 = scalar_select 0, %s6, %s4
  // Predicated region
  $region2: #{uvit_forward.21} parent=0 // pred_check
    _
  $region3: #{uvit_forward.21} parent=0 // pred_check_branch
    %9 = sbr.rel (0) target = $region5
  $region4: #{uvit_forward.21} parent=0 // pred_region
    _
  $region5: #{uvit_forward.21} parent=0 // pred_fallthru
    _
  // Predicated region
  $region6: #{uvit_forward.21} parent=0 // pred_check
    _
  $region7: #{uvit_forward.21} parent=0 // pred_check_branch
    %11 = sbr.rel (0) target = $region9
  $region8: #{uvit_forward.21} parent=0 // pred_region
    _
  $region9: #{uvit_forward.21} parent=0 // pred_fallthru
    _
  // Predicated region
  $region10: #{uvit_forward.21} parent=0 // pred_check
    _
  $region11: #{uvit_forward.21} parent=0 // pred_check_branch
    %13 = sbr.rel (0) target = $region13
  $region12: #{uvit_forward.21} parent=0 // pred_region
    _
  $region13: #{uvit_forward.21} parent=0 // pred_fallthru
    _
  %v15 = vld [vmem:[%s0] sm:$0xff]
  %v16 = vld [vmem:[%s0 + $0x8] sm:$0x3f]
  %v17 = vpack.c.bf16 %v16, %v15
  %v18 = vld [vmem:[%s1] sm:$0xf]
  %v19 = vld [vmem:[%s1 + $0x4] sm:$0xf]
  %v20 = vld [vmem:[%s1 + $0x8] sm:$0xf]
  %v21 = vld [vmem:[%s1 + $0xc] sm:$0xf]
  %v22 = vld [vmem:[%s2] sm:$0x1]
  %v24 = vperm.slane %v22, 0
  %v30 = vunpack.c.l.b16 %v18
  %v31 = vunpack.c.l.b16 %v19
  %v32 = vunpack.c.l.b16 %v20
  %v33 = vunpack.c.l.b16 %v21
  %v34 = vpack.c.b16 %v31, %v30
  %v35 = vpack.c.b16 %v33, %v32
  %vm38 = vcmask 261120
  %v40 = vsel %vm38, %v17, 0
  %42 = vmatpush.bf16.msra.mxu0 0
  %43 = vmatpush.bf16.msra.mxu0 0
  %44 = vmatpush.bf16.msra.mxu0 0
  %45 = vmatpush.bf16.msra.mxu0 0
  %46 = vmatpush.bf16.msra.mxu0 0
  %47 = vmatpush.bf16.msra.mxu0 0
  %48 = vmatpush.bf16.msra.mxu0 %v35
  %49 = vmatpush.bf16.msra.mxu0 %v34
  %50 = vmatmul.bf16.gmra.mxu0 %v40
  %v51 = vpop.f32.mrf.mxu0
  %v52 = vadd.f32 %v24, %v51
  %v53 = vpop.f32.mrf.mxu0
  %v54 = vadd.f32 %v24, %v53
  %55 = vdwg.mxu0
  %vm56 = vcmask 523264
  %57 = vst.msk [vmem:[%s3] sm:$0xff] %vm56, %v52
  %vm58 = vcmask 521216
  %59 = vst.msk [vmem:[%s3 + $0x8] sm:$0x3f] %vm58, %v54
  // Predicated region
  $region14: #{uvit_forward.21} parent=0 // pred_check
    _
  $region15: #{uvit_forward.21} parent=0 // pred_check_branch
    %61 = sbr.rel (0) target = $region17
  $region16: #{uvit_forward.21} parent=0 // pred_region
    _
  $region17: #{uvit_forward.21} parent=0 // pred_fallthru
    _
  // Predicated region
  $region18: #{uvit_forward.21} parent=0 // pred_check
    _
  $region19: #{uvit_forward.21} parent=0 // pred_check_branch
    %63 = sbr.rel (0) target = $region21
  $region20: #{uvit_forward.21} parent=0 // pred_region
    _
  $region21: #{uvit_forward.21} parent=0 // pred_fallthru
    _

// kernel: uvit_forward.22
$region0: #{uvit_forward.22}
  #allocation0 [shape = 'u32[]', space=smem, size = 0x4, offset = 0x4, fixed_abs, tag = 'smem constant byte address 0x4 - core index']
  #allocation1 [shape = 'u32[72,128]{1,0:T(1,128)}', space=vmem, size = 0x9000, scoped, tag = 'internal scratch']
  %s0 = inlined_call_operand.vmem [shape: bf16[48,64], index: 0, kind: input, shape index: {}]
  %s1 = inlined_call_operand.vmem [shape: f32[1,64], index: 1, kind: input, shape index: {}]
  %s2 = inlined_call_operand.vmem [shape: f32[1,64], index: 2, kind: input, shape index: {}]
  %s3 = inlined_call_operand.vmem [shape: bf16[64,192], index: 3, kind: input, shape index: {}]
  %s4 = inlined_call_operand.vmem [shape: bf16[48,192], index: 4, kind: output, shape index: {}]
  %s5 = sld [smem:[#allocation0]]
  $region26: #{uvit_forward.22} parent=0
    _
  %s7 = ssub.s32 1, %s5
  %s8 = scalar_select 0, %s7, %s5
  // Predicated region
  $region2: #{uvit_forward.22} parent=0 // pred_check
    _
  $region3: #{uvit_forward.22} parent=0 // pred_check_branch
    %10 = sbr.rel (0) target = $region5
  $region4: #{uvit_forward.22} parent=0 // pred_region
    _
  $region5: #{uvit_forward.22} parent=0 // pred_fallthru
    _
  // Predicated region
  $region6: #{uvit_forward.22} parent=0 // pred_check
    _
  $region7: #{uvit_forward.22} parent=0 // pred_check_branch
    %12 = sbr.rel (0) target = $region9
  $region8: #{uvit_forward.22} parent=0 // pred_region
    _
  $region9: #{uvit_forward.22} parent=0 // pred_fallthru
    _
  // Predicated region
  $region10: #{uvit_forward.22} parent=0 // pred_check
    _
  $region11: #{uvit_forward.22} parent=0 // pred_check_branch
    %14 = sbr.rel (0) target = $region13
  $region12: #{uvit_forward.22} parent=0 // pred_region
    _
  $region13: #{uvit_forward.22} parent=0 // pred_fallthru
    _
  // Predicated region
  $region14: #{uvit_forward.22} parent=0 // pred_check
    _
  $region15: #{uvit_forward.22} parent=0 // pred_check_branch
    %16 = sbr.rel (0) target = $region17
  $region16: #{uvit_forward.22} parent=0 // pred_region
    _
  $region17: #{uvit_forward.22} parent=0 // pred_fallthru
    _
  %v18 = vld [vmem:[%s0] sm:$0xf]
  %v19 = vld [vmem:[%s0 + $0x4] sm:$0xf]
  %v20 = vld [vmem:[%s0 + $0x8] sm:$0xf]
  %v21 = vld [vmem:[%s0 + $0xc] sm:$0xf]
  %v22 = vld [vmem:[%s0 + $0x10] sm:$0xf]
  %v23 = vld [vmem:[%s0 + $0x14] sm:$0xf]
  %v24 = vunpack.c.l.bf16 %v18
  %v25 = vunpack.c.l.bf16 %v19
  %v26 = vunpack.c.l.bf16 %v20
  %v27 = vunpack.c.l.bf16 %v21
  %v28 = vunpack.c.l.bf16 %v22
  %v29 = vunpack.c.l.bf16 %v23
  %vm30 = vcmask 523264
  %v31 = vsel %vm30, %v24, 0.0
  %32 = vadd.xlane.f32.xlu0 %v31
  %v33 = vpop.xlane.xlu0 %32
  %v34 = vsel %vm30, %v25, 0.0
  %35 = vadd.xlane.f32.xlu0 %v34
  %v36 = vpop.xlane.xlu0 %35
  %v37 = vsel %vm30, %v26, 0.0
  %38 = vadd.xlane.f32.xlu0 %v37
  %v39 = vpop.xlane.xlu0 %38
  %v40 = vsel %vm30, %v27, 0.0
  %41 = vadd.xlane.f32.xlu0 %v40
  %v42 = vpop.xlane.xlu0 %41
  %v43 = vsel %vm30, %v28, 0.0
  %44 = vadd.xlane.f32.xlu0 %v43
  %v45 = vpop.xlane.xlu0 %44
  %v46 = vsel %vm30, %v29, 0.0
  %47 = vadd.xlane.f32.xlu0 %v46
  %v48 = vpop.xlane.xlu0 %47
  %v49 = vrcp.pop 64.0
  %v50 = vmul.f32 64.0, %v49
  %v51 = vsub.f32 1.0, %v50
  %v52 = vmul.f32 %v49, %v51
  %v53 = vadd.f32 %v49, %v52
  %vm54 = vweird.f32 %v49
  %v55 = vsel %vm54, %v49, %v53
  %v56 = vmul.f32 %v33, %v55
  %v57 = vmul.f32 %v36, %v55
  %v58 = vmul.f32 %v39, %v55
  %v59 = vmul.f32 %v42, %v55
  %v60 = vmul.f32 %v45, %v55
  %v61 = vmul.f32 %v48, %v55
  %v62 = vsub.f32 %v24, %v56
  %v63 = vsub.f32 %v25, %v57
  %v64 = vsub.f32 %v26, %v58
  %v65 = vsub.f32 %v27, %v59
  %v66 = vsub.f32 %v28, %v60
  %v67 = vsub.f32 %v29, %v61
  %v68 = vmul.f32 %v62, %v62
  %v69 = vmul.f32 %v63, %v63
  %v70 = vmul.f32 %v64, %v64
  %v71 = vmul.f32 %v65, %v65
  %v72 = vmul.f32 %v66, %v66
  %v73 = vmul.f32 %v67, %v67
  %v74 = vsel %vm30, %v68, 0.0
  %75 = vadd.xlane.f32.xlu0 %v74
  %v76 = vpop.xlane.xlu0 %75
  %v77 = vsel %vm30, %v69, 0.0
  %78 = vadd.xlane.f32.xlu0 %v77
  %v79 = vpop.xlane.xlu0 %78
  %v80 = vsel %vm30, %v70, 0.0
  %81 = vadd.xlane.f32.xlu0 %v80
  %v82 = vpop.xlane.xlu0 %81
  %v83 = vsel %vm30, %v71, 0.0
  %84 = vadd.xlane.f32.xlu0 %v83
  %v85 = vpop.xlane.xlu0 %84
  %v86 = vsel %vm30, %v72, 0.0
  %87 = vadd.xlane.f32.xlu0 %v86
  %v88 = vpop.xlane.xlu0 %87
  %v89 = vsel %vm30, %v73, 0.0
  %90 = vadd.xlane.f32.xlu0 %v89
  %v91 = vpop.xlane.xlu0 %90
  %v92 = vmul.f32 %v76, %v55
  %v93 = vmul.f32 %v79, %v55
  %v94 = vmul.f32 %v82, %v55
  %v95 = vmul.f32 %v85, %v55
  %v96 = vmul.f32 %v88, %v55
  %v97 = vmul.f32 %v91, %v55
  %v98 = vadd.f32 %v92, 1e-05
  %v99 = vadd.f32 %v93, 1e-05
  %v100 = vadd.f32 %v94, 1e-05
  %v101 = vadd.f32 %v95, 1e-05
  %v102 = vadd.f32 %v96, 1e-05
  %v103 = vadd.f32 %v97, 1e-05
  %v104 = vrsqrt.pop %v98
  %v105 = vmul.f32 %v104, %v98
  %v106 = vmul.f32 %v105, %v104
  %v107 = vmul.f32 0.5, %v106
  %v108 = vsub.f32 1.5, %v107
  %v109 = vmul.f32 %v104, %v108
  %vm110 = vweird.f32 %v98
  %vm111 = vweird.f32 %v104
  %vm112 = vmor %vm110, %vm111
  %v113 = vsel %vm112, %v104, %v109
  %v114 = vrsqrt.pop %v99
  %v115 = vmul.f32 %v114, %v99
  %v116 = vmul.f32 %v115, %v114
  %v117 = vmul.f32 0.5, %v116
  %v118 = vsub.f32 1.5, %v117
  %v119 = vmul.f32 %v114, %v118
  %vm120 = vweird.f32 %v99
  %vm121 = vweird.f32 %v114
  %vm122 = vmor %vm120, %vm121
  %v123 = vsel %vm122, %v114, %v119
  %v124 = vrsqrt.pop %v100
  %v125 = vmul.f32 %v124, %v100
  %v126 = vmul.f32 %v125, %v124
  %v127 = vmul.f32 0.5, %v126
  %v128 = vsub.f32 1.5, %v127
  %v129 = vmul.f32 %v124, %v128
  %vm130 = vweird.f32 %v100
  %vm131 = vweird.f32 %v124
  %vm132 = vmor %vm130, %vm131
  %v133 = vsel %vm132, %v124, %v129
  %v134 = vrsqrt.pop %v101
  %v135 = vmul.f32 %v134, %v101
  %v136 = vmul.f32 %v135, %v134
  %v137 = vmul.f32 0.5, %v136
  %v138 = vsub.f32 1.5, %v137
  %v139 = vmul.f32 %v134, %v138
  %vm140 = vweird.f32 %v101
  %vm141 = vweird.f32 %v134
  %vm142 = vmor %vm140, %vm141
  %v143 = vsel %vm142, %v134, %v139
  %v144 = vrsqrt.pop %v102
  %v145 = vmul.f32 %v144, %v102
  %v146 = vmul.f32 %v145, %v144
  %v147 = vmul.f32 0.5, %v146
  %v148 = vsub.f32 1.5, %v147
  %v149 = vmul.f32 %v144, %v148
  %vm150 = vweird.f32 %v102
  %vm151 = vweird.f32 %v144
  %vm152 = vmor %vm150, %vm151
  %v153 = vsel %vm152, %v144, %v149
  %v154 = vrsqrt.pop %v103
  %v155 = vmul.f32 %v154, %v103
  %v156 = vmul.f32 %v155, %v154
  %v157 = vmul.f32 0.5, %v156
  %v158 = vsub.f32 1.5, %v157
  %v159 = vmul.f32 %v154, %v158
  %vm160 = vweird.f32 %v103
  %vm161 = vweird.f32 %v154
  %vm162 = vmor %vm160, %vm161
  %v163 = vsel %vm162, %v154, %v159
  %v164 = vmul.f32 %v62, %v113
  %v165 = vmul.f32 %v63, %v123
  %v166 = vmul.f32 %v64, %v133
  %v167 = vmul.f32 %v65, %v143
  %v168 = vmul.f32 %v66, %v153
  %v169 = vmul.f32 %v67, %v163
  %v170 = vld [vmem:[%s1] sm:$0x1]
  %v172 = vperm.slane %v170, 0
  %v174 = vmul.f32 %v164, %v172
  %v175 = vmul.f32 %v165, %v172
  %v176 = vmul.f32 %v166, %v172
  %v177 = vmul.f32 %v167, %v172
  %v178 = vmul.f32 %v168, %v172
  %v179 = vmul.f32 %v169, %v172
  %v180 = vld [vmem:[%s2] sm:$0x1]
  %v182 = vperm.slane %v180, 0
  %v184 = vadd.f32 %v174, %v182
  %v185 = vadd.f32 %v175, %v182
  %v186 = vadd.f32 %v176, %v182
  %v187 = vadd.f32 %v177, %v182
  %v188 = vadd.f32 %v178, %v182
  %v189 = vadd.f32 %v179, %v182
  %v190 = vpack.c.bf16 %v185, %v184
  %v191 = vpack.c.bf16 %v187, %v186
  %v192 = vpack.c.bf16 %v189, %v188
  %v193 = vld [vmem:[%s3] sm:$0xff]
  %v194 = vld [vmem:[%s3 + $0x8] sm:$0xff]
  %v195 = vld [vmem:[%s3 + $0x10] sm:$0xff]
  %v196 = vld [vmem:[%s3 + $0x18] sm:$0xff]
  %v197 = vld [vmem:[%s3 + $0x20] sm:$0xff]
  %v198 = vld [vmem:[%s3 + $0x28] sm:$0xff]
  %v199 = vld [vmem:[%s3 + $0x30] sm:$0xff]
  %v200 = vld [vmem:[%s3 + $0x38] sm:$0xff]
  %v209 = vunpack.c.l.b16 %v193
  %v210 = vunpack.c.h.b16 %v193
  %v211 = vunpack.c.l.b16 %v194
  %v212 = vunpack.c.h.b16 %v194
  %v213 = vunpack.c.l.b16 %v195
  %v214 = vunpack.c.h.b16 %v195
  %v215 = vunpack.c.l.b16 %v196
  %v216 = vunpack.c.h.b16 %v196
  %v217 = vunpack.c.l.b16 %v197
  %v218 = vunpack.c.h.b16 %v197
  %v219 = vunpack.c.l.b16 %v198
  %v220 = vunpack.c.h.b16 %v198
  %v221 = vunpack.c.l.b16 %v199
  %v222 = vunpack.c.h.b16 %v199
  %v223 = vunpack.c.l.b16 %v200
  %v224 = vunpack.c.h.b16 %v200
  %v225 = vpack.c.b16 %v211, %v209
  %v226 = vpack.c.b16 %v212, %v210
  %v227 = vpack.c.b16 %v215, %v213
  %v228 = vpack.c.b16 %v216, %v214
  %v229 = vpack.c.b16 %v219, %v217
  %v230 = vpack.c.b16 %v220, %v218
  %v231 = vpack.c.b16 %v223, %v221
  %v232 = vpack.c.b16 %v224, %v222
  %v242 = vsel %vm30, %v190, 0
  %v245 = vsel %vm30, %v191, 0
  %v248 = vsel %vm30, %v192, 0
  %250 = vmatpush.bf16.msra.mxu0 0
  %251 = vmatpush.bf16.msra.mxu0 0
  %252 = vmatpush.bf16.msra.mxu0 0
  %253 = vmatpush.bf16.msra.mxu0 0
  %254 = vmatpush.bf16.msra.mxu0 %v231
  %255 = vmatpush.bf16.msra.mxu0 %v229
  %256 = vmatpush.bf16.msra.mxu0 %v227
  %257 = vmatpush.bf16.msra.mxu0 %v225
  %258 = vmatmul.bf16.gmra.mxu0 %v242
  %v259 = vpop.f32.mrf.mxu0
  %v260 = vadd.f32 0.0, %v259
  %v261 = vpop.f32.mrf.mxu0
  %v262 = vadd.f32 0.0, %v261
  %263 = vmatmul.bf16.gmra.mxu0 %v245
  %v264 = vpop.f32.mrf.mxu0
  %v265 = vadd.f32 0.0, %v264
  %v266 = vpop.f32.mrf.mxu0
  %v267 = vadd.f32 0.0, %v266
  %268 = vmatmul.bf16.gmra.mxu0 %v248
  %v269 = vpop.f32.mrf.mxu0
  %v270 = vadd.f32 0.0, %v269
  %v271 = vpop.f32.mrf.mxu0
  %v272 = vadd.f32 0.0, %v271
  %273 = vdwg.mxu0
  %274 = vmatpush.bf16.msra.mxu0 0
  %275 = vmatpush.bf16.msra.mxu0 0
  %276 = vmatpush.bf16.msra.mxu0 0
  %277 = vmatpush.bf16.msra.mxu0 0
  %278 = vmatpush.bf16.msra.mxu0 %v232
  %279 = vmatpush.bf16.msra.mxu0 %v230
  %280 = vmatpush.bf16.msra.mxu0 %v228
  %281 = vmatpush.bf16.msra.mxu0 %v226
  %282 = vmatmul.bf16.gmra.mxu0 %v242
  %v283 = vpop.f32.mrf.mxu0
  %v284 = vadd.f32 0.0, %v283
  %v285 = vpop.f32.mrf.mxu0
  %v286 = vadd.f32 0.0, %v285
  %287 = vmatmul.bf16.gmra.mxu0 %v245
  %v288 = vpop.f32.mrf.mxu0
  %v289 = vadd.f32 0.0, %v288
  %v290 = vpop.f32.mrf.mxu0
  %v291 = vadd.f32 0.0, %v290
  %292 = vmatmul.bf16.gmra.mxu0 %v248
  %v293 = vpop.f32.mrf.mxu0
  %v294 = vadd.f32 0.0, %v293
  %v295 = vpop.f32.mrf.mxu0
  %v296 = vadd.f32 0.0, %v295
  %297 = vdwg.mxu0
  %v298 = vpack.c.bf16 %v284, %v260
  %v299 = vpack.c.bf16 %v286, %v262
  %v300 = vpack.c.bf16 %v289, %v265
  %v301 = vpack.c.bf16 %v291, %v267
  %v302 = vpack.c.bf16 %v294, %v270
  %v303 = vpack.c.bf16 %v296, %v272
  %vm304 = vcmask 1043456
  %vm305 = vcmask 523268
  %vm306 = vmor %vm305, %vm304
  %307 = vst.msk [vmem:[%s4] sm:$0xff] %vm306, %v298
  %308 = vst.msk [vmem:[%s4 + $0x8] sm:$0xff] %vm306, %v299
  %309 = vst.msk [vmem:[%s4 + $0x10] sm:$0xff] %vm306, %v300
  %310 = vst.msk [vmem:[%s4 + $0x18] sm:$0xff] %vm306, %v301
  %311 = vst.msk [vmem:[%s4 + $0x20] sm:$0xff] %vm306, %v302
  %312 = vst.msk [vmem:[%s4 + $0x28] sm:$0xff] %vm306, %v303
  // Predicated region
  $region18: #{uvit_forward.22} parent=0 // pred_check
    _
  $region19: #{uvit_forward.22} parent=0 // pred_check_branch
    %314 = sbr.rel (0) target = $region21
  $region20: #{uvit_forward.22} parent=0 // pred_region
    _
  $region21: #{uvit_forward.22} parent=0 // pred_fallthru
    _
  // Predicated region
  $region22: #{uvit_forward.22} parent=0 // pred_check
    _
  $region23: #{uvit_forward.22} parent=0 // pred_check_branch
    %316 = sbr.rel (0) target = $region25
  $region24: #{uvit_forward.22} parent=0 // pred_region
    _
  $region25: #{uvit_forward.22} parent=0 // pred_fallthru
    _

// kernel: uvit_forward.24
$region0: #{uvit_forward.24}
  #allocation0 [shape = 'u32[]', space=smem, size = 0x4, offset = 0x4, fixed_abs, tag = 'smem constant byte address 0x4 - core index']
  #allocation1 [shape = 'u32[72,128]{1,0:T(1,128)}', space=vmem, size = 0x9000, scoped, tag = 'internal scratch']
  %s0 = inlined_call_operand.vmem [shape: bf16[48,64], index: 0, kind: input, shape index: {}]
  %s1 = inlined_call_operand.vmem [shape: bf16[64,64], index: 1, kind: input, shape index: {}]
  %s2 = inlined_call_operand.vmem [shape: f32[1,64], index: 2, kind: input, shape index: {}]
  %s3 = inlined_call_operand.vmem [shape: bf16[48,64], index: 3, kind: input, shape index: {}]
  %s4 = inlined_call_operand.vmem [shape: bf16[48,64], index: 4, kind: output, shape index: {}]
  %s5 = sld [smem:[#allocation0]]
  $region26: #{uvit_forward.24} parent=0
    _
  %s7 = ssub.s32 1, %s5
  %s8 = scalar_select 0, %s7, %s5
  // Predicated region
  $region2: #{uvit_forward.24} parent=0 // pred_check
    _
  $region3: #{uvit_forward.24} parent=0 // pred_check_branch
    %10 = sbr.rel (0) target = $region5
  $region4: #{uvit_forward.24} parent=0 // pred_region
    _
  $region5: #{uvit_forward.24} parent=0 // pred_fallthru
    _
  // Predicated region
  $region6: #{uvit_forward.24} parent=0 // pred_check
    _
  $region7: #{uvit_forward.24} parent=0 // pred_check_branch
    %12 = sbr.rel (0) target = $region9
  $region8: #{uvit_forward.24} parent=0 // pred_region
    _
  $region9: #{uvit_forward.24} parent=0 // pred_fallthru
    _
  // Predicated region
  $region10: #{uvit_forward.24} parent=0 // pred_check
    _
  $region11: #{uvit_forward.24} parent=0 // pred_check_branch
    %14 = sbr.rel (0) target = $region13
  $region12: #{uvit_forward.24} parent=0 // pred_region
    _
  $region13: #{uvit_forward.24} parent=0 // pred_fallthru
    _
  // Predicated region
  $region14: #{uvit_forward.24} parent=0 // pred_check
    _
  $region15: #{uvit_forward.24} parent=0 // pred_check_branch
    %16 = sbr.rel (0) target = $region17
  $region16: #{uvit_forward.24} parent=0 // pred_region
    _
  $region17: #{uvit_forward.24} parent=0 // pred_fallthru
    _
  %v18 = vld [vmem:[%s0] sm:$0xf]
  %v19 = vld [vmem:[%s0 + $0x4] sm:$0xf]
  %v20 = vld [vmem:[%s0 + $0x8] sm:$0xf]
  %v21 = vld [vmem:[%s0 + $0xc] sm:$0xf]
  %v22 = vld [vmem:[%s0 + $0x10] sm:$0xf]
  %v23 = vld [vmem:[%s0 + $0x14] sm:$0xf]
  %v24 = vld [vmem:[%s1] sm:$0xf]
  %v25 = vld [vmem:[%s1 + $0x4] sm:$0xf]
  %v26 = vld [vmem:[%s1 + $0x8] sm:$0xf]
  %v27 = vld [vmem:[%s1 + $0xc] sm:$0xf]
  %v28 = vld [vmem:[%s1 + $0x10] sm:$0xf]
  %v29 = vld [vmem:[%s1 + $0x14] sm:$0xf]
  %v30 = vld [vmem:[%s1 + $0x18] sm:$0xf]
  %v31 = vld [vmem:[%s1 + $0x1c] sm:$0xf]
  %v32 = vld [vmem:[%s2] sm:$0x1]
  %v34 = vperm.slane %v32, 0
  %v42 = vunpack.c.l.b16 %v18
  %v43 = vunpack.c.l.b16 %v19
  %v44 = vunpack.c.l.b16 %v20
  %v45 = vunpack.c.l.b16 %v21
  %v46 = vunpack.c.l.b16 %v22
  %v47 = vunpack.c.l.b16 %v23
  %v48 = vpack.c.b16 %v43, %v42
  %v49 = vpack.c.b16 %v45, %v44
  %v50 = vpack.c.b16 %v47, %v46
  %v59 = vunpack.c.l.b16 %v24
  %v60 = vunpack.c.l.b16 %v25
  %v61 = vunpack.c.l.b16 %v26
  %v62 = vunpack.c.l.b16 %v27
  %v63 = vunpack.c.l.b16 %v28
  %v64 = vunpack.c.l.b16 %v29
  %v65 = vunpack.c.l.b16 %v30
  %v66 = vunpack.c.l.b16 %v31
  %v67 = vpack.c.b16 %v60, %v59
  %v68 = vpack.c.b16 %v62, %v61
  %v69 = vpack.c.b16 %v64, %v63
  %v70 = vpack.c.b16 %v66, %v65
  %vm75 = vcmask 523264
  %v77 = vsel %vm75, %v48, 0
  %v80 = vsel %vm75, %v49, 0
  %v83 = vsel %vm75, %v50, 0
  %85 = vmatpush.bf16.msra.mxu0 0
  %86 = vmatpush.bf16.msra.mxu0 0
  %87 = vmatpush.bf16.msra.mxu0 0
  %88 = vmatpush.bf16.msra.mxu0 0
  %89 = vmatpush.bf16.msra.mxu0 %v70
  %90 = vmatpush.bf16.msra.mxu0 %v69
  %91 = vmatpush.bf16.msra.mxu0 %v68
  %92 = vmatpush.bf16.msra.mxu0 %v67
  %93 = vmatmul.bf16.gmra.mxu0 %v77
  %v94 = vpop.f32.mrf.mxu0
  %v95 = vadd.f32 %v34, %v94
  %v96 = vpop.f32.mrf.mxu0
  %v97 = vadd.f32 %v34, %v96
  %98 = vmatmul.bf16.gmra.mxu0 %v80
  %v99 = vpop.f32.mrf.mxu0
  %v100 = vadd.f32 %v34, %v99
  %v101 = vpop.f32.mrf.mxu0
  %v102 = vadd.f32 %v34, %v101
  %103 = vmatmul.bf16.gmra.mxu0 %v83
  %v104 = vpop.f32.mrf.mxu0
  %v105 = vadd.f32 %v34, %v104
  %v106 = vpop.f32.mrf.mxu0
  %v107 = vadd.f32 %v34, %v106
  %108 = vdwg.mxu0
  %v109 = vld [vmem:[%s3] sm:$0xf]
  %v110 = vld [vmem:[%s3 + $0x4] sm:$0xf]
  %v111 = vld [vmem:[%s3 + $0x8] sm:$0xf]
  %v112 = vld [vmem:[%s3 + $0xc] sm:$0xf]
  %v113 = vld [vmem:[%s3 + $0x10] sm:$0xf]
  %v114 = vld [vmem:[%s3 + $0x14] sm:$0xf]
  %v115 = vunpack.c.l.bf16 %v109
  %v116 = vunpack.c.l.bf16 %v110
  %v117 = vunpack.c.l.bf16 %v111
  %v118 = vunpack.c.l.bf16 %v112
  %v119 = vunpack.c.l.bf16 %v113
  %v120 = vunpack.c.l.bf16 %v114
  %v121 = vadd.f32 %v95, %v115
  %v122 = vadd.f32 %v97, %v116
  %v123 = vadd.f32 %v100, %v117
  %v124 = vadd.f32 %v102, %v118
  %v125 = vadd.f32 %v105, %v119
  %v126 = vadd.f32 %v107, %v120
  %v127 = vpack.c.bf16 %v121, %v121
  %v128 = vpack.c.bf16 %v122, %v122
  %v129 = vpack.c.bf16 %v123, %v123
  %v130 = vpack.c.bf16 %v124, %v124
  %v131 = vpack.c.bf16 %v125, %v125
  %v132 = vpack.c.bf16 %v126, %v126
  %vm133 = vcmask 519168
  %134 = vst.msk [vmem:[%s4] sm:$0xf] %vm133, %v127
  %135 = vst.msk [vmem:[%s4 + $0x4] sm:$0xf] %vm133, %v128
  %136 = vst.msk [vmem:[%s4 + $0x8] sm:$0xf] %vm133, %v129
  %137 = vst.msk [vmem:[%s4 + $0xc] sm:$0xf] %vm133, %v130
  %138 = vst.msk [vmem:[%s4 + $0x10] sm:$0xf] %vm133, %v131
  %139 = vst.msk [vmem:[%s4 + $0x14] sm:$0xf] %vm133, %v132
  // Predicated region
  $region18: #{uvit_forward.24} parent=0 // pred_check
    _
  $region19: #{uvit_forward.24} parent=0 // pred_check_branch
    %141 = sbr.rel (0) target = $region21
  $region20: #{uvit_forward.24} parent=0 // pred_region
    _
  $region21: #{uvit_forward.24} parent=0 // pred_fallthru
    _
  // Predicated region
  $region22: #{uvit_forward.24} parent=0 // pred_check
    _
  $region23: #{uvit_forward.24} parent=0 // pred_check_branch
    %143 = sbr.rel (0) target = $region25
  $region24: #{uvit_forward.24} parent=0 // pred_region
    _
  $region25: #{uvit_forward.24} parent=0 // pred_fallthru
    _

// kernel: uvit_forward.23
$region0: #{uvit_forward.23}
  #allocation0 [shape = 'u32[]', space=smem, size = 0x4, offset = 0x4, fixed_abs, tag = 'smem constant byte address 0x4 - core index']
  #allocation1 [shape = 'u32[72,128]{1,0:T(1,128)}', space=vmem, size = 0x9000, scoped, tag = 'internal scratch']
  %s0 = inlined_call_operand.vmem [shape: bf16[2,24,192], index: 0, kind: input, shape index: {}]
  %s1 = inlined_call_operand.vmem [shape: bf16[2,24,64], index: 1, kind: output, shape index: {}]
  %s2 = sld [smem:[#allocation0]]
  $region37: #{uvit_forward.23} parent=0
    _
  %s4 = ssub.s32 1, %s2
  %s5 = scalar_select 0, %s4, %s2
  loop: start=0, step=1, limit=4
  $region2: #{uvit_forward.23} parent=0 // loop_pre_header
    _
  $region3: #{uvit_forward.23} parent=0 // loop_header
    %s7 = sphi 0, %s11
    %p8 = scmp.ge.s32.totalorder %s7, 4
    %s17 = sphi 0, %s19
    %s20 = sphi 0, %s17
    %s21 = sphi 0, %s20
    %s37 = sphi 0, %s21
    %s43 = sphi 0, %s45
    %s46 = sphi 0, %s43
    %s47 = sphi 0, %s46
    %s63 = sphi 0, %s47
  $region4: #{uvit_forward.23} parent=0 // loop_header_branch
    %10 = sbr.rel (%p8) target = $region8
  $region5: #{uvit_forward.23} parent=0 // loop_body
    %s12 = ssub.s32 %s7, 1
    %s13 = ssub.s32 %s7, 2
    %s14 = sadd.s32 %s7, 1
    %s15 = ssub.s32 %s7, %s14
    %p16 = scmp.eq.s32.totalorder %s15, 0
    %s18 = sadd.s32 %s17, 1
    %s19 = scalar_select %p16, %s17, %s18
    %p22 = pneg %p16
    %p23 = scmp.eq.s32.totalorder %s7, 1
    %p24 = por %p22, %p23
    %p25 = scmp.ne.s32.totalorder %s17, %s20
    %p26 = scmp.eq.s32.totalorder %s7, 0
    %p27 = por %p25, %p26
    %p28 = scmp.ne.s32.totalorder %s17, %s20
    %p29 = scmp.eq.s32.totalorder %s12, 1
    %p30 = por %p28, %p29
    %p31 = scmp.ne.s32.totalorder %s20, %s21
    %p32 = scmp.eq.s32.totalorder %s12, 0
    %p33 = por %p31, %p32
    %p34 = scmp.ne.s32.totalorder %s20, %s21
    %p35 = scmp.eq.s32.totalorder %s13, 1
    %p36 = por %p34, %p35
    %p38 = scmp.ne.s32.totalorder %s21, %s37
    %p39 = scmp.eq.s32.totalorder %s13, 0
    %p40 = por %p38, %p39
    %s41 = ssub.s32 %s7, %s14
    %p42 = scmp.eq.s32.totalorder %s41, 0
    %s44 = sadd.s32 %s43, 1
    %s45 = scalar_select %p42, %s43, %s44
    %p48 = pneg %p42
    %p49 = scmp.eq.s32.totalorder %s7, 1
    %p50 = por %p48, %p49
    %p51 = scmp.ne.s32.totalorder %s43, %s46
    %p52 = scmp.eq.s32.totalorder %s7, 0
    %p53 = por %p51, %p52
    %p54 = scmp.ne.s32.totalorder %s43, %s46
    %p55 = scmp.eq.s32.totalorder %s12, 1
    %p56 = por %p54, %p55
    %p57 = scmp.ne.s32.totalorder %s46, %s47
    %p58 = scmp.eq.s32.totalorder %s12, 0
    %p59 = por %p57, %p58
    %p60 = scmp.ne.s32.totalorder %s46, %s47
    %p61 = scmp.eq.s32.totalorder %s13, 1
    %p62 = por %p60, %p61
    %p64 = scmp.ne.s32.totalorder %s47, %s63
    %p65 = scmp.eq.s32.totalorder %s13, 0
    %p66 = por %p64, %p65
    %p67 = scmp.le.s32.totalorder 1, %s7
    %p68 = scmp.lt.s32.totalorder %s7, 3
    %p69 = pnand %p67, %p68
    %p70 = pneg %p69
    // Predicated region
    $region9: #{uvit_forward.23} parent=5 // pred_check
      _
    $region10: #{uvit_forward.23} parent=5 // pred_check_branch
      %72 = sbr.rel (%p69) target = $region12
    $region11: #{uvit_forward.23} parent=5 // pred_region
      %s73 = ssub.s32 %s7, 1
    $region12: #{uvit_forward.23} parent=5 // pred_fallthru
      _
    %p74 = scmp.lt.s32.totalorder %s7, 2
    // Predicated region
    $region13: #{uvit_forward.23} parent=5 // pred_check
      %p75 = pneg %p74
    $region14: #{uvit_forward.23} parent=5 // pred_check_branch
      %77 = sbr.rel (%p75) target = $region16
    $region15: #{uvit_forward.23} parent=5 // pred_region
      // Predicated region
      $region17: #{uvit_forward.23} parent=15 // pred_check
        %p78 = pneg %p27
      $region18: #{uvit_forward.23} parent=15 // pred_check_branch
        %80 = sbr.rel (%p78) target = $region20
      $region19: #{uvit_forward.23} parent=15 // pred_region
        %p81 = scmp.lt.s32.totalorder %s7, 1
        %s82 = scalar_select %p81, %s7, 1
        %s83 = smul.addr %s82, 6
        %s84 = smul.addr %s83, 4
        %s85 = scalar_lea.vmem %s0, %s84
      $region20: #{uvit_forward.23} parent=15 // pred_fallthru
        _
    $region16: #{uvit_forward.23} parent=5 // pred_fallthru
      _
    %p86 = scmp.le.s32.totalorder 1, %s7
    %p87 = scmp.lt.s32.totalorder %s7, 3
    %p88 = pnand %p86, %p87
    %p89 = pneg %p88
    // Predicated region
    $region21: #{uvit_forward.23} parent=5 // pred_check
      _
    $region22: #{uvit_forward.23} parent=5 // pred_check_branch
      %91 = sbr.rel (%p88) target = $region24
    $region23: #{uvit_forward.23} parent=5 // pred_region
      %s92 = ssub.s32 %s7, 1
      %p93 = scmp.lt.s32.totalorder %s12, 1
      %s94 = scalar_select %p93, %s12, 1
      %s95 = smul.addr %s94, 6
      %s96 = smul.addr %s95, 4
      %s97 = scalar_lea.vmem %s0, %s96
      %p98 = pneg %p33
      %p99 = pneg %p30
      %p100 = pneg %p59
      %p101 = pneg %p56
      %p102 = scmp.lt.s32.totalorder %s12, 1
      %s103 = scalar_select %p102, %s12, 1
      %s104 = smul.addr %s103, 3
      %s105 = smul.addr %s104, 4
      %s106 = scalar_lea.vmem %s1, %s105
      %p107 = scmp.lt.s32.totalorder %s12, 1
      %s108 = scalar_select %p107, %s12, 1
      %s109 = smul.addr %s108, 6
      %s110 = smul.addr %s109, 4
      %s111 = scalar_lea.vmem %s0, %s110
      %p112 = scmp.lt.s32.totalorder %s12, 1
      %s113 = scalar_select %p112, %s12, 1
      %s114 = smul.addr %s113, 3
      %s115 = smul.addr %s114, 4
      %s116 = scalar_lea.vmem %s1, %s115
      %v118 = vld [vmem:[%s111] sm:$0xf]
      %v119 = vld [vmem:[%s111 + $0x8] sm:$0xf]
      %v120 = vld [vmem:[%s111 + $0x10] sm:$0xf]
      %v121 = vld [vmem:[%s111 + $0x4] sm:$0xf]
      %v122 = vld [vmem:[%s111 + $0xc] sm:$0xf]
      %v123 = vld [vmem:[%s111 + $0x14] sm:$0xf]
      %v127 = vunpack.c.l.b16 %v118
      %v128 = vunpack.c.l.b16 %v119
      %v129 = vunpack.c.l.b16 %v120
      %v130 = vpack.c.b16 %v128, %v127
      %v131 = vpack.c.b16 %v129, %v129
      %132 = vrot.lane.b32.xlu0 %v130, 64
      %v133 = vpop.permute.xlu0 %132
      %134 = vrot.lane.b32.xlu0 %v131, 64
      %v135 = vpop.permute.xlu0 %134
      %vm136 = vcmask 130048
      %v138 = vsel %vm136, %v130, 0
      %v141 = vsel %vm136, %v131, 0
      %v144 = vsel %vm136, %v133, 0
      %v147 = vsel %vm136, %v135, 0
      %149 = vmatpush.bf16.xpose.msra.mxu0 0
      %150 = vmatpush.bf16.xpose.msra.mxu0 0
      %151 = vmatpush.bf16.xpose.msra.mxu0 0
      %152 = vmatpush.bf16.xpose.msra.mxu0 0
      %153 = vmatpush.bf16.xpose.msra.mxu0 0
      %154 = vmatpush.bf16.xpose.msra.mxu0 0
      %155 = vmatpush.bf16.xpose.msra.mxu0 %v147
      %156 = vmatpush.bf16.xpose.msra.mxu0 %v144
      %157 = vmatmul.bf16.gmra.mxu0 %v138
      %v158 = vpop.f32.mrf.mxu0
      %v159 = vadd.f32 0.0, %v158
      %v160 = vpop.f32.mrf.mxu0
      %v161 = vadd.f32 0.0, %v160
      %162 = vmatmul.bf16.gmra.mxu0 %v141
      %v163 = vpop.f32.mrf.mxu0
      %v164 = vadd.f32 0.0, %v163
      %v165 = vpop.f32.mrf.mxu0
      %166 = vdwg.mxu0
      %v167 = vmul.f32 %v159, 0.25
      %v168 = vmul.f32 %v161, 0.25
      %v169 = vmul.f32 %v164, 0.25
      %vm170 = vcmask 195584
      %v171 = vsel %vm170, %v167, -inf
      %172 = vmax.xlane.f32.xlu0 %v171
      %v173 = vpop.xlane.xlu0 %172
      %v174 = vsel %vm170, %v168, -inf
      %175 = vmax.xlane.f32.xlu0 %v174
      %v176 = vpop.xlane.xlu0 %175
      %v177 = vsel %vm170, %v169, -inf
      %178 = vmax.xlane.f32.xlu0 %v177
      %v179 = vpop.xlane.xlu0 %178
      %v180 = vsub.f32 %v167, %v173
      %v181 = vsub.f32 %v168, %v176
      %v182 = vsub.f32 %v169, %v179
      %v183 = vmul.f32 %v180, 1.442695
      %v184 = vpow.pop %v183
      %v185 = vmul.f32 %v181, 1.442695
      %v186 = vpow.pop %v185
      %v187 = vmul.f32 %v182, 1.442695
      %v188 = vpow.pop %v187
      %v189 = vsel %vm170, %v184, 0.0
      %190 = vadd.xlane.f32.xlu0 %v189
      %v191 = vpop.xlane.xlu0 %190
      %v192 = vsel %vm170, %v186, 0.0
      %193 = vadd.xlane.f32.xlu0 %v192
      %v194 = vpop.xlane.xlu0 %193
      %v195 = vsel %vm170, %v188, 0.0
      %196 = vadd.xlane.f32.xlu0 %v195
      %v197 = vpop.xlane.xlu0 %196
      %v198 = vrcp.pop %v191
      %v199 = vrcp.pop %v194
      %v200 = vrcp.pop %v197
      %v201 = vmul.f32 %v184, %v198
      %v202 = vmul.f32 %v186, %v199
      %v203 = vmul.f32 %v188, %v200
      %v204 = vpack.c.bf16 %v202, %v201
      %v205 = vpack.c.bf16 %v203, %v203
      %v209 = vunpack.c.l.b16 %v121
      %v210 = vunpack.c.l.b16 %v122
      %v211 = vunpack.c.l.b16 %v123
      %v212 = vpack.c.b16 %v210, %v209
      %v213 = vpack.c.b16 %v211, %v211
      %v216 = vsel %vm170, %v204, 0
      %v219 = vsel %vm170, %v205, 0
      %vm221 = vcmask 1043456
      %v223 = vsel %vm221, %v213, 0
      %225 = vmatpush.bf16.msra.mxu0 0
      %226 = vmatpush.bf16.msra.mxu0 0
      %227 = vmatpush.bf16.msra.mxu0 0
      %228 = vmatpush.bf16.msra.mxu0 0
      %229 = vmatpush.bf16.msra.mxu0 0
      %230 = vmatpush.bf16.msra.mxu0 0
      %231 = vmatpush.bf16.msra.mxu0 %v223
      %232 = vmatpush.bf16.msra.mxu0 %v212
      %233 = vmatmul.bf16.gmra.mxu0 %v216
      %v234 = vpop.f32.mrf.mxu0
      %v235 = vadd.f32 0.0, %v234
      %v236 = vpop.f32.mrf.mxu0
      %v237 = vadd.f32 0.0, %v236
      %238 = vmatmul.bf16.gmra.mxu0 %v219
      %v239 = vpop.f32.mrf.mxu0
      %v240 = vadd.f32 0.0, %v239
      %v241 = vpop.f32.mrf.mxu0
      %242 = vdwg.mxu0
      %243 = vrot.lane.b32.xlu0 %v130, 112
      %v244 = vpop.permute.xlu0 %243
      %245 = vrot.lane.b32.xlu0 %v131, 112
      %v246 = vpop.permute.xlu0 %245
      %247 = vrot.lane.b32.xlu0 %v130, 48
      %v248 = vpop.permute.xlu0 %247
      %249 = vrot.lane.b32.xlu0 %v131, 48
      %v250 = vpop.permute.xlu0 %249
      %v252 = vsel %vm136, %v244, 0
      %v255 = vsel %vm136, %v246, 0
      %v258 = vsel %vm136, %v248, 0
      %v261 = vsel %vm136, %v250, 0
      %263 = vmatpush.bf16.xpose.msra.mxu0 0
      %264 = vmatpush.bf16.xpose.msra.mxu0 0
      %265 = vmatpush.bf16.xpose.msra.mxu0 0
      %266 = vmatpush.bf16.xpose.msra.mxu0 0
      %267 = vmatpush.bf16.xpose.msra.mxu0 0
      %268 = vmatpush.bf16.xpose.msra.mxu0 0
      %269 = vmatpush.bf16.xpose.msra.mxu0 %v261
      %270 = vmatpush.bf16.xpose.msra.mxu0 %v258
      %271 = vmatmul.bf16.gmra.mxu0 %v252
      %v272 = vpop.f32.mrf.mxu0
      %v273 = vadd.f32 0.0, %v272
      %v274 = vpop.f32.mrf.mxu0
      %v275 = vadd.f32 0.0, %v274
      %276 = vmatmul.bf16.gmra.mxu0 %v255
      %v277 = vpop.f32.mrf.mxu0
      %v278 = vadd.f32 0.0, %v277
      %v279 = vpop.f32.mrf.mxu0
      %280 = vdwg.mxu0
      %v281 = vmul.f32 %v273, 0.25
      %v282 = vmul.f32 %v275, 0.25
      %v283 = vmul.f32 %v278, 0.25
      %v284 = vsel %vm170, %v281, -inf
      %285 = vmax.xlane.f32.xlu0 %v284
      %v286 = vpop.xlane.xlu0 %285
      %v287 = vsel %vm170, %v282, -inf
      %288 = vmax.xlane.f32.xlu0 %v287
      %v289 = vpop.xlane.xlu0 %288
      %v290 = vsel %vm170, %v283, -inf
      %291 = vmax.xlane.f32.xlu0 %v290
      %v292 = vpop.xlane.xlu0 %291
      %v293 = vsub.f32 %v281, %v286
      %v294 = vsub.f32 %v282, %v289
      %v295 = vsub.f32 %v283, %v292
      %v296 = vmul.f32 %v293, 1.442695
      %v297 = vpow.pop %v296
      %v298 = vmul.f32 %v294, 1.442695
      %v299 = vpow.pop %v298
      %v300 = vmul.f32 %v295, 1.442695
      %v301 = vpow.pop %v300
      %v302 = vsel %vm170, %v297, 0.0
      %303 = vadd.xlane.f32.xlu0 %v302
      %v304 = vpop.xlane.xlu0 %303
      %v305 = vsel %vm170, %v299, 0.0
      %306 = vadd.xlane.f32.xlu0 %v305
      %v307 = vpop.xlane.xlu0 %306
      %v308 = vsel %vm170, %v301, 0.0
      %309 = vadd.xlane.f32.xlu0 %v308
      %v310 = vpop.xlane.xlu0 %309
      %v311 = vrcp.pop %v304
      %v312 = vrcp.pop %v307
      %v313 = vrcp.pop %v310
      %v314 = vmul.f32 %v297, %v311
      %v315 = vmul.f32 %v299, %v312
      %v316 = vmul.f32 %v301, %v313
      %v317 = vpack.c.bf16 %v315, %v314
      %v318 = vpack.c.bf16 %v316, %v316
      %319 = vrot.lane.b32.xlu0 %v212, 112
      %v320 = vpop.permute.xlu0 %319
      %321 = vrot.lane.b32.xlu0 %v213, 112
      %v322 = vpop.permute.xlu0 %321
      %v325 = vsel %vm170, %v317, 0
      %v328 = vsel %vm170, %v318, 0
      %v331 = vsel %vm221, %v322, 0
      %333 = vmatpush.bf16.msra.mxu0 0
      %334 = vmatpush.bf16.msra.mxu0 0
      %335 = vmatpush.bf16.msra.mxu0 0
      %336 = vmatpush.bf16.msra.mxu0 0
      %337 = vmatpush.bf16.msra.mxu0 0
      %338 = vmatpush.bf16.msra.mxu0 0
      %339 = vmatpush.bf16.msra.mxu0 %v331
      %340 = vmatpush.bf16.msra.mxu0 %v320
      %341 = vmatmul.bf16.gmra.mxu0 %v325
      %v342 = vpop.f32.mrf.mxu0
      %v343 = vadd.f32 0.0, %v342
      %v344 = vpop.f32.mrf.mxu0
      %v345 = vadd.f32 0.0, %v344
      %346 = vmatmul.bf16.gmra.mxu0 %v328
      %v347 = vpop.f32.mrf.mxu0
      %v348 = vadd.f32 0.0, %v347
      %v349 = vpop.f32.mrf.mxu0
      %350 = vdwg.mxu0
      %351 = vrot.lane.b32.xlu0 %v130, 96
      %v352 = vpop.permute.xlu0 %351
      %353 = vrot.lane.b32.xlu0 %v131, 96
      %v354 = vpop.permute.xlu0 %353
      %355 = vrot.lane.b32.xlu0 %v130, 32
      %v356 = vpop.permute.xlu0 %355
      %357 = vrot.lane.b32.xlu0 %v131, 32
      %v358 = vpop.permute.xlu0 %357
      %v360 = vsel %vm136, %v352, 0
      %v363 = vsel %vm136, %v354, 0
      %v366 = vsel %vm136, %v356, 0
      %v369 = vsel %vm136, %v358, 0
      %371 = vmatpush.bf16.xpose.msra.mxu0 0
      %372 = vmatpush.bf16.xpose.msra.mxu0 0
      %373 = vmatpush.bf16.xpose.msra.mxu0 0
      %374 = vmatpush.bf16.xpose.msra.mxu0 0
      %375 = vmatpush.bf16.xpose.msra.mxu0 0
      %376 = vmatpush.bf16.xpose.msra.mxu0 0
      %377 = vmatpush.bf16.xpose.msra.mxu0 %v369
      %378 = vmatpush.bf16.xpose.msra.mxu0 %v366
      %379 = vmatmul.bf16.gmra.mxu0 %v360
      %v380 = vpop.f32.mrf.mxu0
      %v381 = vadd.f32 0.0, %v380
      %v382 = vpop.f32.mrf.mxu0
      %v383 = vadd.f32 0.0, %v382
      %384 = vmatmul.bf16.gmra.mxu0 %v363
      %v385 = vpop.f32.mrf.mxu0
      %v386 = vadd.f32 0.0, %v385
      %v387 = vpop.f32.mrf.mxu0
      %388 = vdwg.mxu0
      %v389 = vmul.f32 %v381, 0.25
      %v390 = vmul.f32 %v383, 0.25
      %v391 = vmul.f32 %v386, 0.25
      %v392 = vsel %vm170, %v389, -inf
      %393 = vmax.xlane.f32.xlu0 %v392
      %v394 = vpop.xlane.xlu0 %393
      %v395 = vsel %vm170, %v390, -inf
      %396 = vmax.xlane.f32.xlu0 %v395
      %v397 = vpop.xlane.xlu0 %396
      %v398 = vsel %vm170, %v391, -inf
      %399 = vmax.xlane.f32.xlu0 %v398
      %v400 = vpop.xlane.xlu0 %399
      %v401 = vsub.f32 %v389, %v394
      %v402 = vsub.f32 %v390, %v397
      %v403 = vsub.f32 %v391, %v400
      %v404 = vmul.f32 %v401, 1.442695
      %v405 = vpow.pop %v404
      %v406 = vmul.f32 %v402, 1.442695
      %v407 = vpow.pop %v406
      %v408 = vmul.f32 %v403, 1.442695
      %v409 = vpow.pop %v408
      %v410 = vsel %vm170, %v405, 0.0
      %411 = vadd.xlane.f32.xlu0 %v410
      %v412 = vpop.xlane.xlu0 %411
      %v413 = vsel %vm170, %v407, 0.0
      %414 = vadd.xlane.f32.xlu0 %v413
      %v415 = vpop.xlane.xlu0 %414
      %v416 = vsel %vm170, %v409, 0.0
      %417 = vadd.xlane.f32.xlu0 %v416
      %v418 = vpop.xlane.xlu0 %417
      %v419 = vrcp.pop %v412
      %v420 = vrcp.pop %v415
      %v421 = vrcp.pop %v418
      %v422 = vmul.f32 %v405, %v419
      %v423 = vmul.f32 %v407, %v420
      %v424 = vmul.f32 %v409, %v421
      %v425 = vpack.c.bf16 %v423, %v422
      %v426 = vpack.c.bf16 %v424, %v424
      %427 = vrot.lane.b32.xlu0 %v212, 96
      %v428 = vpop.permute.xlu0 %427
      %429 = vrot.lane.b32.xlu0 %v213, 96
      %v430 = vpop.permute.xlu0 %429
      %v433 = vsel %vm170, %v425, 0
      %v436 = vsel %vm170, %v426, 0
      %v439 = vsel %vm221, %v430, 0
      %441 = vmatpush.bf16.msra.mxu0 0
      %442 = vmatpush.bf16.msra.mxu0 0
      %443 = vmatpush.bf16.msra.mxu0 0
      %444 = vmatpush.bf16.msra.mxu0 0
      %445 = vmatpush.bf16.msra.mxu0 0
      %446 = vmatpush.bf16.msra.mxu0 0
      %447 = vmatpush.bf16.msra.mxu0 %v439
      %448 = vmatpush.bf16.msra.mxu0 %v428
      %449 = vmatmul.bf16.gmra.mxu0 %v433
      %v450 = vpop.f32.mrf.mxu0
      %v451 = vadd.f32 0.0, %v450
      %v452 = vpop.f32.mrf.mxu0
      %v453 = vadd.f32 0.0, %v452
      %454 = vmatmul.bf16.gmra.mxu0 %v436
      %v455 = vpop.f32.mrf.mxu0
      %v456 = vadd.f32 0.0, %v455
      %v457 = vpop.f32.mrf.mxu0
      %458 = vdwg.mxu0
      %459 = vrot.lane.b32.xlu0 %v130, 80
      %v460 = vpop.permute.xlu0 %459
      %461 = vrot.lane.b32.xlu0 %v131, 80
      %v462 = vpop.permute.xlu0 %461
      %463 = vrot.lane.b32.xlu0 %v130, 16
      %v464 = vpop.permute.xlu0 %463
      %465 = vrot.lane.b32.xlu0 %v131, 16
      %v466 = vpop.permute.xlu0 %465
      %v468 = vsel %vm136, %v460, 0
      %v471 = vsel %vm136, %v462, 0
      %v474 = vsel %vm136, %v464, 0
      %v477 = vsel %vm136, %v466, 0
      %479 = vmatpush.bf16.xpose.msra.mxu0 0
      %480 = vmatpush.bf16.xpose.msra.mxu0 0
      %481 = vmatpush.bf16.xpose.msra.mxu0 0
      %482 = vmatpush.bf16.xpose.msra.mxu0 0
      %483 = vmatpush.bf16.xpose.msra.mxu0 0
      %484 = vmatpush.bf16.xpose.msra.mxu0 0
      %485 = vmatpush.bf16.xpose.msra.mxu0 %v477
      %486 = vmatpush.bf16.xpose.msra.mxu0 %v474
      %487 = vmatmul.bf16.gmra.mxu0 %v468
      %v488 = vpop.f32.mrf.mxu0
      %v489 = vadd.f32 0.0, %v488
      %v490 = vpop.f32.mrf.mxu0
      %v491 = vadd.f32 0.0, %v490
      %492 = vmatmul.bf16.gmra.mxu0 %v471
      %v493 = vpop.f32.mrf.mxu0
      %v494 = vadd.f32 0.0, %v493
      %v495 = vpop.f32.mrf.mxu0
      %496 = vdwg.mxu0
      %v497 = vmul.f32 %v489, 0.25
      %v498 = vmul.f32 %v491, 0.25
      %v499 = vmul.f32 %v494, 0.25
      %v500 = vsel %vm170, %v497, -inf
      %501 = vmax.xlane.f32.xlu0 %v500
      %v502 = vpop.xlane.xlu0 %501
      %v503 = vsel %vm170, %v498, -inf
      %504 = vmax.xlane.f32.xlu0 %v503
      %v505 = vpop.xlane.xlu0 %504
      %v506 = vsel %vm170, %v499, -inf
      %507 = vmax.xlane.f32.xlu0 %v506
      %v508 = vpop.xlane.xlu0 %507
      %v509 = vsub.f32 %v497, %v502
      %v510 = vsub.f32 %v498, %v505
      %v511 = vsub.f32 %v499, %v508
      %v512 = vmul.f32 %v509, 1.442695
      %v513 = vpow.pop %v512
      %v514 = vmul.f32 %v510, 1.442695
      %v515 = vpow.pop %v514
      %v516 = vmul.f32 %v511, 1.442695
      %v517 = vpow.pop %v516
      %v518 = vsel %vm170, %v513, 0.0
      %519 = vadd.xlane.f32.xlu0 %v518
      %v520 = vpop.xlane.xlu0 %519
      %v521 = vsel %vm170, %v515, 0.0
      %522 = vadd.xlane.f32.xlu0 %v521
      %v523 = vpop.xlane.xlu0 %522
      %v524 = vsel %vm170, %v517, 0.0
      %525 = vadd.xlane.f32.xlu0 %v524
      %v526 = vpop.xlane.xlu0 %525
      %v527 = vrcp.pop %v520
      %v528 = vrcp.pop %v523
      %v529 = vrcp.pop %v526
      %v530 = vmul.f32 %v513, %v527
      %v531 = vmul.f32 %v515, %v528
      %v532 = vmul.f32 %v517, %v529
      %v533 = vpack.c.bf16 %v531, %v530
      %v534 = vpack.c.bf16 %v532, %v532
      %535 = vrot.lane.b32.xlu0 %v212, 80
      %v536 = vpop.permute.xlu0 %535
      %537 = vrot.lane.b32.xlu0 %v213, 80
      %v538 = vpop.permute.xlu0 %537
      %v541 = vsel %vm170, %v533, 0
      %v544 = vsel %vm170, %v534, 0
      %v547 = vsel %vm221, %v538, 0
      %549 = vmatpush.bf16.msra.mxu0 0
      %550 = vmatpush.bf16.msra.mxu0 0
      %551 = vmatpush.bf16.msra.mxu0 0
      %552 = vmatpush.bf16.msra.mxu0 0
      %553 = vmatpush.bf16.msra.mxu0 0
      %554 = vmatpush.bf16.msra.mxu0 0
      %555 = vmatpush.bf16.msra.mxu0 %v547
      %556 = vmatpush.bf16.msra.mxu0 %v536
      %557 = vmatmul.bf16.gmra.mxu0 %v541
      %v558 = vpop.f32.mrf.mxu0
      %v559 = vadd.f32 0.0, %v558
      %v560 = vpop.f32.mrf.mxu0
      %v561 = vadd.f32 0.0, %v560
      %562 = vmatmul.bf16.gmra.mxu0 %v544
      %v563 = vpop.f32.mrf.mxu0
      %v564 = vadd.f32 0.0, %v563
      %v565 = vpop.f32.mrf.mxu0
      %566 = vdwg.mxu0
      %570 = vrot.lane.b32.xlu0 %v343, 16
      %v571 = vpop.permute.xlu0 %570
      %572 = vrot.lane.b32.xlu0 %v345, 16
      %v573 = vpop.permute.xlu0 %572
      %574 = vrot.lane.b32.xlu0 %v348, 16
      %v575 = vpop.permute.xlu0 %574
      %582 = vrot.lane.b32.xlu0 %v451, 32
      %v583 = vpop.permute.xlu0 %582
      %584 = vrot.lane.b32.xlu0 %v453, 32
      %v585 = vpop.permute.xlu0 %584
      %586 = vrot.lane.b32.xlu0 %v456, 32
      %v587 = vpop.permute.xlu0 %586
      %594 = vrot.lane.b32.xlu0 %v559, 48
      %v595 = vpop.permute.xlu0 %594
      %596 = vrot.lane.b32.xlu0 %v561, 48
      %v597 = vpop.permute.xlu0 %596
      %598 = vrot.lane.b32.xlu0 %v564, 48
      %v599 = vpop.permute.xlu0 %598
      %v603 = vsel %vm136, %v235, %v571
      %v604 = vsel %vm136, %v237, %v573
      %v605 = vsel %vm136, %v240, %v575
      %vm606 = vcmask 261120
      %v607 = vsel %vm606, %v603, %v583
      %v608 = vsel %vm606, %v604, %v585
      %v609 = vsel %vm606, %v605, %v587
      %vm610 = vcmask 392192
      %v611 = vsel %vm610, %v607, %v595
      %v612 = vsel %vm610, %v608, %v597
      %v613 = vsel %vm610, %v609, %v599
      %v614 = vpack.c.bf16 %v611, %v611
      %v615 = vpack.c.bf16 %v612, %v612
      %v616 = vpack.c.bf16 %v613, %v613
      %vm617 = vcmask 519168
      %618 = vst.msk [vmem:[%s116] sm:$0xf] %vm617, %v614
      %619 = vst.msk [vmem:[%s116 + $0x4] sm:$0xf] %vm617, %v615
      %620 = vst.msk [vmem:[%s116 + $0x8] sm:$0xf] %vm617, %v616
      %p621 = scmp.lt.s32.totalorder %s12, 1
      %s622 = scalar_select %p621, %s12, 1
      %s623 = smul.addr %s622, 3
      %s624 = smul.addr %s623, 4
      %s625 = scalar_lea.vmem %s1, %s624
      // Predicated region
      $region25: #{uvit_forward.23} parent=23 // pred_check
        %p626 = pneg %p56
      $region26: #{uvit_forward.23} parent=23 // pred_check_branch
        %628 = sbr.rel (%p626) target = $region28
      $region27: #{uvit_forward.23} parent=23 // pred_region
        _
      $region28: #{uvit_forward.23} parent=23 // pred_fallthru
        _
    $region24: #{uvit_forward.23} parent=5 // pred_fallthru
      _
    %p629 = scmp.le.s32.totalorder 2, %s7
    // Predicated region
    $region29: #{uvit_forward.23} parent=5 // pred_check
      %p630 = pneg %p629
    $region30: #{uvit_forward.23} parent=5 // pred_check_branch
      %632 = sbr.rel (%p630) target = $region32
    $region31: #{uvit_forward.23} parent=5 // pred_region
      %s633 = ssub.s32 %s7, 2
      // Predicated region
      $region33: #{uvit_forward.23} parent=31 // pred_check
        %p634 = pneg %p62
      $region34: #{uvit_forward.23} parent=31 // pred_check_branch
        %636 = sbr.rel (%p634) target = $region36
      $region35: #{uvit_forward.23} parent=31 // pred_region
        %p637 = scmp.lt.s32.totalorder %s13, 1
        %s638 = scalar_select %p637, %s13, 1
        %s639 = smul.addr %s638, 3
        %s640 = smul.addr %s639, 4
        %s641 = scalar_lea.vmem %s1, %s640
      $region36: #{uvit_forward.23} parent=31 // pred_fallthru
        _
    $region32: #{uvit_forward.23} parent=5 // pred_fallthru
      _
  $region6: #{uvit_forward.23} parent=0 // loop_footer
    %s11 = sadd.s32 1, %s7
  $region7: #{uvit_forward.23} parent=0 // loop_footer_branch
    %6 = sbr.rel target = $region3
  $region8: #{uvit_forward.23} parent=0 // loop_exit
    _

// kernel: uvit_forward.25
$region0: #{uvit_forward.25}
  #allocation0 [shape = 'u32[]', space=smem, size = 0x4, offset = 0x4, fixed_abs, tag = 'smem constant byte address 0x4 - core index']
  #allocation1 [shape = 'u32[72,128]{1,0:T(1,128)}', space=vmem, size = 0x9000, scoped, tag = 'internal scratch']
  %s0 = inlined_call_operand.vmem [shape: bf16[48,64], index: 0, kind: input, shape index: {}]
  %s1 = inlined_call_operand.vmem [shape: f32[1,64], index: 1, kind: input, shape index: {}]
  %s2 = inlined_call_operand.vmem [shape: f32[1,64], index: 2, kind: input, shape index: {}]
  %s3 = inlined_call_operand.vmem [shape: bf16[64,256], index: 3, kind: input, shape index: {}]
  %s4 = inlined_call_operand.vmem [shape: f32[1,256], index: 4, kind: input, shape index: {}]
  %s5 = inlined_call_operand.vmem [shape: bf16[48,256], index: 5, kind: output, shape index: {}]
  %s6 = sld [smem:[#allocation0]]
  $region30: #{uvit_forward.25} parent=0
    _
  %s8 = ssub.s32 1, %s6
  %s9 = scalar_select 0, %s8, %s6
  // Predicated region
  $region2: #{uvit_forward.25} parent=0 // pred_check
    _
  $region3: #{uvit_forward.25} parent=0 // pred_check_branch
    %11 = sbr.rel (0) target = $region5
  $region4: #{uvit_forward.25} parent=0 // pred_region
    _
  $region5: #{uvit_forward.25} parent=0 // pred_fallthru
    _
  // Predicated region
  $region6: #{uvit_forward.25} parent=0 // pred_check
    _
  $region7: #{uvit_forward.25} parent=0 // pred_check_branch
    %13 = sbr.rel (0) target = $region9
  $region8: #{uvit_forward.25} parent=0 // pred_region
    _
  $region9: #{uvit_forward.25} parent=0 // pred_fallthru
    _
  // Predicated region
  $region10: #{uvit_forward.25} parent=0 // pred_check
    _
  $region11: #{uvit_forward.25} parent=0 // pred_check_branch
    %15 = sbr.rel (0) target = $region13
  $region12: #{uvit_forward.25} parent=0 // pred_region
    _
  $region13: #{uvit_forward.25} parent=0 // pred_fallthru
    _
  // Predicated region
  $region14: #{uvit_forward.25} parent=0 // pred_check
    _
  $region15: #{uvit_forward.25} parent=0 // pred_check_branch
    %17 = sbr.rel (0) target = $region17
  $region16: #{uvit_forward.25} parent=0 // pred_region
    _
  $region17: #{uvit_forward.25} parent=0 // pred_fallthru
    _
  // Predicated region
  $region18: #{uvit_forward.25} parent=0 // pred_check
    _
  $region19: #{uvit_forward.25} parent=0 // pred_check_branch
    %19 = sbr.rel (0) target = $region21
  $region20: #{uvit_forward.25} parent=0 // pred_region
    _
  $region21: #{uvit_forward.25} parent=0 // pred_fallthru
    _
  %v21 = vld [vmem:[%s0] sm:$0xf]
  %v22 = vld [vmem:[%s0 + $0x4] sm:$0xf]
  %v23 = vld [vmem:[%s0 + $0x8] sm:$0xf]
  %v24 = vld [vmem:[%s0 + $0xc] sm:$0xf]
  %v25 = vld [vmem:[%s0 + $0x10] sm:$0xf]
  %v26 = vld [vmem:[%s0 + $0x14] sm:$0xf]
  %v27 = vunpack.c.l.bf16 %v21
  %v28 = vunpack.c.l.bf16 %v22
  %v29 = vunpack.c.l.bf16 %v23
  %v30 = vunpack.c.l.bf16 %v24
  %v31 = vunpack.c.l.bf16 %v25
  %v32 = vunpack.c.l.bf16 %v26
  %vm33 = vcmask 523264
  %v34 = vsel %vm33, %v27, 0.0
  %35 = vadd.xlane.f32.xlu0 %v34
  %v36 = vpop.xlane.xlu0 %35
  %v37 = vsel %vm33, %v28, 0.0
  %38 = vadd.xlane.f32.xlu0 %v37
  %v39 = vpop.xlane.xlu0 %38
  %v40 = vsel %vm33, %v29, 0.0
  %41 = vadd.xlane.f32.xlu0 %v40
  %v42 = vpop.xlane.xlu0 %41
  %v43 = vsel %vm33, %v30, 0.0
  %44 = vadd.xlane.f32.xlu0 %v43
  %v45 = vpop.xlane.xlu0 %44
  %v46 = vsel %vm33, %v31, 0.0
  %47 = vadd.xlane.f32.xlu0 %v46
  %v48 = vpop.xlane.xlu0 %47
  %v49 = vsel %vm33, %v32, 0.0
  %50 = vadd.xlane.f32.xlu0 %v49
  %v51 = vpop.xlane.xlu0 %50
  %v52 = vrcp.pop 64.0
  %v53 = vmul.f32 64.0, %v52
  %v54 = vsub.f32 1.0, %v53
  %v55 = vmul.f32 %v52, %v54
  %v56 = vadd.f32 %v52, %v55
  %vm57 = vweird.f32 %v52
  %v58 = vsel %vm57, %v52, %v56
  %v59 = vmul.f32 %v36, %v58
  %v60 = vmul.f32 %v39, %v58
  %v61 = vmul.f32 %v42, %v58
  %v62 = vmul.f32 %v45, %v58
  %v63 = vmul.f32 %v48, %v58
  %v64 = vmul.f32 %v51, %v58
  %v65 = vsub.f32 %v27, %v59
  %v66 = vsub.f32 %v28, %v60
  %v67 = vsub.f32 %v29, %v61
  %v68 = vsub.f32 %v30, %v62
  %v69 = vsub.f32 %v31, %v63
  %v70 = vsub.f32 %v32, %v64
  %v71 = vmul.f32 %v65, %v65
  %v72 = vmul.f32 %v66, %v66
  %v73 = vmul.f32 %v67, %v67
  %v74 = vmul.f32 %v68, %v68
  %v75 = vmul.f32 %v69, %v69
  %v76 = vmul.f32 %v70, %v70
  %v77 = vsel %vm33, %v71, 0.0
  %78 = vadd.xlane.f32.xlu0 %v77
  %v79 = vpop.xlane.xlu0 %78
  %v80 = vsel %vm33, %v72, 0.0
  %81 = vadd.xlane.f32.xlu0 %v80
  %v82 = vpop.xlane.xlu0 %81
  %v83 = vsel %vm33, %v73, 0.0
  %84 = vadd.xlane.f32.xlu0 %v83
  %v85 = vpop.xlane.xlu0 %84
  %v86 = vsel %vm33, %v74, 0.0
  %87 = vadd.xlane.f32.xlu0 %v86
  %v88 = vpop.xlane.xlu0 %87
  %v89 = vsel %vm33, %v75, 0.0
  %90 = vadd.xlane.f32.xlu0 %v89
  %v91 = vpop.xlane.xlu0 %90
  %v92 = vsel %vm33, %v76, 0.0
  %93 = vadd.xlane.f32.xlu0 %v92
  %v94 = vpop.xlane.xlu0 %93
  %v95 = vmul.f32 %v79, %v58
  %v96 = vmul.f32 %v82, %v58
  %v97 = vmul.f32 %v85, %v58
  %v98 = vmul.f32 %v88, %v58
  %v99 = vmul.f32 %v91, %v58
  %v100 = vmul.f32 %v94, %v58
  %v101 = vadd.f32 %v95, 1e-05
  %v102 = vadd.f32 %v96, 1e-05
  %v103 = vadd.f32 %v97, 1e-05
  %v104 = vadd.f32 %v98, 1e-05
  %v105 = vadd.f32 %v99, 1e-05
  %v106 = vadd.f32 %v100, 1e-05
  %v107 = vrsqrt.pop %v101
  %v108 = vmul.f32 %v107, %v101
  %v109 = vmul.f32 %v108, %v107
  %v110 = vmul.f32 0.5, %v109
  %v111 = vsub.f32 1.5, %v110
  %v112 = vmul.f32 %v107, %v111
  %vm113 = vweird.f32 %v101
  %vm114 = vweird.f32 %v107
  %vm115 = vmor %vm113, %vm114
  %v116 = vsel %vm115, %v107, %v112
  %v117 = vrsqrt.pop %v102
  %v118 = vmul.f32 %v117, %v102
  %v119 = vmul.f32 %v118, %v117
  %v120 = vmul.f32 0.5, %v119
  %v121 = vsub.f32 1.5, %v120
  %v122 = vmul.f32 %v117, %v121
  %vm123 = vweird.f32 %v102
  %vm124 = vweird.f32 %v117
  %vm125 = vmor %vm123, %vm124
  %v126 = vsel %vm125, %v117, %v122
  %v127 = vrsqrt.pop %v103
  %v128 = vmul.f32 %v127, %v103
  %v129 = vmul.f32 %v128, %v127
  %v130 = vmul.f32 0.5, %v129
  %v131 = vsub.f32 1.5, %v130
  %v132 = vmul.f32 %v127, %v131
  %vm133 = vweird.f32 %v103
  %vm134 = vweird.f32 %v127
  %vm135 = vmor %vm133, %vm134
  %v136 = vsel %vm135, %v127, %v132
  %v137 = vrsqrt.pop %v104
  %v138 = vmul.f32 %v137, %v104
  %v139 = vmul.f32 %v138, %v137
  %v140 = vmul.f32 0.5, %v139
  %v141 = vsub.f32 1.5, %v140
  %v142 = vmul.f32 %v137, %v141
  %vm143 = vweird.f32 %v104
  %vm144 = vweird.f32 %v137
  %vm145 = vmor %vm143, %vm144
  %v146 = vsel %vm145, %v137, %v142
  %v147 = vrsqrt.pop %v105
  %v148 = vmul.f32 %v147, %v105
  %v149 = vmul.f32 %v148, %v147
  %v150 = vmul.f32 0.5, %v149
  %v151 = vsub.f32 1.5, %v150
  %v152 = vmul.f32 %v147, %v151
  %vm153 = vweird.f32 %v105
  %vm154 = vweird.f32 %v147
  %vm155 = vmor %vm153, %vm154
  %v156 = vsel %vm155, %v147, %v152
  %v157 = vrsqrt.pop %v106
  %v158 = vmul.f32 %v157, %v106
  %v159 = vmul.f32 %v158, %v157
  %v160 = vmul.f32 0.5, %v159
  %v161 = vsub.f32 1.5, %v160
  %v162 = vmul.f32 %v157, %v161
  %vm163 = vweird.f32 %v106
  %vm164 = vweird.f32 %v157
  %vm165 = vmor %vm163, %vm164
  %v166 = vsel %vm165, %v157, %v162
  %v167 = vmul.f32 %v65, %v116
  %v168 = vmul.f32 %v66, %v126
  %v169 = vmul.f32 %v67, %v136
  %v170 = vmul.f32 %v68, %v146
  %v171 = vmul.f32 %v69, %v156
  %v172 = vmul.f32 %v70, %v166
  %v173 = vld [vmem:[%s1] sm:$0x1]
  %v175 = vperm.slane %v173, 0
  %v177 = vmul.f32 %v167, %v175
  %v178 = vmul.f32 %v168, %v175
  %v179 = vmul.f32 %v169, %v175
  %v180 = vmul.f32 %v170, %v175
  %v181 = vmul.f32 %v171, %v175
  %v182 = vmul.f32 %v172, %v175
  %v183 = vld [vmem:[%s2] sm:$0x1]
  %v185 = vperm.slane %v183, 0
  %v187 = vadd.f32 %v177, %v185
  %v188 = vadd.f32 %v178, %v185
  %v189 = vadd.f32 %v179, %v185
  %v190 = vadd.f32 %v180, %v185
  %v191 = vadd.f32 %v181, %v185
  %v192 = vadd.f32 %v182, %v185
  %v193 = vpack.c.bf16 %v188, %v187
  %v194 = vpack.c.bf16 %v190, %v189
  %v195 = vpack.c.bf16 %v192, %v191
  %v196 = vld [vmem:[%s3] sm:$0xff]
  %v197 = vld [vmem:[%s3 + $0x8] sm:$0xff]
  %v198 = vld [vmem:[%s3 + $0x10] sm:$0xff]
  %v199 = vld [vmem:[%s3 + $0x18] sm:$0xff]
  %v200 = vld [vmem:[%s3 + $0x20] sm:$0xff]
  %v201 = vld [vmem:[%s3 + $0x28] sm:$0xff]
  %v202 = vld [vmem:[%s3 + $0x30] sm:$0xff]
  %v203 = vld [vmem:[%s3 + $0x38] sm:$0xff]
  %v204 = vld [vmem:[%s4] sm:$0x3]
  %v206 = vperm.slane %v204, 0
  %v207 = vperm.slane %v204, 1
  %v218 = vunpack.c.l.b16 %v196
  %v219 = vunpack.c.h.b16 %v196
  %v220 = vunpack.c.l.b16 %v197
  %v221 = vunpack.c.h.b16 %v197
  %v222 = vunpack.c.l.b16 %v198
  %v223 = vunpack.c.h.b16 %v198
  %v224 = vunpack.c.l.b16 %v199
  %v225 = vunpack.c.h.b16 %v199
  %v226 = vunpack.c.l.b16 %v200
  %v227 = vunpack.c.h.b16 %v200
  %v228 = vunpack.c.l.b16 %v201
  %v229 = vunpack.c.h.b16 %v201
  %v230 = vunpack.c.l.b16 %v202
  %v231 = vunpack.c.h.b16 %v202
  %v232 = vunpack.c.l.b16 %v203
  %v233 = vunpack.c.h.b16 %v203
  %v234 = vpack.c.b16 %v220, %v218
  %v235 = vpack.c.b16 %v221, %v219
  %v236 = vpack.c.b16 %v224, %v222
  %v237 = vpack.c.b16 %v225, %v223
  %v238 = vpack.c.b16 %v228, %v226
  %v239 = vpack.c.b16 %v229, %v227
  %v240 = vpack.c.b16 %v232, %v230
  %v241 = vpack.c.b16 %v233, %v231
  %v251 = vsel %vm33, %v193, 0
  %v254 = vsel %vm33, %v194, 0
  %v257 = vsel %vm33, %v195, 0
  %259 = vmatpush.bf16.msra.mxu0 0
  %260 = vmatpush.bf16.msra.mxu0 0
  %261 = vmatpush.bf16.msra.mxu0 0
  %262 = vmatpush.bf16.msra.mxu0 0
  %263 = vmatpush.bf16.msra.mxu0 %v240
  %264 = vmatpush.bf16.msra.mxu0 %v238
  %265 = vmatpush.bf16.msra.mxu0 %v236
  %266 = vmatpush.bf16.msra.mxu0 %v234
  %267 = vmatmul.bf16.gmra.mxu0 %v251
  %v268 = vpop.f32.mrf.mxu0
  %v269 = vadd.f32 %v206, %v268
  %v270 = vpop.f32.mrf.mxu0
  %v271 = vadd.f32 %v206, %v270
  %272 = vmatmul.bf16.gmra.mxu0 %v254
  %v273 = vpop.f32.mrf.mxu0
  %v274 = vadd.f32 %v206, %v273
  %v275 = vpop.f32.mrf.mxu0
  %v276 = vadd.f32 %v206, %v275
  %277 = vmatmul.bf16.gmra.mxu0 %v257
  %v278 = vpop.f32.mrf.mxu0
  %v279 = vadd.f32 %v206, %v278
  %v280 = vpop.f32.mrf.mxu0
  %v281 = vadd.f32 %v206, %v280
  %282 = vdwg.mxu0
  %283 = vmatpush.bf16.msra.mxu0 0
  %284 = vmatpush.bf16.msra.mxu0 0
  %285 = vmatpush.bf16.msra.mxu0 0
  %286 = vmatpush.bf16.msra.mxu0 0
  %287 = vmatpush.bf16.msra.mxu0 %v241
  %288 = vmatpush.bf16.msra.mxu0 %v239
  %289 = vmatpush.bf16.msra.mxu0 %v237
  %290 = vmatpush.bf16.msra.mxu0 %v235
  %291 = vmatmul.bf16.gmra.mxu0 %v251
  %v292 = vpop.f32.mrf.mxu0
  %v293 = vadd.f32 %v207, %v292
  %v294 = vpop.f32.mrf.mxu0
  %v295 = vadd.f32 %v207, %v294
  %296 = vmatmul.bf16.gmra.mxu0 %v254
  %v297 = vpop.f32.mrf.mxu0
  %v298 = vadd.f32 %v207, %v297
  %v299 = vpop.f32.mrf.mxu0
  %v300 = vadd.f32 %v207, %v299
  %301 = vmatmul.bf16.gmra.mxu0 %v257
  %v302 = vpop.f32.mrf.mxu0
  %v303 = vadd.f32 %v207, %v302
  %v304 = vpop.f32.mrf.mxu0
  %v305 = vadd.f32 %v207, %v304
  %306 = vdwg.mxu0
  %v307 = vmul.f32 %v269, 0.5
  %v308 = vmul.f32 %v293, 0.5
  %v309 = vmul.f32 %v271, 0.5
  %v310 = vmul.f32 %v295, 0.5
  %v311 = vmul.f32 %v274, 0.5
  %v312 = vmul.f32 %v298, 0.5
  %v313 = vmul.f32 %v276, 0.5
  %v314 = vmul.f32 %v300, 0.5
  %v315 = vmul.f32 %v279, 0.5
  %v316 = vmul.f32 %v303, 0.5
  %v317 = vmul.f32 %v281, 0.5
  %v318 = vmul.f32 %v305, 0.5
  %v319 = vmul.f32 %v269, 0.70710677
  %v320 = vmul.f32 %v293, 0.70710677
  %v321 = vmul.f32 %v271, 0.70710677
  %v322 = vmul.f32 %v295, 0.70710677
  %v323 = vmul.f32 %v274, 0.70710677
  %v324 = vmul.f32 %v298, 0.70710677
  %v325 = vmul.f32 %v276, 0.70710677
  %v326 = vmul.f32 %v300, 0.70710677
  %v327 = vmul.f32 %v279, 0.70710677
  %v328 = vmul.f32 %v303, 0.70710677
  %v329 = vmul.f32 %v281, 0.70710677
  %v330 = vmul.f32 %v305, 0.70710677
  %v331 = vmul.f32 %v319, %v319
  %v332 = vmin.f32 16.0, %v331
  %v333 = vmul.f32 %v332, 2.1237322e-06
  %v334 = vadd.f32 %v333, 0.00028619796
  %v335 = vmul.f32 %v332, %v334
  %v336 = vadd.f32 %v335, 0.0036580483
  %v337 = vmul.f32 %v332, %v336
  %v338 = vadd.f32 %v337, 0.05243302
  %v339 = vmul.f32 %v332, %v338
  %v340 = vadd.f32 %v339, 0.18741608
  %v341 = vmul.f32 %v332, %v340
  %v342 = vadd.f32 %v341, 1.1283791
  %v343 = vmul.f32 %v319, %v342
  %v344 = vmul.f32 %v332, 3.8918573e-05
  %v345 = vadd.f32 %v344, 0.001143296
  %v346 = vmul.f32 %v332, %v345
  %v347 = vadd.f32 %v346, 0.014752088
  %v348 = vmul.f32 %v332, %v347
  %v349 = vadd.f32 %v348, 0.112945676
  %v350 = vmul.f32 %v332, %v349
  %v351 = vadd.f32 %v350, 0.4994258
  %v352 = vmul.f32 %v332, %v351
  %v353 = vadd.f32 %v352, 1.0
  %v354 = vrcp.pop %v353
  %v355 = vmul.f32 %v353, %v354
  %v356 = vsub.f32 1.0, %v355
  %v357 = vmul.f32 %v354, %v356
  %v358 = vadd.f32 %v354, %v357
  %vm359 = vweird.f32 %v353
  %vm360 = vweird.f32 %v354
  %vm361 = vmor %vm359, %vm360
  %v362 = vsel %vm361, %v354, %v358
  %v363 = vand.u32 2147483647, %v353
  %vm364 = vcmp.eq.f32.partialorder %v363, 8.507059e+37
  %v365 = vand.u32 %v353, 2147483648
  %v366 = vor.u32 1.1754944e-38, %v365
  %v367 = vsel %vm364, %v366, %v362
  %v368 = vmul.f32 %v343, %v367
  %v369 = vmin.f32 %v368, 1.0
  %v370 = vmax.f32 %v369, -1.0
  %v371 = vmul.f32 %v320, %v320
  %v372 = vmin.f32 16.0, %v371
  %v373 = vmul.f32 %v372, 2.1237322e-06
  %v374 = vadd.f32 %v373, 0.00028619796
  %v375 = vmul.f32 %v372, %v374
  %v376 = vadd.f32 %v375, 0.0036580483
  %v377 = vmul.f32 %v372, %v376
  %v378 = vadd.f32 %v377, 0.05243302
  %v379 = vmul.f32 %v372, %v378
  %v380 = vadd.f32 %v379, 0.18741608
  %v381 = vmul.f32 %v372, %v380
  %v382 = vadd.f32 %v381, 1.1283791
  %v383 = vmul.f32 %v320, %v382
  %v384 = vmul.f32 %v372, 3.8918573e-05
  %v385 = vadd.f32 %v384, 0.001143296
  %v386 = vmul.f32 %v372, %v385
  %v387 = vadd.f32 %v386, 0.014752088
  %v388 = vmul.f32 %v372, %v387
  %v389 = vadd.f32 %v388, 0.112945676
  %v390 = vmul.f32 %v372, %v389
  %v391 = vadd.f32 %v390, 0.4994258
  %v392 = vmul.f32 %v372, %v391
  %v393 = vadd.f32 %v392, 1.0
  %v394 = vrcp.pop %v393
  %v395 = vmul.f32 %v393, %v394
  %v396 = vsub.f32 1.0, %v395
  %v397 = vmul.f32 %v394, %v396
  %v398 = vadd.f32 %v394, %v397
  %vm399 = vweird.f32 %v393
  %vm400 = vweird.f32 %v394
  %vm401 = vmor %vm399, %vm400
  %v402 = vsel %vm401, %v394, %v398
  %v403 = vand.u32 2147483647, %v393
  %vm404 = vcmp.eq.f32.partialorder %v403, 8.507059e+37
  %v405 = vand.u32 %v393, 2147483648
  %v406 = vor.u32 1.1754944e-38, %v405
  %v407 = vsel %vm404, %v406, %v402
  %v408 = vmul.f32 %v383, %v407
  %v409 = vmin.f32 %v408, 1.0
  %v410 = vmax.f32 %v409, -1.0
  %v411 = vmul.f32 %v321, %v321
  %v412 = vmin.f32 16.0, %v411
  %v413 = vmul.f32 %v412, 2.1237322e-06
  %v414 = vadd.f32 %v413, 0.00028619796
  %v415 = vmul.f32 %v412, %v414
  %v416 = vadd.f32 %v415, 0.0036580483
  %v417 = vmul.f32 %v412, %v416
  %v418 = vadd.f32 %v417, 0.05243302
  %v419 = vmul.f32 %v412, %v418
  %v420 = vadd.f32 %v419, 0.18741608
  %v421 = vmul.f32 %v412, %v420
  %v422 = vadd.f32 %v421, 1.1283791
  %v423 = vmul.f32 %v321, %v422
  %v424 = vmul.f32 %v412, 3.8918573e-05
  %v425 = vadd.f32 %v424, 0.001143296
  %v426 = vmul.f32 %v412, %v425
  %v427 = vadd.f32 %v426, 0.014752088
  %v428 = vmul.f32 %v412, %v427
  %v429 = vadd.f32 %v428, 0.112945676
  %v430 = vmul.f32 %v412, %v429
  %v431 = vadd.f32 %v430, 0.4994258
  %v432 = vmul.f32 %v412, %v431
  %v433 = vadd.f32 %v432, 1.0
  %v434 = vrcp.pop %v433
  %v435 = vmul.f32 %v433, %v434
  %v436 = vsub.f32 1.0, %v435
  %v437 = vmul.f32 %v434, %v436
  %v438 = vadd.f32 %v434, %v437
  %vm439 = vweird.f32 %v433
  %vm440 = vweird.f32 %v434
  %vm441 = vmor %vm439, %vm440
  %v442 = vsel %vm441, %v434, %v438
  %v443 = vand.u32 2147483647, %v433
  %vm444 = vcmp.eq.f32.partialorder %v443, 8.507059e+37
  %v445 = vand.u32 %v433, 2147483648
  %v446 = vor.u32 1.1754944e-38, %v445
  %v447 = vsel %vm444, %v446, %v442
  %v448 = vmul.f32 %v423, %v447
  %v449 = vmin.f32 %v448, 1.0
  %v450 = vmax.f32 %v449, -1.0
  %v451 = vmul.f32 %v322, %v322
  %v452 = vmin.f32 16.0, %v451
  %v453 = vmul.f32 %v452, 2.1237322e-06
  %v454 = vadd.f32 %v453, 0.00028619796
  %v455 = vmul.f32 %v452, %v454
  %v456 = vadd.f32 %v455, 0.0036580483
  %v457 = vmul.f32 %v452, %v456
  %v458 = vadd.f32 %v457, 0.05243302
  %v459 = vmul.f32 %v452, %v458
  %v460 = vadd.f32 %v459, 0.18741608
  %v461 = vmul.f32 %v452, %v460
  %v462 = vadd.f32 %v461, 1.1283791
  %v463 = vmul.f32 %v322, %v462
  %v464 = vmul.f32 %v452, 3.8918573e-05
  %v465 = vadd.f32 %v464, 0.001143296
  %v466 = vmul.f32 %v452, %v465
  %v467 = vadd.f32 %v466, 0.014752088
  %v468 = vmul.f32 %v452, %v467
  %v469 = vadd.f32 %v468, 0.112945676
  %v470 = vmul.f32 %v452, %v469
  %v471 = vadd.f32 %v470, 0.4994258
  %v472 = vmul.f32 %v452, %v471
  %v473 = vadd.f32 %v472, 1.0
  %v474 = vrcp.pop %v473
  %v475 = vmul.f32 %v473, %v474
  %v476 = vsub.f32 1.0, %v475
  %v477 = vmul.f32 %v474, %v476
  %v478 = vadd.f32 %v474, %v477
  %vm479 = vweird.f32 %v473
  %vm480 = vweird.f32 %v474
  %vm481 = vmor %vm479, %vm480
  %v482 = vsel %vm481, %v474, %v478
  %v483 = vand.u32 2147483647, %v473
  %vm484 = vcmp.eq.f32.partialorder %v483, 8.507059e+37
  %v485 = vand.u32 %v473, 2147483648
  %v486 = vor.u32 1.1754944e-38, %v485
  %v487 = vsel %vm484, %v486, %v482
  %v488 = vmul.f32 %v463, %v487
  %v489 = vmin.f32 %v488, 1.0
  %v490 = vmax.f32 %v489, -1.0
  %v491 = vmul.f32 %v323, %v323
  %v492 = vmin.f32 16.0, %v491
  %v493 = vmul.f32 %v492, 2.1237322e-06
  %v494 = vadd.f32 %v493, 0.00028619796
  %v495 = vmul.f32 %v492, %v494
  %v496 = vadd.f32 %v495, 0.0036580483
  %v497 = vmul.f32 %v492, %v496
  %v498 = vadd.f32 %v497, 0.05243302
  %v499 = vmul.f32 %v492, %v498
  %v500 = vadd.f32 %v499, 0.18741608
  %v501 = vmul.f32 %v492, %v500
  %v502 = vadd.f32 %v501, 1.1283791
  %v503 = vmul.f32 %v323, %v502
  %v504 = vmul.f32 %v492, 3.8918573e-05
  %v505 = vadd.f32 %v504, 0.001143296
  %v506 = vmul.f32 %v492, %v505
  %v507 = vadd.f32 %v506, 0.014752088
  %v508 = vmul.f32 %v492, %v507
  %v509 = vadd.f32 %v508, 0.112945676
  %v510 = vmul.f32 %v492, %v509
  %v511 = vadd.f32 %v510, 0.4994258
  %v512 = vmul.f32 %v492, %v511
  %v513 = vadd.f32 %v512, 1.0
  %v514 = vrcp.pop %v513
  %v515 = vmul.f32 %v513, %v514
  %v516 = vsub.f32 1.0, %v515
  %v517 = vmul.f32 %v514, %v516
  %v518 = vadd.f32 %v514, %v517
  %vm519 = vweird.f32 %v513
  %vm520 = vweird.f32 %v514
  %vm521 = vmor %vm519, %vm520
  %v522 = vsel %vm521, %v514, %v518
  %v523 = vand.u32 2147483647, %v513
  %vm524 = vcmp.eq.f32.partialorder %v523, 8.507059e+37
  %v525 = vand.u32 %v513, 2147483648
  %v526 = vor.u32 1.1754944e-38, %v525
  %v527 = vsel %vm524, %v526, %v522
  %v528 = vmul.f32 %v503, %v527
  %v529 = vmin.f32 %v528, 1.0
  %v530 = vmax.f32 %v529, -1.0
  %v531 = vmul.f32 %v324, %v324
  %v532 = vmin.f32 16.0, %v531
  %v533 = vmul.f32 %v532, 2.1237322e-06
  %v534 = vadd.f32 %v533, 0.00028619796
  %v535 = vmul.f32 %v532, %v534
  %v536 = vadd.f32 %v535, 0.0036580483
  %v537 = vmul.f32 %v532, %v536
  %v538 = vadd.f32 %v537, 0.05243302
  %v539 = vmul.f32 %v532, %v538
  %v540 = vadd.f32 %v539, 0.18741608
  %v541 = vmul.f32 %v532, %v540
  %v542 = vadd.f32 %v541, 1.1283791
  %v543 = vmul.f32 %v324, %v542
  %v544 = vmul.f32 %v532, 3.8918573e-05
  %v545 = vadd.f32 %v544, 0.001143296
  %v546 = vmul.f32 %v532, %v545
  %v547 = vadd.f32 %v546, 0.014752088
  %v548 = vmul.f32 %v532, %v547
  %v549 = vadd.f32 %v548, 0.112945676
  %v550 = vmul.f32 %v532, %v549
  %v551 = vadd.f32 %v550, 0.4994258
  %v552 = vmul.f32 %v532, %v551
  %v553 = vadd.f32 %v552, 1.0
  %v554 = vrcp.pop %v553
  %v555 = vmul.f32 %v553, %v554
  %v556 = vsub.f32 1.0, %v555
  %v557 = vmul.f32 %v554, %v556
  %v558 = vadd.f32 %v554, %v557
  %vm559 = vweird.f32 %v553
  %vm560 = vweird.f32 %v554
  %vm561 = vmor %vm559, %vm560
  %v562 = vsel %vm561, %v554, %v558
  %v563 = vand.u32 2147483647, %v553
  %vm564 = vcmp.eq.f32.partialorder %v563, 8.507059e+37
  %v565 = vand.u32 %v553, 2147483648
  %v566 = vor.u32 1.1754944e-38, %v565
  %v567 = vsel %vm564, %v566, %v562
  %v568 = vmul.f32 %v543, %v567
  %v569 = vmin.f32 %v568, 1.0
  %v570 = vmax.f32 %v569, -1.0
  %v571 = vmul.f32 %v325, %v325
  %v572 = vmin.f32 16.0, %v571
  %v573 = vmul.f32 %v572, 2.1237322e-06
  %v574 = vadd.f32 %v573, 0.00028619796
  %v575 = vmul.f32 %v572, %v574
  %v576 = vadd.f32 %v575, 0.0036580483
  %v577 = vmul.f32 %v572, %v576
  %v578 = vadd.f32 %v577, 0.05243302
  %v579 = vmul.f32 %v572, %v578
  %v580 = vadd.f32 %v579, 0.18741608
  %v581 = vmul.f32 %v572, %v580
  %v582 = vadd.f32 %v581, 1.1283791
  %v583 = vmul.f32 %v325, %v582
  %v584 = vmul.f32 %v572, 3.8918573e-05
  %v585 = vadd.f32 %v584, 0.001143296
  %v586 = vmul.f32 %v572, %v585
  %v587 = vadd.f32 %v586, 0.014752088
  %v588 = vmul.f32 %v572, %v587
  %v589 = vadd.f32 %v588, 0.112945676
  %v590 = vmul.f32 %v572, %v589
  %v591 = vadd.f32 %v590, 0.4994258
  %v592 = vmul.f32 %v572, %v591
  %v593 = vadd.f32 %v592, 1.0
  %v594 = vrcp.pop %v593
  %v595 = vmul.f32 %v593, %v594
  %v596 = vsub.f32 1.0, %v595
  %v597 = vmul.f32 %v594, %v596
  %v598 = vadd.f32 %v594, %v597
  %vm599 = vweird.f32 %v593
  %vm600 = vweird.f32 %v594
  %vm601 = vmor %vm599, %vm600
  %v602 = vsel %vm601, %v594, %v598
  %v603 = vand.u32 2147483647, %v593
  %vm604 = vcmp.eq.f32.partialorder %v603, 8.507059e+37
  %v605 = vand.u32 %v593, 2147483648
  %v606 = vor.u32 1.1754944e-38, %v605
  %v607 = vsel %vm604, %v606, %v602
  %v608 = vmul.f32 %v583, %v607
  %v609 = vmin.f32 %v608, 1.0
  %v610 = vmax.f32 %v609, -1.0
  %v611 = vmul.f32 %v326, %v326
  %v612 = vmin.f32 16.0, %v611
  %v613 = vmul.f32 %v612, 2.1237322e-06
  %v614 = vadd.f32 %v613, 0.00028619796
  %v615 = vmul.f32 %v612, %v614
  %v616 = vadd.f32 %v615, 0.0036580483
  %v617 = vmul.f32 %v612, %v616
  %v618 = vadd.f32 %v617, 0.05243302
  %v619 = vmul.f32 %v612, %v618
  %v620 = vadd.f32 %v619, 0.18741608
  %v621 = vmul.f32 %v612, %v620
  %v622 = vadd.f32 %v621, 1.1283791
  %v623 = vmul.f32 %v326, %v622
  %v624 = vmul.f32 %v612, 3.8918573e-05
  %v625 = vadd.f32 %v624, 0.001143296
  %v626 = vmul.f32 %v612, %v625
  %v627 = vadd.f32 %v626, 0.014752088
  %v628 = vmul.f32 %v612, %v627
  %v629 = vadd.f32 %v628, 0.112945676
  %v630 = vmul.f32 %v612, %v629
  %v631 = vadd.f32 %v630, 0.4994258
  %v632 = vmul.f32 %v612, %v631
  %v633 = vadd.f32 %v632, 1.0
  %v634 = vrcp.pop %v633
  %v635 = vmul.f32 %v633, %v634
  %v636 = vsub.f32 1.0, %v635
  %v637 = vmul.f32 %v634, %v636
  %v638 = vadd.f32 %v634, %v637
  %vm639 = vweird.f32 %v633
  %vm640 = vweird.f32 %v634
  %vm641 = vmor %vm639, %vm640
  %v642 = vsel %vm641, %v634, %v638
  %v643 = vand.u32 2147483647, %v633
  %vm644 = vcmp.eq.f32.partialorder %v643, 8.507059e+37
  %v645 = vand.u32 %v633, 2147483648
  %v646 = vor.u32 1.1754944e-38, %v645
  %v647 = vsel %vm644, %v646, %v642
  %v648 = vmul.f32 %v623, %v647
  %v649 = vmin.f32 %v648, 1.0
  %v650 = vmax.f32 %v649, -1.0
  %v651 = vmul.f32 %v327, %v327
  %v652 = vmin.f32 16.0, %v651
  %v653 = vmul.f32 %v652, 2.1237322e-06
  %v654 = vadd.f32 %v653, 0.00028619796
  %v655 = vmul.f32 %v652, %v654
  %v656 = vadd.f32 %v655, 0.0036580483
  %v657 = vmul.f32 %v652, %v656
  %v658 = vadd.f32 %v657, 0.05243302
  %v659 = vmul.f32 %v652, %v658
  %v660 = vadd.f32 %v659, 0.18741608
  %v661 = vmul.f32 %v652, %v660
  %v662 = vadd.f32 %v661, 1.1283791
  %v663 = vmul.f32 %v327, %v662
  %v664 = vmul.f32 %v652, 3.8918573e-05
  %v665 = vadd.f32 %v664, 0.001143296
  %v666 = vmul.f32 %v652, %v665
  %v667 = vadd.f32 %v666, 0.014752088
  %v668 = vmul.f32 %v652, %v667
  %v669 = vadd.f32 %v668, 0.112945676
  %v670 = vmul.f32 %v652, %v669
  %v671 = vadd.f32 %v670, 0.4994258
  %v672 = vmul.f32 %v652, %v671
  %v673 = vadd.f32 %v672, 1.0
  %v674 = vrcp.pop %v673
  %v675 = vmul.f32 %v673, %v674
  %v676 = vsub.f32 1.0, %v675
  %v677 = vmul.f32 %v674, %v676
  %v678 = vadd.f32 %v674, %v677
  %vm679 = vweird.f32 %v673
  %vm680 = vweird.f32 %v674
  %vm681 = vmor %vm679, %vm680
  %v682 = vsel %vm681, %v674, %v678
  %v683 = vand.u32 2147483647, %v673
  %vm684 = vcmp.eq.f32.partialorder %v683, 8.507059e+37
  %v685 = vand.u32 %v673, 2147483648
  %v686 = vor.u32 1.1754944e-38, %v685
  %v687 = vsel %vm684, %v686, %v682
  %v688 = vmul.f32 %v663, %v687
  %v689 = vmin.f32 %v688, 1.0
  %v690 = vmax.f32 %v689, -1.0
  %v691 = vmul.f32 %v328, %v328
  %v692 = vmin.f32 16.0, %v691
  %v693 = vmul.f32 %v692, 2.1237322e-06
  %v694 = vadd.f32 %v693, 0.00028619796
  %v695 = vmul.f32 %v692, %v694
  %v696 = vadd.f32 %v695, 0.0036580483
  %v697 = vmul.f32 %v692, %v696
  %v698 = vadd.f32 %v697, 0.05243302
  %v699 = vmul.f32 %v692, %v698
  %v700 = vadd.f32 %v699, 0.18741608
  %v701 = vmul.f32 %v692, %v700
  %v702 = vadd.f32 %v701, 1.1283791
  %v703 = vmul.f32 %v328, %v702
  %v704 = vmul.f32 %v692, 3.8918573e-05
  %v705 = vadd.f32 %v704, 0.001143296
  %v706 = vmul.f32 %v692, %v705
  %v707 = vadd.f32 %v706, 0.014752088
  %v708 = vmul.f32 %v692, %v707
  %v709 = vadd.f32 %v708, 0.112945676
  %v710 = vmul.f32 %v692, %v709
  %v711 = vadd.f32 %v710, 0.4994258
  %v712 = vmul.f32 %v692, %v711
  %v713 = vadd.f32 %v712, 1.0
  %v714 = vrcp.pop %v713
  %v715 = vmul.f32 %v713, %v714
  %v716 = vsub.f32 1.0, %v715
  %v717 = vmul.f32 %v714, %v716
  %v718 = vadd.f32 %v714, %v717
  %vm719 = vweird.f32 %v713
  %vm720 = vweird.f32 %v714
  %vm721 = vmor %vm719, %vm720
  %v722 = vsel %vm721, %v714, %v718
  %v723 = vand.u32 2147483647, %v713
  %vm724 = vcmp.eq.f32.partialorder %v723, 8.507059e+37
  %v725 = vand.u32 %v713, 2147483648
  %v726 = vor.u32 1.1754944e-38, %v725
  %v727 = vsel %vm724, %v726, %v722
  %v728 = vmul.f32 %v703, %v727
  %v729 = vmin.f32 %v728, 1.0
  %v730 = vmax.f32 %v729, -1.0
  %v731 = vmul.f32 %v329, %v329
  %v732 = vmin.f32 16.0, %v731
  %v733 = vmul.f32 %v732, 2.1237322e-06
  %v734 = vadd.f32 %v733, 0.00028619796
  %v735 = vmul.f32 %v732, %v734
  %v736 = vadd.f32 %v735, 0.0036580483
  %v737 = vmul.f32 %v732, %v736
  %v738 = vadd.f32 %v737, 0.05243302
  %v739 = vmul.f32 %v732, %v738
  %v740 = vadd.f32 %v739, 0.18741608
  %v741 = vmul.f32 %v732, %v740
  %v742 = vadd.f32 %v741, 1.1283791
  %v743 = vmul.f32 %v329, %v742
  %v744 = vmul.f32 %v732, 3.8918573e-05
  %v745 = vadd.f32 %v744, 0.001143296
  %v746 = vmul.f32 %v732, %v745
  %v747 = vadd.f32 %v746, 0.014752088
  %v748 = vmul.f32 %v732, %v747
  %v749 = vadd.f32 %v748, 0.112945676
  %v750 = vmul.f32 %v732, %v749
  %v751 = vadd.f32 %v750, 0.4994258
  %v752 = vmul.f32 %v732, %v751
  %v753 = vadd.f32 %v752, 1.0
  %v754 = vrcp.pop %v753
  %v755 = vmul.f32 %v753, %v754
  %v756 = vsub.f32 1.0, %v755
  %v757 = vmul.f32 %v754, %v756
  %v758 = vadd.f32 %v754, %v757
  %vm759 = vweird.f32 %v753
  %vm760 = vweird.f32 %v754
  %vm761 = vmor %vm759, %vm760
  %v762 = vsel %vm761, %v754, %v758
  %v763 = vand.u32 2147483647, %v753
  %vm764 = vcmp.eq.f32.partialorder %v763, 8.507059e+37
  %v765 = vand.u32 %v753, 2147483648
  %v766 = vor.u32 1.1754944e-38, %v765
  %v767 = vsel %vm764, %v766, %v762
  %v768 = vmul.f32 %v743, %v767
  %v769 = vmin.f32 %v768, 1.0
  %v770 = vmax.f32 %v769, -1.0
  %v771 = vmul.f32 %v330, %v330
  %v772 = vmin.f32 16.0, %v771
  %v773 = vmul.f32 %v772, 2.1237322e-06
  %v774 = vadd.f32 %v773, 0.00028619796
  %v775 = vmul.f32 %v772, %v774
  %v776 = vadd.f32 %v775, 0.0036580483
  %v777 = vmul.f32 %v772, %v776
  %v778 = vadd.f32 %v777, 0.05243302
  %v779 = vmul.f32 %v772, %v778
  %v780 = vadd.f32 %v779, 0.18741608
  %v781 = vmul.f32 %v772, %v780
  %v782 = vadd.f32 %v781, 1.1283791
  %v783 = vmul.f32 %v330, %v782
  %v784 = vmul.f32 %v772, 3.8918573e-05
  %v785 = vadd.f32 %v784, 0.001143296
  %v786 = vmul.f32 %v772, %v785
  %v787 = vadd.f32 %v786, 0.014752088
  %v788 = vmul.f32 %v772, %v787
  %v789 = vadd.f32 %v788, 0.112945676
  %v790 = vmul.f32 %v772, %v789
  %v791 = vadd.f32 %v790, 0.4994258
  %v792 = vmul.f32 %v772, %v791
  %v793 = vadd.f32 %v792, 1.0
  %v794 = vrcp.pop %v793
  %v795 = vmul.f32 %v793, %v794
  %v796 = vsub.f32 1.0, %v795
  %v797 = vmul.f32 %v794, %v796
  %v798 = vadd.f32 %v794, %v797
  %vm799 = vweird.f32 %v793
  %vm800 = vweird.f32 %v794
  %vm801 = vmor %vm799, %vm800
  %v802 = vsel %vm801, %v794, %v798
  %v803 = vand.u32 2147483647, %v793
  %vm804 = vcmp.eq.f32.partialorder %v803, 8.507059e+37
  %v805 = vand.u32 %v793, 2147483648
  %v806 = vor.u32 1.1754944e-38, %v805
  %v807 = vsel %vm804, %v806, %v802
  %v808 = vmul.f32 %v783, %v807
  %v809 = vmin.f32 %v808, 1.0
  %v810 = vmax.f32 %v809, -1.0
  %v811 = vadd.f32 %v370, 1.0
  %v812 = vadd.f32 %v410, 1.0
  %v813 = vadd.f32 %v450, 1.0
  %v814 = vadd.f32 %v490, 1.0
  %v815 = vadd.f32 %v530, 1.0
  %v816 = vadd.f32 %v570, 1.0
  %v817 = vadd.f32 %v610, 1.0
  %v818 = vadd.f32 %v650, 1.0
  %v819 = vadd.f32 %v690, 1.0
  %v820 = vadd.f32 %v730, 1.0
  %v821 = vadd.f32 %v770, 1.0
  %v822 = vadd.f32 %v810, 1.0
  %v823 = vmul.f32 %v307, %v811
  %v824 = vmul.f32 %v308, %v812
  %v825 = vmul.f32 %v309, %v813
  %v826 = vmul.f32 %v310, %v814
  %v827 = vmul.f32 %v311, %v815
  %v828 = vmul.f32 %v312, %v816
  %v829 = vmul.f32 %v313, %v817
  %v830 = vmul.f32 %v314, %v818
  %v831 = vmul.f32 %v315, %v819
  %v832 = vmul.f32 %v316, %v820
  %v833 = vmul.f32 %v317, %v821
  %v834 = vmul.f32 %v318, %v822
  %v835 = vpack.c.bf16 %v824, %v823
  %v836 = vpack.c.bf16 %v826, %v825
  %v837 = vpack.c.bf16 %v828, %v827
  %v838 = vpack.c.bf16 %v830, %v829
  %v839 = vpack.c.bf16 %v832, %v831
  %v840 = vpack.c.bf16 %v834, %v833
  %841 = vst [vmem:[%s5] sm:$0xff] %v835
  %842 = vst [vmem:[%s5 + $0x8] sm:$0xff] %v836
  %843 = vst [vmem:[%s5 + $0x10] sm:$0xff] %v837
  %844 = vst [vmem:[%s5 + $0x18] sm:$0xff] %v838
  %845 = vst [vmem:[%s5 + $0x20] sm:$0xff] %v839
  %846 = vst [vmem:[%s5 + $0x28] sm:$0xff] %v840
  // Predicated region
  $region22: #{uvit_forward.25} parent=0 // pred_check
    _
  $region23: #{uvit_forward.25} parent=0 // pred_check_branch
    %848 = sbr.rel (0) target = $region25
  $region24: #{uvit_forward.25} parent=0 // pred_region
    _
  $region25: #{uvit_forward.25} parent=0 // pred_fallthru
    _
  // Predicated region
  $region26: #{uvit_forward.25} parent=0 // pred_check
    _
  $region27: #{uvit_forward.25} parent=0 // pred_check_branch
    %850 = sbr.rel (0) target = $region29
  $region28: #{uvit_forward.25} parent=0 // pred_region
    _
  $region29: #{uvit_forward.25} parent=0 // pred_fallthru
    _

// kernel: uvit_forward.26
$region0: #{uvit_forward.26}
  #allocation0 [shape = 'u32[]', space=smem, size = 0x4, offset = 0x4, fixed_abs, tag = 'smem constant byte address 0x4 - core index']
  #allocation1 [shape = 'u32[72,128]{1,0:T(1,128)}', space=vmem, size = 0x9000, scoped, tag = 'internal scratch']
  %s0 = inlined_call_operand.vmem [shape: bf16[48,256], index: 0, kind: input, shape index: {}]
  %s1 = inlined_call_operand.vmem [shape: bf16[256,64], index: 1, kind: input, shape index: {}]
  %s2 = inlined_call_operand.vmem [shape: f32[1,64], index: 2, kind: input, shape index: {}]
  %s3 = inlined_call_operand.vmem [shape: bf16[48,64], index: 3, kind: input, shape index: {}]
  %s4 = inlined_call_operand.vmem [shape: bf16[48,64], index: 4, kind: output, shape index: {}]
  %s5 = sld [smem:[#allocation0]]
  $region26: #{uvit_forward.26} parent=0
    _
  %s7 = ssub.s32 1, %s5
  %s8 = scalar_select 0, %s7, %s5
  // Predicated region
  $region2: #{uvit_forward.26} parent=0 // pred_check
    _
  $region3: #{uvit_forward.26} parent=0 // pred_check_branch
    %10 = sbr.rel (0) target = $region5
  $region4: #{uvit_forward.26} parent=0 // pred_region
    _
  $region5: #{uvit_forward.26} parent=0 // pred_fallthru
    _
  // Predicated region
  $region6: #{uvit_forward.26} parent=0 // pred_check
    _
  $region7: #{uvit_forward.26} parent=0 // pred_check_branch
    %12 = sbr.rel (0) target = $region9
  $region8: #{uvit_forward.26} parent=0 // pred_region
    _
  $region9: #{uvit_forward.26} parent=0 // pred_fallthru
    _
  // Predicated region
  $region10: #{uvit_forward.26} parent=0 // pred_check
    _
  $region11: #{uvit_forward.26} parent=0 // pred_check_branch
    %14 = sbr.rel (0) target = $region13
  $region12: #{uvit_forward.26} parent=0 // pred_region
    _
  $region13: #{uvit_forward.26} parent=0 // pred_fallthru
    _
  // Predicated region
  $region14: #{uvit_forward.26} parent=0 // pred_check
    _
  $region15: #{uvit_forward.26} parent=0 // pred_check_branch
    %16 = sbr.rel (0) target = $region17
  $region16: #{uvit_forward.26} parent=0 // pred_region
    _
  $region17: #{uvit_forward.26} parent=0 // pred_fallthru
    _
  %v17 = vld [vmem:[%s0] sm:$0xff]
  %v18 = vld [vmem:[%s0 + $0x8] sm:$0xff]
  %v19 = vld [vmem:[%s0 + $0x10] sm:$0xff]
  %v20 = vld [vmem:[%s0 + $0x18] sm:$0xff]
  %v21 = vld [vmem:[%s0 + $0x20] sm:$0xff]
  %v22 = vld [vmem:[%s0 + $0x28] sm:$0xff]
  %v23 = vld [vmem:[%s1] sm:$0xf]
  %v24 = vld [vmem:[%s1 + $0x4] sm:$0xf]
  %v25 = vld [vmem:[%s1 + $0x8] sm:$0xf]
  %v26 = vld [vmem:[%s1 + $0xc] sm:$0xf]
  %v27 = vld [vmem:[%s1 + $0x10] sm:$0xf]
  %v28 = vld [vmem:[%s1 + $0x14] sm:$0xf]
  %v29 = vld [vmem:[%s1 + $0x18] sm:$0xf]
  %v30 = vld [vmem:[%s1 + $0x1c] sm:$0xf]
  %v31 = vld [vmem:[%s1 + $0x20] sm:$0xf]
  %v32 = vld [vmem:[%s1 + $0x24] sm:$0xf]
  %v33 = vld [vmem:[%s1 + $0x28] sm:$0xf]
  %v34 = vld [vmem:[%s1 + $0x2c] sm:$0xf]
  %v35 = vld [vmem:[%s1 + $0x30] sm:$0xf]
  %v36 = vld [vmem:[%s1 + $0x34] sm:$0xf]
  %v37 = vld [vmem:[%s1 + $0x38] sm:$0xf]
  %v38 = vld [vmem:[%s1 + $0x3c] sm:$0xf]
  %v39 = vld [vmem:[%s1 + $0x40] sm:$0xf]
  %v40 = vld [vmem:[%s1 + $0x44] sm:$0xf]
  %v41 = vld [vmem:[%s1 + $0x48] sm:$0xf]
  %v42 = vld [vmem:[%s1 + $0x4c] sm:$0xf]
  %v43 = vld [vmem:[%s1 + $0x50] sm:$0xf]
  %v44 = vld [vmem:[%s1 + $0x54] sm:$0xf]
  %v45 = vld [vmem:[%s1 + $0x58] sm:$0xf]
  %v46 = vld [vmem:[%s1 + $0x5c] sm:$0xf]
  %v47 = vld [vmem:[%s1 + $0x60] sm:$0xf]
  %v48 = vld [vmem:[%s1 + $0x64] sm:$0xf]
  %v49 = vld [vmem:[%s1 + $0x68] sm:$0xf]
  %v50 = vld [vmem:[%s1 + $0x6c] sm:$0xf]
  %v51 = vld [vmem:[%s1 + $0x70] sm:$0xf]
  %v52 = vld [vmem:[%s1 + $0x74] sm:$0xf]
  %v53 = vld [vmem:[%s1 + $0x78] sm:$0xf]
  %v54 = vld [vmem:[%s1 + $0x7c] sm:$0xf]
  %v55 = vld [vmem:[%s2] sm:$0x1]
  %v57 = vperm.slane %v55, 0
  %v65 = vunpack.c.l.b16 %v17
  %v66 = vunpack.c.h.b16 %v17
  %v67 = vunpack.c.l.b16 %v18
  %v68 = vunpack.c.h.b16 %v18
  %v69 = vunpack.c.l.b16 %v19
  %v70 = vunpack.c.h.b16 %v19
  %v71 = vunpack.c.l.b16 %v20
  %v72 = vunpack.c.h.b16 %v20
  %v73 = vunpack.c.l.b16 %v21
  %v74 = vunpack.c.h.b16 %v21
  %v75 = vunpack.c.l.b16 %v22
  %v76 = vunpack.c.h.b16 %v22
  %v77 = vpack.c.b16 %v67, %v65
  %v78 = vpack.c.b16 %v68, %v66
  %v79 = vpack.c.b16 %v71, %v69
  %v80 = vpack.c.b16 %v72, %v70
  %v81 = vpack.c.b16 %v75, %v73
  %v82 = vpack.c.b16 %v76, %v74
  %v121 = vunpack.c.l.b16 %v23
  %v122 = vunpack.c.l.b16 %v24
  %v123 = vunpack.c.l.b16 %v25
  %v124 = vunpack.c.l.b16 %v26
  %v125 = vunpack.c.l.b16 %v27
  %v126 = vunpack.c.l.b16 %v28
  %v127 = vunpack.c.l.b16 %v29
  %v128 = vunpack.c.l.b16 %v30
  %v129 = vunpack.c.l.b16 %v31
  %v130 = vunpack.c.l.b16 %v32
  %v131 = vunpack.c.l.b16 %v33
  %v132 = vunpack.c.l.b16 %v34
  %v133 = vunpack.c.l.b16 %v35
  %v134 = vunpack.c.l.b16 %v36
  %v135 = vunpack.c.l.b16 %v37
  %v136 = vunpack.c.l.b16 %v38
  %v137 = vunpack.c.l.b16 %v39
  %v138 = vunpack.c.l.b16 %v40
  %v139 = vunpack.c.l.b16 %v41
  %v140 = vunpack.c.l.b16 %v42
  %v141 = vunpack.c.l.b16 %v43
  %v142 = vunpack.c.l.b16 %v44
  %v143 = vunpack.c.l.b16 %v45
  %v144 = vunpack.c.l.b16 %v46
  %v145 = vunpack.c.l.b16 %v47
  %v146 = vunpack.c.l.b16 %v48
  %v147 = vunpack.c.l.b16 %v49
  %v148 = vunpack.c.l.b16 %v50
  %v149 = vunpack.c.l.b16 %v51
  %v150 = vunpack.c.l.b16 %v52
  %v151 = vunpack.c.l.b16 %v53
  %v152 = vunpack.c.l.b16 %v54
  %v153 = vpack.c.b16 %v122, %v121
  %v154 = vpack.c.b16 %v124, %v123
  %v155 = vpack.c.b16 %v126, %v125
  %v156 = vpack.c.b16 %v128, %v127
  %v157 = vpack.c.b16 %v130, %v129
  %v158 = vpack.c.b16 %v132, %v131
  %v159 = vpack.c.b16 %v134, %v133
  %v160 = vpack.c.b16 %v136, %v135
  %v161 = vpack.c.b16 %v138, %v137
  %v162 = vpack.c.b16 %v140, %v139
  %v163 = vpack.c.b16 %v142, %v141
  %v164 = vpack.c.b16 %v144, %v143
  %v165 = vpack.c.b16 %v146, %v145
  %v166 = vpack.c.b16 %v148, %v147
  %v167 = vpack.c.b16 %v150, %v149
  %v168 = vpack.c.b16 %v152, %v151
  %185 = vmatpush.bf16.msra.mxu0 %v160
  %186 = vmatpush.bf16.msra.mxu0 %v159
  %187 = vmatpush.bf16.msra.mxu0 %v158
  %188 = vmatpush.bf16.msra.mxu0 %v157
  %189 = vmatpush.bf16.msra.mxu0 %v156
  %190 = vmatpush.bf16.msra.mxu0 %v155
  %191 = vmatpush.bf16.msra.mxu0 %v154
  %192 = vmatpush.bf16.msra.mxu0 %v153
  %193 = vmatmul.bf16.gmra.mxu0 %v77
  %v194 = vpop.f32.mrf.mxu0
  %v195 = vadd.f32 %v57, %v194
  %v196 = vpop.f32.mrf.mxu0
  %v197 = vadd.f32 %v57, %v196
  %198 = vmatmul.bf16.gmra.mxu0 %v79
  %v199 = vpop.f32.mrf.mxu0
  %v200 = vadd.f32 %v57, %v199
  %v201 = vpop.f32.mrf.mxu0
  %v202 = vadd.f32 %v57, %v201
  %203 = vmatmul.bf16.gmra.mxu0 %v81
  %v204 = vpop.f32.mrf.mxu0
  %v205 = vadd.f32 %v57, %v204
  %v206 = vpop.f32.mrf.mxu0
  %v207 = vadd.f32 %v57, %v206
  %208 = vdwg.mxu0
  %209 = vmatpush.bf16.msra.mxu0 %v168
  %210 = vmatpush.bf16.msra.mxu0 %v167
  %211 = vmatpush.bf16.msra.mxu0 %v166
  %212 = vmatpush.bf16.msra.mxu0 %v165
  %213 = vmatpush.bf16.msra.mxu0 %v164
  %214 = vmatpush.bf16.msra.mxu0 %v163
  %215 = vmatpush.bf16.msra.mxu0 %v162
  %216 = vmatpush.bf16.msra.mxu0 %v161
  %217 = vmatmul.bf16.gmra.mxu0 %v78
  %v218 = vpop.f32.mrf.mxu0
  %v219 = vadd.f32 %v195, %v218
  %v220 = vpop.f32.mrf.mxu0
  %v221 = vadd.f32 %v197, %v220
  %222 = vmatmul.bf16.gmra.mxu0 %v80
  %v223 = vpop.f32.mrf.mxu0
  %v224 = vadd.f32 %v200, %v223
  %v225 = vpop.f32.mrf.mxu0
  %v226 = vadd.f32 %v202, %v225
  %227 = vmatmul.bf16.gmra.mxu0 %v82
  %v228 = vpop.f32.mrf.mxu0
  %v229 = vadd.f32 %v205, %v228
  %v230 = vpop.f32.mrf.mxu0
  %v231 = vadd.f32 %v207, %v230
  %232 = vdwg.mxu0
  %v233 = vld [vmem:[%s3] sm:$0xf]
  %v234 = vld [vmem:[%s3 + $0x4] sm:$0xf]
  %v235 = vld [vmem:[%s3 + $0x8] sm:$0xf]
  %v236 = vld [vmem:[%s3 + $0xc] sm:$0xf]
  %v237 = vld [vmem:[%s3 + $0x10] sm:$0xf]
  %v238 = vld [vmem:[%s3 + $0x14] sm:$0xf]
  %v239 = vunpack.c.l.bf16 %v233
  %v240 = vunpack.c.l.bf16 %v234
  %v241 = vunpack.c.l.bf16 %v235
  %v242 = vunpack.c.l.bf16 %v236
  %v243 = vunpack.c.l.bf16 %v237
  %v244 = vunpack.c.l.bf16 %v238
  %v245 = vadd.f32 %v219, %v239
  %v246 = vadd.f32 %v221, %v240
  %v247 = vadd.f32 %v224, %v241
  %v248 = vadd.f32 %v226, %v242
  %v249 = vadd.f32 %v229, %v243
  %v250 = vadd.f32 %v231, %v244
  %v251 = vpack.c.bf16 %v245, %v245
  %v252 = vpack.c.bf16 %v246, %v246
  %v253 = vpack.c.bf16 %v247, %v247
  %v254 = vpack.c.bf16 %v248, %v248
  %v255 = vpack.c.bf16 %v249, %v249
  %v256 = vpack.c.bf16 %v250, %v250
  %vm257 = vcmask 519168
  %258 = vst.msk [vmem:[%s4] sm:$0xf] %vm257, %v251
  %259 = vst.msk [vmem:[%s4 + $0x4] sm:$0xf] %vm257, %v252
  %260 = vst.msk [vmem:[%s4 + $0x8] sm:$0xf] %vm257, %v253
  %261 = vst.msk [vmem:[%s4 + $0xc] sm:$0xf] %vm257, %v254
  %262 = vst.msk [vmem:[%s4 + $0x10] sm:$0xf] %vm257, %v255
  %263 = vst.msk [vmem:[%s4 + $0x14] sm:$0xf] %vm257, %v256
  // Predicated region
  $region18: #{uvit_forward.26} parent=0 // pred_check
    _
  $region19: #{uvit_forward.26} parent=0 // pred_check_branch
    %265 = sbr.rel (0) target = $region21
  $region20: #{uvit_forward.26} parent=0 // pred_region
    _
  $region21: #{uvit_forward.26} parent=0 // pred_fallthru
    _
  // Predicated region
  $region22: #{uvit_forward.26} parent=0 // pred_check
    _
  $region23: #{uvit_forward.26} parent=0 // pred_check_branch
    %267 = sbr.rel (0) target = $region25
  $region24: #{uvit_forward.26} parent=0 // pred_region
    _
  $region25: #{uvit_forward.26} parent=0 // pred_fallthru
    _

// kernel: uvit_forward.32
$region0: #{uvit_forward.32}
  #allocation0 [shape = 'u32[]', space=smem, size = 0x4, offset = 0x4, fixed_abs, tag = 'smem constant byte address 0x4 - core index']
  #allocation1 [shape = 'u32[72,128]{1,0:T(1,128)}', space=vmem, size = 0x9000, scoped, tag = 'internal scratch']
  %s0 = inlined_call_operand.vmem [shape: bf16[48,64], index: 0, kind: input, shape index: {}]
  %s1 = inlined_call_operand.vmem [shape: bf16[48,64], index: 1, kind: input, shape index: {}]
  %s2 = inlined_call_operand.vmem [shape: bf16[64,64], index: 2, kind: input, shape index: {}]
  %s3 = inlined_call_operand.vmem [shape: bf16[64,64], index: 3, kind: input, shape index: {}]
  %s4 = inlined_call_operand.vmem [shape: f32[1,64], index: 4, kind: input, shape index: {}]
  %s5 = inlined_call_operand.vmem [shape: bf16[48,64], index: 5, kind: output, shape index: {}]
  %s6 = sld [smem:[#allocation0]]
  $region30: #{uvit_forward.32} parent=0
    _
  %s8 = ssub.s32 1, %s6
  %s9 = scalar_select 0, %s8, %s6
  // Predicated region
  $region2: #{uvit_forward.32} parent=0 // pred_check
    _
  $region3: #{uvit_forward.32} parent=0 // pred_check_branch
    %11 = sbr.rel (0) target = $region5
  $region4: #{uvit_forward.32} parent=0 // pred_region
    _
  $region5: #{uvit_forward.32} parent=0 // pred_fallthru
    _
  // Predicated region
  $region6: #{uvit_forward.32} parent=0 // pred_check
    _
  $region7: #{uvit_forward.32} parent=0 // pred_check_branch
    %13 = sbr.rel (0) target = $region9
  $region8: #{uvit_forward.32} parent=0 // pred_region
    _
  $region9: #{uvit_forward.32} parent=0 // pred_fallthru
    _
  // Predicated region
  $region10: #{uvit_forward.32} parent=0 // pred_check
    _
  $region11: #{uvit_forward.32} parent=0 // pred_check_branch
    %15 = sbr.rel (0) target = $region13
  $region12: #{uvit_forward.32} parent=0 // pred_region
    _
  $region13: #{uvit_forward.32} parent=0 // pred_fallthru
    _
  // Predicated region
  $region14: #{uvit_forward.32} parent=0 // pred_check
    _
  $region15: #{uvit_forward.32} parent=0 // pred_check_branch
    %17 = sbr.rel (0) target = $region17
  $region16: #{uvit_forward.32} parent=0 // pred_region
    _
  $region17: #{uvit_forward.32} parent=0 // pred_fallthru
    _
  // Predicated region
  $region18: #{uvit_forward.32} parent=0 // pred_check
    _
  $region19: #{uvit_forward.32} parent=0 // pred_check_branch
    %19 = sbr.rel (0) target = $region21
  $region20: #{uvit_forward.32} parent=0 // pred_region
    _
  $region21: #{uvit_forward.32} parent=0 // pred_fallthru
    _
  %v21 = vld [vmem:[%s0] sm:$0xf]
  %v22 = vld [vmem:[%s0 + $0x4] sm:$0xf]
  %v23 = vld [vmem:[%s0 + $0x8] sm:$0xf]
  %v24 = vld [vmem:[%s0 + $0xc] sm:$0xf]
  %v25 = vld [vmem:[%s0 + $0x10] sm:$0xf]
  %v26 = vld [vmem:[%s0 + $0x14] sm:$0xf]
  %v27 = vld [vmem:[%s2] sm:$0xf]
  %v28 = vld [vmem:[%s2 + $0x4] sm:$0xf]
  %v29 = vld [vmem:[%s2 + $0x8] sm:$0xf]
  %v30 = vld [vmem:[%s2 + $0xc] sm:$0xf]
  %v31 = vld [vmem:[%s2 + $0x10] sm:$0xf]
  %v32 = vld [vmem:[%s2 + $0x14] sm:$0xf]
  %v33 = vld [vmem:[%s2 + $0x18] sm:$0xf]
  %v34 = vld [vmem:[%s2 + $0x1c] sm:$0xf]
  %v35 = vld [vmem:[%s1] sm:$0xf]
  %v36 = vld [vmem:[%s1 + $0x4] sm:$0xf]
  %v37 = vld [vmem:[%s1 + $0x8] sm:$0xf]
  %v38 = vld [vmem:[%s1 + $0xc] sm:$0xf]
  %v39 = vld [vmem:[%s1 + $0x10] sm:$0xf]
  %v40 = vld [vmem:[%s1 + $0x14] sm:$0xf]
  %v41 = vld [vmem:[%s3] sm:$0xf]
  %v42 = vld [vmem:[%s3 + $0x4] sm:$0xf]
  %v43 = vld [vmem:[%s3 + $0x8] sm:$0xf]
  %v44 = vld [vmem:[%s3 + $0xc] sm:$0xf]
  %v45 = vld [vmem:[%s3 + $0x10] sm:$0xf]
  %v46 = vld [vmem:[%s3 + $0x14] sm:$0xf]
  %v47 = vld [vmem:[%s3 + $0x18] sm:$0xf]
  %v48 = vld [vmem:[%s3 + $0x1c] sm:$0xf]
  %v55 = vunpack.c.l.b16 %v35
  %v56 = vunpack.c.l.b16 %v36
  %v57 = vunpack.c.l.b16 %v37
  %v58 = vunpack.c.l.b16 %v38
  %v59 = vunpack.c.l.b16 %v39
  %v60 = vunpack.c.l.b16 %v40
  %v61 = vpack.c.b16 %v56, %v55
  %v62 = vpack.c.b16 %v58, %v57
  %v63 = vpack.c.b16 %v60, %v59
  %v72 = vunpack.c.l.b16 %v41
  %v73 = vunpack.c.l.b16 %v42
  %v74 = vunpack.c.l.b16 %v43
  %v75 = vunpack.c.l.b16 %v44
  %v76 = vunpack.c.l.b16 %v45
  %v77 = vunpack.c.l.b16 %v46
  %v78 = vunpack.c.l.b16 %v47
  %v79 = vunpack.c.l.b16 %v48
  %v80 = vpack.c.b16 %v73, %v72
  %v81 = vpack.c.b16 %v75, %v74
  %v82 = vpack.c.b16 %v77, %v76
  %v83 = vpack.c.b16 %v79, %v78
  %vm88 = vcmask 523264
  %v90 = vsel %vm88, %v61, 0
  %v93 = vsel %vm88, %v62, 0
  %v96 = vsel %vm88, %v63, 0
  %98 = vmatpush.bf16.msra.mxu0 0
  %99 = vmatpush.bf16.msra.mxu0 0
  %100 = vmatpush.bf16.msra.mxu0 0
  %101 = vmatpush.bf16.msra.mxu0 0
  %102 = vmatpush.bf16.msra.mxu0 %v83
  %103 = vmatpush.bf16.msra.mxu0 %v82
  %104 = vmatpush.bf16.msra.mxu0 %v81
  %105 = vmatpush.bf16.msra.mxu0 %v80
  %106 = vmatmul.bf16.gmra.mxu0 %v90
  %v107 = vpop.f32.mrf.mxu0
  %v108 = vadd.f32 0.0, %v107
  %v109 = vpop.f32.mrf.mxu0
  %v110 = vadd.f32 0.0, %v109
  %111 = vmatmul.bf16.gmra.mxu0 %v93
  %v112 = vpop.f32.mrf.mxu0
  %v113 = vadd.f32 0.0, %v112
  %v114 = vpop.f32.mrf.mxu0
  %v115 = vadd.f32 0.0, %v114
  %116 = vmatmul.bf16.gmra.mxu0 %v96
  %v117 = vpop.f32.mrf.mxu0
  %v118 = vadd.f32 0.0, %v117
  %v119 = vpop.f32.mrf.mxu0
  %v120 = vadd.f32 0.0, %v119
  %121 = vdwg.mxu0
  %v128 = vunpack.c.l.b16 %v21
  %v129 = vunpack.c.l.b16 %v22
  %v130 = vunpack.c.l.b16 %v23
  %v131 = vunpack.c.l.b16 %v24
  %v132 = vunpack.c.l.b16 %v25
  %v133 = vunpack.c.l.b16 %v26
  %v134 = vpack.c.b16 %v129, %v128
  %v135 = vpack.c.b16 %v131, %v130
  %v136 = vpack.c.b16 %v133, %v132
  %v145 = vunpack.c.l.b16 %v27
  %v146 = vunpack.c.l.b16 %v28
  %v147 = vunpack.c.l.b16 %v29
  %v148 = vunpack.c.l.b16 %v30
  %v149 = vunpack.c.l.b16 %v31
  %v150 = vunpack.c.l.b16 %v32
  %v151 = vunpack.c.l.b16 %v33
  %v152 = vunpack.c.l.b16 %v34
  %v153 = vpack.c.b16 %v146, %v145
  %v154 = vpack.c.b16 %v148, %v147
  %v155 = vpack.c.b16 %v150, %v149
  %v156 = vpack.c.b16 %v152, %v151
  %v162 = vsel %vm88, %v134, 0
  %v165 = vsel %vm88, %v135, 0
  %v168 = vsel %vm88, %v136, 0
  %170 = vmatpush.bf16.msra.mxu0 0
  %171 = vmatpush.bf16.msra.mxu0 0
  %172 = vmatpush.bf16.msra.mxu0 0
  %173 = vmatpush.bf16.msra.mxu0 0
  %174 = vmatpush.bf16.msra.mxu0 %v156
  %175 = vmatpush.bf16.msra.mxu0 %v155
  %176 = vmatpush.bf16.msra.mxu0 %v154
  %177 = vmatpush.bf16.msra.mxu0 %v153
  %178 = vmatmul.bf16.gmra.mxu0 %v162
  %v179 = vpop.f32.mrf.mxu0
  %v180 = vadd.f32 %v108, %v179
  %v181 = vpop.f32.mrf.mxu0
  %v182 = vadd.f32 %v110, %v181
  %183 = vmatmul.bf16.gmra.mxu0 %v165
  %v184 = vpop.f32.mrf.mxu0
  %v185 = vadd.f32 %v113, %v184
  %v186 = vpop.f32.mrf.mxu0
  %v187 = vadd.f32 %v115, %v186
  %188 = vmatmul.bf16.gmra.mxu0 %v168
  %v189 = vpop.f32.mrf.mxu0
  %v190 = vadd.f32 %v118, %v189
  %v191 = vpop.f32.mrf.mxu0
  %v192 = vadd.f32 %v120, %v191
  %193 = vdwg.mxu0
  %v194 = vld [vmem:[%s4] sm:$0x1]
  %v196 = vperm.slane %v194, 0
  %v198 = vadd.f32 %v180, %v196
  %v199 = vadd.f32 %v182, %v196
  %v200 = vadd.f32 %v185, %v196
  %v201 = vadd.f32 %v187, %v196
  %v202 = vadd.f32 %v190, %v196
  %v203 = vadd.f32 %v192, %v196
  %v204 = vpack.c.bf16 %v198, %v198
  %v205 = vpack.c.bf16 %v199, %v199
  %v206 = vpack.c.bf16 %v200, %v200
  %v207 = vpack.c.bf16 %v201, %v201
  %v208 = vpack.c.bf16 %v202, %v202
  %v209 = vpack.c.bf16 %v203, %v203
  %vm210 = vcmask 519168
  %211 = vst.msk [vmem:[%s5] sm:$0xf] %vm210, %v204
  %212 = vst.msk [vmem:[%s5 + $0x4] sm:$0xf] %vm210, %v205
  %213 = vst.msk [vmem:[%s5 + $0x8] sm:$0xf] %vm210, %v206
  %214 = vst.msk [vmem:[%s5 + $0xc] sm:$0xf] %vm210, %v207
  %215 = vst.msk [vmem:[%s5 + $0x10] sm:$0xf] %vm210, %v208
  %216 = vst.msk [vmem:[%s5 + $0x14] sm:$0xf] %vm210, %v209
  // Predicated region
  $region22: #{uvit_forward.32} parent=0 // pred_check
    _
  $region23: #{uvit_forward.32} parent=0 // pred_check_branch
    %218 = sbr.rel (0) target = $region25
  $region24: #{uvit_forward.32} parent=0 // pred_region
    _
  $region25: #{uvit_forward.32} parent=0 // pred_fallthru
    _
  // Predicated region
  $region26: #{uvit_forward.32} parent=0 // pred_check
    _
  $region27: #{uvit_forward.32} parent=0 // pred_check_branch
    %220 = sbr.rel (0) target = $region29
  $region28: #{uvit_forward.32} parent=0 // pred_region
    _
  $region29: #{uvit_forward.32} parent=0 // pred_fallthru
    _

// kernel: uvit_forward.36
$region0: #{uvit_forward.36}
  #allocation0 [shape = 'u32[]', space=smem, size = 0x4, offset = 0x4, fixed_abs, tag = 'smem constant byte address 0x4 - core index']
  #allocation1 [shape = 'u32[72,128]{1,0:T(1,128)}', space=vmem, size = 0x9000, scoped, tag = 'internal scratch']
  %s0 = inlined_call_operand.vmem [shape: bf16[48,64], index: 0, kind: input, shape index: {}]
  %s1 = inlined_call_operand.vmem [shape: f32[1,64], index: 1, kind: input, shape index: {}]
  %s2 = inlined_call_operand.hbm [shape: f32[1,64], index: 2, kind: input, shape index: {}]
  %s3 = inlined_call_operand.vmem [shape: bf16[64,256], index: 3, kind: input, shape index: {}]
  %s4 = inlined_call_operand.vmem [shape: f32[1,256], index: 4, kind: input, shape index: {}]
  %s5 = inlined_call_operand.vmem [shape: bf16[48,256], index: 5, kind: output, shape index: {}]
  %s6 = sld [smem:[#allocation0]]
  $region34: #{uvit_forward.36} parent=0
    _
  %s8 = ssub.s32 1, %s6
  %s9 = scalar_select 0, %s8, %s6
  $region1: #{uvit_forward.36} parent=0
    #allocation2 [shape = 'u8[512]{0}', space=vmem, size = 0x400, scoped, tag = 'input window, operand 2, single buffered']
    #allocation3 [shape = 's32[1]{0}', space=sflag, size = 0x4, scoped, tag = 'scoped memory for uvit_forward.36']
    %10 = vsyncpa [#allocation3], 0
    // Predicated region
    $region2: #{uvit_forward.36} parent=1 // pred_check
      _
    $region3: #{uvit_forward.36} parent=1 // pred_check_branch
      %12 = sbr.rel (0) target = $region5
    $region4: #{uvit_forward.36} parent=1 // pred_region
      _
    $region5: #{uvit_forward.36} parent=1 // pred_fallthru
      _
    // Predicated region
    $region6: #{uvit_forward.36} parent=1 // pred_check
      _
    $region7: #{uvit_forward.36} parent=1 // pred_check_branch
      %14 = sbr.rel (0) target = $region9
    $region8: #{uvit_forward.36} parent=1 // pred_region
      _
    $region9: #{uvit_forward.36} parent=1 // pred_fallthru
      _
    // Predicated region
    $region10: #{uvit_forward.36} parent=1 // pred_check
      _
    $region11: #{uvit_forward.36} parent=1 // pred_check_branch
      %16 = sbr.rel (0) target = $region13
    $region12: #{uvit_forward.36} parent=1 // pred_region
      %18 = vsyncadd [#allocation3], 0
      %s20 = sshll.u32 %s2, 4
      %s21 = int_to_ptr.hbm [resolvable:$true] %s20
      %s22 = sshll.u32 [#allocation2], 4
      %s23 = int_to_ptr.vmem [resolvable:$true] %s22
      %25 = dma.hbm_to_vmem [thread:$0]  %s21, 16, %s23, [#allocation3]
    $region13: #{uvit_forward.36} parent=1 // pred_fallthru
      _
    // Predicated region
    $region14: #{uvit_forward.36} parent=1 // pred_check
      _
    $region15: #{uvit_forward.36} parent=1 // pred_check_branch
      %27 = sbr.rel (0) target = $region17
    $region16: #{uvit_forward.36} parent=1 // pred_region
      _
    $region17: #{uvit_forward.36} parent=1 // pred_fallthru
      _
    // Predicated region
    $region18: #{uvit_forward.36} parent=1 // pred_check
      _
    $region19: #{uvit_forward.36} parent=1 // pred_check_branch
      %29 = sbr.rel (0) target = $region21
    $region20: #{uvit_forward.36} parent=1 // pred_region
      _
    $region21: #{uvit_forward.36} parent=1 // pred_fallthru
      _
    // Predicated region
    $region22: #{uvit_forward.36} parent=1 // pred_check
      _
    $region23: #{uvit_forward.36} parent=1 // pred_check_branch
      %31 = sbr.rel (0) target = $region25
    $region24: #{uvit_forward.36} parent=1 // pred_region
      %33 = dma.done [#allocation3], 16
    $region25: #{uvit_forward.36} parent=1 // pred_fallthru
      _
    %v35 = vld [vmem:[%s0] sm:$0xf]
    %v36 = vld [vmem:[%s0 + $0x4] sm:$0xf]
    %v37 = vld [vmem:[%s0 + $0x8] sm:$0xf]
    %v38 = vld [vmem:[%s0 + $0xc] sm:$0xf]
    %v39 = vld [vmem:[%s0 + $0x10] sm:$0xf]
    %v40 = vld [vmem:[%s0 + $0x14] sm:$0xf]
    %v41 = vunpack.c.l.bf16 %v35
    %v42 = vunpack.c.l.bf16 %v36
    %v43 = vunpack.c.l.bf16 %v37
    %v44 = vunpack.c.l.bf16 %v38
    %v45 = vunpack.c.l.bf16 %v39
    %v46 = vunpack.c.l.bf16 %v40
    %vm47 = vcmask 523264
    %v48 = vsel %vm47, %v41, 0.0
    %49 = vadd.xlane.f32.xlu0 %v48
    %v50 = vpop.xlane.xlu0 %49
    %v51 = vsel %vm47, %v42, 0.0
    %52 = vadd.xlane.f32.xlu0 %v51
    %v53 = vpop.xlane.xlu0 %52
    %v54 = vsel %vm47, %v43, 0.0
    %55 = vadd.xlane.f32.xlu0 %v54
    %v56 = vpop.xlane.xlu0 %55
    %v57 = vsel %vm47, %v44, 0.0
    %58 = vadd.xlane.f32.xlu0 %v57
    %v59 = vpop.xlane.xlu0 %58
    %v60 = vsel %vm47, %v45, 0.0
    %61 = vadd.xlane.f32.xlu0 %v60
    %v62 = vpop.xlane.xlu0 %61
    %v63 = vsel %vm47, %v46, 0.0
    %64 = vadd.xlane.f32.xlu0 %v63
    %v65 = vpop.xlane.xlu0 %64
    %v66 = vrcp.pop 64.0
    %v67 = vmul.f32 64.0, %v66
    %v68 = vsub.f32 1.0, %v67
    %v69 = vmul.f32 %v66, %v68
    %v70 = vadd.f32 %v66, %v69
    %vm71 = vweird.f32 %v66
    %v72 = vsel %vm71, %v66, %v70
    %v73 = vmul.f32 %v50, %v72
    %v74 = vmul.f32 %v53, %v72
    %v75 = vmul.f32 %v56, %v72
    %v76 = vmul.f32 %v59, %v72
    %v77 = vmul.f32 %v62, %v72
    %v78 = vmul.f32 %v65, %v72
    %v79 = vsub.f32 %v41, %v73
    %v80 = vsub.f32 %v42, %v74
    %v81 = vsub.f32 %v43, %v75
    %v82 = vsub.f32 %v44, %v76
    %v83 = vsub.f32 %v45, %v77
    %v84 = vsub.f32 %v46, %v78
    %v85 = vmul.f32 %v79, %v79
    %v86 = vmul.f32 %v80, %v80
    %v87 = vmul.f32 %v81, %v81
    %v88 = vmul.f32 %v82, %v82
    %v89 = vmul.f32 %v83, %v83
    %v90 = vmul.f32 %v84, %v84
    %v91 = vsel %vm47, %v85, 0.0
    %92 = vadd.xlane.f32.xlu0 %v91
    %v93 = vpop.xlane.xlu0 %92
    %v94 = vsel %vm47, %v86, 0.0
    %95 = vadd.xlane.f32.xlu0 %v94
    %v96 = vpop.xlane.xlu0 %95
    %v97 = vsel %vm47, %v87, 0.0
    %98 = vadd.xlane.f32.xlu0 %v97
    %v99 = vpop.xlane.xlu0 %98
    %v100 = vsel %vm47, %v88, 0.0
    %101 = vadd.xlane.f32.xlu0 %v100
    %v102 = vpop.xlane.xlu0 %101
    %v103 = vsel %vm47, %v89, 0.0
    %104 = vadd.xlane.f32.xlu0 %v103
    %v105 = vpop.xlane.xlu0 %104
    %v106 = vsel %vm47, %v90, 0.0
    %107 = vadd.xlane.f32.xlu0 %v106
    %v108 = vpop.xlane.xlu0 %107
    %v109 = vmul.f32 %v93, %v72
    %v110 = vmul.f32 %v96, %v72
    %v111 = vmul.f32 %v99, %v72
    %v112 = vmul.f32 %v102, %v72
    %v113 = vmul.f32 %v105, %v72
    %v114 = vmul.f32 %v108, %v72
    %v115 = vadd.f32 %v109, 1e-05
    %v116 = vadd.f32 %v110, 1e-05
    %v117 = vadd.f32 %v111, 1e-05
    %v118 = vadd.f32 %v112, 1e-05
    %v119 = vadd.f32 %v113, 1e-05
    %v120 = vadd.f32 %v114, 1e-05
    %v121 = vrsqrt.pop %v115
    %v122 = vmul.f32 %v121, %v115
    %v123 = vmul.f32 %v122, %v121
    %v124 = vmul.f32 0.5, %v123
    %v125 = vsub.f32 1.5, %v124
    %v126 = vmul.f32 %v121, %v125
    %vm127 = vweird.f32 %v115
    %vm128 = vweird.f32 %v121
    %vm129 = vmor %vm127, %vm128
    %v130 = vsel %vm129, %v121, %v126
    %v131 = vrsqrt.pop %v116
    %v132 = vmul.f32 %v131, %v116
    %v133 = vmul.f32 %v132, %v131
    %v134 = vmul.f32 0.5, %v133
    %v135 = vsub.f32 1.5, %v134
    %v136 = vmul.f32 %v131, %v135
    %vm137 = vweird.f32 %v116
    %vm138 = vweird.f32 %v131
    %vm139 = vmor %vm137, %vm138
    %v140 = vsel %vm139, %v131, %v136
    %v141 = vrsqrt.pop %v117
    %v142 = vmul.f32 %v141, %v117
    %v143 = vmul.f32 %v142, %v141
    %v144 = vmul.f32 0.5, %v143
    %v145 = vsub.f32 1.5, %v144
    %v146 = vmul.f32 %v141, %v145
    %vm147 = vweird.f32 %v117
    %vm148 = vweird.f32 %v141
    %vm149 = vmor %vm147, %vm148
    %v150 = vsel %vm149, %v141, %v146
    %v151 = vrsqrt.pop %v118
    %v152 = vmul.f32 %v151, %v118
    %v153 = vmul.f32 %v152, %v151
    %v154 = vmul.f32 0.5, %v153
    %v155 = vsub.f32 1.5, %v154
    %v156 = vmul.f32 %v151, %v155
    %vm157 = vweird.f32 %v118
    %vm158 = vweird.f32 %v151
    %vm159 = vmor %vm157, %vm158
    %v160 = vsel %vm159, %v151, %v156
    %v161 = vrsqrt.pop %v119
    %v162 = vmul.f32 %v161, %v119
    %v163 = vmul.f32 %v162, %v161
    %v164 = vmul.f32 0.5, %v163
    %v165 = vsub.f32 1.5, %v164
    %v166 = vmul.f32 %v161, %v165
    %vm167 = vweird.f32 %v119
    %vm168 = vweird.f32 %v161
    %vm169 = vmor %vm167, %vm168
    %v170 = vsel %vm169, %v161, %v166
    %v171 = vrsqrt.pop %v120
    %v172 = vmul.f32 %v171, %v120
    %v173 = vmul.f32 %v172, %v171
    %v174 = vmul.f32 0.5, %v173
    %v175 = vsub.f32 1.5, %v174
    %v176 = vmul.f32 %v171, %v175
    %vm177 = vweird.f32 %v120
    %vm178 = vweird.f32 %v171
    %vm179 = vmor %vm177, %vm178
    %v180 = vsel %vm179, %v171, %v176
    %v181 = vmul.f32 %v79, %v130
    %v182 = vmul.f32 %v80, %v140
    %v183 = vmul.f32 %v81, %v150
    %v184 = vmul.f32 %v82, %v160
    %v185 = vmul.f32 %v83, %v170
    %v186 = vmul.f32 %v84, %v180
    %v187 = vld [vmem:[%s1] sm:$0x1]
    %v189 = vperm.slane %v187, 0
    %v191 = vmul.f32 %v181, %v189
    %v192 = vmul.f32 %v182, %v189
    %v193 = vmul.f32 %v183, %v189
    %v194 = vmul.f32 %v184, %v189
    %v195 = vmul.f32 %v185, %v189
    %v196 = vmul.f32 %v186, %v189
    %v197 = vld [vmem:[#allocation2] sm:$0x1]
    %v199 = vperm.slane %v197, 0
    %v201 = vadd.f32 %v191, %v199
    %v202 = vadd.f32 %v192, %v199
    %v203 = vadd.f32 %v193, %v199
    %v204 = vadd.f32 %v194, %v199
    %v205 = vadd.f32 %v195, %v199
    %v206 = vadd.f32 %v196, %v199
    %v207 = vpack.c.bf16 %v202, %v201
    %v208 = vpack.c.bf16 %v204, %v203
    %v209 = vpack.c.bf16 %v206, %v205
    %v210 = vld [vmem:[%s3] sm:$0xff]
    %v211 = vld [vmem:[%s3 + $0x8] sm:$0xff]
    %v212 = vld [vmem:[%s3 + $0x10] sm:$0xff]
    %v213 = vld [vmem:[%s3 + $0x18] sm:$0xff]
    %v214 = vld [vmem:[%s3 + $0x20] sm:$0xff]
    %v215 = vld [vmem:[%s3 + $0x28] sm:$0xff]
    %v216 = vld [vmem:[%s3 + $0x30] sm:$0xff]
    %v217 = vld [vmem:[%s3 + $0x38] sm:$0xff]
    %v218 = vld [vmem:[%s4] sm:$0x3]
    %v220 = vperm.slane %v218, 0
    %v221 = vperm.slane %v218, 1
    %v232 = vunpack.c.l.b16 %v210
    %v233 = vunpack.c.h.b16 %v210
    %v234 = vunpack.c.l.b16 %v211
    %v235 = vunpack.c.h.b16 %v211
    %v236 = vunpack.c.l.b16 %v212
    %v237 = vunpack.c.h.b16 %v212
    %v238 = vunpack.c.l.b16 %v213
    %v239 = vunpack.c.h.b16 %v213
    %v240 = vunpack.c.l.b16 %v214
    %v241 = vunpack.c.h.b16 %v214
    %v242 = vunpack.c.l.b16 %v215
    %v243 = vunpack.c.h.b16 %v215
    %v244 = vunpack.c.l.b16 %v216
    %v245 = vunpack.c.h.b16 %v216
    %v246 = vunpack.c.l.b16 %v217
    %v247 = vunpack.c.h.b16 %v217
    %v248 = vpack.c.b16 %v234, %v232
    %v249 = vpack.c.b16 %v235, %v233
    %v250 = vpack.c.b16 %v238, %v236
    %v251 = vpack.c.b16 %v239, %v237
    %v252 = vpack.c.b16 %v242, %v240
    %v253 = vpack.c.b16 %v243, %v241
    %v254 = vpack.c.b16 %v246, %v244
    %v255 = vpack.c.b16 %v247, %v245
    %v265 = vsel %vm47, %v207, 0
    %v268 = vsel %vm47, %v208, 0
    %v271 = vsel %vm47, %v209, 0
    %273 = vmatpush.bf16.msra.mxu0 0
    %274 = vmatpush.bf16.msra.mxu0 0
    %275 = vmatpush.bf16.msra.mxu0 0
    %276 = vmatpush.bf16.msra.mxu0 0
    %277 = vmatpush.bf16.msra.mxu0 %v254
    %278 = vmatpush.bf16.msra.mxu0 %v252
    %279 = vmatpush.bf16.msra.mxu0 %v250
    %280 = vmatpush.bf16.msra.mxu0 %v248
    %281 = vmatmul.bf16.gmra.mxu0 %v265
    %v282 = vpop.f32.mrf.mxu0
    %v283 = vadd.f32 %v220, %v282
    %v284 = vpop.f32.mrf.mxu0
    %v285 = vadd.f32 %v220, %v284
    %286 = vmatmul.bf16.gmra.mxu0 %v268
    %v287 = vpop.f32.mrf.mxu0
    %v288 = vadd.f32 %v220, %v287
    %v289 = vpop.f32.mrf.mxu0
    %v290 = vadd.f32 %v220, %v289
    %291 = vmatmul.bf16.gmra.mxu0 %v271
    %v292 = vpop.f32.mrf.mxu0
    %v293 = vadd.f32 %v220, %v292
    %v294 = vpop.f32.mrf.mxu0
    %v295 = vadd.f32 %v220, %v294
    %296 = vdwg.mxu0
    %297 = vmatpush.bf16.msra.mxu0 0
    %298 = vmatpush.bf16.msra.mxu0 0
    %299 = vmatpush.bf16.msra.mxu0 0
    %300 = vmatpush.bf16.msra.mxu0 0
    %301 = vmatpush.bf16.msra.mxu0 %v255
    %302 = vmatpush.bf16.msra.mxu0 %v253
    %303 = vmatpush.bf16.msra.mxu0 %v251
    %304 = vmatpush.bf16.msra.mxu0 %v249
    %305 = vmatmul.bf16.gmra.mxu0 %v265
    %v306 = vpop.f32.mrf.mxu0
    %v307 = vadd.f32 %v221, %v306
    %v308 = vpop.f32.mrf.mxu0
    %v309 = vadd.f32 %v221, %v308
    %310 = vmatmul.bf16.gmra.mxu0 %v268
    %v311 = vpop.f32.mrf.mxu0
    %v312 = vadd.f32 %v221, %v311
    %v313 = vpop.f32.mrf.mxu0
    %v314 = vadd.f32 %v221, %v313
    %315 = vmatmul.bf16.gmra.mxu0 %v271
    %v316 = vpop.f32.mrf.mxu0
    %v317 = vadd.f32 %v221, %v316
    %v318 = vpop.f32.mrf.mxu0
    %v319 = vadd.f32 %v221, %v318
    %320 = vdwg.mxu0
    %v321 = vmul.f32 %v283, 0.5
    %v322 = vmul.f32 %v307, 0.5
    %v323 = vmul.f32 %v285, 0.5
    %v324 = vmul.f32 %v309, 0.5
    %v325 = vmul.f32 %v288, 0.5
    %v326 = vmul.f32 %v312, 0.5
    %v327 = vmul.f32 %v290, 0.5
    %v328 = vmul.f32 %v314, 0.5
    %v329 = vmul.f32 %v293, 0.5
    %v330 = vmul.f32 %v317, 0.5
    %v331 = vmul.f32 %v295, 0.5
    %v332 = vmul.f32 %v319, 0.5
    %v333 = vmul.f32 %v283, 0.70710677
    %v334 = vmul.f32 %v307, 0.70710677
    %v335 = vmul.f32 %v285, 0.70710677
    %v336 = vmul.f32 %v309, 0.70710677
    %v337 = vmul.f32 %v288, 0.70710677
    %v338 = vmul.f32 %v312, 0.70710677
    %v339 = vmul.f32 %v290, 0.70710677
    %v340 = vmul.f32 %v314, 0.70710677
    %v341 = vmul.f32 %v293, 0.70710677
    %v342 = vmul.f32 %v317, 0.70710677
    %v343 = vmul.f32 %v295, 0.70710677
    %v344 = vmul.f32 %v319, 0.70710677
    %v345 = vmul.f32 %v333, %v333
    %v346 = vmin.f32 16.0, %v345
    %v347 = vmul.f32 %v346, 2.1237322e-06
    %v348 = vadd.f32 %v347, 0.00028619796
    %v349 = vmul.f32 %v346, %v348
    %v350 = vadd.f32 %v349, 0.0036580483
    %v351 = vmul.f32 %v346, %v350
    %v352 = vadd.f32 %v351, 0.05243302
    %v353 = vmul.f32 %v346, %v352
    %v354 = vadd.f32 %v353, 0.18741608
    %v355 = vmul.f32 %v346, %v354
    %v356 = vadd.f32 %v355, 1.1283791
    %v357 = vmul.f32 %v333, %v356
    %v358 = vmul.f32 %v346, 3.8918573e-05
    %v359 = vadd.f32 %v358, 0.001143296
    %v360 = vmul.f32 %v346, %v359
    %v361 = vadd.f32 %v360, 0.014752088
    %v362 = vmul.f32 %v346, %v361
    %v363 = vadd.f32 %v362, 0.112945676
    %v364 = vmul.f32 %v346, %v363
    %v365 = vadd.f32 %v364, 0.4994258
    %v366 = vmul.f32 %v346, %v365
    %v367 = vadd.f32 %v366, 1.0
    %v368 = vrcp.pop %v367
    %v369 = vmul.f32 %v367, %v368
    %v370 = vsub.f32 1.0, %v369
    %v371 = vmul.f32 %v368, %v370
    %v372 = vadd.f32 %v368, %v371
    %vm373 = vweird.f32 %v367
    %vm374 = vweird.f32 %v368
    %vm375 = vmor %vm373, %vm374
    %v376 = vsel %vm375, %v368, %v372
    %v377 = vand.u32 2147483647, %v367
    %vm378 = vcmp.eq.f32.partialorder %v377, 8.507059e+37
    %v379 = vand.u32 %v367, 2147483648
    %v380 = vor.u32 1.1754944e-38, %v379
    %v381 = vsel %vm378, %v380, %v376
    %v382 = vmul.f32 %v357, %v381
    %v383 = vmin.f32 %v382, 1.0
    %v384 = vmax.f32 %v383, -1.0
    %v385 = vmul.f32 %v334, %v334
    %v386 = vmin.f32 16.0, %v385
    %v387 = vmul.f32 %v386, 2.1237322e-06
    %v388 = vadd.f32 %v387, 0.00028619796
    %v389 = vmul.f32 %v386, %v388
    %v390 = vadd.f32 %v389, 0.0036580483
    %v391 = vmul.f32 %v386, %v390
    %v392 = vadd.f32 %v391, 0.05243302
    %v393 = vmul.f32 %v386, %v392
    %v394 = vadd.f32 %v393, 0.18741608
    %v395 = vmul.f32 %v386, %v394
    %v396 = vadd.f32 %v395, 1.1283791
    %v397 = vmul.f32 %v334, %v396
    %v398 = vmul.f32 %v386, 3.8918573e-05
    %v399 = vadd.f32 %v398, 0.001143296
    %v400 = vmul.f32 %v386, %v399
    %v401 = vadd.f32 %v400, 0.014752088
    %v402 = vmul.f32 %v386, %v401
    %v403 = vadd.f32 %v402, 0.112945676
    %v404 = vmul.f32 %v386, %v403
    %v405 = vadd.f32 %v404, 0.4994258
    %v406 = vmul.f32 %v386, %v405
    %v407 = vadd.f32 %v406, 1.0
    %v408 = vrcp.pop %v407
    %v409 = vmul.f32 %v407, %v408
    %v410 = vsub.f32 1.0, %v409
    %v411 = vmul.f32 %v408, %v410
    %v412 = vadd.f32 %v408, %v411
    %vm413 = vweird.f32 %v407
    %vm414 = vweird.f32 %v408
    %vm415 = vmor %vm413, %vm414
    %v416 = vsel %vm415, %v408, %v412
    %v417 = vand.u32 2147483647, %v407
    %vm418 = vcmp.eq.f32.partialorder %v417, 8.507059e+37
    %v419 = vand.u32 %v407, 2147483648
    %v420 = vor.u32 1.1754944e-38, %v419
    %v421 = vsel %vm418, %v420, %v416
    %v422 = vmul.f32 %v397, %v421
    %v423 = vmin.f32 %v422, 1.0
    %v424 = vmax.f32 %v423, -1.0
    %v425 = vmul.f32 %v335, %v335
    %v426 = vmin.f32 16.0, %v425
    %v427 = vmul.f32 %v426, 2.1237322e-06
    %v428 = vadd.f32 %v427, 0.00028619796
    %v429 = vmul.f32 %v426, %v428
    %v430 = vadd.f32 %v429, 0.0036580483
    %v431 = vmul.f32 %v426, %v430
    %v432 = vadd.f32 %v431, 0.05243302
    %v433 = vmul.f32 %v426, %v432
    %v434 = vadd.f32 %v433, 0.18741608
    %v435 = vmul.f32 %v426, %v434
    %v436 = vadd.f32 %v435, 1.1283791
    %v437 = vmul.f32 %v335, %v436
    %v438 = vmul.f32 %v426, 3.8918573e-05
    %v439 = vadd.f32 %v438, 0.001143296
    %v440 = vmul.f32 %v426, %v439
    %v441 = vadd.f32 %v440, 0.014752088
    %v442 = vmul.f32 %v426, %v441
    %v443 = vadd.f32 %v442, 0.112945676
    %v444 = vmul.f32 %v426, %v443
    %v445 = vadd.f32 %v444, 0.4994258
    %v446 = vmul.f32 %v426, %v445
    %v447 = vadd.f32 %v446, 1.0
    %v448 = vrcp.pop %v447
    %v449 = vmul.f32 %v447, %v448
    %v450 = vsub.f32 1.0, %v449
    %v451 = vmul.f32 %v448, %v450
    %v452 = vadd.f32 %v448, %v451
    %vm453 = vweird.f32 %v447
    %vm454 = vweird.f32 %v448
    %vm455 = vmor %vm453, %vm454
    %v456 = vsel %vm455, %v448, %v452
    %v457 = vand.u32 2147483647, %v447
    %vm458 = vcmp.eq.f32.partialorder %v457, 8.507059e+37
    %v459 = vand.u32 %v447, 2147483648
    %v460 = vor.u32 1.1754944e-38, %v459
    %v461 = vsel %vm458, %v460, %v456
    %v462 = vmul.f32 %v437, %v461
    %v463 = vmin.f32 %v462, 1.0
    %v464 = vmax.f32 %v463, -1.0
    %v465 = vmul.f32 %v336, %v336
    %v466 = vmin.f32 16.0, %v465
    %v467 = vmul.f32 %v466, 2.1237322e-06
    %v468 = vadd.f32 %v467, 0.00028619796
    %v469 = vmul.f32 %v466, %v468
    %v470 = vadd.f32 %v469, 0.0036580483
    %v471 = vmul.f32 %v466, %v470
    %v472 = vadd.f32 %v471, 0.05243302
    %v473 = vmul.f32 %v466, %v472
    %v474 = vadd.f32 %v473, 0.18741608
    %v475 = vmul.f32 %v466, %v474
    %v476 = vadd.f32 %v475, 1.1283791
    %v477 = vmul.f32 %v336, %v476
    %v478 = vmul.f32 %v466, 3.8918573e-05
    %v479 = vadd.f32 %v478, 0.001143296
    %v480 = vmul.f32 %v466, %v479
    %v481 = vadd.f32 %v480, 0.014752088
    %v482 = vmul.f32 %v466, %v481
    %v483 = vadd.f32 %v482, 0.112945676
    %v484 = vmul.f32 %v466, %v483
    %v485 = vadd.f32 %v484, 0.4994258
    %v486 = vmul.f32 %v466, %v485
    %v487 = vadd.f32 %v486, 1.0
    %v488 = vrcp.pop %v487
    %v489 = vmul.f32 %v487, %v488
    %v490 = vsub.f32 1.0, %v489
    %v491 = vmul.f32 %v488, %v490
    %v492 = vadd.f32 %v488, %v491
    %vm493 = vweird.f32 %v487
    %vm494 = vweird.f32 %v488
    %vm495 = vmor %vm493, %vm494
    %v496 = vsel %vm495, %v488, %v492
    %v497 = vand.u32 2147483647, %v487
    %vm498 = vcmp.eq.f32.partialorder %v497, 8.507059e+37
    %v499 = vand.u32 %v487, 2147483648
    %v500 = vor.u32 1.1754944e-38, %v499
    %v501 = vsel %vm498, %v500, %v496
    %v502 = vmul.f32 %v477, %v501
    %v503 = vmin.f32 %v502, 1.0
    %v504 = vmax.f32 %v503, -1.0
    %v505 = vmul.f32 %v337, %v337
    %v506 = vmin.f32 16.0, %v505
    %v507 = vmul.f32 %v506, 2.1237322e-06
    %v508 = vadd.f32 %v507, 0.00028619796
    %v509 = vmul.f32 %v506, %v508
    %v510 = vadd.f32 %v509, 0.0036580483
    %v511 = vmul.f32 %v506, %v510
    %v512 = vadd.f32 %v511, 0.05243302
    %v513 = vmul.f32 %v506, %v512
    %v514 = vadd.f32 %v513, 0.18741608
    %v515 = vmul.f32 %v506, %v514
    %v516 = vadd.f32 %v515, 1.1283791
    %v517 = vmul.f32 %v337, %v516
    %v518 = vmul.f32 %v506, 3.8918573e-05
    %v519 = vadd.f32 %v518, 0.001143296
    %v520 = vmul.f32 %v506, %v519
    %v521 = vadd.f32 %v520, 0.014752088
    %v522 = vmul.f32 %v506, %v521
    %v523 = vadd.f32 %v522, 0.112945676
    %v524 = vmul.f32 %v506, %v523
    %v525 = vadd.f32 %v524, 0.4994258
    %v526 = vmul.f32 %v506, %v525
    %v527 = vadd.f32 %v526, 1.0
    %v528 = vrcp.pop %v527
    %v529 = vmul.f32 %v527, %v528
    %v530 = vsub.f32 1.0, %v529
    %v531 = vmul.f32 %v528, %v530
    %v532 = vadd.f32 %v528, %v531
    %vm533 = vweird.f32 %v527
    %vm534 = vweird.f32 %v528
    %vm535 = vmor %vm533, %vm534
    %v536 = vsel %vm535, %v528, %v532
    %v537 = vand.u32 2147483647, %v527
    %vm538 = vcmp.eq.f32.partialorder %v537, 8.507059e+37
    %v539 = vand.u32 %v527, 2147483648
    %v540 = vor.u32 1.1754944e-38, %v539
    %v541 = vsel %vm538, %v540, %v536
    %v542 = vmul.f32 %v517, %v541
    %v543 = vmin.f32 %v542, 1.0
    %v544 = vmax.f32 %v543, -1.0
    %v545 = vmul.f32 %v338, %v338
    %v546 = vmin.f32 16.0, %v545
    %v547 = vmul.f32 %v546, 2.1237322e-06
    %v548 = vadd.f32 %v547, 0.00028619796
    %v549 = vmul.f32 %v546, %v548
    %v550 = vadd.f32 %v549, 0.0036580483
    %v551 = vmul.f32 %v546, %v550
    %v552 = vadd.f32 %v551, 0.05243302
    %v553 = vmul.f32 %v546, %v552
    %v554 = vadd.f32 %v553, 0.18741608
    %v555 = vmul.f32 %v546, %v554
    %v556 = vadd.f32 %v555, 1.1283791
    %v557 = vmul.f32 %v338, %v556
    %v558 = vmul.f32 %v546, 3.8918573e-05
    %v559 = vadd.f32 %v558, 0.001143296
    %v560 = vmul.f32 %v546, %v559
    %v561 = vadd.f32 %v560, 0.014752088
    %v562 = vmul.f32 %v546, %v561
    %v563 = vadd.f32 %v562, 0.112945676
    %v564 = vmul.f32 %v546, %v563
    %v565 = vadd.f32 %v564, 0.4994258
    %v566 = vmul.f32 %v546, %v565
    %v567 = vadd.f32 %v566, 1.0
    %v568 = vrcp.pop %v567
    %v569 = vmul.f32 %v567, %v568
    %v570 = vsub.f32 1.0, %v569
    %v571 = vmul.f32 %v568, %v570
    %v572 = vadd.f32 %v568, %v571
    %vm573 = vweird.f32 %v567
    %vm574 = vweird.f32 %v568
    %vm575 = vmor %vm573, %vm574
    %v576 = vsel %vm575, %v568, %v572
    %v577 = vand.u32 2147483647, %v567
    %vm578 = vcmp.eq.f32.partialorder %v577, 8.507059e+37
    %v579 = vand.u32 %v567, 2147483648
    %v580 = vor.u32 1.1754944e-38, %v579
    %v581 = vsel %vm578, %v580, %v576
    %v582 = vmul.f32 %v557, %v581
    %v583 = vmin.f32 %v582, 1.0
    %v584 = vmax.f32 %v583, -1.0
    %v585 = vmul.f32 %v339, %v339
    %v586 = vmin.f32 16.0, %v585
    %v587 = vmul.f32 %v586, 2.1237322e-06
    %v588 = vadd.f32 %v587, 0.00028619796
    %v589 = vmul.f32 %v586, %v588
    %v590 = vadd.f32 %v589, 0.0036580483
    %v591 = vmul.f32 %v586, %v590
    %v592 = vadd.f32 %v591, 0.05243302
    %v593 = vmul.f32 %v586, %v592
    %v594 = vadd.f32 %v593, 0.18741608
    %v595 = vmul.f32 %v586, %v594
    %v596 = vadd.f32 %v595, 1.1283791
    %v597 = vmul.f32 %v339, %v596
    %v598 = vmul.f32 %v586, 3.8918573e-05
    %v599 = vadd.f32 %v598, 0.001143296
    %v600 = vmul.f32 %v586, %v599
    %v601 = vadd.f32 %v600, 0.014752088
    %v602 = vmul.f32 %v586, %v601
    %v603 = vadd.f32 %v602, 0.112945676
    %v604 = vmul.f32 %v586, %v603
    %v605 = vadd.f32 %v604, 0.4994258
    %v606 = vmul.f32 %v586, %v605
    %v607 = vadd.f32 %v606, 1.0
    %v608 = vrcp.pop %v607
    %v609 = vmul.f32 %v607, %v608
    %v610 = vsub.f32 1.0, %v609
    %v611 = vmul.f32 %v608, %v610
    %v612 = vadd.f32 %v608, %v611
    %vm613 = vweird.f32 %v607
    %vm614 = vweird.f32 %v608
    %vm615 = vmor %vm613, %vm614
    %v616 = vsel %vm615, %v608, %v612
    %v617 = vand.u32 2147483647, %v607
    %vm618 = vcmp.eq.f32.partialorder %v617, 8.507059e+37
    %v619 = vand.u32 %v607, 2147483648
    %v620 = vor.u32 1.1754944e-38, %v619
    %v621 = vsel %vm618, %v620, %v616
    %v622 = vmul.f32 %v597, %v621
    %v623 = vmin.f32 %v622, 1.0
    %v624 = vmax.f32 %v623, -1.0
    %v625 = vmul.f32 %v340, %v340
    %v626 = vmin.f32 16.0, %v625
    %v627 = vmul.f32 %v626, 2.1237322e-06
    %v628 = vadd.f32 %v627, 0.00028619796
    %v629 = vmul.f32 %v626, %v628
    %v630 = vadd.f32 %v629, 0.0036580483
    %v631 = vmul.f32 %v626, %v630
    %v632 = vadd.f32 %v631, 0.05243302
    %v633 = vmul.f32 %v626, %v632
    %v634 = vadd.f32 %v633, 0.18741608
    %v635 = vmul.f32 %v626, %v634
    %v636 = vadd.f32 %v635, 1.1283791
    %v637 = vmul.f32 %v340, %v636
    %v638 = vmul.f32 %v626, 3.8918573e-05
    %v639 = vadd.f32 %v638, 0.001143296
    %v640 = vmul.f32 %v626, %v639
    %v641 = vadd.f32 %v640, 0.014752088
    %v642 = vmul.f32 %v626, %v641
    %v643 = vadd.f32 %v642, 0.112945676
    %v644 = vmul.f32 %v626, %v643
    %v645 = vadd.f32 %v644, 0.4994258
    %v646 = vmul.f32 %v626, %v645
    %v647 = vadd.f32 %v646, 1.0
    %v648 = vrcp.pop %v647
    %v649 = vmul.f32 %v647, %v648
    %v650 = vsub.f32 1.0, %v649
    %v651 = vmul.f32 %v648, %v650
    %v652 = vadd.f32 %v648, %v651
    %vm653 = vweird.f32 %v647
    %vm654 = vweird.f32 %v648
    %vm655 = vmor %vm653, %vm654
    %v656 = vsel %vm655, %v648, %v652
    %v657 = vand.u32 2147483647, %v647
    %vm658 = vcmp.eq.f32.partialorder %v657, 8.507059e+37
    %v659 = vand.u32 %v647, 2147483648
    %v660 = vor.u32 1.1754944e-38, %v659
    %v661 = vsel %vm658, %v660, %v656
    %v662 = vmul.f32 %v637, %v661
    %v663 = vmin.f32 %v662, 1.0
    %v664 = vmax.f32 %v663, -1.0
    %v665 = vmul.f32 %v341, %v341
    %v666 = vmin.f32 16.0, %v665
    %v667 = vmul.f32 %v666, 2.1237322e-06
    %v668 = vadd.f32 %v667, 0.00028619796
    %v669 = vmul.f32 %v666, %v668
    %v670 = vadd.f32 %v669, 0.0036580483
    %v671 = vmul.f32 %v666, %v670
    %v672 = vadd.f32 %v671, 0.05243302
    %v673 = vmul.f32 %v666, %v672
    %v674 = vadd.f32 %v673, 0.18741608
    %v675 = vmul.f32 %v666, %v674
    %v676 = vadd.f32 %v675, 1.1283791
    %v677 = vmul.f32 %v341, %v676
    %v678 = vmul.f32 %v666, 3.8918573e-05
    %v679 = vadd.f32 %v678, 0.001143296
    %v680 = vmul.f32 %v666, %v679
    %v681 = vadd.f32 %v680, 0.014752088
    %v682 = vmul.f32 %v666, %v681
    %v683 = vadd.f32 %v682, 0.112945676
    %v684 = vmul.f32 %v666, %v683
    %v685 = vadd.f32 %v684, 0.4994258
    %v686 = vmul.f32 %v666, %v685
    %v687 = vadd.f32 %v686, 1.0
    %v688 = vrcp.pop %v687
    %v689 = vmul.f32 %v687, %v688
    %v690 = vsub.f32 1.0, %v689
    %v691 = vmul.f32 %v688, %v690
    %v692 = vadd.f32 %v688, %v691
    %vm693 = vweird.f32 %v687
    %vm694 = vweird.f32 %v688
    %vm695 = vmor %vm693, %vm694
    %v696 = vsel %vm695, %v688, %v692
    %v697 = vand.u32 2147483647, %v687
    %vm698 = vcmp.eq.f32.partialorder %v697, 8.507059e+37
    %v699 = vand.u32 %v687, 2147483648
    %v700 = vor.u32 1.1754944e-38, %v699
    %v701 = vsel %vm698, %v700, %v696
    %v702 = vmul.f32 %v677, %v701
    %v703 = vmin.f32 %v702, 1.0
    %v704 = vmax.f32 %v703, -1.0
    %v705 = vmul.f32 %v342, %v342
    %v706 = vmin.f32 16.0, %v705
    %v707 = vmul.f32 %v706, 2.1237322e-06
    %v708 = vadd.f32 %v707, 0.00028619796
    %v709 = vmul.f32 %v706, %v708
    %v710 = vadd.f32 %v709, 0.0036580483
    %v711 = vmul.f32 %v706, %v710
    %v712 = vadd.f32 %v711, 0.05243302
    %v713 = vmul.f32 %v706, %v712
    %v714 = vadd.f32 %v713, 0.18741608
    %v715 = vmul.f32 %v706, %v714
    %v716 = vadd.f32 %v715, 1.1283791
    %v717 = vmul.f32 %v342, %v716
    %v718 = vmul.f32 %v706, 3.8918573e-05
    %v719 = vadd.f32 %v718, 0.001143296
    %v720 = vmul.f32 %v706, %v719
    %v721 = vadd.f32 %v720, 0.014752088
    %v722 = vmul.f32 %v706, %v721
    %v723 = vadd.f32 %v722, 0.112945676
    %v724 = vmul.f32 %v706, %v723
    %v725 = vadd.f32 %v724, 0.4994258
    %v726 = vmul.f32 %v706, %v725
    %v727 = vadd.f32 %v726, 1.0
    %v728 = vrcp.pop %v727
    %v729 = vmul.f32 %v727, %v728
    %v730 = vsub.f32 1.0, %v729
    %v731 = vmul.f32 %v728, %v730
    %v732 = vadd.f32 %v728, %v731
    %vm733 = vweird.f32 %v727
    %vm734 = vweird.f32 %v728
    %vm735 = vmor %vm733, %vm734
    %v736 = vsel %vm735, %v728, %v732
    %v737 = vand.u32 2147483647, %v727
    %vm738 = vcmp.eq.f32.partialorder %v737, 8.507059e+37
    %v739 = vand.u32 %v727, 2147483648
    %v740 = vor.u32 1.1754944e-38, %v739
    %v741 = vsel %vm738, %v740, %v736
    %v742 = vmul.f32 %v717, %v741
    %v743 = vmin.f32 %v742, 1.0
    %v744 = vmax.f32 %v743, -1.0
    %v745 = vmul.f32 %v343, %v343
    %v746 = vmin.f32 16.0, %v745
    %v747 = vmul.f32 %v746, 2.1237322e-06
    %v748 = vadd.f32 %v747, 0.00028619796
    %v749 = vmul.f32 %v746, %v748
    %v750 = vadd.f32 %v749, 0.0036580483
    %v751 = vmul.f32 %v746, %v750
    %v752 = vadd.f32 %v751, 0.05243302
    %v753 = vmul.f32 %v746, %v752
    %v754 = vadd.f32 %v753, 0.18741608
    %v755 = vmul.f32 %v746, %v754
    %v756 = vadd.f32 %v755, 1.1283791
    %v757 = vmul.f32 %v343, %v756
    %v758 = vmul.f32 %v746, 3.8918573e-05
    %v759 = vadd.f32 %v758, 0.001143296
    %v760 = vmul.f32 %v746, %v759
    %v761 = vadd.f32 %v760, 0.014752088
    %v762 = vmul.f32 %v746, %v761
    %v763 = vadd.f32 %v762, 0.112945676
    %v764 = vmul.f32 %v746, %v763
    %v765 = vadd.f32 %v764, 0.4994258
    %v766 = vmul.f32 %v746, %v765
    %v767 = vadd.f32 %v766, 1.0
    %v768 = vrcp.pop %v767
    %v769 = vmul.f32 %v767, %v768
    %v770 = vsub.f32 1.0, %v769
    %v771 = vmul.f32 %v768, %v770
    %v772 = vadd.f32 %v768, %v771
    %vm773 = vweird.f32 %v767
    %vm774 = vweird.f32 %v768
    %vm775 = vmor %vm773, %vm774
    %v776 = vsel %vm775, %v768, %v772
    %v777 = vand.u32 2147483647, %v767
    %vm778 = vcmp.eq.f32.partialorder %v777, 8.507059e+37
    %v779 = vand.u32 %v767, 2147483648
    %v780 = vor.u32 1.1754944e-38, %v779
    %v781 = vsel %vm778, %v780, %v776
    %v782 = vmul.f32 %v757, %v781
    %v783 = vmin.f32 %v782, 1.0
    %v784 = vmax.f32 %v783, -1.0
    %v785 = vmul.f32 %v344, %v344
    %v786 = vmin.f32 16.0, %v785
    %v787 = vmul.f32 %v786, 2.1237322e-06
    %v788 = vadd.f32 %v787, 0.00028619796
    %v789 = vmul.f32 %v786, %v788
    %v790 = vadd.f32 %v789, 0.0036580483
    %v791 = vmul.f32 %v786, %v790
    %v792 = vadd.f32 %v791, 0.05243302
    %v793 = vmul.f32 %v786, %v792
    %v794 = vadd.f32 %v793, 0.18741608
    %v795 = vmul.f32 %v786, %v794
    %v796 = vadd.f32 %v795, 1.1283791
    %v797 = vmul.f32 %v344, %v796
    %v798 = vmul.f32 %v786, 3.8918573e-05
    %v799 = vadd.f32 %v798, 0.001143296
    %v800 = vmul.f32 %v786, %v799
    %v801 = vadd.f32 %v800, 0.014752088
    %v802 = vmul.f32 %v786, %v801
    %v803 = vadd.f32 %v802, 0.112945676
    %v804 = vmul.f32 %v786, %v803
    %v805 = vadd.f32 %v804, 0.4994258
    %v806 = vmul.f32 %v786, %v805
    %v807 = vadd.f32 %v806, 1.0
    %v808 = vrcp.pop %v807
    %v809 = vmul.f32 %v807, %v808
    %v810 = vsub.f32 1.0, %v809
    %v811 = vmul.f32 %v808, %v810
    %v812 = vadd.f32 %v808, %v811
    %vm813 = vweird.f32 %v807
    %vm814 = vweird.f32 %v808
    %vm815 = vmor %vm813, %vm814
    %v816 = vsel %vm815, %v808, %v812
    %v817 = vand.u32 2147483647, %v807
    %vm818 = vcmp.eq.f32.partialorder %v817, 8.507059e+37
    %v819 = vand.u32 %v807, 2147483648
    %v820 = vor.u32 1.1754944e-38, %v819
    %v821 = vsel %vm818, %v820, %v816
    %v822 = vmul.f32 %v797, %v821
    %v823 = vmin.f32 %v822, 1.0
    %v824 = vmax.f32 %v823, -1.0
    %v825 = vadd.f32 %v384, 1.0
    %v826 = vadd.f32 %v424, 1.0
    %v827 = vadd.f32 %v464, 1.0
    %v828 = vadd.f32 %v504, 1.0
    %v829 = vadd.f32 %v544, 1.0
    %v830 = vadd.f32 %v584, 1.0
    %v831 = vadd.f32 %v624, 1.0
    %v832 = vadd.f32 %v664, 1.0
    %v833 = vadd.f32 %v704, 1.0
    %v834 = vadd.f32 %v744, 1.0
    %v835 = vadd.f32 %v784, 1.0
    %v836 = vadd.f32 %v824, 1.0
    %v837 = vmul.f32 %v321, %v825
    %v838 = vmul.f32 %v322, %v826
    %v839 = vmul.f32 %v323, %v827
    %v840 = vmul.f32 %v324, %v828
    %v841 = vmul.f32 %v325, %v829
    %v842 = vmul.f32 %v326, %v830
    %v843 = vmul.f32 %v327, %v831
    %v844 = vmul.f32 %v328, %v832
    %v845 = vmul.f32 %v329, %v833
    %v846 = vmul.f32 %v330, %v834
    %v847 = vmul.f32 %v331, %v835
    %v848 = vmul.f32 %v332, %v836
    %v849 = vpack.c.bf16 %v838, %v837
    %v850 = vpack.c.bf16 %v840, %v839
    %v851 = vpack.c.bf16 %v842, %v841
    %v852 = vpack.c.bf16 %v844, %v843
    %v853 = vpack.c.bf16 %v846, %v845
    %v854 = vpack.c.bf16 %v848, %v847
    %855 = vst [vmem:[%s5] sm:$0xff] %v849
    %856 = vst [vmem:[%s5 + $0x8] sm:$0xff] %v850
    %857 = vst [vmem:[%s5 + $0x10] sm:$0xff] %v851
    %858 = vst [vmem:[%s5 + $0x18] sm:$0xff] %v852
    %859 = vst [vmem:[%s5 + $0x20] sm:$0xff] %v853
    %860 = vst [vmem:[%s5 + $0x28] sm:$0xff] %v854
    // Predicated region
    $region26: #{uvit_forward.36} parent=1 // pred_check
      _
    $region27: #{uvit_forward.36} parent=1 // pred_check_branch
      %862 = sbr.rel (0) target = $region29
    $region28: #{uvit_forward.36} parent=1 // pred_region
      _
    $region29: #{uvit_forward.36} parent=1 // pred_fallthru
      _
    // Predicated region
    $region30: #{uvit_forward.36} parent=1 // pred_check
      _
    $region31: #{uvit_forward.36} parent=1 // pred_check_branch
      %864 = sbr.rel (0) target = $region33
    $region32: #{uvit_forward.36} parent=1 // pred_region
      _
    $region33: #{uvit_forward.36} parent=1 // pred_fallthru
      _
    %865 = vsyncpa [#allocation3], 1

// kernel: uvit_forward.38
$region0: #{uvit_forward.38}
  #allocation0 [shape = 'u32[]', space=smem, size = 0x4, offset = 0x4, fixed_abs, tag = 'smem constant byte address 0x4 - core index']
  #allocation1 [shape = 'u32[72,128]{1,0:T(1,128)}', space=vmem, size = 0x9000, scoped, tag = 'internal scratch']
  %s0 = inlined_call_operand.vmem [shape: bf16[32,64], index: 0, kind: input, shape index: {}]
  %s1 = inlined_call_operand.vmem [shape: f32[1,64], index: 1, kind: input, shape index: {}]
  %s2 = inlined_call_operand.vmem [shape: f32[1,64], index: 2, kind: input, shape index: {}]
  %s3 = inlined_call_operand.vmem [shape: bf16[64,64], index: 3, kind: input, shape index: {}]
  %s4 = inlined_call_operand.vmem [shape: f32[1,64], index: 4, kind: input, shape index: {}]
  %s5 = inlined_call_operand.vmem [shape: f32[32,64], index: 5, kind: output, shape index: {}]
  %s6 = sld [smem:[#allocation0]]
  $region30: #{uvit_forward.38} parent=0
    _
  %s8 = ssub.s32 1, %s6
  %s9 = scalar_select 0, %s8, %s6
  // Predicated region
  $region2: #{uvit_forward.38} parent=0 // pred_check
    _
  $region3: #{uvit_forward.38} parent=0 // pred_check_branch
    %11 = sbr.rel (0) target = $region5
  $region4: #{uvit_forward.38} parent=0 // pred_region
    _
  $region5: #{uvit_forward.38} parent=0 // pred_fallthru
    _
  // Predicated region
  $region6: #{uvit_forward.38} parent=0 // pred_check
    _
  $region7: #{uvit_forward.38} parent=0 // pred_check_branch
    %13 = sbr.rel (0) target = $region9
  $region8: #{uvit_forward.38} parent=0 // pred_region
    _
  $region9: #{uvit_forward.38} parent=0 // pred_fallthru
    _
  // Predicated region
  $region10: #{uvit_forward.38} parent=0 // pred_check
    _
  $region11: #{uvit_forward.38} parent=0 // pred_check_branch
    %15 = sbr.rel (0) target = $region13
  $region12: #{uvit_forward.38} parent=0 // pred_region
    _
  $region13: #{uvit_forward.38} parent=0 // pred_fallthru
    _
  // Predicated region
  $region14: #{uvit_forward.38} parent=0 // pred_check
    _
  $region15: #{uvit_forward.38} parent=0 // pred_check_branch
    %17 = sbr.rel (0) target = $region17
  $region16: #{uvit_forward.38} parent=0 // pred_region
    _
  $region17: #{uvit_forward.38} parent=0 // pred_fallthru
    _
  // Predicated region
  $region18: #{uvit_forward.38} parent=0 // pred_check
    _
  $region19: #{uvit_forward.38} parent=0 // pred_check_branch
    %19 = sbr.rel (0) target = $region21
  $region20: #{uvit_forward.38} parent=0 // pred_region
    _
  $region21: #{uvit_forward.38} parent=0 // pred_fallthru
    _
  %v21 = vld [vmem:[%s0] sm:$0xf]
  %v22 = vld [vmem:[%s0 + $0x4] sm:$0xf]
  %v23 = vld [vmem:[%s0 + $0x8] sm:$0xf]
  %v24 = vld [vmem:[%s0 + $0xc] sm:$0xf]
  %v25 = vunpack.c.l.bf16 %v21
  %v26 = vunpack.c.l.bf16 %v22
  %v27 = vunpack.c.l.bf16 %v23
  %v28 = vunpack.c.l.bf16 %v24
  %vm29 = vcmask 523264
  %v30 = vsel %vm29, %v25, 0.0
  %31 = vadd.xlane.f32.xlu0 %v30
  %v32 = vpop.xlane.xlu0 %31
  %v33 = vsel %vm29, %v26, 0.0
  %34 = vadd.xlane.f32.xlu0 %v33
  %v35 = vpop.xlane.xlu0 %34
  %v36 = vsel %vm29, %v27, 0.0
  %37 = vadd.xlane.f32.xlu0 %v36
  %v38 = vpop.xlane.xlu0 %37
  %v39 = vsel %vm29, %v28, 0.0
  %40 = vadd.xlane.f32.xlu0 %v39
  %v41 = vpop.xlane.xlu0 %40
  %v42 = vrcp.pop 64.0
  %v43 = vmul.f32 64.0, %v42
  %v44 = vsub.f32 1.0, %v43
  %v45 = vmul.f32 %v42, %v44
  %v46 = vadd.f32 %v42, %v45
  %vm47 = vweird.f32 %v42
  %v48 = vsel %vm47, %v42, %v46
  %v49 = vmul.f32 %v32, %v48
  %v50 = vmul.f32 %v35, %v48
  %v51 = vmul.f32 %v38, %v48
  %v52 = vmul.f32 %v41, %v48
  %v53 = vsub.f32 %v25, %v49
  %v54 = vsub.f32 %v26, %v50
  %v55 = vsub.f32 %v27, %v51
  %v56 = vsub.f32 %v28, %v52
  %v57 = vmul.f32 %v53, %v53
  %v58 = vmul.f32 %v54, %v54
  %v59 = vmul.f32 %v55, %v55
  %v60 = vmul.f32 %v56, %v56
  %v61 = vsel %vm29, %v57, 0.0
  %62 = vadd.xlane.f32.xlu0 %v61
  %v63 = vpop.xlane.xlu0 %62
  %v64 = vsel %vm29, %v58, 0.0
  %65 = vadd.xlane.f32.xlu0 %v64
  %v66 = vpop.xlane.xlu0 %65
  %v67 = vsel %vm29, %v59, 0.0
  %68 = vadd.xlane.f32.xlu0 %v67
  %v69 = vpop.xlane.xlu0 %68
  %v70 = vsel %vm29, %v60, 0.0
  %71 = vadd.xlane.f32.xlu0 %v70
  %v72 = vpop.xlane.xlu0 %71
  %v73 = vmul.f32 %v63, %v48
  %v74 = vmul.f32 %v66, %v48
  %v75 = vmul.f32 %v69, %v48
  %v76 = vmul.f32 %v72, %v48
  %v77 = vadd.f32 %v73, 1e-05
  %v78 = vadd.f32 %v74, 1e-05
  %v79 = vadd.f32 %v75, 1e-05
  %v80 = vadd.f32 %v76, 1e-05
  %v81 = vrsqrt.pop %v77
  %v82 = vmul.f32 %v81, %v77
  %v83 = vmul.f32 %v82, %v81
  %v84 = vmul.f32 0.5, %v83
  %v85 = vsub.f32 1.5, %v84
  %v86 = vmul.f32 %v81, %v85
  %vm87 = vweird.f32 %v77
  %vm88 = vweird.f32 %v81
  %vm89 = vmor %vm87, %vm88
  %v90 = vsel %vm89, %v81, %v86
  %v91 = vrsqrt.pop %v78
  %v92 = vmul.f32 %v91, %v78
  %v93 = vmul.f32 %v92, %v91
  %v94 = vmul.f32 0.5, %v93
  %v95 = vsub.f32 1.5, %v94
  %v96 = vmul.f32 %v91, %v95
  %vm97 = vweird.f32 %v78
  %vm98 = vweird.f32 %v91
  %vm99 = vmor %vm97, %vm98
  %v100 = vsel %vm99, %v91, %v96
  %v101 = vrsqrt.pop %v79
  %v102 = vmul.f32 %v101, %v79
  %v103 = vmul.f32 %v102, %v101
  %v104 = vmul.f32 0.5, %v103
  %v105 = vsub.f32 1.5, %v104
  %v106 = vmul.f32 %v101, %v105
  %vm107 = vweird.f32 %v79
  %vm108 = vweird.f32 %v101
  %vm109 = vmor %vm107, %vm108
  %v110 = vsel %vm109, %v101, %v106
  %v111 = vrsqrt.pop %v80
  %v112 = vmul.f32 %v111, %v80
  %v113 = vmul.f32 %v112, %v111
  %v114 = vmul.f32 0.5, %v113
  %v115 = vsub.f32 1.5, %v114
  %v116 = vmul.f32 %v111, %v115
  %vm117 = vweird.f32 %v80
  %vm118 = vweird.f32 %v111
  %vm119 = vmor %vm117, %vm118
  %v120 = vsel %vm119, %v111, %v116
  %v121 = vmul.f32 %v53, %v90
  %v122 = vmul.f32 %v54, %v100
  %v123 = vmul.f32 %v55, %v110
  %v124 = vmul.f32 %v56, %v120
  %v125 = vld [vmem:[%s1] sm:$0x1]
  %v127 = vperm.slane %v125, 0
  %v129 = vmul.f32 %v121, %v127
  %v130 = vmul.f32 %v122, %v127
  %v131 = vmul.f32 %v123, %v127
  %v132 = vmul.f32 %v124, %v127
  %v133 = vld [vmem:[%s2] sm:$0x1]
  %v135 = vperm.slane %v133, 0
  %v137 = vadd.f32 %v129, %v135
  %v138 = vadd.f32 %v130, %v135
  %v139 = vadd.f32 %v131, %v135
  %v140 = vadd.f32 %v132, %v135
  %v141 = vpack.c.bf16 %v138, %v137
  %v142 = vpack.c.bf16 %v140, %v139
  %v143 = vld [vmem:[%s3] sm:$0xf]
  %v144 = vld [vmem:[%s3 + $0x4] sm:$0xf]
  %v145 = vld [vmem:[%s3 + $0x8] sm:$0xf]
  %v146 = vld [vmem:[%s3 + $0xc] sm:$0xf]
  %v147 = vld [vmem:[%s3 + $0x10] sm:$0xf]
  %v148 = vld [vmem:[%s3 + $0x14] sm:$0xf]
  %v149 = vld [vmem:[%s3 + $0x18] sm:$0xf]
  %v150 = vld [vmem:[%s3 + $0x1c] sm:$0xf]
  %v151 = vld [vmem:[%s4] sm:$0x1]
  %v153 = vperm.slane %v151, 0
  %v163 = vunpack.c.l.b16 %v143
  %v164 = vunpack.c.l.b16 %v144
  %v165 = vunpack.c.l.b16 %v145
  %v166 = vunpack.c.l.b16 %v146
  %v167 = vunpack.c.l.b16 %v147
  %v168 = vunpack.c.l.b16 %v148
  %v169 = vunpack.c.l.b16 %v149
  %v170 = vunpack.c.l.b16 %v150
  %v171 = vpack.c.b16 %v164, %v163
  %v172 = vpack.c.b16 %v166, %v165
  %v173 = vpack.c.b16 %v168, %v167
  %v174 = vpack.c.b16 %v170, %v169
  %v180 = vsel %vm29, %v141, 0
  %v183 = vsel %vm29, %v142, 0
  %185 = vmatpush.bf16.msra.mxu0 0
  %186 = vmatpush.bf16.msra.mxu0 0
  %187 = vmatpush.bf16.msra.mxu0 0
  %188 = vmatpush.bf16.msra.mxu0 0
  %189 = vmatpush.bf16.msra.mxu0 %v174
  %190 = vmatpush.bf16.msra.mxu0 %v173
  %191 = vmatpush.bf16.msra.mxu0 %v172
  %192 = vmatpush.bf16.msra.mxu0 %v171
  %193 = vmatmul.bf16.gmra.mxu0 %v180
  %v194 = vpop.f32.mrf.mxu0
  %v195 = vadd.f32 %v153, %v194
  %v196 = vpop.f32.mrf.mxu0
  %v197 = vadd.f32 %v153, %v196
  %198 = vmatmul.bf16.gmra.mxu0 %v183
  %v199 = vpop.f32.mrf.mxu0
  %v200 = vadd.f32 %v153, %v199
  %v201 = vpop.f32.mrf.mxu0
  %v202 = vadd.f32 %v153, %v201
  %203 = vdwg.mxu0
  %204 = vst.msk [vmem:[%s5] sm:$0xff] %vm29, %v195
  %205 = vst.msk [vmem:[%s5 + $0x8] sm:$0xff] %vm29, %v197
  %206 = vst.msk [vmem:[%s5 + $0x10] sm:$0xff] %vm29, %v200
  %207 = vst.msk [vmem:[%s5 + $0x18] sm:$0xff] %vm29, %v202
  // Predicated region
  $region22: #{uvit_forward.38} parent=0 // pred_check
    _
  $region23: #{uvit_forward.38} parent=0 // pred_check_branch
    %209 = sbr.rel (0) target = $region25
  $region24: #{uvit_forward.38} parent=0 // pred_region
    _
  $region25: #{uvit_forward.38} parent=0 // pred_fallthru
    _
  // Predicated region
  $region26: #{uvit_forward.38} parent=0 // pred_check
    _
  $region27: #{uvit_forward.38} parent=0 // pred_check_branch
    %211 = sbr.rel (0) target = $region29
  $region28: #{uvit_forward.38} parent=0 // pred_region
    _
  $region29: #{uvit_forward.38} parent=0 // pred_fallthru
    _

// kernel: uvit_forward.39
$region0: #{uvit_forward.39}
  #allocation0 [shape = 'u32[]', space=smem, size = 0x4, offset = 0x4, fixed_abs, tag = 'smem constant byte address 0x4 - core index']
  #allocation1 [shape = 'u32[72,128]{1,0:T(1,128)}', space=vmem, size = 0x9000, scoped, tag = 'internal scratch']
  %s0 = inlined_call_operand.vmem [shape: f32[2,4,18,18], index: 0, kind: input, shape index: {}]
  %s1 = inlined_call_operand.vmem [shape: f32[144], index: 1, kind: input, shape index: {}]
  %s2 = inlined_call_operand.vmem [shape: f32[4], index: 2, kind: input, shape index: {}]
  %s3 = inlined_call_operand.hbm [shape: f32[2,4,16,16], index: 3, kind: output, shape index: {}]
  %s4 = sld [smem:[#allocation0]]
  $region53: #{uvit_forward.39} parent=0
    _
  %s6 = ssub.s32 1, %s4
  %s7 = scalar_select 0, %s6, %s4
  $region1: #{uvit_forward.39} parent=0
    #allocation2 [shape = 'u8[1024]{0}', space=smem, size = 0x400, scoped, tag = 'input window, operand 1, single buffered']
    #allocation3 [shape = 's32[2]{0}', space=sflag, size = 0x8, scoped, tag = 'scoped memory for uvit_forward.39']
    #allocation4 [shape = 's32[2]{0}', space=sflag, size = 0x8, scoped, tag = 'scoped memory for uvit_forward.39']
    #allocation5 [shape = 'u8[512]{0}', space=smem, size = 0x200, scoped, tag = 'input window, operand 2, single buffered']
    #allocation6 [shape = 's32[1]{0}', space=sflag, size = 0x4, scoped, tag = 'scoped memory for uvit_forward.39']
    #allocation7 [shape = 'u8[65536]{0}', space=vmem, size = 0x10000, scoped, tag = 'output window, operand 0']
    %8 = vsyncpa [#allocation4], 0
    %9 = vsyncpa [#allocation6], 0
    %10 = vsyncpa [#allocation3], 0
    %s11 = scalar_lea.sflag [#allocation3], 1
    %12 = vsyncpa %s11, 0
    loop: start=0, step=1, limit=4
    $region2: #{uvit_forward.39} parent=1 // loop_pre_header
      _
    $region3: #{uvit_forward.39} parent=1 // loop_header
      %s14 = sphi 0, %s18
      %p15 = scmp.ge.s32.totalorder %s14, 4
      %s24 = sphi 0, %s26
      %s27 = sphi 0, %s24
      %s28 = sphi 0, %s27
      %s44 = sphi 0, %s28
      %s48 = sphi 0, %s48
      %s50 = sphi 0, %s48
      %s51 = sphi 0, %s50
      %s65 = sphi 0, %s51
      %s69 = sphi 0, %s69
      %s71 = sphi 0, %s69
      %s72 = sphi 0, %s71
      %s86 = sphi 0, %s72
      %s92 = sphi 0, %s94
      %s95 = sphi 0, %s92
      %s96 = sphi 0, %s95
      %s112 = sphi 0, %s96
    $region4: #{uvit_forward.39} parent=1 // loop_header_branch
      %17 = sbr.rel (%p15) target = $region8
    $region5: #{uvit_forward.39} parent=1 // loop_body
      %s19 = ssub.s32 %s14, 1
      %s20 = ssub.s32 %s14, 2
      %s21 = sadd.s32 %s14, 1
      %s22 = ssub.s32 %s14, %s21
      %p23 = scmp.eq.s32.totalorder %s22, 0
      %s25 = sadd.s32 %s24, 1
      %s26 = scalar_select %p23, %s24, %s25
      %p29 = pneg %p23
      %p30 = scmp.eq.s32.totalorder %s14, 1
      %p31 = por %p29, %p30
      %p32 = scmp.ne.s32.totalorder %s24, %s27
      %p33 = scmp.eq.s32.totalorder %s14, 0
      %p34 = por %p32, %p33
      %p35 = scmp.ne.s32.totalorder %s24, %s27
      %p36 = scmp.eq.s32.totalorder %s19, 1
      %p37 = por %p35, %p36
      %p38 = scmp.ne.s32.totalorder %s27, %s28
      %p39 = scmp.eq.s32.totalorder %s19, 0
      %p40 = por %p38, %p39
      %p41 = scmp.ne.s32.totalorder %s27, %s28
      %p42 = scmp.eq.s32.totalorder %s20, 1
      %p43 = por %p41, %p42
      %p45 = scmp.ne.s32.totalorder %s28, %s44
      %p46 = scmp.eq.s32.totalorder %s20, 0
      %p47 = por %p45, %p46
      %s49 = sadd.s32 %s48, 1
      %p52 = scmp.eq.s32.totalorder %s14, 1
      %p53 = scmp.ne.s32.totalorder %s48, %s50
      %p54 = scmp.eq.s32.totalorder %s14, 0
      %p55 = por %p53, %p54
      %p56 = scmp.ne.s32.totalorder %s48, %s50
      %p57 = scmp.eq.s32.totalorder %s19, 1
      %p58 = por %p56, %p57
      %p59 = scmp.ne.s32.totalorder %s50, %s51
      %p60 = scmp.eq.s32.totalorder %s19, 0
      %p61 = por %p59, %p60
      %p62 = scmp.ne.s32.totalorder %s50, %s51
      %p63 = scmp.eq.s32.totalorder %s20, 1
      %p64 = por %p62, %p63
      %p66 = scmp.ne.s32.totalorder %s51, %s65
      %p67 = scmp.eq.s32.totalorder %s20, 0
      %p68 = por %p66, %p67
      %s70 = sadd.s32 %s69, 1
      %p73 = scmp.eq.s32.totalorder %s14, 1
      %p74 = scmp.ne.s32.totalorder %s69, %s71
      %p75 = scmp.eq.s32.totalorder %s14, 0
      %p76 = por %p74, %p75
      %p77 = scmp.ne.s32.totalorder %s69, %s71
      %p78 = scmp.eq.s32.totalorder %s19, 1
      %p79 = por %p77, %p78
      %p80 = scmp.ne.s32.totalorder %s71, %s72
      %p81 = scmp.eq.s32.totalorder %s19, 0
      %p82 = por %p80, %p81
      %p83 = scmp.ne.s32.totalorder %s71, %s72
      %p84 = scmp.eq.s32.totalorder %s20, 1
      %p85 = por %p83, %p84
      %p87 = scmp.ne.s32.totalorder %s72, %s86
      %p88 = scmp.eq.s32.totalorder %s20, 0
      %p89 = por %p87, %p88
      %s90 = ssub.s32 %s14, %s21
      %p91 = scmp.eq.s32.totalorder %s90, 0
      %s93 = sadd.s32 %s92, 1
      %s94 = scalar_select %p91, %s92, %s93
      %p97 = pneg %p91
      %p98 = scmp.eq.s32.totalorder %s14, 1
      %p99 = por %p97, %p98
      %p100 = scmp.ne.s32.totalorder %s92, %s95
      %p101 = scmp.eq.s32.totalorder %s14, 0
      %p102 = por %p100, %p101
      %p103 = scmp.ne.s32.totalorder %s92, %s95
      %p104 = scmp.eq.s32.totalorder %s19, 1
      %p105 = por %p103, %p104
      %p106 = scmp.ne.s32.totalorder %s95, %s96
      %p107 = scmp.eq.s32.totalorder %s19, 0
      %p108 = por %p106, %p107
      %p109 = scmp.ne.s32.totalorder %s95, %s96
      %p110 = scmp.eq.s32.totalorder %s20, 1
      %p111 = por %p109, %p110
      %p113 = scmp.ne.s32.totalorder %s96, %s112
      %p114 = scmp.eq.s32.totalorder %s20, 0
      %p115 = por %p113, %p114
      %p116 = scmp.le.s32.totalorder 1, %s14
      %p117 = scmp.lt.s32.totalorder %s14, 3
      %p118 = pnand %p116, %p117
      %p119 = pneg %p118
      // Predicated region
      $region9: #{uvit_forward.39} parent=5 // pred_check
        _
      $region10: #{uvit_forward.39} parent=5 // pred_check_branch
        %121 = sbr.rel (%p118) target = $region12
      $region11: #{uvit_forward.39} parent=5 // pred_region
        %s122 = ssub.s32 %s14, 1
        // Predicated region
        $region13: #{uvit_forward.39} parent=11 // pred_check
          %p123 = pneg %p61
        $region14: #{uvit_forward.39} parent=11 // pred_check_branch
          %125 = sbr.rel (%p123) target = $region16
        $region15: #{uvit_forward.39} parent=11 // pred_region
          %127 = vsyncadd [#allocation4], 0
          %s129 = sshll.u32 %s1, 4
          %s130 = int_to_ptr.vmem [resolvable:$true] %s129
          %132 = dma.vmem_to_smem %s130, 32, [#allocation2], [#allocation4]
        $region16: #{uvit_forward.39} parent=11 // pred_fallthru
          _
        // Predicated region
        $region17: #{uvit_forward.39} parent=11 // pred_check
          %p133 = pneg %p82
        $region18: #{uvit_forward.39} parent=11 // pred_check_branch
          %135 = sbr.rel (%p133) target = $region20
        $region19: #{uvit_forward.39} parent=11 // pred_region
          %137 = vsyncadd [#allocation6], 0
          %s139 = sshll.u32 %s2, 4
          %s140 = int_to_ptr.vmem [resolvable:$true] %s139
          %142 = dma.vmem_to_smem %s140, 16, [#allocation5], [#allocation6]
        $region20: #{uvit_forward.39} parent=11 // pred_fallthru
          _
      $region12: #{uvit_forward.39} parent=5 // pred_fallthru
        _
      %p143 = scmp.lt.s32.totalorder %s14, 2
      // Predicated region
      $region21: #{uvit_forward.39} parent=5 // pred_check
        %p144 = pneg %p143
      $region22: #{uvit_forward.39} parent=5 // pred_check_branch
        %146 = sbr.rel (%p144) target = $region24
      $region23: #{uvit_forward.39} parent=5 // pred_region
        // Predicated region
        $region25: #{uvit_forward.39} parent=23 // pred_check
          %p147 = pneg %p34
        $region26: #{uvit_forward.39} parent=23 // pred_check_branch
          %149 = sbr.rel (%p147) target = $region28
        $region27: #{uvit_forward.39} parent=23 // pred_region
          %p150 = scmp.lt.s32.totalorder %s14, 1
          %s151 = scalar_select %p150, %s14, 1
          %s152 = smul.addr %s151, 12
          %s153 = smul.addr %s152, 8
          %s154 = scalar_lea.vmem %s0, %s153
        $region28: #{uvit_forward.39} parent=23 // pred_fallthru
          _
      $region24: #{uvit_forward.39} parent=5 // pred_fallthru
        _
      %p155 = scmp.le.s32.totalorder 1, %s14
      %p156 = scmp.lt.s32.totalorder %s14, 3
      %p157 = pnand %p155, %p156
      %p158 = pneg %p157
      // Predicated region
      $region29: #{uvit_forward.39} parent=5 // pred_check
        _
      $region30: #{uvit_forward.39} parent=5 // pred_check_branch
        %160 = sbr.rel (%p157) target = $region32
      $region31: #{uvit_forward.39} parent=5 // pred_region
        %s161 = ssub.s32 %s14, 1
        // Predicated region
        $region33: #{uvit_forward.39} parent=31 // pred_check
          %p162 = pneg %p61
        $region34: #{uvit_forward.39} parent=31 // pred_check_branch
          %164 = sbr.rel (%p162) target = $region36
        $region35: #{uvit_forward.39} parent=31 // pred_region
          %166 = dma.done [#allocation4], 32
        $region36: #{uvit_forward.39} parent=31 // pred_fallthru
          _
        // Predicated region
        $region37: #{uvit_forward.39} parent=31 // pred_check
          %p167 = pneg %p82
        $region38: #{uvit_forward.39} parent=31 // pred_check_branch
          %169 = sbr.rel (%p167) target = $region40
        $region39: #{uvit_forward.39} parent=31 // pred_region
          %171 = dma.done [#allocation6], 16
        $region40: #{uvit_forward.39} parent=31 // pred_fallthru
          _
        %172 = sfence
        %p173 = scmp.lt.s32.totalorder %s19, 1
        %s174 = scalar_select %p173, %s19, 1
        %s175 = smul.addr %s174, 12
        %s176 = smul.addr %s175, 8
        %s177 = scalar_lea.vmem %s0, %s176
        %p178 = pneg %p40
        %p179 = pneg %p37
        %p180 = pneg %p61
        %p181 = pneg %p58
        %p182 = pneg %p82
        %p183 = pneg %p79
        %p184 = pneg %p108
        %p185 = pneg %p105
        %s186 = sand.u32 %s95, 1
        %s187 = scalar_lea.sflag [#allocation3], %s186
        %s188 = sand.u32 %s95, 1
        %s189 = smul.addr %s188, 64
        %s190 = scalar_lea.vmem [#allocation7], %s189
        %p191 = scmp.lt.s32.totalorder %s19, 1
        %s192 = scalar_select %p191, %s19, 1
        %s193 = smul.addr %s192, 12
        %s194 = smul.addr %s193, 8
        %s195 = scalar_lea.vmem %s0, %s194
        %v196 = vld [vmem:[%s195] sm:$0xff]
        %v197 = vld [vmem:[%s195 + $0x8] sm:$0xff]
        %v198 = vld [vmem:[%s195 + $0x10] sm:$0x3]
        %s199 = scalar_lea.vmem %s195, 24
        %v200 = vld [vmem:[%s199] sm:$0xff]
        %v201 = vld [vmem:[%s199 + $0x8] sm:$0xff]
        %v202 = vld [vmem:[%s199 + $0x10] sm:$0x3]
        %s203 = scalar_lea.vmem %s195, 48
        %v204 = vld [vmem:[%s203] sm:$0xff]
        %v205 = vld [vmem:[%s203 + $0x8] sm:$0xff]
        %v206 = vld [vmem:[%s203 + $0x10] sm:$0x3]
        %s207 = scalar_lea.vmem %s195, 72
        %v208 = vld [vmem:[%s207] sm:$0xff]
        %v209 = vld [vmem:[%s207 + $0x8] sm:$0xff]
        %v210 = vld [vmem:[%s207 + $0x10] sm:$0x3]
        %s211 = sld [smem:[#allocation2]]
        %v212 = vstv %s211
        %v213 = vmul.f32 %v212, %v196
        %v214 = vmul.f32 %v212, %v197
        %v215 = vadd.f32 %v213, 0.0
        %v216 = vadd.f32 %v214, 0.0
        %s217 = sld [smem:[#allocation2 + $0x1]]
        %v218 = vstv %s217
        %v219 = vmul.f32 %v218, %v196
        %v220 = vmul.f32 %v218, %v197
        %223 = vrot.lane.b32.xlu0 %v219, 127
        %v224 = vpop.permute.xlu0 %223
        %225 = vrot.lane.b32.xlu0 %v220, 127
        %v226 = vpop.permute.xlu0 %225
        %v229 = vadd.f32 %v215, %v224
        %v230 = vadd.f32 %v216, %v226
        %s231 = sld [smem:[#allocation2 + $0x2]]
        %v232 = vstv %s231
        %v233 = vmul.f32 %v232, %v196
        %v234 = vmul.f32 %v232, %v197
        %237 = vrot.lane.b32.xlu0 %v233, 126
        %v238 = vpop.permute.xlu0 %237
        %239 = vrot.lane.b32.xlu0 %v234, 126
        %v240 = vpop.permute.xlu0 %239
        %v243 = vadd.f32 %v229, %v238
        %v244 = vadd.f32 %v230, %v240
        %s245 = sld [smem:[#allocation2 + $0x3]]
        %v246 = vstv %s245
        %v247 = vmul.f32 %v246, %v196
        %v248 = vmul.f32 %v246, %v197
        %v249 = vmul.f32 %v246, %v198
        %vm253 = vcmask 1046528
        %v254 = vrot.slane %v247, 1
        %v255 = vrot.slane %v248, 1
        %v256 = vsel %vm253, %v254, %v255
        %v257 = vrot.slane %v249, 1
        %v258 = vsel %vm253, %v255, %v257
        %v261 = vadd.f32 %v243, %v256
        %v262 = vadd.f32 %v244, %v258
        %s263 = sld [smem:[#allocation2 + $0x4]]
        %v264 = vstv %s263
        %v265 = vmul.f32 %v264, %v196
        %v266 = vmul.f32 %v264, %v197
        %v267 = vmul.f32 %v264, %v198
        %v271 = vrot.slane %v265, 1
        %v272 = vrot.slane %v266, 1
        %v273 = vsel %vm253, %v271, %v272
        %v274 = vrot.slane %v267, 1
        %v275 = vsel %vm253, %v272, %v274
        %276 = vrot.lane.b32.xlu0 %v273, 127
        %v277 = vpop.permute.xlu0 %276
        %278 = vrot.lane.b32.xlu0 %v275, 127
        %v279 = vpop.permute.xlu0 %278
        %v282 = vadd.f32 %v261, %v277
        %v283 = vadd.f32 %v262, %v279
        %s284 = sld [smem:[#allocation2 + $0x5]]
        %v285 = vstv %s284
        %v286 = vmul.f32 %v285, %v196
        %v287 = vmul.f32 %v285, %v197
        %v288 = vmul.f32 %v285, %v198
        %v292 = vrot.slane %v286, 1
        %v293 = vrot.slane %v287, 1
        %v294 = vsel %vm253, %v292, %v293
        %v295 = vrot.slane %v288, 1
        %v296 = vsel %vm253, %v293, %v295
        %297 = vrot.lane.b32.xlu0 %v294, 126
        %v298 = vpop.permute.xlu0 %297
        %299 = vrot.lane.b32.xlu0 %v296, 126
        %v300 = vpop.permute.xlu0 %299
        %v303 = vadd.f32 %v282, %v298
        %v304 = vadd.f32 %v283, %v300
        %s305 = sld [smem:[#allocation2 + $0x6]]
        %v306 = vstv %s305
        %v307 = vmul.f32 %v306, %v196
        %v308 = vmul.f32 %v306, %v197
        %v309 = vmul.f32 %v306, %v198
        %vm313 = vcmask 1045504
        %v314 = vrot.slane %v307, 2
        %v315 = vrot.slane %v308, 2
        %v316 = vsel %vm313, %v314, %v315
        %v317 = vrot.slane %v309, 2
        %v318 = vsel %vm313, %v315, %v317
        %v321 = vadd.f32 %v303, %v316
        %v322 = vadd.f32 %v304, %v318
        %s323 = sld [smem:[#allocation2 + $0x7]]
        %v324 = vstv %s323
        %v325 = vmul.f32 %v324, %v196
        %v326 = vmul.f32 %v324, %v197
        %v327 = vmul.f32 %v324, %v198
        %v331 = vrot.slane %v325, 2
        %v332 = vrot.slane %v326, 2
        %v333 = vsel %vm313, %v331, %v332
        %v334 = vrot.slane %v327, 2
        %v335 = vsel %vm313, %v332, %v334
        %336 = vrot.lane.b32.xlu0 %v333, 127
        %v337 = vpop.permute.xlu0 %336
        %338 = vrot.lane.b32.xlu0 %v335, 127
        %v339 = vpop.permute.xlu0 %338
        %v342 = vadd.f32 %v321, %v337
        %v343 = vadd.f32 %v322, %v339
        %s344 = sld [smem:[#allocation2 + $0x8]]
        %v345 = vstv %s344
        %v346 = vmul.f32 %v345, %v196
        %v347 = vmul.f32 %v345, %v197
        %v348 = vmul.f32 %v345, %v198
        %v352 = vrot.slane %v346, 2
        %v353 = vrot.slane %v347, 2
        %v354 = vsel %vm313, %v352, %v353
        %v355 = vrot.slane %v348, 2
        %v356 = vsel %vm313, %v353, %v355
        %357 = vrot.lane.b32.xlu0 %v354, 126
        %v358 = vpop.permute.xlu0 %357
        %359 = vrot.lane.b32.xlu0 %v356, 126
        %v360 = vpop.permute.xlu0 %359
        %v363 = vadd.f32 %v342, %v358
        %v364 = vadd.f32 %v343, %v360
        %s365 = sld [smem:[#allocation2 + $0x9]]
        %v366 = vstv %s365
        %v367 = vmul.f32 %v366, %v200
        %v368 = vmul.f32 %v366, %v201
        %v369 = vadd.f32 %v363, %v367
        %v370 = vadd.f32 %v364, %v368
        %s371 = sld [smem:[#allocation2 + $0xa]]
        %v372 = vstv %s371
        %v373 = vmul.f32 %v372, %v200
        %v374 = vmul.f32 %v372, %v201
        %377 = vrot.lane.b32.xlu0 %v373, 127
        %v378 = vpop.permute.xlu0 %377
        %379 = vrot.lane.b32.xlu0 %v374, 127
        %v380 = vpop.permute.xlu0 %379
        %v383 = vadd.f32 %v369, %v378
        %v384 = vadd.f32 %v370, %v380
        %s385 = sld [smem:[#allocation2 + $0xb]]
        %v386 = vstv %s385
        %v387 = vmul.f32 %v386, %v200
        %v388 = vmul.f32 %v386, %v201
        %391 = vrot.lane.b32.xlu0 %v387, 126
        %v392 = vpop.permute.xlu0 %391
        %393 = vrot.lane.b32.xlu0 %v388, 126
        %v394 = vpop.permute.xlu0 %393
        %v397 = vadd.f32 %v383, %v392
        %v398 = vadd.f32 %v384, %v394
        %s399 = sld [smem:[#allocation2 + $0xc]]
        %v400 = vstv %s399
        %v401 = vmul.f32 %v400, %v200
        %v402 = vmul.f32 %v400, %v201
        %v403 = vmul.f32 %v400, %v202
        %v407 = vrot.slane %v401, 1
        %v408 = vrot.slane %v402, 1
        %v409 = vsel %vm253, %v407, %v408
        %v410 = vrot.slane %v403, 1
        %v411 = vsel %vm253, %v408, %v410
        %v414 = vadd.f32 %v397, %v409
        %v415 = vadd.f32 %v398, %v411
        %s416 = sld [smem:[#allocation2 + $0xd]]
        %v417 = vstv %s416
        %v418 = vmul.f32 %v417, %v200
        %v419 = vmul.f32 %v417, %v201
        %v420 = vmul.f32 %v417, %v202
        %v424 = vrot.slane %v418, 1
        %v425 = vrot.slane %v419, 1
        %v426 = vsel %vm253, %v424, %v425
        %v427 = vrot.slane %v420, 1
        %v428 = vsel %vm253, %v425, %v427
        %429 = vrot.lane.b32.xlu0 %v426, 127
        %v430 = vpop.permute.xlu0 %429
        %431 = vrot.lane.b32.xlu0 %v428, 127
        %v432 = vpop.permute.xlu0 %431
        %v435 = vadd.f32 %v414, %v430
        %v436 = vadd.f32 %v415, %v432
        %s437 = sld [smem:[#allocation2 + $0xe]]
        %v438 = vstv %s437
        %v439 = vmul.f32 %v438, %v200
        %v440 = vmul.f32 %v438, %v201
        %v441 = vmul.f32 %v438, %v202
        %v445 = vrot.slane %v439, 1
        %v446 = vrot.slane %v440, 1
        %v447 = vsel %vm253, %v445, %v446
        %v448 = vrot.slane %v441, 1
        %v449 = vsel %vm253, %v446, %v448
        %450 = vrot.lane.b32.xlu0 %v447, 126
        %v451 = vpop.permute.xlu0 %450
        %452 = vrot.lane.b32.xlu0 %v449, 126
        %v453 = vpop.permute.xlu0 %452
        %v456 = vadd.f32 %v435, %v451
        %v457 = vadd.f32 %v436, %v453
        %s458 = sld [smem:[#allocation2 + $0xf]]
        %v459 = vstv %s458
        %v460 = vmul.f32 %v459, %v200
        %v461 = vmul.f32 %v459, %v201
        %v462 = vmul.f32 %v459, %v202
        %v466 = vrot.slane %v460, 2
        %v467 = vrot.slane %v461, 2
        %v468 = vsel %vm313, %v466, %v467
        %v469 = vrot.slane %v462, 2
        %v470 = vsel %vm313, %v467, %v469
        %v473 = vadd.f32 %v456, %v468
        %v474 = vadd.f32 %v457, %v470
        %s475 = sld [smem:[#allocation2 + $0x10]]
        %v476 = vstv %s475
        %v477 = vmul.f32 %v476, %v200
        %v478 = vmul.f32 %v476, %v201
        %v479 = vmul.f32 %v476, %v202
        %v483 = vrot.slane %v477, 2
        %v484 = vrot.slane %v478, 2
        %v485 = vsel %vm313, %v483, %v484
        %v486 = vrot.slane %v479, 2
        %v487 = vsel %vm313, %v484, %v486
        %488 = vrot.lane.b32.xlu0 %v485, 127
        %v489 = vpop.permute.xlu0 %488
        %490 = vrot.lane.b32.xlu0 %v487, 127
        %v491 = vpop.permute.xlu0 %490
        %v494 = vadd.f32 %v473, %v489
        %v495 = vadd.f32 %v474, %v491
        %s496 = sld [smem:[#allocation2 + $0x11]]
        %v497 = vstv %s496
        %v498 = vmul.f32 %v497, %v200
        %v499 = vmul.f32 %v497, %v201
        %v500 = vmul.f32 %v497, %v202
        %v504 = vrot.slane %v498, 2
        %v505 = vrot.slane %v499, 2
        %v506 = vsel %vm313, %v504, %v505
        %v507 = vrot.slane %v500, 2
        %v508 = vsel %vm313, %v505, %v507
        %509 = vrot.lane.b32.xlu0 %v506, 126
        %v510 = vpop.permute.xlu0 %509
        %511 = vrot.lane.b32.xlu0 %v508, 126
        %v512 = vpop.permute.xlu0 %511
        %v515 = vadd.f32 %v494, %v510
        %v516 = vadd.f32 %v495, %v512
        %s517 = sld [smem:[#allocation2 + $0x12]]
        %v518 = vstv %s517
        %v519 = vmul.f32 %v518, %v204
        %v520 = vmul.f32 %v518, %v205
        %v521 = vadd.f32 %v515, %v519
        %v522 = vadd.f32 %v516, %v520
        %s523 = sld [smem:[#allocation2 + $0x13]]
        %v524 = vstv %s523
        %v525 = vmul.f32 %v524, %v204
        %v526 = vmul.f32 %v524, %v205
        %529 = vrot.lane.b32.xlu0 %v525, 127
        %v530 = vpop.permute.xlu0 %529
        %531 = vrot.lane.b32.xlu0 %v526, 127
        %v532 = vpop.permute.xlu0 %531
        %v535 = vadd.f32 %v521, %v530
        %v536 = vadd.f32 %v522, %v532
        %s537 = sld [smem:[#allocation2 + $0x14]]
        %v538 = vstv %s537
        %v539 = vmul.f32 %v538, %v204
        %v540 = vmul.f32 %v538, %v205
        %543 = vrot.lane.b32.xlu0 %v539, 126
        %v544 = vpop.permute.xlu0 %543
        %545 = vrot.lane.b32.xlu0 %v540, 126
        %v546 = vpop.permute.xlu0 %545
        %v549 = vadd.f32 %v535, %v544
        %v550 = vadd.f32 %v536, %v546
        %s551 = sld [smem:[#allocation2 + $0x15]]
        %v552 = vstv %s551
        %v553 = vmul.f32 %v552, %v204
        %v554 = vmul.f32 %v552, %v205
        %v555 = vmul.f32 %v552, %v206
        %v559 = vrot.slane %v553, 1
        %v560 = vrot.slane %v554, 1
        %v561 = vsel %vm253, %v559, %v560
        %v562 = vrot.slane %v555, 1
        %v563 = vsel %vm253, %v560, %v562
        %v566 = vadd.f32 %v549, %v561
        %v567 = vadd.f32 %v550, %v563
        %s568 = sld [smem:[#allocation2 + $0x16]]
        %v569 = vstv %s568
        %v570 = vmul.f32 %v569, %v204
        %v571 = vmul.f32 %v569, %v205
        %v572 = vmul.f32 %v569, %v206
        %v576 = vrot.slane %v570, 1
        %v577 = vrot.slane %v571, 1
        %v578 = vsel %vm253, %v576, %v577
        %v579 = vrot.slane %v572, 1
        %v580 = vsel %vm253, %v577, %v579
        %581 = vrot.lane.b32.xlu0 %v578, 127
        %v582 = vpop.permute.xlu0 %581
        %583 = vrot.lane.b32.xlu0 %v580, 127
        %v584 = vpop.permute.xlu0 %583
        %v587 = vadd.f32 %v566, %v582
        %v588 = vadd.f32 %v567, %v584
        %s589 = sld [smem:[#allocation2 + $0x17]]
        %v590 = vstv %s589
        %v591 = vmul.f32 %v590, %v204
        %v592 = vmul.f32 %v590, %v205
        %v593 = vmul.f32 %v590, %v206
        %v597 = vrot.slane %v591, 1
        %v598 = vrot.slane %v592, 1
        %v599 = vsel %vm253, %v597, %v598
        %v600 = vrot.slane %v593, 1
        %v601 = vsel %vm253, %v598, %v600
        %602 = vrot.lane.b32.xlu0 %v599, 126
        %v603 = vpop.permute.xlu0 %602
        %604 = vrot.lane.b32.xlu0 %v601, 126
        %v605 = vpop.permute.xlu0 %604
        %v608 = vadd.f32 %v587, %v603
        %v609 = vadd.f32 %v588, %v605
        %s610 = sld [smem:[#allocation2 + $0x18]]
        %v611 = vstv %s610
        %v612 = vmul.f32 %v611, %v204
        %v613 = vmul.f32 %v611, %v205
        %v614 = vmul.f32 %v611, %v206
        %v618 = vrot.slane %v612, 2
        %v619 = vrot.slane %v613, 2
        %v620 = vsel %vm313, %v618, %v619
        %v621 = vrot.slane %v614, 2
        %v622 = vsel %vm313, %v619, %v621
        %v625 = vadd.f32 %v608, %v620
        %v626 = vadd.f32 %v609, %v622
        %s627 = sld [smem:[#allocation2 + $0x19]]
        %v628 = vstv %s627
        %v629 = vmul.f32 %v628, %v204
        %v630 = vmul.f32 %v628, %v205
        %v631 = vmul.f32 %v628, %v206
        %v635 = vrot.slane %v629, 2
        %v636 = vrot.slane %v630, 2
        %v637 = vsel %vm313, %v635, %v636
        %v638 = vrot.slane %v631, 2
        %v639 = vsel %vm313, %v636, %v638
        %640 = vrot.lane.b32.xlu0 %v637, 127
        %v641 = vpop.permute.xlu0 %640
        %642 = vrot.lane.b32.xlu0 %v639, 127
        %v643 = vpop.permute.xlu0 %642
        %v646 = vadd.f32 %v625, %v641
        %v647 = vadd.f32 %v626, %v643
        %s648 = sld [smem:[#allocation2 + $0x1a]]
        %v649 = vstv %s648
        %v650 = vmul.f32 %v649, %v204
        %v651 = vmul.f32 %v649, %v205
        %v652 = vmul.f32 %v649, %v206
        %v656 = vrot.slane %v650, 2
        %v657 = vrot.slane %v651, 2
        %v658 = vsel %vm313, %v656, %v657
        %v659 = vrot.slane %v652, 2
        %v660 = vsel %vm313, %v657, %v659
        %661 = vrot.lane.b32.xlu0 %v658, 126
        %v662 = vpop.permute.xlu0 %661
        %663 = vrot.lane.b32.xlu0 %v660, 126
        %v664 = vpop.permute.xlu0 %663
        %v667 = vadd.f32 %v646, %v662
        %v668 = vadd.f32 %v647, %v664
        %s669 = sld [smem:[#allocation2 + $0x1b]]
        %v670 = vstv %s669
        %v671 = vmul.f32 %v670, %v208
        %v672 = vmul.f32 %v670, %v209
        %v673 = vadd.f32 %v667, %v671
        %v674 = vadd.f32 %v668, %v672
        %s675 = sld [smem:[#allocation2 + $0x1c]]
        %v676 = vstv %s675
        %v677 = vmul.f32 %v676, %v208
        %v678 = vmul.f32 %v676, %v209
        %681 = vrot.lane.b32.xlu0 %v677, 127
        %v682 = vpop.permute.xlu0 %681
        %683 = vrot.lane.b32.xlu0 %v678, 127
        %v684 = vpop.permute.xlu0 %683
        %v687 = vadd.f32 %v673, %v682
        %v688 = vadd.f32 %v674, %v684
        %s689 = sld [smem:[#allocation2 + $0x1d]]
        %v690 = vstv %s689
        %v691 = vmul.f32 %v690, %v208
        %v692 = vmul.f32 %v690, %v209
        %695 = vrot.lane.b32.xlu0 %v691, 126
        %v696 = vpop.permute.xlu0 %695
        %697 = vrot.lane.b32.xlu0 %v692, 126
        %v698 = vpop.permute.xlu0 %697
        %v701 = vadd.f32 %v687, %v696
        %v702 = vadd.f32 %v688, %v698
        %s703 = sld [smem:[#allocation2 + $0x1e]]
        %v704 = vstv %s703
        %v705 = vmul.f32 %v704, %v208
        %v706 = vmul.f32 %v704, %v209
        %v707 = vmul.f32 %v704, %v210
        %v711 = vrot.slane %v705, 1
        %v712 = vrot.slane %v706, 1
        %v713 = vsel %vm253, %v711, %v712
        %v714 = vrot.slane %v707, 1
        %v715 = vsel %vm253, %v712, %v714
        %v718 = vadd.f32 %v701, %v713
        %v719 = vadd.f32 %v702, %v715
        %s720 = sld [smem:[#allocation2 + $0x1f]]
        %v721 = vstv %s720
        %v722 = vmul.f32 %v721, %v208
        %v723 = vmul.f32 %v721, %v209
        %v724 = vmul.f32 %v721, %v210
        %v728 = vrot.slane %v722, 1
        %v729 = vrot.slane %v723, 1
        %v730 = vsel %vm253, %v728, %v729
        %v731 = vrot.slane %v724, 1
        %v732 = vsel %vm253, %v729, %v731
        %733 = vrot.lane.b32.xlu0 %v730, 127
        %v734 = vpop.permute.xlu0 %733
        %735 = vrot.lane.b32.xlu0 %v732, 127
        %v736 = vpop.permute.xlu0 %735
        %v739 = vadd.f32 %v718, %v734
        %v740 = vadd.f32 %v719, %v736
        %s741 = sld [smem:[#allocation2 + $0x20]]
        %v742 = vstv %s741
        %v743 = vmul.f32 %v742, %v208
        %v744 = vmul.f32 %v742, %v209
        %v745 = vmul.f32 %v742, %v210
        %v749 = vrot.slane %v743, 1
        %v750 = vrot.slane %v744, 1
        %v751 = vsel %vm253, %v749, %v750
        %v752 = vrot.slane %v745, 1
        %v753 = vsel %vm253, %v750, %v752
        %754 = vrot.lane.b32.xlu0 %v751, 126
        %v755 = vpop.permute.xlu0 %754
        %756 = vrot.lane.b32.xlu0 %v753, 126
        %v757 = vpop.permute.xlu0 %756
        %v760 = vadd.f32 %v739, %v755
        %v761 = vadd.f32 %v740, %v757
        %s762 = sld [smem:[#allocation2 + $0x21]]
        %v763 = vstv %s762
        %v764 = vmul.f32 %v763, %v208
        %v765 = vmul.f32 %v763, %v209
        %v766 = vmul.f32 %v763, %v210
        %v770 = vrot.slane %v764, 2
        %v771 = vrot.slane %v765, 2
        %v772 = vsel %vm313, %v770, %v771
        %v773 = vrot.slane %v766, 2
        %v774 = vsel %vm313, %v771, %v773
        %v777 = vadd.f32 %v760, %v772
        %v778 = vadd.f32 %v761, %v774
        %s779 = sld [smem:[#allocation2 + $0x22]]
        %v780 = vstv %s779
        %v781 = vmul.f32 %v780, %v208
        %v782 = vmul.f32 %v780, %v209
        %v783 = vmul.f32 %v780, %v210
        %v787 = vrot.slane %v781, 2
        %v788 = vrot.slane %v782, 2
        %v789 = vsel %vm313, %v787, %v788
        %v790 = vrot.slane %v783, 2
        %v791 = vsel %vm313, %v788, %v790
        %792 = vrot.lane.b32.xlu0 %v789, 127
        %v793 = vpop.permute.xlu0 %792
        %794 = vrot.lane.b32.xlu0 %v791, 127
        %v795 = vpop.permute.xlu0 %794
        %v798 = vadd.f32 %v777, %v793
        %v799 = vadd.f32 %v778, %v795
        %s800 = sld [smem:[#allocation2 + $0x23]]
        %v801 = vstv %s800
        %v802 = vmul.f32 %v801, %v208
        %v803 = vmul.f32 %v801, %v209
        %v804 = vmul.f32 %v801, %v210
        %v808 = vrot.slane %v802, 2
        %v809 = vrot.slane %v803, 2
        %v810 = vsel %vm313, %v808, %v809
        %v811 = vrot.slane %v804, 2
        %v812 = vsel %vm313, %v809, %v811
        %813 = vrot.lane.b32.xlu0 %v810, 126
        %v814 = vpop.permute.xlu0 %813
        %815 = vrot.lane.b32.xlu0 %v812, 126
        %v816 = vpop.permute.xlu0 %815
        %v819 = vadd.f32 %v798, %v814
        %v820 = vadd.f32 %v799, %v816
        %s821 = sld [smem:[#allocation5]]
        %v822 = vstv %s821
        %v823 = vadd.f32 %v819, %v822
        %v824 = vadd.f32 %v820, %v822
        %vm825 = vcmask 130048
        %826 = vst.msk [vmem:[%s190] sm:$0xff] %vm825, %v823
        %827 = vst.msk [vmem:[%s190 + $0x8] sm:$0xff] %vm825, %v824
        %s828 = sld [smem:[#allocation2 + $0x24]]
        %v829 = vstv %s828
        %v830 = vmul.f32 %v829, %v196
        %v831 = vmul.f32 %v829, %v197
        %v832 = vadd.f32 %v830, 0.0
        %v833 = vadd.f32 %v831, 0.0
        %s834 = sld [smem:[#allocation2 + $0x25]]
        %v835 = vstv %s834
        %v836 = vmul.f32 %v835, %v196
        %v837 = vmul.f32 %v835, %v197
        %840 = vrot.lane.b32.xlu0 %v836, 127
        %v841 = vpop.permute.xlu0 %840
        %842 = vrot.lane.b32.xlu0 %v837, 127
        %v843 = vpop.permute.xlu0 %842
        %v846 = vadd.f32 %v832, %v841
        %v847 = vadd.f32 %v833, %v843
        %s848 = sld [smem:[#allocation2 + $0x26]]
        %v849 = vstv %s848
        %v850 = vmul.f32 %v849, %v196
        %v851 = vmul.f32 %v849, %v197
        %854 = vrot.lane.b32.xlu0 %v850, 126
        %v855 = vpop.permute.xlu0 %854
        %856 = vrot.lane.b32.xlu0 %v851, 126
        %v857 = vpop.permute.xlu0 %856
        %v860 = vadd.f32 %v846, %v855
        %v861 = vadd.f32 %v847, %v857
        %s862 = sld [smem:[#allocation2 + $0x27]]
        %v863 = vstv %s862
        %v864 = vmul.f32 %v863, %v196
        %v865 = vmul.f32 %v863, %v197
        %v866 = vmul.f32 %v863, %v198
        %v870 = vrot.slane %v864, 1
        %v871 = vrot.slane %v865, 1
        %v872 = vsel %vm253, %v870, %v871
        %v873 = vrot.slane %v866, 1
        %v874 = vsel %vm253, %v871, %v873
        %v877 = vadd.f32 %v860, %v872
        %v878 = vadd.f32 %v861, %v874
        %s879 = sld [smem:[#allocation2 + $0x28]]
        %v880 = vstv %s879
        %v881 = vmul.f32 %v880, %v196
        %v882 = vmul.f32 %v880, %v197
        %v883 = vmul.f32 %v880, %v198
        %v887 = vrot.slane %v881, 1
        %v888 = vrot.slane %v882, 1
        %v889 = vsel %vm253, %v887, %v888
        %v890 = vrot.slane %v883, 1
        %v891 = vsel %vm253, %v888, %v890
        %892 = vrot.lane.b32.xlu0 %v889, 127
        %v893 = vpop.permute.xlu0 %892
        %894 = vrot.lane.b32.xlu0 %v891, 127
        %v895 = vpop.permute.xlu0 %894
        %v898 = vadd.f32 %v877, %v893
        %v899 = vadd.f32 %v878, %v895
        %s900 = sld [smem:[#allocation2 + $0x29]]
        %v901 = vstv %s900
        %v902 = vmul.f32 %v901, %v196
        %v903 = vmul.f32 %v901, %v197
        %v904 = vmul.f32 %v901, %v198
        %v908 = vrot.slane %v902, 1
        %v909 = vrot.slane %v903, 1
        %v910 = vsel %vm253, %v908, %v909
        %v911 = vrot.slane %v904, 1
        %v912 = vsel %vm253, %v909, %v911
        %913 = vrot.lane.b32.xlu0 %v910, 126
        %v914 = vpop.permute.xlu0 %913
        %915 = vrot.lane.b32.xlu0 %v912, 126
        %v916 = vpop.permute.xlu0 %915
        %v919 = vadd.f32 %v898, %v914
        %v920 = vadd.f32 %v899, %v916
        %s921 = sld [smem:[#allocation2 + $0x2a]]
        %v922 = vstv %s921
        %v923 = vmul.f32 %v922, %v196
        %v924 = vmul.f32 %v922, %v197
        %v925 = vmul.f32 %v922, %v198
        %v929 = vrot.slane %v923, 2
        %v930 = vrot.slane %v924, 2
        %v931 = vsel %vm313, %v929, %v930
        %v932 = vrot.slane %v925, 2
        %v933 = vsel %vm313, %v930, %v932
        %v936 = vadd.f32 %v919, %v931
        %v937 = vadd.f32 %v920, %v933
        %s938 = sld [smem:[#allocation2 + $0x2b]]
        %v939 = vstv %s938
        %v940 = vmul.f32 %v939, %v196
        %v941 = vmul.f32 %v939, %v197
        %v942 = vmul.f32 %v939, %v198
        %v946 = vrot.slane %v940, 2
        %v947 = vrot.slane %v941, 2
        %v948 = vsel %vm313, %v946, %v947
        %v949 = vrot.slane %v942, 2
        %v950 = vsel %vm313, %v947, %v949
        %951 = vrot.lane.b32.xlu0 %v948, 127
        %v952 = vpop.permute.xlu0 %951
        %953 = vrot.lane.b32.xlu0 %v950, 127
        %v954 = vpop.permute.xlu0 %953
        %v957 = vadd.f32 %v936, %v952
        %v958 = vadd.f32 %v937, %v954
        %s959 = sld [smem:[#allocation2 + $0x2c]]
        %v960 = vstv %s959
        %v961 = vmul.f32 %v960, %v196
        %v962 = vmul.f32 %v960, %v197
        %v963 = vmul.f32 %v960, %v198
        %v967 = vrot.slane %v961, 2
        %v968 = vrot.slane %v962, 2
        %v969 = vsel %vm313, %v967, %v968
        %v970 = vrot.slane %v963, 2
        %v971 = vsel %vm313, %v968, %v970
        %972 = vrot.lane.b32.xlu0 %v969, 126
        %v973 = vpop.permute.xlu0 %972
        %974 = vrot.lane.b32.xlu0 %v971, 126
        %v975 = vpop.permute.xlu0 %974
        %v978 = vadd.f32 %v957, %v973
        %v979 = vadd.f32 %v958, %v975
        %s980 = sld [smem:[#allocation2 + $0x2d]]
        %v981 = vstv %s980
        %v982 = vmul.f32 %v981, %v200
        %v983 = vmul.f32 %v981, %v201
        %v984 = vadd.f32 %v978, %v982
        %v985 = vadd.f32 %v979, %v983
        %s986 = sld [smem:[#allocation2 + $0x2e]]
        %v987 = vstv %s986
        %v988 = vmul.f32 %v987, %v200
        %v989 = vmul.f32 %v987, %v201
        %992 = vrot.lane.b32.xlu0 %v988, 127
        %v993 = vpop.permute.xlu0 %992
        %994 = vrot.lane.b32.xlu0 %v989, 127
        %v995 = vpop.permute.xlu0 %994
        %v998 = vadd.f32 %v984, %v993
        %v999 = vadd.f32 %v985, %v995
        %s1000 = sld [smem:[#allocation2 + $0x2f]]
        %v1001 = vstv %s1000
        %v1002 = vmul.f32 %v1001, %v200
        %v1003 = vmul.f32 %v1001, %v201
        %1006 = vrot.lane.b32.xlu0 %v1002, 126
        %v1007 = vpop.permute.xlu0 %1006
        %1008 = vrot.lane.b32.xlu0 %v1003, 126
        %v1009 = vpop.permute.xlu0 %1008
        %v1012 = vadd.f32 %v998, %v1007
        %v1013 = vadd.f32 %v999, %v1009
        %s1014 = sld [smem:[#allocation2 + $0x30]]
        %v1015 = vstv %s1014
        %v1016 = vmul.f32 %v1015, %v200
        %v1017 = vmul.f32 %v1015, %v201
        %v1018 = vmul.f32 %v1015, %v202
        %v1022 = vrot.slane %v1016, 1
        %v1023 = vrot.slane %v1017, 1
        %v1024 = vsel %vm253, %v1022, %v1023
        %v1025 = vrot.slane %v1018, 1
        %v1026 = vsel %vm253, %v1023, %v1025
        %v1029 = vadd.f32 %v1012, %v1024
        %v1030 = vadd.f32 %v1013, %v1026
        %s1031 = sld [smem:[#allocation2 + $0x31]]
        %v1032 = vstv %s1031
        %v1033 = vmul.f32 %v1032, %v200
        %v1034 = vmul.f32 %v1032, %v201
        %v1035 = vmul.f32 %v1032, %v202
        %v1039 = vrot.slane %v1033, 1
        %v1040 = vrot.slane %v1034, 1
        %v1041 = vsel %vm253, %v1039, %v1040
        %v1042 = vrot.slane %v1035, 1
        %v1043 = vsel %vm253, %v1040, %v1042
        %1044 = vrot.lane.b32.xlu0 %v1041, 127
        %v1045 = vpop.permute.xlu0 %1044
        %1046 = vrot.lane.b32.xlu0 %v1043, 127
        %v1047 = vpop.permute.xlu0 %1046
        %v1050 = vadd.f32 %v1029, %v1045
        %v1051 = vadd.f32 %v1030, %v1047
        %s1052 = sld [smem:[#allocation2 + $0x32]]
        %v1053 = vstv %s1052
        %v1054 = vmul.f32 %v1053, %v200
        %v1055 = vmul.f32 %v1053, %v201
        %v1056 = vmul.f32 %v1053, %v202
        %v1060 = vrot.slane %v1054, 1
        %v1061 = vrot.slane %v1055, 1
        %v1062 = vsel %vm253, %v1060, %v1061
        %v1063 = vrot.slane %v1056, 1
        %v1064 = vsel %vm253, %v1061, %v1063
        %1065 = vrot.lane.b32.xlu0 %v1062, 126
        %v1066 = vpop.permute.xlu0 %1065
        %1067 = vrot.lane.b32.xlu0 %v1064, 126
        %v1068 = vpop.permute.xlu0 %1067
        %v1071 = vadd.f32 %v1050, %v1066
        %v1072 = vadd.f32 %v1051, %v1068
        %s1073 = sld [smem:[#allocation2 + $0x33]]
        %v1074 = vstv %s1073
        %v1075 = vmul.f32 %v1074, %v200
        %v1076 = vmul.f32 %v1074, %v201
        %v1077 = vmul.f32 %v1074, %v202
        %v1081 = vrot.slane %v1075, 2
        %v1082 = vrot.slane %v1076, 2
        %v1083 = vsel %vm313, %v1081, %v1082
        %v1084 = vrot.slane %v1077, 2
        %v1085 = vsel %vm313, %v1082, %v1084
        %v1088 = vadd.f32 %v1071, %v1083
        %v1089 = vadd.f32 %v1072, %v1085
        %s1090 = sld [smem:[#allocation2 + $0x34]]
        %v1091 = vstv %s1090
        %v1092 = vmul.f32 %v1091, %v200
        %v1093 = vmul.f32 %v1091, %v201
        %v1094 = vmul.f32 %v1091, %v202
        %v1098 = vrot.slane %v1092, 2
        %v1099 = vrot.slane %v1093, 2
        %v1100 = vsel %vm313, %v1098, %v1099
        %v1101 = vrot.slane %v1094, 2
        %v1102 = vsel %vm313, %v1099, %v1101
        %1103 = vrot.lane.b32.xlu0 %v1100, 127
        %v1104 = vpop.permute.xlu0 %1103
        %1105 = vrot.lane.b32.xlu0 %v1102, 127
        %v1106 = vpop.permute.xlu0 %1105
        %v1109 = vadd.f32 %v1088, %v1104
        %v1110 = vadd.f32 %v1089, %v1106
        %s1111 = sld [smem:[#allocation2 + $0x35]]
        %v1112 = vstv %s1111
        %v1113 = vmul.f32 %v1112, %v200
        %v1114 = vmul.f32 %v1112, %v201
        %v1115 = vmul.f32 %v1112, %v202
        %v1119 = vrot.slane %v1113, 2
        %v1120 = vrot.slane %v1114, 2
        %v1121 = vsel %vm313, %v1119, %v1120
        %v1122 = vrot.slane %v1115, 2
        %v1123 = vsel %vm313, %v1120, %v1122
        %1124 = vrot.lane.b32.xlu0 %v1121, 126
        %v1125 = vpop.permute.xlu0 %1124
        %1126 = vrot.lane.b32.xlu0 %v1123, 126
        %v1127 = vpop.permute.xlu0 %1126
        %v1130 = vadd.f32 %v1109, %v1125
        %v1131 = vadd.f32 %v1110, %v1127
        %s1132 = sld [smem:[#allocation2 + $0x36]]
        %v1133 = vstv %s1132
        %v1134 = vmul.f32 %v1133, %v204
        %v1135 = vmul.f32 %v1133, %v205
        %v1136 = vadd.f32 %v1130, %v1134
        %v1137 = vadd.f32 %v1131, %v1135
        %s1138 = sld [smem:[#allocation2 + $0x37]]
        %v1139 = vstv %s1138
        %v1140 = vmul.f32 %v1139, %v204
        %v1141 = vmul.f32 %v1139, %v205
        %1144 = vrot.lane.b32.xlu0 %v1140, 127
        %v1145 = vpop.permute.xlu0 %1144
        %1146 = vrot.lane.b32.xlu0 %v1141, 127
        %v1147 = vpop.permute.xlu0 %1146
        %v1150 = vadd.f32 %v1136, %v1145
        %v1151 = vadd.f32 %v1137, %v1147
        %s1152 = sld [smem:[#allocation2 + $0x38]]
        %v1153 = vstv %s1152
        %v1154 = vmul.f32 %v1153, %v204
        %v1155 = vmul.f32 %v1153, %v205
        %1158 = vrot.lane.b32.xlu0 %v1154, 126
        %v1159 = vpop.permute.xlu0 %1158
        %1160 = vrot.lane.b32.xlu0 %v1155, 126
        %v1161 = vpop.permute.xlu0 %1160
        %v1164 = vadd.f32 %v1150, %v1159
        %v1165 = vadd.f32 %v1151, %v1161
        %s1166 = sld [smem:[#allocation2 + $0x39]]
        %v1167 = vstv %s1166
        %v1168 = vmul.f32 %v1167, %v204
        %v1169 = vmul.f32 %v1167, %v205
        %v1170 = vmul.f32 %v1167, %v206
        %v1174 = vrot.slane %v1168, 1
        %v1175 = vrot.slane %v1169, 1
        %v1176 = vsel %vm253, %v1174, %v1175
        %v1177 = vrot.slane %v1170, 1
        %v1178 = vsel %vm253, %v1175, %v1177
        %v1181 = vadd.f32 %v1164, %v1176
        %v1182 = vadd.f32 %v1165, %v1178
        %s1183 = sld [smem:[#allocation2 + $0x3a]]
        %v1184 = vstv %s1183
        %v1185 = vmul.f32 %v1184, %v204
        %v1186 = vmul.f32 %v1184, %v205
        %v1187 = vmul.f32 %v1184, %v206
        %v1191 = vrot.slane %v1185, 1
        %v1192 = vrot.slane %v1186, 1
        %v1193 = vsel %vm253, %v1191, %v1192
        %v1194 = vrot.slane %v1187, 1
        %v1195 = vsel %vm253, %v1192, %v1194
        %1196 = vrot.lane.b32.xlu0 %v1193, 127
        %v1197 = vpop.permute.xlu0 %1196
        %1198 = vrot.lane.b32.xlu0 %v1195, 127
        %v1199 = vpop.permute.xlu0 %1198
        %v1202 = vadd.f32 %v1181, %v1197
        %v1203 = vadd.f32 %v1182, %v1199
        %s1204 = sld [smem:[#allocation2 + $0x3b]]
        %v1205 = vstv %s1204
        %v1206 = vmul.f32 %v1205, %v204
        %v1207 = vmul.f32 %v1205, %v205
        %v1208 = vmul.f32 %v1205, %v206
        %v1212 = vrot.slane %v1206, 1
        %v1213 = vrot.slane %v1207, 1
        %v1214 = vsel %vm253, %v1212, %v1213
        %v1215 = vrot.slane %v1208, 1
        %v1216 = vsel %vm253, %v1213, %v1215
        %1217 = vrot.lane.b32.xlu0 %v1214, 126
        %v1218 = vpop.permute.xlu0 %1217
        %1219 = vrot.lane.b32.xlu0 %v1216, 126
        %v1220 = vpop.permute.xlu0 %1219
        %v1223 = vadd.f32 %v1202, %v1218
        %v1224 = vadd.f32 %v1203, %v1220
        %s1225 = sld [smem:[#allocation2 + $0x3c]]
        %v1226 = vstv %s1225
        %v1227 = vmul.f32 %v1226, %v204
        %v1228 = vmul.f32 %v1226, %v205
        %v1229 = vmul.f32 %v1226, %v206
        %v1233 = vrot.slane %v1227, 2
        %v1234 = vrot.slane %v1228, 2
        %v1235 = vsel %vm313, %v1233, %v1234
        %v1236 = vrot.slane %v1229, 2
        %v1237 = vsel %vm313, %v1234, %v1236
        %v1240 = vadd.f32 %v1223, %v1235
        %v1241 = vadd.f32 %v1224, %v1237
        %s1242 = sld [smem:[#allocation2 + $0x3d]]
        %v1243 = vstv %s1242
        %v1244 = vmul.f32 %v1243, %v204
        %v1245 = vmul.f32 %v1243, %v205
        %v1246 = vmul.f32 %v1243, %v206
        %v1250 = vrot.slane %v1244, 2
        %v1251 = vrot.slane %v1245, 2
        %v1252 = vsel %vm313, %v1250, %v1251
        %v1253 = vrot.slane %v1246, 2
        %v1254 = vsel %vm313, %v1251, %v1253
        %1255 = vrot.lane.b32.xlu0 %v1252, 127
        %v1256 = vpop.permute.xlu0 %1255
        %1257 = vrot.lane.b32.xlu0 %v1254, 127
        %v1258 = vpop.permute.xlu0 %1257
        %v1261 = vadd.f32 %v1240, %v1256
        %v1262 = vadd.f32 %v1241, %v1258
        %s1263 = sld [smem:[#allocation2 + $0x3e]]
        %v1264 = vstv %s1263
        %v1265 = vmul.f32 %v1264, %v204
        %v1266 = vmul.f32 %v1264, %v205
        %v1267 = vmul.f32 %v1264, %v206
        %v1271 = vrot.slane %v1265, 2
        %v1272 = vrot.slane %v1266, 2
        %v1273 = vsel %vm313, %v1271, %v1272
        %v1274 = vrot.slane %v1267, 2
        %v1275 = vsel %vm313, %v1272, %v1274
        %1276 = vrot.lane.b32.xlu0 %v1273, 126
        %v1277 = vpop.permute.xlu0 %1276
        %1278 = vrot.lane.b32.xlu0 %v1275, 126
        %v1279 = vpop.permute.xlu0 %1278
        %v1282 = vadd.f32 %v1261, %v1277
        %v1283 = vadd.f32 %v1262, %v1279
        %s1284 = sld [smem:[#allocation2 + $0x3f]]
        %v1285 = vstv %s1284
        %v1286 = vmul.f32 %v1285, %v208
        %v1287 = vmul.f32 %v1285, %v209
        %v1288 = vadd.f32 %v1282, %v1286
        %v1289 = vadd.f32 %v1283, %v1287
        %s1290 = sld [smem:[#allocation2 + $0x40]]
        %v1291 = vstv %s1290
        %v1292 = vmul.f32 %v1291, %v208
        %v1293 = vmul.f32 %v1291, %v209
        %1296 = vrot.lane.b32.xlu0 %v1292, 127
        %v1297 = vpop.permute.xlu0 %1296
        %1298 = vrot.lane.b32.xlu0 %v1293, 127
        %v1299 = vpop.permute.xlu0 %1298
        %v1302 = vadd.f32 %v1288, %v1297
        %v1303 = vadd.f32 %v1289, %v1299
        %s1304 = sld [smem:[#allocation2 + $0x41]]
        %v1305 = vstv %s1304
        %v1306 = vmul.f32 %v1305, %v208
        %v1307 = vmul.f32 %v1305, %v209
        %1310 = vrot.lane.b32.xlu0 %v1306, 126
        %v1311 = vpop.permute.xlu0 %1310
        %1312 = vrot.lane.b32.xlu0 %v1307, 126
        %v1313 = vpop.permute.xlu0 %1312
        %v1316 = vadd.f32 %v1302, %v1311
        %v1317 = vadd.f32 %v1303, %v1313
        %s1318 = sld [smem:[#allocation2 + $0x42]]
        %v1319 = vstv %s1318
        %v1320 = vmul.f32 %v1319, %v208
        %v1321 = vmul.f32 %v1319, %v209
        %v1322 = vmul.f32 %v1319, %v210
        %v1326 = vrot.slane %v1320, 1
        %v1327 = vrot.slane %v1321, 1
        %v1328 = vsel %vm253, %v1326, %v1327
        %v1329 = vrot.slane %v1322, 1
        %v1330 = vsel %vm253, %v1327, %v1329
        %v1333 = vadd.f32 %v1316, %v1328
        %v1334 = vadd.f32 %v1317, %v1330
        %s1335 = sld [smem:[#allocation2 + $0x43]]
        %v1336 = vstv %s1335
        %v1337 = vmul.f32 %v1336, %v208
        %v1338 = vmul.f32 %v1336, %v209
        %v1339 = vmul.f32 %v1336, %v210
        %v1343 = vrot.slane %v1337, 1
        %v1344 = vrot.slane %v1338, 1
        %v1345 = vsel %vm253, %v1343, %v1344
        %v1346 = vrot.slane %v1339, 1
        %v1347 = vsel %vm253, %v1344, %v1346
        %1348 = vrot.lane.b32.xlu0 %v1345, 127
        %v1349 = vpop.permute.xlu0 %1348
        %1350 = vrot.lane.b32.xlu0 %v1347, 127
        %v1351 = vpop.permute.xlu0 %1350
        %v1354 = vadd.f32 %v1333, %v1349
        %v1355 = vadd.f32 %v1334, %v1351
        %s1356 = sld [smem:[#allocation2 + $0x44]]
        %v1357 = vstv %s1356
        %v1358 = vmul.f32 %v1357, %v208
        %v1359 = vmul.f32 %v1357, %v209
        %v1360 = vmul.f32 %v1357, %v210
        %v1364 = vrot.slane %v1358, 1
        %v1365 = vrot.slane %v1359, 1
        %v1366 = vsel %vm253, %v1364, %v1365
        %v1367 = vrot.slane %v1360, 1
        %v1368 = vsel %vm253, %v1365, %v1367
        %1369 = vrot.lane.b32.xlu0 %v1366, 126
        %v1370 = vpop.permute.xlu0 %1369
        %1371 = vrot.lane.b32.xlu0 %v1368, 126
        %v1372 = vpop.permute.xlu0 %1371
        %v1375 = vadd.f32 %v1354, %v1370
        %v1376 = vadd.f32 %v1355, %v1372
        %s1377 = sld [smem:[#allocation2 + $0x45]]
        %v1378 = vstv %s1377
        %v1379 = vmul.f32 %v1378, %v208
        %v1380 = vmul.f32 %v1378, %v209
        %v1381 = vmul.f32 %v1378, %v210
        %v1385 = vrot.slane %v1379, 2
        %v1386 = vrot.slane %v1380, 2
        %v1387 = vsel %vm313, %v1385, %v1386
        %v1388 = vrot.slane %v1381, 2
        %v1389 = vsel %vm313, %v1386, %v1388
        %v1392 = vadd.f32 %v1375, %v1387
        %v1393 = vadd.f32 %v1376, %v1389
        %s1394 = sld [smem:[#allocation2 + $0x46]]
        %v1395 = vstv %s1394
        %v1396 = vmul.f32 %v1395, %v208
        %v1397 = vmul.f32 %v1395, %v209
        %v1398 = vmul.f32 %v1395, %v210
        %v1402 = vrot.slane %v1396, 2
        %v1403 = vrot.slane %v1397, 2
        %v1404 = vsel %vm313, %v1402, %v1403
        %v1405 = vrot.slane %v1398, 2
        %v1406 = vsel %vm313, %v1403, %v1405
        %1407 = vrot.lane.b32.xlu0 %v1404, 127
        %v1408 = vpop.permute.xlu0 %1407
        %1409 = vrot.lane.b32.xlu0 %v1406, 127
        %v1410 = vpop.permute.xlu0 %1409
        %v1413 = vadd.f32 %v1392, %v1408
        %v1414 = vadd.f32 %v1393, %v1410
        %s1415 = sld [smem:[#allocation2 + $0x47]]
        %v1416 = vstv %s1415
        %v1417 = vmul.f32 %v1416, %v208
        %v1418 = vmul.f32 %v1416, %v209
        %v1419 = vmul.f32 %v1416, %v210
        %v1423 = vrot.slane %v1417, 2
        %v1424 = vrot.slane %v1418, 2
        %v1425 = vsel %vm313, %v1423, %v1424
        %v1426 = vrot.slane %v1419, 2
        %v1427 = vsel %vm313, %v1424, %v1426
        %1428 = vrot.lane.b32.xlu0 %v1425, 126
        %v1429 = vpop.permute.xlu0 %1428
        %1430 = vrot.lane.b32.xlu0 %v1427, 126
        %v1431 = vpop.permute.xlu0 %1430
        %v1434 = vadd.f32 %v1413, %v1429
        %v1435 = vadd.f32 %v1414, %v1431
        %s1436 = sld [smem:[#allocation5 + $0x1]]
        %v1437 = vstv %s1436
        %v1438 = vadd.f32 %v1434, %v1437
        %v1439 = vadd.f32 %v1435, %v1437
        %s1440 = scalar_lea.vmem %s190, 16 [#allocation7]
        %1441 = vst.msk [vmem:[%s1440] sm:$0xff] %vm825, %v1438
        %1442 = vst.msk [vmem:[%s1440 + $0x8] sm:$0xff] %vm825, %v1439
        %s1443 = sld [smem:[#allocation2 + $0x48]]
        %v1444 = vstv %s1443
        %v1445 = vmul.f32 %v1444, %v196
        %v1446 = vmul.f32 %v1444, %v197
        %v1447 = vadd.f32 %v1445, 0.0
        %v1448 = vadd.f32 %v1446, 0.0
        %s1449 = sld [smem:[#allocation2 + $0x49]]
        %v1450 = vstv %s1449
        %v1451 = vmul.f32 %v1450, %v196
        %v1452 = vmul.f32 %v1450, %v197
        %1455 = vrot.lane.b32.xlu0 %v1451, 127
        %v1456 = vpop.permute.xlu0 %1455
        %1457 = vrot.lane.b32.xlu0 %v1452, 127
        %v1458 = vpop.permute.xlu0 %1457
        %v1461 = vadd.f32 %v1447, %v1456
        %v1462 = vadd.f32 %v1448, %v1458
        %s1463 = sld [smem:[#allocation2 + $0x4a]]
        %v1464 = vstv %s1463
        %v1465 = vmul.f32 %v1464, %v196
        %v1466 = vmul.f32 %v1464, %v197
        %1469 = vrot.lane.b32.xlu0 %v1465, 126
        %v1470 = vpop.permute.xlu0 %1469
        %1471 = vrot.lane.b32.xlu0 %v1466, 126
        %v1472 = vpop.permute.xlu0 %1471
        %v1475 = vadd.f32 %v1461, %v1470
        %v1476 = vadd.f32 %v1462, %v1472
        %s1477 = sld [smem:[#allocation2 + $0x4b]]
        %v1478 = vstv %s1477
        %v1479 = vmul.f32 %v1478, %v196
        %v1480 = vmul.f32 %v1478, %v197
        %v1481 = vmul.f32 %v1478, %v198
        %v1485 = vrot.slane %v1479, 1
        %v1486 = vrot.slane %v1480, 1
        %v1487 = vsel %vm253, %v1485, %v1486
        %v1488 = vrot.slane %v1481, 1
        %v1489 = vsel %vm253, %v1486, %v1488
        %v1492 = vadd.f32 %v1475, %v1487
        %v1493 = vadd.f32 %v1476, %v1489
        %s1494 = sld [smem:[#allocation2 + $0x4c]]
        %v1495 = vstv %s1494
        %v1496 = vmul.f32 %v1495, %v196
        %v1497 = vmul.f32 %v1495, %v197
        %v1498 = vmul.f32 %v1495, %v198
        %v1502 = vrot.slane %v1496, 1
        %v1503 = vrot.slane %v1497, 1
        %v1504 = vsel %vm253, %v1502, %v1503
        %v1505 = vrot.slane %v1498, 1
        %v1506 = vsel %vm253, %v1503, %v1505
        %1507 = vrot.lane.b32.xlu0 %v1504, 127
        %v1508 = vpop.permute.xlu0 %1507
        %1509 = vrot.lane.b32.xlu0 %v1506, 127
        %v1510 = vpop.permute.xlu0 %1509
        %v1513 = vadd.f32 %v1492, %v1508
        %v1514 = vadd.f32 %v1493, %v1510
        %s1515 = sld [smem:[#allocation2 + $0x4d]]
        %v1516 = vstv %s1515
        %v1517 = vmul.f32 %v1516, %v196
        %v1518 = vmul.f32 %v1516, %v197
        %v1519 = vmul.f32 %v1516, %v198
        %v1523 = vrot.slane %v1517, 1
        %v1524 = vrot.slane %v1518, 1
        %v1525 = vsel %vm253, %v1523, %v1524
        %v1526 = vrot.slane %v1519, 1
        %v1527 = vsel %vm253, %v1524, %v1526
        %1528 = vrot.lane.b32.xlu0 %v1525, 126
        %v1529 = vpop.permute.xlu0 %1528
        %1530 = vrot.lane.b32.xlu0 %v1527, 126
        %v1531 = vpop.permute.xlu0 %1530
        %v1534 = vadd.f32 %v1513, %v1529
        %v1535 = vadd.f32 %v1514, %v1531
        %s1536 = sld [smem:[#allocation2 + $0x4e]]
        %v1537 = vstv %s1536
        %v1538 = vmul.f32 %v1537, %v196
        %v1539 = vmul.f32 %v1537, %v197
        %v1540 = vmul.f32 %v1537, %v198
        %v1544 = vrot.slane %v1538, 2
        %v1545 = vrot.slane %v1539, 2
        %v1546 = vsel %vm313, %v1544, %v1545
        %v1547 = vrot.slane %v1540, 2
        %v1548 = vsel %vm313, %v1545, %v1547
        %v1551 = vadd.f32 %v1534, %v1546
        %v1552 = vadd.f32 %v1535, %v1548
        %s1553 = sld [smem:[#allocation2 + $0x4f]]
        %v1554 = vstv %s1553
        %v1555 = vmul.f32 %v1554, %v196
        %v1556 = vmul.f32 %v1554, %v197
        %v1557 = vmul.f32 %v1554, %v198
        %v1561 = vrot.slane %v1555, 2
        %v1562 = vrot.slane %v1556, 2
        %v1563 = vsel %vm313, %v1561, %v1562
        %v1564 = vrot.slane %v1557, 2
        %v1565 = vsel %vm313, %v1562, %v1564
        %1566 = vrot.lane.b32.xlu0 %v1563, 127
        %v1567 = vpop.permute.xlu0 %1566
        %1568 = vrot.lane.b32.xlu0 %v1565, 127
        %v1569 = vpop.permute.xlu0 %1568
        %v1572 = vadd.f32 %v1551, %v1567
        %v1573 = vadd.f32 %v1552, %v1569
        %s1574 = sld [smem:[#allocation2 + $0x50]]
        %v1575 = vstv %s1574
        %v1576 = vmul.f32 %v1575, %v196
        %v1577 = vmul.f32 %v1575, %v197
        %v1578 = vmul.f32 %v1575, %v198
        %v1582 = vrot.slane %v1576, 2
        %v1583 = vrot.slane %v1577, 2
        %v1584 = vsel %vm313, %v1582, %v1583
        %v1585 = vrot.slane %v1578, 2
        %v1586 = vsel %vm313, %v1583, %v1585
        %1587 = vrot.lane.b32.xlu0 %v1584, 126
        %v1588 = vpop.permute.xlu0 %1587
        %1589 = vrot.lane.b32.xlu0 %v1586, 126
        %v1590 = vpop.permute.xlu0 %1589
        %v1593 = vadd.f32 %v1572, %v1588
        %v1594 = vadd.f32 %v1573, %v1590
        %s1595 = sld [smem:[#allocation2 + $0x51]]
        %v1596 = vstv %s1595
        %v1597 = vmul.f32 %v1596, %v200
        %v1598 = vmul.f32 %v1596, %v201
        %v1599 = vadd.f32 %v1593, %v1597
        %v1600 = vadd.f32 %v1594, %v1598
        %s1601 = sld [smem:[#allocation2 + $0x52]]
        %v1602 = vstv %s1601
        %v1603 = vmul.f32 %v1602, %v200
        %v1604 = vmul.f32 %v1602, %v201
        %1607 = vrot.lane.b32.xlu0 %v1603, 127
        %v1608 = vpop.permute.xlu0 %1607
        %1609 = vrot.lane.b32.xlu0 %v1604, 127
        %v1610 = vpop.permute.xlu0 %1609
        %v1613 = vadd.f32 %v1599, %v1608
        %v1614 = vadd.f32 %v1600, %v1610
        %s1615 = sld [smem:[#allocation2 + $0x53]]
        %v1616 = vstv %s1615
        %v1617 = vmul.f32 %v1616, %v200
        %v1618 = vmul.f32 %v1616, %v201
        %1621 = vrot.lane.b32.xlu0 %v1617, 126
        %v1622 = vpop.permute.xlu0 %1621
        %1623 = vrot.lane.b32.xlu0 %v1618, 126
        %v1624 = vpop.permute.xlu0 %1623
        %v1627 = vadd.f32 %v1613, %v1622
        %v1628 = vadd.f32 %v1614, %v1624
        %s1629 = sld [smem:[#allocation2 + $0x54]]
        %v1630 = vstv %s1629
        %v1631 = vmul.f32 %v1630, %v200
        %v1632 = vmul.f32 %v1630, %v201
        %v1633 = vmul.f32 %v1630, %v202
        %v1637 = vrot.slane %v1631, 1
        %v1638 = vrot.slane %v1632, 1
        %v1639 = vsel %vm253, %v1637, %v1638
        %v1640 = vrot.slane %v1633, 1
        %v1641 = vsel %vm253, %v1638, %v1640
        %v1644 = vadd.f32 %v1627, %v1639
        %v1645 = vadd.f32 %v1628, %v1641
        %s1646 = sld [smem:[#allocation2 + $0x55]]
        %v1647 = vstv %s1646
        %v1648 = vmul.f32 %v1647, %v200
        %v1649 = vmul.f32 %v1647, %v201
        %v1650 = vmul.f32 %v1647, %v202
        %v1654 = vrot.slane %v1648, 1
        %v1655 = vrot.slane %v1649, 1
        %v1656 = vsel %vm253, %v1654, %v1655
        %v1657 = vrot.slane %v1650, 1
        %v1658 = vsel %vm253, %v1655, %v1657
        %1659 = vrot.lane.b32.xlu0 %v1656, 127
        %v1660 = vpop.permute.xlu0 %1659
        %1661 = vrot.lane.b32.xlu0 %v1658, 127
        %v1662 = vpop.permute.xlu0 %1661
        %v1665 = vadd.f32 %v1644, %v1660
        %v1666 = vadd.f32 %v1645, %v1662
        %s1667 = sld [smem:[#allocation2 + $0x56]]
        %v1668 = vstv %s1667
        %v1669 = vmul.f32 %v1668, %v200
        %v1670 = vmul.f32 %v1668, %v201
        %v1671 = vmul.f32 %v1668, %v202
        %v1675 = vrot.slane %v1669, 1
        %v1676 = vrot.slane %v1670, 1
        %v1677 = vsel %vm253, %v1675, %v1676
        %v1678 = vrot.slane %v1671, 1
        %v1679 = vsel %vm253, %v1676, %v1678
        %1680 = vrot.lane.b32.xlu0 %v1677, 126
        %v1681 = vpop.permute.xlu0 %1680
        %1682 = vrot.lane.b32.xlu0 %v1679, 126
        %v1683 = vpop.permute.xlu0 %1682
        %v1686 = vadd.f32 %v1665, %v1681
        %v1687 = vadd.f32 %v1666, %v1683
        %s1688 = sld [smem:[#allocation2 + $0x57]]
        %v1689 = vstv %s1688
        %v1690 = vmul.f32 %v1689, %v200
        %v1691 = vmul.f32 %v1689, %v201
        %v1692 = vmul.f32 %v1689, %v202
        %v1696 = vrot.slane %v1690, 2
        %v1697 = vrot.slane %v1691, 2
        %v1698 = vsel %vm313, %v1696, %v1697
        %v1699 = vrot.slane %v1692, 2
        %v1700 = vsel %vm313, %v1697, %v1699
        %v1703 = vadd.f32 %v1686, %v1698
        %v1704 = vadd.f32 %v1687, %v1700
        %s1705 = sld [smem:[#allocation2 + $0x58]]
        %v1706 = vstv %s1705
        %v1707 = vmul.f32 %v1706, %v200
        %v1708 = vmul.f32 %v1706, %v201
        %v1709 = vmul.f32 %v1706, %v202
        %v1713 = vrot.slane %v1707, 2
        %v1714 = vrot.slane %v1708, 2
        %v1715 = vsel %vm313, %v1713, %v1714
        %v1716 = vrot.slane %v1709, 2
        %v1717 = vsel %vm313, %v1714, %v1716
        %1718 = vrot.lane.b32.xlu0 %v1715, 127
        %v1719 = vpop.permute.xlu0 %1718
        %1720 = vrot.lane.b32.xlu0 %v1717, 127
        %v1721 = vpop.permute.xlu0 %1720
        %v1724 = vadd.f32 %v1703, %v1719
        %v1725 = vadd.f32 %v1704, %v1721
        %s1726 = sld [smem:[#allocation2 + $0x59]]
        %v1727 = vstv %s1726
        %v1728 = vmul.f32 %v1727, %v200
        %v1729 = vmul.f32 %v1727, %v201
        %v1730 = vmul.f32 %v1727, %v202
        %v1734 = vrot.slane %v1728, 2
        %v1735 = vrot.slane %v1729, 2
        %v1736 = vsel %vm313, %v1734, %v1735
        %v1737 = vrot.slane %v1730, 2
        %v1738 = vsel %vm313, %v1735, %v1737
        %1739 = vrot.lane.b32.xlu0 %v1736, 126
        %v1740 = vpop.permute.xlu0 %1739
        %1741 = vrot.lane.b32.xlu0 %v1738, 126
        %v1742 = vpop.permute.xlu0 %1741
        %v1745 = vadd.f32 %v1724, %v1740
        %v1746 = vadd.f32 %v1725, %v1742
        %s1747 = sld [smem:[#allocation2 + $0x5a]]
        %v1748 = vstv %s1747
        %v1749 = vmul.f32 %v1748, %v204
        %v1750 = vmul.f32 %v1748, %v205
        %v1751 = vadd.f32 %v1745, %v1749
        %v1752 = vadd.f32 %v1746, %v1750
        %s1753 = sld [smem:[#allocation2 + $0x5b]]
        %v1754 = vstv %s1753
        %v1755 = vmul.f32 %v1754, %v204
        %v1756 = vmul.f32 %v1754, %v205
        %1759 = vrot.lane.b32.xlu0 %v1755, 127
        %v1760 = vpop.permute.xlu0 %1759
        %1761 = vrot.lane.b32.xlu0 %v1756, 127
        %v1762 = vpop.permute.xlu0 %1761
        %v1765 = vadd.f32 %v1751, %v1760
        %v1766 = vadd.f32 %v1752, %v1762
        %s1767 = sld [smem:[#allocation2 + $0x5c]]
        %v1768 = vstv %s1767
        %v1769 = vmul.f32 %v1768, %v204
        %v1770 = vmul.f32 %v1768, %v205
        %1773 = vrot.lane.b32.xlu0 %v1769, 126
        %v1774 = vpop.permute.xlu0 %1773
        %1775 = vrot.lane.b32.xlu0 %v1770, 126
        %v1776 = vpop.permute.xlu0 %1775
        %v1779 = vadd.f32 %v1765, %v1774
        %v1780 = vadd.f32 %v1766, %v1776
        %s1781 = sld [smem:[#allocation2 + $0x5d]]
        %v1782 = vstv %s1781
        %v1783 = vmul.f32 %v1782, %v204
        %v1784 = vmul.f32 %v1782, %v205
        %v1785 = vmul.f32 %v1782, %v206
        %v1789 = vrot.slane %v1783, 1
        %v1790 = vrot.slane %v1784, 1
        %v1791 = vsel %vm253, %v1789, %v1790
        %v1792 = vrot.slane %v1785, 1
        %v1793 = vsel %vm253, %v1790, %v1792
        %v1796 = vadd.f32 %v1779, %v1791
        %v1797 = vadd.f32 %v1780, %v1793
        %s1798 = sld [smem:[#allocation2 + $0x5e]]
        %v1799 = vstv %s1798
        %v1800 = vmul.f32 %v1799, %v204
        %v1801 = vmul.f32 %v1799, %v205
        %v1802 = vmul.f32 %v1799, %v206
        %v1806 = vrot.slane %v1800, 1
        %v1807 = vrot.slane %v1801, 1
        %v1808 = vsel %vm253, %v1806, %v1807
        %v1809 = vrot.slane %v1802, 1
        %v1810 = vsel %vm253, %v1807, %v1809
        %1811 = vrot.lane.b32.xlu0 %v1808, 127
        %v1812 = vpop.permute.xlu0 %1811
        %1813 = vrot.lane.b32.xlu0 %v1810, 127
        %v1814 = vpop.permute.xlu0 %1813
        %v1817 = vadd.f32 %v1796, %v1812
        %v1818 = vadd.f32 %v1797, %v1814
        %s1819 = sld [smem:[#allocation2 + $0x5f]]
        %v1820 = vstv %s1819
        %v1821 = vmul.f32 %v1820, %v204
        %v1822 = vmul.f32 %v1820, %v205
        %v1823 = vmul.f32 %v1820, %v206
        %v1827 = vrot.slane %v1821, 1
        %v1828 = vrot.slane %v1822, 1
        %v1829 = vsel %vm253, %v1827, %v1828
        %v1830 = vrot.slane %v1823, 1
        %v1831 = vsel %vm253, %v1828, %v1830
        %1832 = vrot.lane.b32.xlu0 %v1829, 126
        %v1833 = vpop.permute.xlu0 %1832
        %1834 = vrot.lane.b32.xlu0 %v1831, 126
        %v1835 = vpop.permute.xlu0 %1834
        %v1838 = vadd.f32 %v1817, %v1833
        %v1839 = vadd.f32 %v1818, %v1835
        %s1840 = sld [smem:[#allocation2 + $0x60]]
        %v1841 = vstv %s1840
        %v1842 = vmul.f32 %v1841, %v204
        %v1843 = vmul.f32 %v1841, %v205
        %v1844 = vmul.f32 %v1841, %v206
        %v1848 = vrot.slane %v1842, 2
        %v1849 = vrot.slane %v1843, 2
        %v1850 = vsel %vm313, %v1848, %v1849
        %v1851 = vrot.slane %v1844, 2
        %v1852 = vsel %vm313, %v1849, %v1851
        %v1855 = vadd.f32 %v1838, %v1850
        %v1856 = vadd.f32 %v1839, %v1852
        %s1857 = sld [smem:[#allocation2 + $0x61]]
        %v1858 = vstv %s1857
        %v1859 = vmul.f32 %v1858, %v204
        %v1860 = vmul.f32 %v1858, %v205
        %v1861 = vmul.f32 %v1858, %v206
        %v1865 = vrot.slane %v1859, 2
        %v1866 = vrot.slane %v1860, 2
        %v1867 = vsel %vm313, %v1865, %v1866
        %v1868 = vrot.slane %v1861, 2
        %v1869 = vsel %vm313, %v1866, %v1868
        %1870 = vrot.lane.b32.xlu0 %v1867, 127
        %v1871 = vpop.permute.xlu0 %1870
        %1872 = vrot.lane.b32.xlu0 %v1869, 127
        %v1873 = vpop.permute.xlu0 %1872
        %v1876 = vadd.f32 %v1855, %v1871
        %v1877 = vadd.f32 %v1856, %v1873
        %s1878 = sld [smem:[#allocation2 + $0x62]]
        %v1879 = vstv %s1878
        %v1880 = vmul.f32 %v1879, %v204
        %v1881 = vmul.f32 %v1879, %v205
        %v1882 = vmul.f32 %v1879, %v206
        %v1886 = vrot.slane %v1880, 2
        %v1887 = vrot.slane %v1881, 2
        %v1888 = vsel %vm313, %v1886, %v1887
        %v1889 = vrot.slane %v1882, 2
        %v1890 = vsel %vm313, %v1887, %v1889
        %1891 = vrot.lane.b32.xlu0 %v1888, 126
        %v1892 = vpop.permute.xlu0 %1891
        %1893 = vrot.lane.b32.xlu0 %v1890, 126
        %v1894 = vpop.permute.xlu0 %1893
        %v1897 = vadd.f32 %v1876, %v1892
        %v1898 = vadd.f32 %v1877, %v1894
        %s1899 = sld [smem:[#allocation2 + $0x63]]
        %v1900 = vstv %s1899
        %v1901 = vmul.f32 %v1900, %v208
        %v1902 = vmul.f32 %v1900, %v209
        %v1903 = vadd.f32 %v1897, %v1901
        %v1904 = vadd.f32 %v1898, %v1902
        %s1905 = sld [smem:[#allocation2 + $0x64]]
        %v1906 = vstv %s1905
        %v1907 = vmul.f32 %v1906, %v208
        %v1908 = vmul.f32 %v1906, %v209
        %1911 = vrot.lane.b32.xlu0 %v1907, 127
        %v1912 = vpop.permute.xlu0 %1911
        %1913 = vrot.lane.b32.xlu0 %v1908, 127
        %v1914 = vpop.permute.xlu0 %1913
        %v1917 = vadd.f32 %v1903, %v1912
        %v1918 = vadd.f32 %v1904, %v1914
        %s1919 = sld [smem:[#allocation2 + $0x65]]
        %v1920 = vstv %s1919
        %v1921 = vmul.f32 %v1920, %v208
        %v1922 = vmul.f32 %v1920, %v209
        %1925 = vrot.lane.b32.xlu0 %v1921, 126
        %v1926 = vpop.permute.xlu0 %1925
        %1927 = vrot.lane.b32.xlu0 %v1922, 126
        %v1928 = vpop.permute.xlu0 %1927
        %v1931 = vadd.f32 %v1917, %v1926
        %v1932 = vadd.f32 %v1918, %v1928
        %s1933 = sld [smem:[#allocation2 + $0x66]]
        %v1934 = vstv %s1933
        %v1935 = vmul.f32 %v1934, %v208
        %v1936 = vmul.f32 %v1934, %v209
        %v1937 = vmul.f32 %v1934, %v210
        %v1941 = vrot.slane %v1935, 1
        %v1942 = vrot.slane %v1936, 1
        %v1943 = vsel %vm253, %v1941, %v1942
        %v1944 = vrot.slane %v1937, 1
        %v1945 = vsel %vm253, %v1942, %v1944
        %v1948 = vadd.f32 %v1931, %v1943
        %v1949 = vadd.f32 %v1932, %v1945
        %s1950 = sld [smem:[#allocation2 + $0x67]]
        %v1951 = vstv %s1950
        %v1952 = vmul.f32 %v1951, %v208
        %v1953 = vmul.f32 %v1951, %v209
        %v1954 = vmul.f32 %v1951, %v210
        %v1958 = vrot.slane %v1952, 1
        %v1959 = vrot.slane %v1953, 1
        %v1960 = vsel %vm253, %v1958, %v1959
        %v1961 = vrot.slane %v1954, 1
        %v1962 = vsel %vm253, %v1959, %v1961
        %1963 = vrot.lane.b32.xlu0 %v1960, 127
        %v1964 = vpop.permute.xlu0 %1963
        %1965 = vrot.lane.b32.xlu0 %v1962, 127
        %v1966 = vpop.permute.xlu0 %1965
        %v1969 = vadd.f32 %v1948, %v1964
        %v1970 = vadd.f32 %v1949, %v1966
        %s1971 = sld [smem:[#allocation2 + $0x68]]
        %v1972 = vstv %s1971
        %v1973 = vmul.f32 %v1972, %v208
        %v1974 = vmul.f32 %v1972, %v209
        %v1975 = vmul.f32 %v1972, %v210
        %v1979 = vrot.slane %v1973, 1
        %v1980 = vrot.slane %v1974, 1
        %v1981 = vsel %vm253, %v1979, %v1980
        %v1982 = vrot.slane %v1975, 1
        %v1983 = vsel %vm253, %v1980, %v1982
        %1984 = vrot.lane.b32.xlu0 %v1981, 126
        %v1985 = vpop.permute.xlu0 %1984
        %1986 = vrot.lane.b32.xlu0 %v1983, 126
        %v1987 = vpop.permute.xlu0 %1986
        %v1990 = vadd.f32 %v1969, %v1985
        %v1991 = vadd.f32 %v1970, %v1987
        %s1992 = sld [smem:[#allocation2 + $0x69]]
        %v1993 = vstv %s1992
        %v1994 = vmul.f32 %v1993, %v208
        %v1995 = vmul.f32 %v1993, %v209
        %v1996 = vmul.f32 %v1993, %v210
        %v2000 = vrot.slane %v1994, 2
        %v2001 = vrot.slane %v1995, 2
        %v2002 = vsel %vm313, %v2000, %v2001
        %v2003 = vrot.slane %v1996, 2
        %v2004 = vsel %vm313, %v2001, %v2003
        %v2007 = vadd.f32 %v1990, %v2002
        %v2008 = vadd.f32 %v1991, %v2004
        %s2009 = sld [smem:[#allocation2 + $0x6a]]
        %v2010 = vstv %s2009
        %v2011 = vmul.f32 %v2010, %v208
        %v2012 = vmul.f32 %v2010, %v209
        %v2013 = vmul.f32 %v2010, %v210
        %v2017 = vrot.slane %v2011, 2
        %v2018 = vrot.slane %v2012, 2
        %v2019 = vsel %vm313, %v2017, %v2018
        %v2020 = vrot.slane %v2013, 2
        %v2021 = vsel %vm313, %v2018, %v2020
        %2022 = vrot.lane.b32.xlu0 %v2019, 127
        %v2023 = vpop.permute.xlu0 %2022
        %2024 = vrot.lane.b32.xlu0 %v2021, 127
        %v2025 = vpop.permute.xlu0 %2024
        %v2028 = vadd.f32 %v2007, %v2023
        %v2029 = vadd.f32 %v2008, %v2025
        %s2030 = sld [smem:[#allocation2 + $0x6b]]
        %v2031 = vstv %s2030
        %v2032 = vmul.f32 %v2031, %v208
        %v2033 = vmul.f32 %v2031, %v209
        %v2034 = vmul.f32 %v2031, %v210
        %v2038 = vrot.slane %v2032, 2
        %v2039 = vrot.slane %v2033, 2
        %v2040 = vsel %vm313, %v2038, %v2039
        %v2041 = vrot.slane %v2034, 2
        %v2042 = vsel %vm313, %v2039, %v2041
        %2043 = vrot.lane.b32.xlu0 %v2040, 126
        %v2044 = vpop.permute.xlu0 %2043
        %2045 = vrot.lane.b32.xlu0 %v2042, 126
        %v2046 = vpop.permute.xlu0 %2045
        %v2049 = vadd.f32 %v2028, %v2044
        %v2050 = vadd.f32 %v2029, %v2046
        %s2051 = sld [smem:[#allocation5 + $0x2]]
        %v2052 = vstv %s2051
        %v2053 = vadd.f32 %v2049, %v2052
        %v2054 = vadd.f32 %v2050, %v2052
        %s2055 = scalar_lea.vmem %s190, 32 [#allocation7]
        %2056 = vst.msk [vmem:[%s2055] sm:$0xff] %vm825, %v2053
        %2057 = vst.msk [vmem:[%s2055 + $0x8] sm:$0xff] %vm825, %v2054
        %s2058 = sld [smem:[#allocation2 + $0x6c]]
        %v2059 = vstv %s2058
        %v2060 = vmul.f32 %v2059, %v196
        %v2061 = vmul.f32 %v2059, %v197
        %v2062 = vadd.f32 %v2060, 0.0
        %v2063 = vadd.f32 %v2061, 0.0
        %s2064 = sld [smem:[#allocation2 + $0x6d]]
        %v2065 = vstv %s2064
        %v2066 = vmul.f32 %v2065, %v196
        %v2067 = vmul.f32 %v2065, %v197
        %2070 = vrot.lane.b32.xlu0 %v2066, 127
        %v2071 = vpop.permute.xlu0 %2070
        %2072 = vrot.lane.b32.xlu0 %v2067, 127
        %v2073 = vpop.permute.xlu0 %2072
        %v2076 = vadd.f32 %v2062, %v2071
        %v2077 = vadd.f32 %v2063, %v2073
        %s2078 = sld [smem:[#allocation2 + $0x6e]]
        %v2079 = vstv %s2078
        %v2080 = vmul.f32 %v2079, %v196
        %v2081 = vmul.f32 %v2079, %v197
        %2084 = vrot.lane.b32.xlu0 %v2080, 126
        %v2085 = vpop.permute.xlu0 %2084
        %2086 = vrot.lane.b32.xlu0 %v2081, 126
        %v2087 = vpop.permute.xlu0 %2086
        %v2090 = vadd.f32 %v2076, %v2085
        %v2091 = vadd.f32 %v2077, %v2087
        %s2092 = sld [smem:[#allocation2 + $0x6f]]
        %v2093 = vstv %s2092
        %v2094 = vmul.f32 %v2093, %v196
        %v2095 = vmul.f32 %v2093, %v197
        %v2096 = vmul.f32 %v2093, %v198
        %v2100 = vrot.slane %v2094, 1
        %v2101 = vrot.slane %v2095, 1
        %v2102 = vsel %vm253, %v2100, %v2101
        %v2103 = vrot.slane %v2096, 1
        %v2104 = vsel %vm253, %v2101, %v2103
        %v2107 = vadd.f32 %v2090, %v2102
        %v2108 = vadd.f32 %v2091, %v2104
        %s2109 = sld [smem:[#allocation2 + $0x70]]
        %v2110 = vstv %s2109
        %v2111 = vmul.f32 %v2110, %v196
        %v2112 = vmul.f32 %v2110, %v197
        %v2113 = vmul.f32 %v2110, %v198
        %v2117 = vrot.slane %v2111, 1
        %v2118 = vrot.slane %v2112, 1
        %v2119 = vsel %vm253, %v2117, %v2118
        %v2120 = vrot.slane %v2113, 1
        %v2121 = vsel %vm253, %v2118, %v2120
        %2122 = vrot.lane.b32.xlu0 %v2119, 127
        %v2123 = vpop.permute.xlu0 %2122
        %2124 = vrot.lane.b32.xlu0 %v2121, 127
        %v2125 = vpop.permute.xlu0 %2124
        %v2128 = vadd.f32 %v2107, %v2123
        %v2129 = vadd.f32 %v2108, %v2125
        %s2130 = sld [smem:[#allocation2 + $0x71]]
        %v2131 = vstv %s2130
        %v2132 = vmul.f32 %v2131, %v196
        %v2133 = vmul.f32 %v2131, %v197
        %v2134 = vmul.f32 %v2131, %v198
        %v2138 = vrot.slane %v2132, 1
        %v2139 = vrot.slane %v2133, 1
        %v2140 = vsel %vm253, %v2138, %v2139
        %v2141 = vrot.slane %v2134, 1
        %v2142 = vsel %vm253, %v2139, %v2141
        %2143 = vrot.lane.b32.xlu0 %v2140, 126
        %v2144 = vpop.permute.xlu0 %2143
        %2145 = vrot.lane.b32.xlu0 %v2142, 126
        %v2146 = vpop.permute.xlu0 %2145
        %v2149 = vadd.f32 %v2128, %v2144
        %v2150 = vadd.f32 %v2129, %v2146
        %s2151 = sld [smem:[#allocation2 + $0x72]]
        %v2152 = vstv %s2151
        %v2153 = vmul.f32 %v2152, %v196
        %v2154 = vmul.f32 %v2152, %v197
        %v2155 = vmul.f32 %v2152, %v198
        %v2159 = vrot.slane %v2153, 2
        %v2160 = vrot.slane %v2154, 2
        %v2161 = vsel %vm313, %v2159, %v2160
        %v2162 = vrot.slane %v2155, 2
        %v2163 = vsel %vm313, %v2160, %v2162
        %v2166 = vadd.f32 %v2149, %v2161
        %v2167 = vadd.f32 %v2150, %v2163
        %s2168 = sld [smem:[#allocation2 + $0x73]]
        %v2169 = vstv %s2168
        %v2170 = vmul.f32 %v2169, %v196
        %v2171 = vmul.f32 %v2169, %v197
        %v2172 = vmul.f32 %v2169, %v198
        %v2176 = vrot.slane %v2170, 2
        %v2177 = vrot.slane %v2171, 2
        %v2178 = vsel %vm313, %v2176, %v2177
        %v2179 = vrot.slane %v2172, 2
        %v2180 = vsel %vm313, %v2177, %v2179
        %2181 = vrot.lane.b32.xlu0 %v2178, 127
        %v2182 = vpop.permute.xlu0 %2181
        %2183 = vrot.lane.b32.xlu0 %v2180, 127
        %v2184 = vpop.permute.xlu0 %2183
        %v2187 = vadd.f32 %v2166, %v2182
        %v2188 = vadd.f32 %v2167, %v2184
        %s2189 = sld [smem:[#allocation2 + $0x74]]
        %v2190 = vstv %s2189
        %v2191 = vmul.f32 %v2190, %v196
        %v2192 = vmul.f32 %v2190, %v197
        %v2193 = vmul.f32 %v2190, %v198
        %v2197 = vrot.slane %v2191, 2
        %v2198 = vrot.slane %v2192, 2
        %v2199 = vsel %vm313, %v2197, %v2198
        %v2200 = vrot.slane %v2193, 2
        %v2201 = vsel %vm313, %v2198, %v2200
        %2202 = vrot.lane.b32.xlu0 %v2199, 126
        %v2203 = vpop.permute.xlu0 %2202
        %2204 = vrot.lane.b32.xlu0 %v2201, 126
        %v2205 = vpop.permute.xlu0 %2204
        %v2208 = vadd.f32 %v2187, %v2203
        %v2209 = vadd.f32 %v2188, %v2205
        %s2210 = sld [smem:[#allocation2 + $0x75]]
        %v2211 = vstv %s2210
        %v2212 = vmul.f32 %v2211, %v200
        %v2213 = vmul.f32 %v2211, %v201
        %v2214 = vadd.f32 %v2208, %v2212
        %v2215 = vadd.f32 %v2209, %v2213
        %s2216 = sld [smem:[#allocation2 + $0x76]]
        %v2217 = vstv %s2216
        %v2218 = vmul.f32 %v2217, %v200
        %v2219 = vmul.f32 %v2217, %v201
        %2222 = vrot.lane.b32.xlu0 %v2218, 127
        %v2223 = vpop.permute.xlu0 %2222
        %2224 = vrot.lane.b32.xlu0 %v2219, 127
        %v2225 = vpop.permute.xlu0 %2224
        %v2228 = vadd.f32 %v2214, %v2223
        %v2229 = vadd.f32 %v2215, %v2225
        %s2230 = sld [smem:[#allocation2 + $0x77]]
        %v2231 = vstv %s2230
        %v2232 = vmul.f32 %v2231, %v200
        %v2233 = vmul.f32 %v2231, %v201
        %2236 = vrot.lane.b32.xlu0 %v2232, 126
        %v2237 = vpop.permute.xlu0 %2236
        %2238 = vrot.lane.b32.xlu0 %v2233, 126
        %v2239 = vpop.permute.xlu0 %2238
        %v2242 = vadd.f32 %v2228, %v2237
        %v2243 = vadd.f32 %v2229, %v2239
        %s2244 = sld [smem:[#allocation2 + $0x78]]
        %v2245 = vstv %s2244
        %v2246 = vmul.f32 %v2245, %v200
        %v2247 = vmul.f32 %v2245, %v201
        %v2248 = vmul.f32 %v2245, %v202
        %v2252 = vrot.slane %v2246, 1
        %v2253 = vrot.slane %v2247, 1
        %v2254 = vsel %vm253, %v2252, %v2253
        %v2255 = vrot.slane %v2248, 1
        %v2256 = vsel %vm253, %v2253, %v2255
        %v2259 = vadd.f32 %v2242, %v2254
        %v2260 = vadd.f32 %v2243, %v2256
        %s2261 = sld [smem:[#allocation2 + $0x79]]
        %v2262 = vstv %s2261
        %v2263 = vmul.f32 %v2262, %v200
        %v2264 = vmul.f32 %v2262, %v201
        %v2265 = vmul.f32 %v2262, %v202
        %v2269 = vrot.slane %v2263, 1
        %v2270 = vrot.slane %v2264, 1
        %v2271 = vsel %vm253, %v2269, %v2270
        %v2272 = vrot.slane %v2265, 1
        %v2273 = vsel %vm253, %v2270, %v2272
        %2274 = vrot.lane.b32.xlu0 %v2271, 127
        %v2275 = vpop.permute.xlu0 %2274
        %2276 = vrot.lane.b32.xlu0 %v2273, 127
        %v2277 = vpop.permute.xlu0 %2276
        %v2280 = vadd.f32 %v2259, %v2275
        %v2281 = vadd.f32 %v2260, %v2277
        %s2282 = sld [smem:[#allocation2 + $0x7a]]
        %v2283 = vstv %s2282
        %v2284 = vmul.f32 %v2283, %v200
        %v2285 = vmul.f32 %v2283, %v201
        %v2286 = vmul.f32 %v2283, %v202
        %v2290 = vrot.slane %v2284, 1
        %v2291 = vrot.slane %v2285, 1
        %v2292 = vsel %vm253, %v2290, %v2291
        %v2293 = vrot.slane %v2286, 1
        %v2294 = vsel %vm253, %v2291, %v2293
        %2295 = vrot.lane.b32.xlu0 %v2292, 126
        %v2296 = vpop.permute.xlu0 %2295
        %2297 = vrot.lane.b32.xlu0 %v2294, 126
        %v2298 = vpop.permute.xlu0 %2297
        %v2301 = vadd.f32 %v2280, %v2296
        %v2302 = vadd.f32 %v2281, %v2298
        %s2303 = sld [smem:[#allocation2 + $0x7b]]
        %v2304 = vstv %s2303
        %v2305 = vmul.f32 %v2304, %v200
        %v2306 = vmul.f32 %v2304, %v201
        %v2307 = vmul.f32 %v2304, %v202
        %v2311 = vrot.slane %v2305, 2
        %v2312 = vrot.slane %v2306, 2
        %v2313 = vsel %vm313, %v2311, %v2312
        %v2314 = vrot.slane %v2307, 2
        %v2315 = vsel %vm313, %v2312, %v2314
        %v2318 = vadd.f32 %v2301, %v2313
        %v2319 = vadd.f32 %v2302, %v2315
        %s2320 = sld [smem:[#allocation2 + $0x7c]]
        %v2321 = vstv %s2320
        %v2322 = vmul.f32 %v2321, %v200
        %v2323 = vmul.f32 %v2321, %v201
        %v2324 = vmul.f32 %v2321, %v202
        %v2328 = vrot.slane %v2322, 2
        %v2329 = vrot.slane %v2323, 2
        %v2330 = vsel %vm313, %v2328, %v2329
        %v2331 = vrot.slane %v2324, 2
        %v2332 = vsel %vm313, %v2329, %v2331
        %2333 = vrot.lane.b32.xlu0 %v2330, 127
        %v2334 = vpop.permute.xlu0 %2333
        %2335 = vrot.lane.b32.xlu0 %v2332, 127
        %v2336 = vpop.permute.xlu0 %2335
        %v2339 = vadd.f32 %v2318, %v2334
        %v2340 = vadd.f32 %v2319, %v2336
        %s2341 = sld [smem:[#allocation2 + $0x7d]]
        %v2342 = vstv %s2341
        %v2343 = vmul.f32 %v2342, %v200
        %v2344 = vmul.f32 %v2342, %v201
        %v2345 = vmul.f32 %v2342, %v202
        %v2349 = vrot.slane %v2343, 2
        %v2350 = vrot.slane %v2344, 2
        %v2351 = vsel %vm313, %v2349, %v2350
        %v2352 = vrot.slane %v2345, 2
        %v2353 = vsel %vm313, %v2350, %v2352
        %2354 = vrot.lane.b32.xlu0 %v2351, 126
        %v2355 = vpop.permute.xlu0 %2354
        %2356 = vrot.lane.b32.xlu0 %v2353, 126
        %v2357 = vpop.permute.xlu0 %2356
        %v2360 = vadd.f32 %v2339, %v2355
        %v2361 = vadd.f32 %v2340, %v2357
        %s2362 = sld [smem:[#allocation2 + $0x7e]]
        %v2363 = vstv %s2362
        %v2364 = vmul.f32 %v2363, %v204
        %v2365 = vmul.f32 %v2363, %v205
        %v2366 = vadd.f32 %v2360, %v2364
        %v2367 = vadd.f32 %v2361, %v2365
        %s2368 = sld [smem:[#allocation2 + $0x7f]]
        %v2369 = vstv %s2368
        %v2370 = vmul.f32 %v2369, %v204
        %v2371 = vmul.f32 %v2369, %v205
        %2374 = vrot.lane.b32.xlu0 %v2370, 127
        %v2375 = vpop.permute.xlu0 %2374
        %2376 = vrot.lane.b32.xlu0 %v2371, 127
        %v2377 = vpop.permute.xlu0 %2376
        %v2380 = vadd.f32 %v2366, %v2375
        %v2381 = vadd.f32 %v2367, %v2377
        %s2382 = sld [smem:[#allocation2 + $0x80]]
        %v2383 = vstv %s2382
        %v2384 = vmul.f32 %v2383, %v204
        %v2385 = vmul.f32 %v2383, %v205
        %2388 = vrot.lane.b32.xlu0 %v2384, 126
        %v2389 = vpop.permute.xlu0 %2388
        %2390 = vrot.lane.b32.xlu0 %v2385, 126
        %v2391 = vpop.permute.xlu0 %2390
        %v2394 = vadd.f32 %v2380, %v2389
        %v2395 = vadd.f32 %v2381, %v2391
        %s2396 = sld [smem:[#allocation2 + $0x81]]
        %v2397 = vstv %s2396
        %v2398 = vmul.f32 %v2397, %v204
        %v2399 = vmul.f32 %v2397, %v205
        %v2400 = vmul.f32 %v2397, %v206
        %v2404 = vrot.slane %v2398, 1
        %v2405 = vrot.slane %v2399, 1
        %v2406 = vsel %vm253, %v2404, %v2405
        %v2407 = vrot.slane %v2400, 1
        %v2408 = vsel %vm253, %v2405, %v2407
        %v2411 = vadd.f32 %v2394, %v2406
        %v2412 = vadd.f32 %v2395, %v2408
        %s2413 = sld [smem:[#allocation2 + $0x82]]
        %v2414 = vstv %s2413
        %v2415 = vmul.f32 %v2414, %v204
        %v2416 = vmul.f32 %v2414, %v205
        %v2417 = vmul.f32 %v2414, %v206
        %v2421 = vrot.slane %v2415, 1
        %v2422 = vrot.slane %v2416, 1
        %v2423 = vsel %vm253, %v2421, %v2422
        %v2424 = vrot.slane %v2417, 1
        %v2425 = vsel %vm253, %v2422, %v2424
        %2426 = vrot.lane.b32.xlu0 %v2423, 127
        %v2427 = vpop.permute.xlu0 %2426
        %2428 = vrot.lane.b32.xlu0 %v2425, 127
        %v2429 = vpop.permute.xlu0 %2428
        %v2432 = vadd.f32 %v2411, %v2427
        %v2433 = vadd.f32 %v2412, %v2429
        %s2434 = sld [smem:[#allocation2 + $0x83]]
        %v2435 = vstv %s2434
        %v2436 = vmul.f32 %v2435, %v204
        %v2437 = vmul.f32 %v2435, %v205
        %v2438 = vmul.f32 %v2435, %v206
        %v2442 = vrot.slane %v2436, 1
        %v2443 = vrot.slane %v2437, 1
        %v2444 = vsel %vm253, %v2442, %v2443
        %v2445 = vrot.slane %v2438, 1
        %v2446 = vsel %vm253, %v2443, %v2445
        %2447 = vrot.lane.b32.xlu0 %v2444, 126
        %v2448 = vpop.permute.xlu0 %2447
        %2449 = vrot.lane.b32.xlu0 %v2446, 126
        %v2450 = vpop.permute.xlu0 %2449
        %v2453 = vadd.f32 %v2432, %v2448
        %v2454 = vadd.f32 %v2433, %v2450
        %s2455 = sld [smem:[#allocation2 + $0x84]]
        %v2456 = vstv %s2455
        %v2457 = vmul.f32 %v2456, %v204
        %v2458 = vmul.f32 %v2456, %v205
        %v2459 = vmul.f32 %v2456, %v206
        %v2463 = vrot.slane %v2457, 2
        %v2464 = vrot.slane %v2458, 2
        %v2465 = vsel %vm313, %v2463, %v2464
        %v2466 = vrot.slane %v2459, 2
        %v2467 = vsel %vm313, %v2464, %v2466
        %v2470 = vadd.f32 %v2453, %v2465
        %v2471 = vadd.f32 %v2454, %v2467
        %s2472 = sld [smem:[#allocation2 + $0x85]]
        %v2473 = vstv %s2472
        %v2474 = vmul.f32 %v2473, %v204
        %v2475 = vmul.f32 %v2473, %v205
        %v2476 = vmul.f32 %v2473, %v206
        %v2480 = vrot.slane %v2474, 2
        %v2481 = vrot.slane %v2475, 2
        %v2482 = vsel %vm313, %v2480, %v2481
        %v2483 = vrot.slane %v2476, 2
        %v2484 = vsel %vm313, %v2481, %v2483
        %2485 = vrot.lane.b32.xlu0 %v2482, 127
        %v2486 = vpop.permute.xlu0 %2485
        %2487 = vrot.lane.b32.xlu0 %v2484, 127
        %v2488 = vpop.permute.xlu0 %2487
        %v2491 = vadd.f32 %v2470, %v2486
        %v2492 = vadd.f32 %v2471, %v2488
        %s2493 = sld [smem:[#allocation2 + $0x86]]
        %v2494 = vstv %s2493
        %v2495 = vmul.f32 %v2494, %v204
        %v2496 = vmul.f32 %v2494, %v205
        %v2497 = vmul.f32 %v2494, %v206
        %v2501 = vrot.slane %v2495, 2
        %v2502 = vrot.slane %v2496, 2
        %v2503 = vsel %vm313, %v2501, %v2502
        %v2504 = vrot.slane %v2497, 2
        %v2505 = vsel %vm313, %v2502, %v2504
        %2506 = vrot.lane.b32.xlu0 %v2503, 126
        %v2507 = vpop.permute.xlu0 %2506
        %2508 = vrot.lane.b32.xlu0 %v2505, 126
        %v2509 = vpop.permute.xlu0 %2508
        %v2512 = vadd.f32 %v2491, %v2507
        %v2513 = vadd.f32 %v2492, %v2509
        %s2514 = sld [smem:[#allocation2 + $0x87]]
        %v2515 = vstv %s2514
        %v2516 = vmul.f32 %v2515, %v208
        %v2517 = vmul.f32 %v2515, %v209
        %v2518 = vadd.f32 %v2512, %v2516
        %v2519 = vadd.f32 %v2513, %v2517
        %s2520 = sld [smem:[#allocation2 + $0x88]]
        %v2521 = vstv %s2520
        %v2522 = vmul.f32 %v2521, %v208
        %v2523 = vmul.f32 %v2521, %v209
        %2526 = vrot.lane.b32.xlu0 %v2522, 127
        %v2527 = vpop.permute.xlu0 %2526
        %2528 = vrot.lane.b32.xlu0 %v2523, 127
        %v2529 = vpop.permute.xlu0 %2528
        %v2532 = vadd.f32 %v2518, %v2527
        %v2533 = vadd.f32 %v2519, %v2529
        %s2534 = sld [smem:[#allocation2 + $0x89]]
        %v2535 = vstv %s2534
        %v2536 = vmul.f32 %v2535, %v208
        %v2537 = vmul.f32 %v2535, %v209
        %2540 = vrot.lane.b32.xlu0 %v2536, 126
        %v2541 = vpop.permute.xlu0 %2540
        %2542 = vrot.lane.b32.xlu0 %v2537, 126
        %v2543 = vpop.permute.xlu0 %2542
        %v2546 = vadd.f32 %v2532, %v2541
        %v2547 = vadd.f32 %v2533, %v2543
        %s2548 = sld [smem:[#allocation2 + $0x8a]]
        %v2549 = vstv %s2548
        %v2550 = vmul.f32 %v2549, %v208
        %v2551 = vmul.f32 %v2549, %v209
        %v2552 = vmul.f32 %v2549, %v210
        %v2556 = vrot.slane %v2550, 1
        %v2557 = vrot.slane %v2551, 1
        %v2558 = vsel %vm253, %v2556, %v2557
        %v2559 = vrot.slane %v2552, 1
        %v2560 = vsel %vm253, %v2557, %v2559
        %v2563 = vadd.f32 %v2546, %v2558
        %v2564 = vadd.f32 %v2547, %v2560
        %s2565 = sld [smem:[#allocation2 + $0x8b]]
        %v2566 = vstv %s2565
        %v2567 = vmul.f32 %v2566, %v208
        %v2568 = vmul.f32 %v2566, %v209
        %v2569 = vmul.f32 %v2566, %v210
        %v2573 = vrot.slane %v2567, 1
        %v2574 = vrot.slane %v2568, 1
        %v2575 = vsel %vm253, %v2573, %v2574
        %v2576 = vrot.slane %v2569, 1
        %v2577 = vsel %vm253, %v2574, %v2576
        %2578 = vrot.lane.b32.xlu0 %v2575, 127
        %v2579 = vpop.permute.xlu0 %2578
        %2580 = vrot.lane.b32.xlu0 %v2577, 127
        %v2581 = vpop.permute.xlu0 %2580
        %v2584 = vadd.f32 %v2563, %v2579
        %v2585 = vadd.f32 %v2564, %v2581
        %s2586 = sld [smem:[#allocation2 + $0x8c]]
        %v2587 = vstv %s2586
        %v2588 = vmul.f32 %v2587, %v208
        %v2589 = vmul.f32 %v2587, %v209
        %v2590 = vmul.f32 %v2587, %v210
        %v2594 = vrot.slane %v2588, 1
        %v2595 = vrot.slane %v2589, 1
        %v2596 = vsel %vm253, %v2594, %v2595
        %v2597 = vrot.slane %v2590, 1
        %v2598 = vsel %vm253, %v2595, %v2597
        %2599 = vrot.lane.b32.xlu0 %v2596, 126
        %v2600 = vpop.permute.xlu0 %2599
        %2601 = vrot.lane.b32.xlu0 %v2598, 126
        %v2602 = vpop.permute.xlu0 %2601
        %v2605 = vadd.f32 %v2584, %v2600
        %v2606 = vadd.f32 %v2585, %v2602
        %s2607 = sld [smem:[#allocation2 + $0x8d]]
        %v2608 = vstv %s2607
        %v2609 = vmul.f32 %v2608, %v208
        %v2610 = vmul.f32 %v2608, %v209
        %v2611 = vmul.f32 %v2608, %v210
        %v2615 = vrot.slane %v2609, 2
        %v2616 = vrot.slane %v2610, 2
        %v2617 = vsel %vm313, %v2615, %v2616
        %v2618 = vrot.slane %v2611, 2
        %v2619 = vsel %vm313, %v2616, %v2618
        %v2622 = vadd.f32 %v2605, %v2617
        %v2623 = vadd.f32 %v2606, %v2619
        %s2624 = sld [smem:[#allocation2 + $0x8e]]
        %v2625 = vstv %s2624
        %v2626 = vmul.f32 %v2625, %v208
        %v2627 = vmul.f32 %v2625, %v209
        %v2628 = vmul.f32 %v2625, %v210
        %v2632 = vrot.slane %v2626, 2
        %v2633 = vrot.slane %v2627, 2
        %v2634 = vsel %vm313, %v2632, %v2633
        %v2635 = vrot.slane %v2628, 2
        %v2636 = vsel %vm313, %v2633, %v2635
        %2637 = vrot.lane.b32.xlu0 %v2634, 127
        %v2638 = vpop.permute.xlu0 %2637
        %2639 = vrot.lane.b32.xlu0 %v2636, 127
        %v2640 = vpop.permute.xlu0 %2639
        %v2643 = vadd.f32 %v2622, %v2638
        %v2644 = vadd.f32 %v2623, %v2640
        %s2645 = sld [smem:[#allocation2 + $0x8f]]
        %v2646 = vstv %s2645
        %v2647 = vmul.f32 %v2646, %v208
        %v2648 = vmul.f32 %v2646, %v209
        %v2649 = vmul.f32 %v2646, %v210
        %v2653 = vrot.slane %v2647, 2
        %v2654 = vrot.slane %v2648, 2
        %v2655 = vsel %vm313, %v2653, %v2654
        %v2656 = vrot.slane %v2649, 2
        %v2657 = vsel %vm313, %v2654, %v2656
        %2658 = vrot.lane.b32.xlu0 %v2655, 126
        %v2659 = vpop.permute.xlu0 %2658
        %2660 = vrot.lane.b32.xlu0 %v2657, 126
        %v2661 = vpop.permute.xlu0 %2660
        %v2664 = vadd.f32 %v2643, %v2659
        %v2665 = vadd.f32 %v2644, %v2661
        %s2666 = sld [smem:[#allocation5 + $0x3]]
        %v2667 = vstv %s2666
        %v2668 = vadd.f32 %v2664, %v2667
        %v2669 = vadd.f32 %v2665, %v2667
        %s2670 = scalar_lea.vmem %s190, 48 [#allocation7]
        %2671 = vst.msk [vmem:[%s2670] sm:$0xff] %vm825, %v2668
        %2672 = vst.msk [vmem:[%s2670 + $0x8] sm:$0xff] %vm825, %v2669
        %s2673 = sand.u32 %s95, 1
        %s2674 = scalar_lea.sflag [#allocation3], %s2673
        %s2675 = sand.u32 %s95, 1
        %s2676 = smul.addr %s2675, 64
        %s2677 = scalar_lea.vmem [#allocation7], %s2676
        // Predicated region
        $region41: #{uvit_forward.39} parent=31 // pred_check
          %p2678 = pneg %p105
        $region42: #{uvit_forward.39} parent=31 // pred_check_branch
          %2680 = sbr.rel (%p2678) target = $region44
        $region43: #{uvit_forward.39} parent=31 // pred_region
          %2682 = vsyncadd %s2674, 0
          %s2683 = smul.addr %s19, 8
          %s2684 = smul.addr %s2683, 8
          %s2685 = scalar_lea.hbm %s3, %s2684
          %s2686 = sshll.u32 %s2677, 4
          %s2687 = int_to_ptr.vmem [resolvable:$true] %s2686
          %s2688 = sshll.u32 %s2685, 4
          %s2689 = int_to_ptr.hbm [resolvable:$true] %s2688
          %2694 = dma.vmem_to_hbm [thread:$0]  %s2687, 1024, %s2689, %s2674, 128, 128, 8
        $region44: #{uvit_forward.39} parent=31 // pred_fallthru
          _
      $region32: #{uvit_forward.39} parent=5 // pred_fallthru
        _
      %p2695 = scmp.le.s32.totalorder 2, %s14
      // Predicated region
      $region45: #{uvit_forward.39} parent=5 // pred_check
        %p2696 = pneg %p2695
      $region46: #{uvit_forward.39} parent=5 // pred_check_branch
        %2698 = sbr.rel (%p2696) target = $region48
      $region47: #{uvit_forward.39} parent=5 // pred_region
        %s2699 = ssub.s32 %s14, 2
        // Predicated region
        $region49: #{uvit_forward.39} parent=47 // pred_check
          %p2700 = pneg %p111
        $region50: #{uvit_forward.39} parent=47 // pred_check_branch
          %2702 = sbr.rel (%p2700) target = $region52
        $region51: #{uvit_forward.39} parent=47 // pred_region
          %s2703 = sand.u32 %s96, 1
          %s2704 = scalar_lea.sflag [#allocation3], %s2703
          %s2705 = sand.u32 %s96, 1
          %s2706 = smul.addr %s2705, 64
          %s2707 = scalar_lea.vmem [#allocation7], %s2706
          %2709 = dma.done %s2704, 1024
        $region52: #{uvit_forward.39} parent=47 // pred_fallthru
          _
      $region48: #{uvit_forward.39} parent=5 // pred_fallthru
        _
    $region6: #{uvit_forward.39} parent=1 // loop_footer
      %s18 = sadd.s32 1, %s14
    $region7: #{uvit_forward.39} parent=1 // loop_footer_branch
      %13 = sbr.rel target = $region3
    $region8: #{uvit_forward.39} parent=1 // loop_exit
      _
    %2710 = vsyncpa [#allocation3], 1
    %s2711 = scalar_lea.sflag [#allocation3], 1
    %2712 = vsyncpa %s2711, 1
    %2713 = vsyncpa [#allocation4], 1
    %s2714 = scalar_lea.sflag [#allocation4], 1
    %2715 = vsyncpa %s2714, 1
    %2716 = vsyncpa [#allocation6], 1

</llo_original>
